<compile_context>
chip_gen: v7x
topology: tpu7x:2x2x1
jax: 0.10.0
libtpu: 0.0.40
codegen_flags: <defaults>
</compile_context>

<pallas_src>
import functools

import jax
import jax.numpy as jnp
from jax import lax
from jax.experimental import pallas as pl
from jax.experimental.pallas import tpu as pltpu

KH = KW = 3          # conv kernel size
EPS = 1e-5           # BatchNorm eps (PyTorch default)


def _conv_block_kernel(x_ref, w1_ref, w2_ref, p_ref, o_ref, *, H, W):
    """One grid step = NB images; channels on sublanes, flat spatial on lanes.

    x_ref : (NB, Cp, H*W)     zero-padded channels, last channel == 1.0
    w1_ref: (Cout, 9*Cp)      im2col conv1 weights (bias in the ones-channel col)
    w2_ref: (Cout, 9*Cout)    im2col conv2 weights
    p_ref : (Cout, 5)         packed per-channel [s1, t1, b2, s2, t2]
    o_ref : (NB, 1, Cout*Hp*Wp)
    """
    NB, Cp, HW = x_ref.shape
    Cout = w1_ref.shape[0]
    S = NB * HW                       # flat spatial length of this half-batch
    DW = 2 * W + 2                    # flat-index reach of a 3x3 valid window
    Hp, Wp = (H - 4) // 2, (W - 4) // 2
    F = Cout * Hp * Wp
    offs = [kh * W + kw for kh in range(KH) for kw in range(KW)]

    # Channel-major flat view of the images in this step (lane axis = spatial).
    if NB == 1:
        xc = x_ref[0]                                              # (Cp, HW)
    else:
        xc = jnp.transpose(x_ref[...], (1, 0, 2)).reshape(Cp, S)
    # Trailing zero columns so both conv outputs keep a full S-column frame
    # (valid output positions never read them).
    xc = jnp.concatenate([xc, jnp.zeros((Cp, 2 * DW), jnp.float32)], axis=1)

    def im2col(v, width):
        # Row (kh*KW + kw)*C + c of the result holds v[c, j + kh*W + kw].
        return jnp.concatenate([v[:, d:d + width] for d in offs], axis=0)

    # conv1 (3x3 valid, bias via the constant-ones channel) -> ReLU -> BN1
    y1 = jnp.dot(w1_ref[...], im2col(xc, S + DW),
                 preferred_element_type=jnp.float32)               # (Cout, S+DW)
    z1 = jnp.maximum(y1, 0.0) * p_ref[:, 0:1] + p_ref[:, 1:2]

    # conv2 (3x3 valid) + bias -> ReLU -> BN2
    y2 = jnp.dot(w2_ref[...], im2col(z1, S),
                 preferred_element_type=jnp.float32) + p_ref[:, 2:3]
    z2 = jnp.maximum(y2, 0.0) * p_ref[:, 3:4] + p_ref[:, 4:5]      # (Cout, S)

    # Dropout(p=0.2): eval-mode identity (no-op).

    # MaxPool2d(2, 2) over the valid (H-4) x (W-4) region of every image.
    z3 = z2.reshape(Cout * NB, H, W)[:, :2 * Hp, :2 * Wp]          # (Cout*NB,12,12)
    g = jnp.max(z3.reshape(Cout * NB, Hp, 2, 2 * Wp), axis=2)      # pool rows
    g = jnp.max(g.reshape(Cout * NB, Hp, Wp, 2), axis=3)           # pool cols

    if NB == 1:
        out = g.reshape(1, 1, F)
    else:
        out = jnp.transpose(g.reshape(Cout, NB, Hp, Wp),
                            (1, 0, 2, 3)).reshape(NB, 1, F)
    o_ref[...] = out.astype(o_ref.dtype)


@jax.jit
def conv_bn_relu_up(x_nchw, params):
    """NCHW in -> NCHW out, matching the PyTorch block in eval mode."""
    (w1, b1, g1, be1, m1, v1,
     w2, b2, g2, be2, m2, v2) = params

    N, Cin, H, W = x_nchw.shape
    Cout = w1.shape[0]
    Hp, Wp = (H - 4) // 2, (W - 4) // 2
    F = Cout * Hp * Wp
    HW = H * W
    f32 = jnp.float32

    # Fold eval-mode BatchNorm into per-channel scale/shift.
    s1 = (g1 / jnp.sqrt(v1 + EPS)).astype(f32)
    t1 = (be1 - m1 * s1).astype(f32)
    s2 = (g2 / jnp.sqrt(v2 + EPS)).astype(f32)
    t2 = (be2 - m2 * s2).astype(f32)
    pbn = jnp.stack([s1, t1, b2.astype(f32), s2, t2], axis=1)       # (Cout, 5)

    # Zero-pad input channels to a multiple of 8 and append a constant-ones
    # channel (it carries conv1's bias through the im2col matmul).
    Cp = ((Cin + 1 + 7) // 8) * 8
    xflat = x_nchw.reshape(N, Cin, HW).astype(f32)                  # free reshape
    xf = jnp.concatenate(
        [xflat,
         jnp.zeros((N, Cp - Cin - 1, HW), f32),
         jnp.ones((N, 1, HW), f32)], axis=1)                        # (N, Cp, HW)

    # im2col weight matrices: column (kh*KW + kw)*C + c  <->  tap (kh, kw, c).
    w1t = jnp.pad(jnp.transpose(w1, (0, 2, 3, 1)).astype(f32),
                  ((0, 0), (0, 0), (0, 0), (0, Cp - Cin)))
    w1t = w1t.at[:, 0, 0, Cp - 1].set(b1.astype(f32))               # bias column
    w1m = w1t.reshape(Cout, KH * KW * Cp)
    w2m = jnp.transpose(w2, (0, 2, 3, 1)).astype(f32).reshape(Cout, KH * KW * Cout)

    # Two "parallel" half-batches (one per TensorCore on v7x) when N is even;
    # each step folds its whole half-batch onto the GEMM lane axis.
    if N % 2 == 0:
        G, NB = 2, N // 2
    else:
        G, NB = 1, N

    kernel = functools.partial(_conv_block_kernel, H=H, W=W)
    out = pl.pallas_call(
        kernel,
        out_shape=jax.ShapeDtypeStruct((N, 1, F), f32),
        grid=(G,),
        in_specs=[
            pl.BlockSpec((NB, Cp, HW), lambda g: (g, 0, 0)),
            pl.BlockSpec((Cout, KH * KW * Cp), lambda g: (0, 0)),
            pl.BlockSpec((Cout, KH * KW * Cout), lambda g: (0, 0)),
            pl.BlockSpec((Cout, 5), lambda g: (0, 0)),
        ],
        out_specs=pl.BlockSpec((NB, 1, F), lambda g: (g, 0, 0)),
        compiler_params=pltpu.CompilerParams(
            dimension_semantics=("parallel",)),
    )(xf, w1m, w2m, pbn)

    return out.reshape(N, Cout, Hp, Wp)                             # NCHW, free


def reference(x_nchw, params):
    """Pure-JAX reference (same math, XLA conv) for a correctness check."""
    (w1, b1, g1, be1, m1, v1,
     w2, b2, g2, be2, m2, v2) = params
    x = jnp.transpose(x_nchw, (0, 2, 3, 1)).astype(jnp.float32)

    def conv(x, w_oihw, b):
        w = jnp.transpose(w_oihw, (2, 3, 1, 0))
        y = lax.conv_general_dilated(
            x, w, (1, 1), 'VALID',
            dimension_numbers=('NHWC', 'HWIO', 'NHWC'))
        return y + b

    def bn(x, g, be, m, v):
        return (x - m) / jnp.sqrt(v + EPS) * g + be

    h = bn(jnp.maximum(conv(x, w1, b1), 0.0), g1, be1, m1, v1)
    h = bn(jnp.maximum(conv(h, w2, b2), 0.0), g2, be2, m2, v2)
    h = lax.reduce_window(h, -jnp.inf, lax.max,
                          (1, 2, 2, 1), (1, 2, 2, 1), 'VALID')
    return jnp.transpose(h, (0, 3, 1, 2))


if __name__ == "__main__":
    N, CIN, COUT, H, W = 2, 4, 8, 16, 16

    key = jax.random.PRNGKey(0)
    ks = jax.random.split(key, 13)

    x = jax.random.normal(ks[0], (N, CIN, H, W), jnp.float32)

    # Deterministic synthetic parameters (PyTorch layouts: Conv OIHW, BN per-channel).
    w1 = 0.1 * jax.random.normal(ks[1], (COUT, CIN, KH, KW), jnp.float32)
    b1 = 0.1 * jax.random.normal(ks[2], (COUT,), jnp.float32)
    g1 = 1.0 + 0.1 * jax.random.normal(ks[3], (COUT,), jnp.float32)
    be1 = 0.1 * jax.random.normal(ks[4], (COUT,), jnp.float32)
    m1 = 0.1 * jax.random.normal(ks[5], (COUT,), jnp.float32)
    v1 = 0.5 + jnp.abs(jax.random.normal(ks[6], (COUT,), jnp.float32))

    w2 = 0.1 * jax.random.normal(ks[7], (COUT, COUT, KH, KW), jnp.float32)
    b2 = 0.1 * jax.random.normal(ks[8], (COUT,), jnp.float32)
    g2 = 1.0 + 0.1 * jax.random.normal(ks[9], (COUT,), jnp.float32)
    be2 = 0.1 * jax.random.normal(ks[10], (COUT,), jnp.float32)
    m2 = 0.1 * jax.random.normal(ks[11], (COUT,), jnp.float32)
    v2 = 0.5 + jnp.abs(jax.random.normal(ks[12], (COUT,), jnp.float32))

    params = (w1, b1, g1, be1, m1, v1, w2, b2, g2, be2, m2, v2)

    out = jax.block_until_ready(conv_bn_relu_up(x, params))
    ref = jax.block_until_ready(reference(x, params))

    assert out.shape == (N, COUT, (H - 4) // 2, (W - 4) // 2), out.shape
    assert jnp.allclose(out, ref, atol=1e-4, rtol=1e-4), \
        f"max abs err {jnp.max(jnp.abs(out - ref))}"
    print("KERNEL_OK")
</pallas_src>

<mosaic_0001>
module attributes {stable_mosaic.version = 11 : i64} {
  func.func @_conv_block_kernel(%arg0: i32, %arg1: memref<1x8x256xf32, #tpu.memory_space<vmem>>, %arg2: memref<8x72xf32, #tpu.memory_space<vmem>>, %arg3: memref<8x72xf32, #tpu.memory_space<vmem>>, %arg4: memref<8x5xf32, #tpu.memory_space<vmem>>, %arg5: memref<1x1x288xf32, #tpu.memory_space<vmem>>) attributes {dimension_semantics = [#tpu.dimension_semantics<parallel>], iteration_bounds = array<i64: 2>, scalar_prefetch = 0 : i64, scratch_operands = 0 : i64, tpu.core_type = #tpu.core_type<tc>, window_params = [{transform_indices = @transform_0, window_bounds = array<i64: 1, 8, 256>}, {pipeline_mode = #tpu.pipeline_mode<synchronous>, transform_indices = @transform_1, window_bounds = array<i64: 8, 72>}, {pipeline_mode = #tpu.pipeline_mode<synchronous>, transform_indices = @transform_2, window_bounds = array<i64: 8, 72>}, {pipeline_mode = #tpu.pipeline_mode<synchronous>, transform_indices = @transform_3, window_bounds = array<i64: 8, 5>}, {transform_indices = @transform_4, window_bounds = array<i64: 1, 1, 288>}]} {
    %c0 = arith.constant 0 : index
    %c0_0 = arith.constant 0 : index
    %c0_1 = arith.constant 0 : index
    %0 = vector.load %arg1[%c0, %c0_0, %c0_1] : memref<1x8x256xf32, #tpu.memory_space<vmem>>, vector<1x8x256xf32>
    %1 = vector.shape_cast %0 : vector<1x8x256xf32> to vector<8x256xf32>
    %cst = arith.constant 0.000000e+00 : f32
    %2 = vector.broadcast %cst : f32 to vector<8x68xf32>
    %3 = tpu.concatenate %1, %2 in 1 : vector<8x256xf32>, vector<8x68xf32> -> vector<8x324xf32>
    %c0_2 = arith.constant 0 : index
    %c0_3 = arith.constant 0 : index
    %4 = vector.load %arg2[%c0_2, %c0_3] : memref<8x72xf32, #tpu.memory_space<vmem>>, vector<8x72xf32>
    %5 = vector.extract_strided_slice %3 {offsets = [0, 0], sizes = [8, 290], strides = [1, 1]} : vector<8x324xf32> to vector<8x290xf32>
    %6 = vector.extract_strided_slice %3 {offsets = [0, 1], sizes = [8, 290], strides = [1, 1]} : vector<8x324xf32> to vector<8x290xf32>
    %7 = vector.extract_strided_slice %3 {offsets = [0, 2], sizes = [8, 290], strides = [1, 1]} : vector<8x324xf32> to vector<8x290xf32>
    %8 = vector.extract_strided_slice %3 {offsets = [0, 16], sizes = [8, 290], strides = [1, 1]} : vector<8x324xf32> to vector<8x290xf32>
    %9 = vector.extract_strided_slice %3 {offsets = [0, 17], sizes = [8, 290], strides = [1, 1]} : vector<8x324xf32> to vector<8x290xf32>
    %10 = vector.extract_strided_slice %3 {offsets = [0, 18], sizes = [8, 290], strides = [1, 1]} : vector<8x324xf32> to vector<8x290xf32>
    %11 = vector.extract_strided_slice %3 {offsets = [0, 32], sizes = [8, 290], strides = [1, 1]} : vector<8x324xf32> to vector<8x290xf32>
    %12 = vector.extract_strided_slice %3 {offsets = [0, 33], sizes = [8, 290], strides = [1, 1]} : vector<8x324xf32> to vector<8x290xf32>
    %13 = vector.extract_strided_slice %3 {offsets = [0, 34], sizes = [8, 290], strides = [1, 1]} : vector<8x324xf32> to vector<8x290xf32>
    %14 = tpu.concatenate %5, %6, %7, %8, %9, %10, %11, %12, %13 in 0 : vector<8x290xf32>, vector<8x290xf32>, vector<8x290xf32>, vector<8x290xf32>, vector<8x290xf32>, vector<8x290xf32>, vector<8x290xf32>, vector<8x290xf32>, vector<8x290xf32> -> vector<72x290xf32>
    %cst_4 = arith.constant dense<0.000000e+00> : vector<8x290xf32>
    %15 = tpu.matmul %4, %14, %cst_4 {dimension_numbers = #tpu.dot_dimension_numbers<[1], [0], [0], [1], [0, 0, 1, 1], [], []>} : vector<8x72xf32>, vector<72x290xf32>, vector<8x290xf32> -> vector<8x290xf32>
    %cst_5 = arith.constant 0.000000e+00 : f32
    %16 = vector.broadcast %cst_5 : f32 to vector<8x290xf32>
    %17 = arith.maximumf %15, %16 : vector<8x290xf32>
    %c0_6 = arith.constant 0 : index
    %c0_7 = arith.constant 0 : index
    %18 = vector.load %arg4[%c0_6, %c0_7] : memref<8x5xf32, #tpu.memory_space<vmem>>, vector<8x1xf32>
    %19 = vector.broadcast %18 : vector<8x1xf32> to vector<8x290xf32>
    %20 = arith.mulf %17, %19 : vector<8x290xf32>
    %c0_8 = arith.constant 0 : index
    %c1 = arith.constant 1 : index
    %21 = vector.load %arg4[%c0_8, %c1] : memref<8x5xf32, #tpu.memory_space<vmem>>, vector<8x1xf32>
    %22 = vector.broadcast %21 : vector<8x1xf32> to vector<8x290xf32>
    %23 = arith.addf %20, %22 : vector<8x290xf32>
    %c0_9 = arith.constant 0 : index
    %c0_10 = arith.constant 0 : index
    %24 = vector.load %arg3[%c0_9, %c0_10] : memref<8x72xf32, #tpu.memory_space<vmem>>, vector<8x72xf32>
    %25 = vector.extract_strided_slice %23 {offsets = [0, 0], sizes = [8, 256], strides = [1, 1]} : vector<8x290xf32> to vector<8x256xf32>
    %26 = vector.extract_strided_slice %23 {offsets = [0, 1], sizes = [8, 256], strides = [1, 1]} : vector<8x290xf32> to vector<8x256xf32>
    %27 = vector.extract_strided_slice %23 {offsets = [0, 2], sizes = [8, 256], strides = [1, 1]} : vector<8x290xf32> to vector<8x256xf32>
    %28 = vector.extract_strided_slice %23 {offsets = [0, 16], sizes = [8, 256], strides = [1, 1]} : vector<8x290xf32> to vector<8x256xf32>
    %29 = vector.extract_strided_slice %23 {offsets = [0, 17], sizes = [8, 256], strides = [1, 1]} : vector<8x290xf32> to vector<8x256xf32>
    %30 = vector.extract_strided_slice %23 {offsets = [0, 18], sizes = [8, 256], strides = [1, 1]} : vector<8x290xf32> to vector<8x256xf32>
    %31 = vector.extract_strided_slice %23 {offsets = [0, 32], sizes = [8, 256], strides = [1, 1]} : vector<8x290xf32> to vector<8x256xf32>
    %32 = vector.extract_strided_slice %23 {offsets = [0, 33], sizes = [8, 256], strides = [1, 1]} : vector<8x290xf32> to vector<8x256xf32>
    %33 = vector.extract_strided_slice %23 {offsets = [0, 34], sizes = [8, 256], strides = [1, 1]} : vector<8x290xf32> to vector<8x256xf32>
    %34 = tpu.concatenate %25, %26, %27, %28, %29, %30, %31, %32, %33 in 0 : vector<8x256xf32>, vector<8x256xf32>, vector<8x256xf32>, vector<8x256xf32>, vector<8x256xf32>, vector<8x256xf32>, vector<8x256xf32>, vector<8x256xf32>, vector<8x256xf32> -> vector<72x256xf32>
    %cst_11 = arith.constant dense<0.000000e+00> : vector<8x256xf32>
    %35 = tpu.matmul %24, %34, %cst_11 {dimension_numbers = #tpu.dot_dimension_numbers<[1], [0], [0], [1], [0, 0, 1, 1], [], []>} : vector<8x72xf32>, vector<72x256xf32>, vector<8x256xf32> -> vector<8x256xf32>
    %c0_12 = arith.constant 0 : index
    %c2 = arith.constant 2 : index
    %36 = vector.load %arg4[%c0_12, %c2] : memref<8x5xf32, #tpu.memory_space<vmem>>, vector<8x1xf32>
    %37 = vector.broadcast %36 : vector<8x1xf32> to vector<8x256xf32>
    %38 = arith.addf %35, %37 : vector<8x256xf32>
    %cst_13 = arith.constant 0.000000e+00 : f32
    %39 = vector.broadcast %cst_13 : f32 to vector<8x256xf32>
    %40 = arith.maximumf %38, %39 : vector<8x256xf32>
    %c0_14 = arith.constant 0 : index
    %c3 = arith.constant 3 : index
    %41 = vector.load %arg4[%c0_14, %c3] : memref<8x5xf32, #tpu.memory_space<vmem>>, vector<8x1xf32>
    %42 = vector.broadcast %41 : vector<8x1xf32> to vector<8x256xf32>
    %43 = arith.mulf %40, %42 : vector<8x256xf32>
    %c0_15 = arith.constant 0 : index
    %c4 = arith.constant 4 : index
    %44 = vector.load %arg4[%c0_15, %c4] : memref<8x5xf32, #tpu.memory_space<vmem>>, vector<8x1xf32>
    %45 = vector.broadcast %44 : vector<8x1xf32> to vector<8x256xf32>
    %46 = arith.addf %43, %45 : vector<8x256xf32>
    %47 = vector.shape_cast %46 : vector<8x256xf32> to vector<8x16x16xf32>
    %48 = vector.extract_strided_slice %47 {offsets = [0, 0, 0], sizes = [8, 12, 12], strides = [1, 1, 1]} : vector<8x16x16xf32> to vector<8x12x12xf32>
    %49 = vector.shape_cast %48 : vector<8x12x12xf32> to vector<8x6x2x12xf32>
    %cst_16 = arith.constant dense<0xFF800000> : vector<8x6x12xf32>
    %50 = vector.multi_reduction <maximumf>, %49, %cst_16 [2] : vector<8x6x2x12xf32> to vector<8x6x12xf32>
    %51 = vector.shape_cast %50 : vector<8x6x12xf32> to vector<8x6x6x2xf32>
    %cst_17 = arith.constant dense<0xFF800000> : vector<8x6x6xf32>
    %52 = vector.multi_reduction <maximumf>, %51, %cst_17 [3] : vector<8x6x6x2xf32> to vector<8x6x6xf32>
    %53 = vector.shape_cast %52 : vector<8x6x6xf32> to vector<1x1x288xf32>
    %c0_18 = arith.constant 0 : index
    %c0_19 = arith.constant 0 : index
    %c0_20 = arith.constant 0 : index
    %54 = vector.load %arg5[%c0_18, %c0_19, %c0_20] : memref<1x1x288xf32, #tpu.memory_space<vmem>>, vector<1x1x288xf32>
    tpu.vector_store %arg5[%c0_18, %c0_19, %c0_20], %53 {strides = array<i32>} : memref<1x1x288xf32, #tpu.memory_space<vmem>>, vector<1x1x288xf32>,
    return
  }
  func.func @transform_0(%arg0: i32) -> (i32, i32, i32) {
    %c0_i32 = arith.constant 0 : i32
    %c0_i32_0 = arith.constant 0 : i32
    %c0_i32_1 = arith.constant 0 : i32
    return %arg0, %c0_i32, %c0_i32_0 : i32, i32, i32
  }
  func.func @transform_1(%arg0: i32) -> (i32, i32) {
    %c0_i32 = arith.constant 0 : i32
    %c0_i32_0 = arith.constant 0 : i32
    %c0_i32_1 = arith.constant 0 : i32
    return %c0_i32, %c0_i32_0 : i32, i32
  }
  func.func @transform_2(%arg0: i32) -> (i32, i32) {
    %c0_i32 = arith.constant 0 : i32
    %c0_i32_0 = arith.constant 0 : i32
    %c0_i32_1 = arith.constant 0 : i32
    return %c0_i32, %c0_i32_0 : i32, i32
  }
  func.func @transform_3(%arg0: i32) -> (i32, i32) {
    %c0_i32 = arith.constant 0 : i32
    %c0_i32_0 = arith.constant 0 : i32
    %c0_i32_1 = arith.constant 0 : i32
    return %c0_i32, %c0_i32_0 : i32, i32
  }
  func.func @transform_4(%arg0: i32) -> (i32, i32, i32) {
    %c0_i32 = arith.constant 0 : i32
    %c0_i32_0 = arith.constant 0 : i32
    %c0_i32_1 = arith.constant 0 : i32
    return %arg0, %c0_i32, %c0_i32_0 : i32, i32, i32
  }
}

</mosaic_0001>

<llo_original>
// kernel: conv_bn_relu_up.1
$region0: #{conv_bn_relu_up.1}
  #allocation0 [shape = 'u32[]', space=smem, size = 0x4, offset = 0x4, fixed_abs, tag = 'smem constant byte address 0x4 - core index']
  #allocation1 [shape = 'u32[144,128]{1,0:T(1,128)}', space=vmem, size = 0x12000, scoped, tag = 'internal scratch']
  %s0 = inlined_call_operand.vmem [shape: f32[2,8,256], index: 0, kind: input, shape index: {}]
  %s1 = inlined_call_operand.vmem [shape: f32[8,72], index: 1, kind: input, shape index: {}]
  %s2 = inlined_call_operand.vmem [shape: f32[8,72], index: 2, kind: input, shape index: {}]
  %s3 = inlined_call_operand.vmem [shape: f32[8,5], index: 3, kind: input, shape index: {}]
  %s4 = inlined_call_operand.vmem [shape: f32[2,1,288], index: 4, kind: output, shape index: {}]
  %s5 = sld [smem:[#allocation0]]
  $region49: #{conv_bn_relu_up.1} parent=0
    _
  %s7 = ssub.s32 1, %s5
  %s8 = scalar_select 0, %s7, %s5
  loop: start=0, step=1, limit=4
  $region2: #{conv_bn_relu_up.1} parent=0 // loop_pre_header
    _
  $region3: #{conv_bn_relu_up.1} parent=0 // loop_header
    %s10 = sphi 0, %s14
    %p11 = scmp.ge.s32.totalorder %s10, 4
    %s20 = sphi 0, %s22
    %s23 = sphi 0, %s20
    %s24 = sphi 0, %s23
    %s40 = sphi 0, %s24
    %s44 = sphi 0, %s44
    %s46 = sphi 0, %s44
    %s47 = sphi 0, %s46
    %s61 = sphi 0, %s47
    %s65 = sphi 0, %s65
    %s67 = sphi 0, %s65
    %s68 = sphi 0, %s67
    %s82 = sphi 0, %s68
    %s86 = sphi 0, %s86
    %s88 = sphi 0, %s86
    %s89 = sphi 0, %s88
    %s103 = sphi 0, %s89
    %s109 = sphi 0, %s111
    %s112 = sphi 0, %s109
    %s113 = sphi 0, %s112
    %s129 = sphi 0, %s113
  $region4: #{conv_bn_relu_up.1} parent=0 // loop_header_branch
    %13 = sbr.rel (%p11) target = $region8
  $region5: #{conv_bn_relu_up.1} parent=0 // loop_body
    %s15 = ssub.s32 %s10, 1
    %s16 = ssub.s32 %s10, 2
    %s17 = sadd.s32 %s10, 1
    %s18 = ssub.s32 %s10, %s17
    %p19 = scmp.eq.s32.totalorder %s18, 0
    %s21 = sadd.s32 %s20, 1
    %s22 = scalar_select %p19, %s20, %s21
    %p25 = pneg %p19
    %p26 = scmp.eq.s32.totalorder %s10, 1
    %p27 = por %p25, %p26
    %p28 = scmp.ne.s32.totalorder %s20, %s23
    %p29 = scmp.eq.s32.totalorder %s10, 0
    %p30 = por %p28, %p29
    %p31 = scmp.ne.s32.totalorder %s20, %s23
    %p32 = scmp.eq.s32.totalorder %s15, 1
    %p33 = por %p31, %p32
    %p34 = scmp.ne.s32.totalorder %s23, %s24
    %p35 = scmp.eq.s32.totalorder %s15, 0
    %p36 = por %p34, %p35
    %p37 = scmp.ne.s32.totalorder %s23, %s24
    %p38 = scmp.eq.s32.totalorder %s16, 1
    %p39 = por %p37, %p38
    %p41 = scmp.ne.s32.totalorder %s24, %s40
    %p42 = scmp.eq.s32.totalorder %s16, 0
    %p43 = por %p41, %p42
    %s45 = sadd.s32 %s44, 1
    %p48 = scmp.eq.s32.totalorder %s10, 1
    %p49 = scmp.ne.s32.totalorder %s44, %s46
    %p50 = scmp.eq.s32.totalorder %s10, 0
    %p51 = por %p49, %p50
    %p52 = scmp.ne.s32.totalorder %s44, %s46
    %p53 = scmp.eq.s32.totalorder %s15, 1
    %p54 = por %p52, %p53
    %p55 = scmp.ne.s32.totalorder %s46, %s47
    %p56 = scmp.eq.s32.totalorder %s15, 0
    %p57 = por %p55, %p56
    %p58 = scmp.ne.s32.totalorder %s46, %s47
    %p59 = scmp.eq.s32.totalorder %s16, 1
    %p60 = por %p58, %p59
    %p62 = scmp.ne.s32.totalorder %s47, %s61
    %p63 = scmp.eq.s32.totalorder %s16, 0
    %p64 = por %p62, %p63
    %s66 = sadd.s32 %s65, 1
    %p69 = scmp.eq.s32.totalorder %s10, 1
    %p70 = scmp.ne.s32.totalorder %s65, %s67
    %p71 = scmp.eq.s32.totalorder %s10, 0
    %p72 = por %p70, %p71
    %p73 = scmp.ne.s32.totalorder %s65, %s67
    %p74 = scmp.eq.s32.totalorder %s15, 1
    %p75 = por %p73, %p74
    %p76 = scmp.ne.s32.totalorder %s67, %s68
    %p77 = scmp.eq.s32.totalorder %s15, 0
    %p78 = por %p76, %p77
    %p79 = scmp.ne.s32.totalorder %s67, %s68
    %p80 = scmp.eq.s32.totalorder %s16, 1
    %p81 = por %p79, %p80
    %p83 = scmp.ne.s32.totalorder %s68, %s82
    %p84 = scmp.eq.s32.totalorder %s16, 0
    %p85 = por %p83, %p84
    %s87 = sadd.s32 %s86, 1
    %p90 = scmp.eq.s32.totalorder %s10, 1
    %p91 = scmp.ne.s32.totalorder %s86, %s88
    %p92 = scmp.eq.s32.totalorder %s10, 0
    %p93 = por %p91, %p92
    %p94 = scmp.ne.s32.totalorder %s86, %s88
    %p95 = scmp.eq.s32.totalorder %s15, 1
    %p96 = por %p94, %p95
    %p97 = scmp.ne.s32.totalorder %s88, %s89
    %p98 = scmp.eq.s32.totalorder %s15, 0
    %p99 = por %p97, %p98
    %p100 = scmp.ne.s32.totalorder %s88, %s89
    %p101 = scmp.eq.s32.totalorder %s16, 1
    %p102 = por %p100, %p101
    %p104 = scmp.ne.s32.totalorder %s89, %s103
    %p105 = scmp.eq.s32.totalorder %s16, 0
    %p106 = por %p104, %p105
    %s107 = ssub.s32 %s10, %s17
    %p108 = scmp.eq.s32.totalorder %s107, 0
    %s110 = sadd.s32 %s109, 1
    %s111 = scalar_select %p108, %s109, %s110
    %p114 = pneg %p108
    %p115 = scmp.eq.s32.totalorder %s10, 1
    %p116 = por %p114, %p115
    %p117 = scmp.ne.s32.totalorder %s109, %s112
    %p118 = scmp.eq.s32.totalorder %s10, 0
    %p119 = por %p117, %p118
    %p120 = scmp.ne.s32.totalorder %s109, %s112
    %p121 = scmp.eq.s32.totalorder %s15, 1
    %p122 = por %p120, %p121
    %p123 = scmp.ne.s32.totalorder %s112, %s113
    %p124 = scmp.eq.s32.totalorder %s15, 0
    %p125 = por %p123, %p124
    %p126 = scmp.ne.s32.totalorder %s112, %s113
    %p127 = scmp.eq.s32.totalorder %s16, 1
    %p128 = por %p126, %p127
    %p130 = scmp.ne.s32.totalorder %s113, %s129
    %p131 = scmp.eq.s32.totalorder %s16, 0
    %p132 = por %p130, %p131
    %p133 = scmp.le.s32.totalorder 1, %s10
    %p134 = scmp.lt.s32.totalorder %s10, 3
    %p135 = pnand %p133, %p134
    %p136 = pneg %p135
    // Predicated region
    $region9: #{conv_bn_relu_up.1} parent=5 // pred_check
      _
    $region10: #{conv_bn_relu_up.1} parent=5 // pred_check_branch
      %138 = sbr.rel (%p135) target = $region12
    $region11: #{conv_bn_relu_up.1} parent=5 // pred_region
      %s139 = ssub.s32 %s10, 1
      // Predicated region
      $region13: #{conv_bn_relu_up.1} parent=11 // pred_check
        %p140 = pneg %p57
      $region14: #{conv_bn_relu_up.1} parent=11 // pred_check_branch
        %142 = sbr.rel (%p140) target = $region16
      $region15: #{conv_bn_relu_up.1} parent=11 // pred_region
        _
      $region16: #{conv_bn_relu_up.1} parent=11 // pred_fallthru
        _
      // Predicated region
      $region17: #{conv_bn_relu_up.1} parent=11 // pred_check
        %p143 = pneg %p78
      $region18: #{conv_bn_relu_up.1} parent=11 // pred_check_branch
        %145 = sbr.rel (%p143) target = $region20
      $region19: #{conv_bn_relu_up.1} parent=11 // pred_region
        _
      $region20: #{conv_bn_relu_up.1} parent=11 // pred_fallthru
        _
      // Predicated region
      $region21: #{conv_bn_relu_up.1} parent=11 // pred_check
        %p146 = pneg %p99
      $region22: #{conv_bn_relu_up.1} parent=11 // pred_check_branch
        %148 = sbr.rel (%p146) target = $region24
      $region23: #{conv_bn_relu_up.1} parent=11 // pred_region
        _
      $region24: #{conv_bn_relu_up.1} parent=11 // pred_fallthru
        _
    $region12: #{conv_bn_relu_up.1} parent=5 // pred_fallthru
      _
    %p149 = scmp.lt.s32.totalorder %s10, 2
    // Predicated region
    $region25: #{conv_bn_relu_up.1} parent=5 // pred_check
      %p150 = pneg %p149
    $region26: #{conv_bn_relu_up.1} parent=5 // pred_check_branch
      %152 = sbr.rel (%p150) target = $region28
    $region27: #{conv_bn_relu_up.1} parent=5 // pred_region
      // Predicated region
      $region29: #{conv_bn_relu_up.1} parent=27 // pred_check
        %p153 = pneg %p30
      $region30: #{conv_bn_relu_up.1} parent=27 // pred_check_branch
        %155 = sbr.rel (%p153) target = $region32
      $region31: #{conv_bn_relu_up.1} parent=27 // pred_region
        %p156 = scmp.lt.s32.totalorder %s10, 1
        %s157 = scalar_select %p156, %s10, 1
        %s158 = smul.addr %s157, 2
        %s159 = smul.addr %s158, 8
        %s160 = scalar_lea.vmem %s0, %s159
      $region32: #{conv_bn_relu_up.1} parent=27 // pred_fallthru
        _
    $region28: #{conv_bn_relu_up.1} parent=5 // pred_fallthru
      _
    %p161 = scmp.le.s32.totalorder 1, %s10
    %p162 = scmp.lt.s32.totalorder %s10, 3
    %p163 = pnand %p161, %p162
    %p164 = pneg %p163
    // Predicated region
    $region33: #{conv_bn_relu_up.1} parent=5 // pred_check
      _
    $region34: #{conv_bn_relu_up.1} parent=5 // pred_check_branch
      %166 = sbr.rel (%p163) target = $region36
    $region35: #{conv_bn_relu_up.1} parent=5 // pred_region
      %s167 = ssub.s32 %s10, 1
      %p168 = scmp.lt.s32.totalorder %s15, 1
      %s169 = scalar_select %p168, %s15, 1
      %s170 = smul.addr %s169, 2
      %s171 = smul.addr %s170, 8
      %s172 = scalar_lea.vmem %s0, %s171
      %p173 = pneg %p36
      %p174 = pneg %p33
      %p175 = pneg %p57
      %p176 = pneg %p54
      %p177 = pneg %p78
      %p178 = pneg %p75
      %p179 = pneg %p99
      %p180 = pneg %p96
      %p181 = pneg %p125
      %p182 = pneg %p122
      %p183 = scmp.lt.s32.totalorder %s15, 1
      %s184 = scalar_select %p183, %s15, 1
      %s185 = smul.addr %s184, 3
      %s186 = scalar_lea.vmem %s4, %s185
      %p187 = scmp.lt.s32.totalorder %s15, 1
      %s188 = scalar_select %p187, %s15, 1
      %s189 = smul.addr %s188, 2
      %s190 = smul.addr %s189, 8
      %s191 = scalar_lea.vmem %s0, %s190
      %p192 = scmp.lt.s32.totalorder %s15, 1
      %s193 = scalar_select %p192, %s15, 1
      %s194 = smul.addr %s193, 3
      %s195 = scalar_lea.vmem %s4, %s194
      %v196 = vld [vmem:[%s191] sm:$0xff]
      %v197 = vld [vmem:[%s191 + $0x8] sm:$0xff]
      %v198 = vld [vmem:[%s1] sm:$0xff]
      %202 = vrot.lane.b32.xlu0 %v196, 127
      %v203 = vpop.permute.xlu0 %202
      %204 = vrot.lane.b32.xlu0 %v197, 127
      %v205 = vpop.permute.xlu0 %204
      %206 = vrot.lane.b32.xlu0 0.0, 127
      %v207 = vpop.permute.xlu0 %206
      %vm208 = vcmask 1039360
      %v209 = vsel %vm208, %v203, %v205
      %v210 = vsel %vm208, %v205, %v207
      %214 = vrot.lane.b32.xlu0 %v196, 126
      %v215 = vpop.permute.xlu0 %214
      %216 = vrot.lane.b32.xlu0 %v197, 126
      %v217 = vpop.permute.xlu0 %216
      %218 = vrot.lane.b32.xlu0 0.0, 126
      %v219 = vpop.permute.xlu0 %218
      %vm220 = vcmask 1031168
      %v221 = vsel %vm220, %v215, %v217
      %v222 = vsel %vm220, %v217, %v219
      %226 = vrot.lane.b32.xlu0 %v196, 112
      %v227 = vpop.permute.xlu0 %226
      %228 = vrot.lane.b32.xlu0 %v197, 112
      %v229 = vpop.permute.xlu0 %228
      %230 = vrot.lane.b32.xlu0 0.0, 112
      %v231 = vpop.permute.xlu0 %230
      %vm232 = vcmask 916480
      %v233 = vsel %vm232, %v227, %v229
      %v234 = vsel %vm232, %v229, %v231
      %238 = vrot.lane.b32.xlu0 %v196, 111
      %v239 = vpop.permute.xlu0 %238
      %240 = vrot.lane.b32.xlu0 %v197, 111
      %v241 = vpop.permute.xlu0 %240
      %242 = vrot.lane.b32.xlu0 0.0, 111
      %v243 = vpop.permute.xlu0 %242
      %vm244 = vcmask 908288
      %v245 = vsel %vm244, %v239, %v241
      %v246 = vsel %vm244, %v241, %v243
      %250 = vrot.lane.b32.xlu0 %v196, 110
      %v251 = vpop.permute.xlu0 %250
      %252 = vrot.lane.b32.xlu0 %v197, 110
      %v253 = vpop.permute.xlu0 %252
      %254 = vrot.lane.b32.xlu0 0.0, 110
      %v255 = vpop.permute.xlu0 %254
      %vm256 = vcmask 900096
      %v257 = vsel %vm256, %v251, %v253
      %v258 = vsel %vm256, %v253, %v255
      %262 = vrot.lane.b32.xlu0 %v196, 96
      %v263 = vpop.permute.xlu0 %262
      %264 = vrot.lane.b32.xlu0 %v197, 96
      %v265 = vpop.permute.xlu0 %264
      %266 = vrot.lane.b32.xlu0 0.0, 96
      %v267 = vpop.permute.xlu0 %266
      %vm268 = vcmask 785408
      %v269 = vsel %vm268, %v263, %v265
      %v270 = vsel %vm268, %v265, %v267
      %274 = vrot.lane.b32.xlu0 %v196, 95
      %v275 = vpop.permute.xlu0 %274
      %276 = vrot.lane.b32.xlu0 %v197, 95
      %v277 = vpop.permute.xlu0 %276
      %278 = vrot.lane.b32.xlu0 0.0, 95
      %v279 = vpop.permute.xlu0 %278
      %vm280 = vcmask 777216
      %v281 = vsel %vm280, %v275, %v277
      %v282 = vsel %vm280, %v277, %v279
      %286 = vrot.lane.b32.xlu0 %v196, 94
      %v287 = vpop.permute.xlu0 %286
      %288 = vrot.lane.b32.xlu0 %v197, 94
      %v289 = vpop.permute.xlu0 %288
      %290 = vrot.lane.b32.xlu0 0.0, 94
      %v291 = vpop.permute.xlu0 %290
      %vm292 = vcmask 769024
      %v293 = vsel %vm292, %v287, %v289
      %v294 = vsel %vm292, %v289, %v291
      %vm298 = vcmask 588800
      %v300 = vsel %vm298, %v198, 0
      %302 = vmatprep.subr.mxu0 %v197
      %303 = vmatpush1.msra.mxu0 %v196
      %304 = vmatprep.subr.mxu0 %v210
      %305 = vmatpush1.msra.mxu0 %v209
      %306 = vmatprep.subr.mxu0 %v222
      %307 = vmatpush1.msra.mxu0 %v221
      %308 = vmatprep.subr.mxu0 %v234
      %309 = vmatpush1.msra.mxu0 %v233
      %310 = vmatprep.subr.mxu0 %v246
      %311 = vmatpush1.msra.mxu0 %v245
      %312 = vmatprep.subr.mxu0 %v258
      %313 = vmatpush1.msra.mxu0 %v257
      %314 = vmatprep.subr.mxu0 %v270
      %315 = vmatpush1.msra.mxu0 %v269
      %316 = vmatprep.subr.mxu0 %v282
      %317 = vmatpush1.msra.mxu0 %v281
      %318 = vmatprep.subr.mxu0 %v294
      %319 = vmatpush1.msra.mxu0 %v293
      %320 = vmatprep.subr.mxu0 0.0
      %321 = vmatpush1.msra.mxu0 0.0
      %322 = vmatprep.subr.mxu0 0.0
      %323 = vmatpush1.msra.mxu0 0.0
      %324 = vmatprep.subr.mxu0 0.0
      %325 = vmatpush1.msra.mxu0 0.0
      %326 = vmatprep.subr.mxu0 0.0
      %327 = vmatpush1.msra.mxu0 0.0
      %328 = vmatprep.subr.mxu0 0.0
      %329 = vmatpush1.msra.mxu0 0.0
      %330 = vmatprep.subr.mxu0 0.0
      %331 = vmatpush1.msra.mxu0 0.0
      %332 = vmatprep.subr.mxu0 0.0
      %333 = vmatpush1.msra.mxu0 0.0
      %334 = vmatprep.subr.mxu0 0.0
      %335 = vmatpush1.msra.mxu0 0.0
      %336 = vmatprep.subr.mxu0 0.0
      %337 = vmatpush1.msra.mxu0 0.0
      %338 = vmatprep.subr.mxu0 0.0
      %339 = vmatpush1.msra.mxu0 0.0
      %340 = vmatprep.subr.mxu0 0.0
      %341 = vmatpush1.msra.mxu0 0.0
      %342 = vmatprep.subr.mxu0 0.0
      %343 = vmatpush1.msra.mxu0 0.0
      %344 = vmatprep.subr.mxu0 0.0
      %345 = vmatpush1.msra.mxu0 0.0
      %346 = vmatprep.subr.mxu0 0.0
      %347 = vmatpush1.msra.mxu0 0.0
      %348 = vmatprep.subr.mxu0 0.0
      %349 = vmatpush1.msra.mxu0 0.0
      %350 = vmatprep.subr.mxu0 0.0
      %351 = vmatpush1.msra.mxu0 0.0
      %352 = vmatprep.subr.mxu0 0.0
      %353 = vmatpush1.msra.mxu0 0.0
      %354 = vmatprep.subr.mxu0 0.0
      %355 = vmatpush1.msra.mxu0 0.0
      %356 = vmatprep.subr.mxu0 0.0
      %357 = vmatpush1.msra.mxu0 0.0
      %358 = vmatprep.subr.mxu0 0.0
      %359 = vmatpush1.msra.mxu0 0.0
      %360 = vmatprep.subr.mxu0 0.0
      %361 = vmatpush1.msra.mxu0 0.0
      %362 = vmatprep.subr.mxu0 0.0
      %363 = vmatpush1.msra.mxu0 0.0
      %364 = vmatprep.subr.mxu0 0.0
      %365 = vmatpush1.msra.mxu0 0.0
      %366 = vmatprep.mubr.f32.mxu0 0.0
      %367 = vmatmul.mubr.f32.gmra.mrb[0].mxu0 %v300
      %v368 = vpop.f32.mrb[0].mxu0
      %v369 = vadd.f32 0.0, %v368
      %v370 = vpop.f32.mrb[0].mxu0
      %v371 = vadd.f32 0.0, %v370
      %372 = vdwg.mxu0
      %373 = vmatprep.subr.mxu0 0.0
      %374 = vmatpush1.msra.mxu0 0.0
      %375 = vmatprep.subr.mxu0 0.0
      %376 = vmatpush1.msra.mxu0 %v207
      %377 = vmatprep.subr.mxu0 0.0
      %378 = vmatpush1.msra.mxu0 %v219
      %379 = vmatprep.subr.mxu0 0.0
      %380 = vmatpush1.msra.mxu0 %v231
      %381 = vmatprep.subr.mxu0 0.0
      %382 = vmatpush1.msra.mxu0 %v243
      %383 = vmatprep.subr.mxu0 0.0
      %384 = vmatpush1.msra.mxu0 %v255
      %385 = vmatprep.subr.mxu0 0.0
      %386 = vmatpush1.msra.mxu0 %v267
      %387 = vmatprep.subr.mxu0 0.0
      %388 = vmatpush1.msra.mxu0 %v279
      %389 = vmatprep.subr.mxu0 0.0
      %390 = vmatpush1.msra.mxu0 %v291
      %391 = vmatprep.subr.mxu0 0.0
      %392 = vmatpush1.msra.mxu0 0.0
      %393 = vmatprep.subr.mxu0 0.0
      %394 = vmatpush1.msra.mxu0 0.0
      %395 = vmatprep.subr.mxu0 0.0
      %396 = vmatpush1.msra.mxu0 0.0
      %397 = vmatprep.subr.mxu0 0.0
      %398 = vmatpush1.msra.mxu0 0.0
      %399 = vmatprep.subr.mxu0 0.0
      %400 = vmatpush1.msra.mxu0 0.0
      %401 = vmatprep.subr.mxu0 0.0
      %402 = vmatpush1.msra.mxu0 0.0
      %403 = vmatprep.subr.mxu0 0.0
      %404 = vmatpush1.msra.mxu0 0.0
      %405 = vmatprep.subr.mxu0 0.0
      %406 = vmatpush1.msra.mxu0 0.0
      %407 = vmatprep.subr.mxu0 0.0
      %408 = vmatpush1.msra.mxu0 0.0
      %409 = vmatprep.subr.mxu0 0.0
      %410 = vmatpush1.msra.mxu0 0.0
      %411 = vmatprep.subr.mxu0 0.0
      %412 = vmatpush1.msra.mxu0 0.0
      %413 = vmatprep.subr.mxu0 0.0
      %414 = vmatpush1.msra.mxu0 0.0
      %415 = vmatprep.subr.mxu0 0.0
      %416 = vmatpush1.msra.mxu0 0.0
      %417 = vmatprep.subr.mxu0 0.0
      %418 = vmatpush1.msra.mxu0 0.0
      %419 = vmatprep.subr.mxu0 0.0
      %420 = vmatpush1.msra.mxu0 0.0
      %421 = vmatprep.subr.mxu0 0.0
      %422 = vmatpush1.msra.mxu0 0.0
      %423 = vmatprep.subr.mxu0 0.0
      %424 = vmatpush1.msra.mxu0 0.0
      %425 = vmatprep.subr.mxu0 0.0
      %426 = vmatpush1.msra.mxu0 0.0
      %427 = vmatprep.subr.mxu0 0.0
      %428 = vmatpush1.msra.mxu0 0.0
      %429 = vmatprep.subr.mxu0 0.0
      %430 = vmatpush1.msra.mxu0 0.0
      %431 = vmatprep.subr.mxu0 0.0
      %432 = vmatpush1.msra.mxu0 0.0
      %433 = vmatprep.subr.mxu0 0.0
      %434 = vmatpush1.msra.mxu0 0.0
      %435 = vmatprep.subr.mxu0 0.0
      %436 = vmatpush1.msra.mxu0 0.0
      %437 = vmatprep.mubr.f32.mxu0 0.0
      %438 = vmatmul.mubr.f32.gmra.mrb[0].mxu0 %v300
      %v439 = vpop.f32.mrb[0].mxu0
      %v440 = vadd.f32 0.0, %v439
      %v441 = vpop.f32.mrb[0].mxu0
      %442 = vdwg.mxu0
      %v443 = vmax.f32 %v369, 0.0
      %v444 = vmax.f32 %v371, 0.0
      %v445 = vmax.f32 %v440, 0.0
      %v446 = vld [vmem:[%s3] sm:$0xff]
      %448 = vset.pattern.permute.xlu0 0
      %449 = vperm.xlu0 %448, %v446
      %v450 = vpop.permute.xlu0 %449
      %v452 = vmul.f32 %v443, %v450
      %v453 = vmul.f32 %v444, %v450
      %v454 = vmul.f32 %v445, %v450
      %455 = vset.pattern.permute.xlu0 1
      %456 = vperm.xlu0 %455, %v446
      %v457 = vpop.permute.xlu0 %456
      %v459 = vadd.f32 %v452, %v457
      %v460 = vadd.f32 %v453, %v457
      %v461 = vadd.f32 %v454, %v457
      %v462 = vld [vmem:[%s2] sm:$0xff]
      %466 = vrot.lane.b32.xlu0 %v459, 127
      %v467 = vpop.permute.xlu0 %466
      %468 = vrot.lane.b32.xlu0 %v460, 127
      %v469 = vpop.permute.xlu0 %468
      %470 = vrot.lane.b32.xlu0 %v461, 127
      %v471 = vpop.permute.xlu0 %470
      %v472 = vsel %vm208, %v467, %v469
      %v473 = vsel %vm208, %v469, %v471
      %476 = vrot.lane.b32.xlu0 %v459, 126
      %v477 = vpop.permute.xlu0 %476
      %478 = vrot.lane.b32.xlu0 %v460, 126
      %v479 = vpop.permute.xlu0 %478
      %480 = vrot.lane.b32.xlu0 %v461, 126
      %v481 = vpop.permute.xlu0 %480
      %v482 = vsel %vm220, %v477, %v479
      %v483 = vsel %vm220, %v479, %v481
      %486 = vrot.lane.b32.xlu0 %v459, 112
      %v487 = vpop.permute.xlu0 %486
      %488 = vrot.lane.b32.xlu0 %v460, 112
      %v489 = vpop.permute.xlu0 %488
      %490 = vrot.lane.b32.xlu0 %v461, 112
      %v491 = vpop.permute.xlu0 %490
      %v492 = vsel %vm232, %v487, %v489
      %v493 = vsel %vm232, %v489, %v491
      %496 = vrot.lane.b32.xlu0 %v459, 111
      %v497 = vpop.permute.xlu0 %496
      %498 = vrot.lane.b32.xlu0 %v460, 111
      %v499 = vpop.permute.xlu0 %498
      %500 = vrot.lane.b32.xlu0 %v461, 111
      %v501 = vpop.permute.xlu0 %500
      %v502 = vsel %vm244, %v497, %v499
      %v503 = vsel %vm244, %v499, %v501
      %506 = vrot.lane.b32.xlu0 %v459, 110
      %v507 = vpop.permute.xlu0 %506
      %508 = vrot.lane.b32.xlu0 %v460, 110
      %v509 = vpop.permute.xlu0 %508
      %510 = vrot.lane.b32.xlu0 %v461, 110
      %v511 = vpop.permute.xlu0 %510
      %v512 = vsel %vm256, %v507, %v509
      %v513 = vsel %vm256, %v509, %v511
      %516 = vrot.lane.b32.xlu0 %v459, 96
      %v517 = vpop.permute.xlu0 %516
      %518 = vrot.lane.b32.xlu0 %v460, 96
      %v519 = vpop.permute.xlu0 %518
      %520 = vrot.lane.b32.xlu0 %v461, 96
      %v521 = vpop.permute.xlu0 %520
      %v522 = vsel %vm268, %v517, %v519
      %v523 = vsel %vm268, %v519, %v521
      %526 = vrot.lane.b32.xlu0 %v459, 95
      %v527 = vpop.permute.xlu0 %526
      %528 = vrot.lane.b32.xlu0 %v460, 95
      %v529 = vpop.permute.xlu0 %528
      %530 = vrot.lane.b32.xlu0 %v461, 95
      %v531 = vpop.permute.xlu0 %530
      %v532 = vsel %vm280, %v527, %v529
      %v533 = vsel %vm280, %v529, %v531
      %536 = vrot.lane.b32.xlu0 %v459, 94
      %v537 = vpop.permute.xlu0 %536
      %538 = vrot.lane.b32.xlu0 %v460, 94
      %v539 = vpop.permute.xlu0 %538
      %540 = vrot.lane.b32.xlu0 %v461, 94
      %v541 = vpop.permute.xlu0 %540
      %v542 = vsel %vm292, %v537, %v539
      %v543 = vsel %vm292, %v539, %v541
      %546 = vset.pattern.permute.xlu0 2
      %547 = vperm.xlu0 %546, %v446
      %v548 = vpop.permute.xlu0 %547
      %v551 = vsel %vm298, %v462, 0
      %553 = vmatprep.subr.mxu0 %v460
      %554 = vmatpush1.msra.mxu0 %v459
      %555 = vmatprep.subr.mxu0 %v473
      %556 = vmatpush1.msra.mxu0 %v472
      %557 = vmatprep.subr.mxu0 %v483
      %558 = vmatpush1.msra.mxu0 %v482
      %559 = vmatprep.subr.mxu0 %v493
      %560 = vmatpush1.msra.mxu0 %v492
      %561 = vmatprep.subr.mxu0 %v503
      %562 = vmatpush1.msra.mxu0 %v502
      %563 = vmatprep.subr.mxu0 %v513
      %564 = vmatpush1.msra.mxu0 %v512
      %565 = vmatprep.subr.mxu0 %v523
      %566 = vmatpush1.msra.mxu0 %v522
      %567 = vmatprep.subr.mxu0 %v533
      %568 = vmatpush1.msra.mxu0 %v532
      %569 = vmatprep.subr.mxu0 %v543
      %570 = vmatpush1.msra.mxu0 %v542
      %571 = vmatprep.subr.mxu0 0.0
      %572 = vmatpush1.msra.mxu0 0.0
      %573 = vmatprep.subr.mxu0 0.0
      %574 = vmatpush1.msra.mxu0 0.0
      %575 = vmatprep.subr.mxu0 0.0
      %576 = vmatpush1.msra.mxu0 0.0
      %577 = vmatprep.subr.mxu0 0.0
      %578 = vmatpush1.msra.mxu0 0.0
      %579 = vmatprep.subr.mxu0 0.0
      %580 = vmatpush1.msra.mxu0 0.0
      %581 = vmatprep.subr.mxu0 0.0
      %582 = vmatpush1.msra.mxu0 0.0
      %583 = vmatprep.subr.mxu0 0.0
      %584 = vmatpush1.msra.mxu0 0.0
      %585 = vmatprep.subr.mxu0 0.0
      %586 = vmatpush1.msra.mxu0 0.0
      %587 = vmatprep.subr.mxu0 0.0
      %588 = vmatpush1.msra.mxu0 0.0
      %589 = vmatprep.subr.mxu0 0.0
      %590 = vmatpush1.msra.mxu0 0.0
      %591 = vmatprep.subr.mxu0 0.0
      %592 = vmatpush1.msra.mxu0 0.0
      %593 = vmatprep.subr.mxu0 0.0
      %594 = vmatpush1.msra.mxu0 0.0
      %595 = vmatprep.subr.mxu0 0.0
      %596 = vmatpush1.msra.mxu0 0.0
      %597 = vmatprep.subr.mxu0 0.0
      %598 = vmatpush1.msra.mxu0 0.0
      %599 = vmatprep.subr.mxu0 0.0
      %600 = vmatpush1.msra.mxu0 0.0
      %601 = vmatprep.subr.mxu0 0.0
      %602 = vmatpush1.msra.mxu0 0.0
      %603 = vmatprep.subr.mxu0 0.0
      %604 = vmatpush1.msra.mxu0 0.0
      %605 = vmatprep.subr.mxu0 0.0
      %606 = vmatpush1.msra.mxu0 0.0
      %607 = vmatprep.subr.mxu0 0.0
      %608 = vmatpush1.msra.mxu0 0.0
      %609 = vmatprep.subr.mxu0 0.0
      %610 = vmatpush1.msra.mxu0 0.0
      %611 = vmatprep.subr.mxu0 0.0
      %612 = vmatpush1.msra.mxu0 0.0
      %613 = vmatprep.subr.mxu0 0.0
      %614 = vmatpush1.msra.mxu0 0.0
      %615 = vmatprep.subr.mxu0 0.0
      %616 = vmatpush1.msra.mxu0 0.0
      %617 = vmatprep.mubr.f32.mxu0 0.0
      %618 = vmatmul.mubr.f32.gmra.mrb[0].mxu0 %v551
      %v619 = vpop.f32.mrb[0].mxu0
      %v620 = vadd.f32 %v548, %v619
      %v621 = vpop.f32.mrb[0].mxu0
      %v622 = vadd.f32 %v548, %v621
      %623 = vdwg.mxu0
      %v624 = vmax.f32 %v620, 0.0
      %v625 = vmax.f32 %v622, 0.0
      %626 = vset.pattern.permute.xlu0 3
      %627 = vperm.xlu0 %626, %v446
      %v628 = vpop.permute.xlu0 %627
      %v630 = vmul.f32 %v624, %v628
      %v631 = vmul.f32 %v625, %v628
      %632 = vset.pattern.permute.xlu0 4
      %633 = vperm.xlu0 %632, %v446
      %v634 = vpop.permute.xlu0 %633
      %v636 = vadd.f32 %v630, %v634
      %v637 = vadd.f32 %v631, %v634
      %639 = vrot.lane.b32.xlu0 %v636, 112
      %v640 = vpop.permute.xlu0 %639
      %642 = vrot.lane.b32.xlu0 %v636, 96
      %v643 = vpop.permute.xlu0 %642
      %645 = vrot.lane.b32.xlu0 %v636, 80
      %v646 = vpop.permute.xlu0 %645
      %648 = vrot.lane.b32.xlu0 %v636, 64
      %v649 = vpop.permute.xlu0 %648
      %651 = vrot.lane.b32.xlu0 %v636, 48
      %v652 = vpop.permute.xlu0 %651
      %654 = vrot.lane.b32.xlu0 %v636, 32
      %v655 = vpop.permute.xlu0 %654
      %657 = vrot.lane.b32.xlu0 %v636, 16
      %v658 = vpop.permute.xlu0 %657
      %661 = vrot.lane.b32.xlu0 %v637, 112
      %v662 = vpop.permute.xlu0 %661
      %664 = vrot.lane.b32.xlu0 %v637, 96
      %v665 = vpop.permute.xlu0 %664
      %667 = vrot.lane.b32.xlu0 %v637, 80
      %v668 = vpop.permute.xlu0 %667
      %670 = vrot.lane.b32.xlu0 %v637, 64
      %v671 = vpop.permute.xlu0 %670
      %673 = vrot.lane.b32.xlu0 %v637, 48
      %v674 = vpop.permute.xlu0 %673
      %676 = vrot.lane.b32.xlu0 %v637, 32
      %v677 = vpop.permute.xlu0 %676
      %679 = vrot.lane.b32.xlu0 %v637, 16
      %v680 = vpop.permute.xlu0 %679
      %v682 = vcombine.low %v636, %v643
      %v683 = vcombine.high %v636, %v643
      %v685 = vunpack.c.l.s4 1983009808
      %v686 = vunpack.c.0.s8 %v685
      %v687 = vlaneseq
      %v688 = vshrl.u32 %v687, 7
      %v689 = vsub.s32 %v686, %v688
      %v690 = vrot.slane %v682, %v689
      %v692 = vunpack.c.l.s4 1983009808
      %v693 = vunpack.c.0.s8 %v692
      %v694 = vlaneseq
      %v695 = vshrl.u32 %v694, 7
      %v696 = vsub.s32 %v693, %v695
      %v697 = vrot.slane %v683, %v696
      %v698 = vcombine.low %v640, %v646
      %v699 = vcombine.high %v640, %v646
      %v701 = vunpack.c.l.s4 1983009808
      %v702 = vunpack.c.0.s8 %v701
      %v703 = vlaneseq
      %v704 = vshrl.u32 %v703, 7
      %v705 = vsub.s32 %v702, %v704
      %v706 = vrot.slane %v698, %v705
      %v708 = vunpack.c.l.s4 1983009808
      %v709 = vunpack.c.0.s8 %v708
      %v710 = vlaneseq
      %v711 = vshrl.u32 %v710, 7
      %v712 = vsub.s32 %v709, %v711
      %v713 = vrot.slane %v699, %v712
      %v714 = vcombine.low %v649, %v655
      %v715 = vcombine.high %v649, %v655
      %v717 = vunpack.c.l.s4 1983009808
      %v718 = vunpack.c.0.s8 %v717
      %v719 = vlaneseq
      %v720 = vshrl.u32 %v719, 7
      %v721 = vsub.s32 %v718, %v720
      %v722 = vrot.slane %v714, %v721
      %v724 = vunpack.c.l.s4 1983009808
      %v725 = vunpack.c.0.s8 %v724
      %v726 = vlaneseq
      %v727 = vshrl.u32 %v726, 7
      %v728 = vsub.s32 %v725, %v727
      %v729 = vrot.slane %v715, %v728
      %v730 = vcombine.low %v652, %v658
      %v731 = vcombine.high %v652, %v658
      %v733 = vunpack.c.l.s4 1983009808
      %v734 = vunpack.c.0.s8 %v733
      %v735 = vlaneseq
      %v736 = vshrl.u32 %v735, 7
      %v737 = vsub.s32 %v734, %v736
      %v738 = vrot.slane %v730, %v737
      %v740 = vunpack.c.l.s4 1983009808
      %v741 = vunpack.c.0.s8 %v740
      %v742 = vlaneseq
      %v743 = vshrl.u32 %v742, 7
      %v744 = vsub.s32 %v741, %v743
      %v745 = vrot.slane %v731, %v744
      %v746 = vcombine.low %v690, %v706
      %v747 = vcombine.high %v690, %v706
      %v749 = vunpack.c.l.s4 1934713408
      %v750 = vunpack.c.0.s8 %v749
      %v751 = vlaneseq
      %v752 = vshrl.u32 %v751, 7
      %v753 = vsub.s32 %v750, %v752
      %v754 = vrot.slane %v746, %v753
      %v756 = vunpack.c.l.s4 1934713408
      %v757 = vunpack.c.0.s8 %v756
      %v758 = vlaneseq
      %v759 = vshrl.u32 %v758, 7
      %v760 = vsub.s32 %v757, %v759
      %v761 = vrot.slane %v747, %v760
      %v762 = vcombine.low %v697, %v713
      %v763 = vcombine.high %v697, %v713
      %v765 = vunpack.c.l.s4 1934713408
      %v766 = vunpack.c.0.s8 %v765
      %v767 = vlaneseq
      %v768 = vshrl.u32 %v767, 7
      %v769 = vsub.s32 %v766, %v768
      %v770 = vrot.slane %v762, %v769
      %v772 = vunpack.c.l.s4 1934713408
      %v773 = vunpack.c.0.s8 %v772
      %v774 = vlaneseq
      %v775 = vshrl.u32 %v774, 7
      %v776 = vsub.s32 %v773, %v775
      %v777 = vrot.slane %v763, %v776
      %v778 = vcombine.low %v722, %v738
      %v779 = vcombine.high %v722, %v738
      %v781 = vunpack.c.l.s4 1934713408
      %v782 = vunpack.c.0.s8 %v781
      %v783 = vlaneseq
      %v784 = vshrl.u32 %v783, 7
      %v785 = vsub.s32 %v782, %v784
      %v786 = vrot.slane %v778, %v785
      %v788 = vunpack.c.l.s4 1934713408
      %v789 = vunpack.c.0.s8 %v788
      %v790 = vlaneseq
      %v791 = vshrl.u32 %v790, 7
      %v792 = vsub.s32 %v789, %v791
      %v793 = vrot.slane %v779, %v792
      %v794 = vcombine.low %v729, %v745
      %v795 = vcombine.high %v729, %v745
      %v797 = vunpack.c.l.s4 1934713408
      %v798 = vunpack.c.0.s8 %v797
      %v799 = vlaneseq
      %v800 = vshrl.u32 %v799, 7
      %v801 = vsub.s32 %v798, %v800
      %v802 = vrot.slane %v794, %v801
      %v804 = vunpack.c.l.s4 1934713408
      %v805 = vunpack.c.0.s8 %v804
      %v806 = vlaneseq
      %v807 = vshrl.u32 %v806, 7
      %v808 = vsub.s32 %v805, %v807
      %v809 = vrot.slane %v795, %v808
      %v810 = vcombine.low %v754, %v786
      %v811 = vcombine.high %v754, %v786
      %v812 = vcombine.low %v761, %v793
      %v813 = vcombine.high %v761, %v793
      %v814 = vcombine.low %v770, %v802
      %v815 = vcombine.high %v770, %v802
      %v816 = vcombine.low %v777, %v809
      %v817 = vcombine.high %v777, %v809
      %v818 = vcombine.low %v637, %v665
      %v819 = vcombine.high %v637, %v665
      %v821 = vunpack.c.l.s4 1983009808
      %v822 = vunpack.c.0.s8 %v821
      %v823 = vlaneseq
      %v824 = vshrl.u32 %v823, 7
      %v825 = vsub.s32 %v822, %v824
      %v826 = vrot.slane %v818, %v825
      %v828 = vunpack.c.l.s4 1983009808
      %v829 = vunpack.c.0.s8 %v828
      %v830 = vlaneseq
      %v831 = vshrl.u32 %v830, 7
      %v832 = vsub.s32 %v829, %v831
      %v833 = vrot.slane %v819, %v832
      %v834 = vcombine.low %v662, %v668
      %v835 = vcombine.high %v662, %v668
      %v837 = vunpack.c.l.s4 1983009808
      %v838 = vunpack.c.0.s8 %v837
      %v839 = vlaneseq
      %v840 = vshrl.u32 %v839, 7
      %v841 = vsub.s32 %v838, %v840
      %v842 = vrot.slane %v834, %v841
      %v844 = vunpack.c.l.s4 1983009808
      %v845 = vunpack.c.0.s8 %v844
      %v846 = vlaneseq
      %v847 = vshrl.u32 %v846, 7
      %v848 = vsub.s32 %v845, %v847
      %v849 = vrot.slane %v835, %v848
      %v850 = vcombine.low %v671, %v677
      %v851 = vcombine.high %v671, %v677
      %v853 = vunpack.c.l.s4 1983009808
      %v854 = vunpack.c.0.s8 %v853
      %v855 = vlaneseq
      %v856 = vshrl.u32 %v855, 7
      %v857 = vsub.s32 %v854, %v856
      %v858 = vrot.slane %v850, %v857
      %v860 = vunpack.c.l.s4 1983009808
      %v861 = vunpack.c.0.s8 %v860
      %v862 = vlaneseq
      %v863 = vshrl.u32 %v862, 7
      %v864 = vsub.s32 %v861, %v863
      %v865 = vrot.slane %v851, %v864
      %v866 = vcombine.low %v674, %v680
      %v867 = vcombine.high %v674, %v680
      %v869 = vunpack.c.l.s4 1983009808
      %v870 = vunpack.c.0.s8 %v869
      %v871 = vlaneseq
      %v872 = vshrl.u32 %v871, 7
      %v873 = vsub.s32 %v870, %v872
      %v874 = vrot.slane %v866, %v873
      %v876 = vunpack.c.l.s4 1983009808
      %v877 = vunpack.c.0.s8 %v876
      %v878 = vlaneseq
      %v879 = vshrl.u32 %v878, 7
      %v880 = vsub.s32 %v877, %v879
      %v881 = vrot.slane %v867, %v880
      %v882 = vcombine.low %v826, %v842
      %v883 = vcombine.high %v826, %v842
      %v885 = vunpack.c.l.s4 1934713408
      %v886 = vunpack.c.0.s8 %v885
      %v887 = vlaneseq
      %v888 = vshrl.u32 %v887, 7
      %v889 = vsub.s32 %v886, %v888
      %v890 = vrot.slane %v882, %v889
      %v892 = vunpack.c.l.s4 1934713408
      %v893 = vunpack.c.0.s8 %v892
      %v894 = vlaneseq
      %v895 = vshrl.u32 %v894, 7
      %v896 = vsub.s32 %v893, %v895
      %v897 = vrot.slane %v883, %v896
      %v898 = vcombine.low %v833, %v849
      %v899 = vcombine.high %v833, %v849
      %v901 = vunpack.c.l.s4 1934713408
      %v902 = vunpack.c.0.s8 %v901
      %v903 = vlaneseq
      %v904 = vshrl.u32 %v903, 7
      %v905 = vsub.s32 %v902, %v904
      %v906 = vrot.slane %v898, %v905
      %v908 = vunpack.c.l.s4 1934713408
      %v909 = vunpack.c.0.s8 %v908
      %v910 = vlaneseq
      %v911 = vshrl.u32 %v910, 7
      %v912 = vsub.s32 %v909, %v911
      %v913 = vrot.slane %v899, %v912
      %v914 = vcombine.low %v858, %v874
      %v915 = vcombine.high %v858, %v874
      %v917 = vunpack.c.l.s4 1934713408
      %v918 = vunpack.c.0.s8 %v917
      %v919 = vlaneseq
      %v920 = vshrl.u32 %v919, 7
      %v921 = vsub.s32 %v918, %v920
      %v922 = vrot.slane %v914, %v921
      %v924 = vunpack.c.l.s4 1934713408
      %v925 = vunpack.c.0.s8 %v924
      %v926 = vlaneseq
      %v927 = vshrl.u32 %v926, 7
      %v928 = vsub.s32 %v925, %v927
      %v929 = vrot.slane %v915, %v928
      %v930 = vcombine.low %v865, %v881
      %v931 = vcombine.high %v865, %v881
      %v933 = vunpack.c.l.s4 1934713408
      %v934 = vunpack.c.0.s8 %v933
      %v935 = vlaneseq
      %v936 = vshrl.u32 %v935, 7
      %v937 = vsub.s32 %v934, %v936
      %v938 = vrot.slane %v930, %v937
      %v940 = vunpack.c.l.s4 1934713408
      %v941 = vunpack.c.0.s8 %v940
      %v942 = vlaneseq
      %v943 = vshrl.u32 %v942, 7
      %v944 = vsub.s32 %v941, %v943
      %v945 = vrot.slane %v931, %v944
      %v946 = vcombine.low %v890, %v922
      %v947 = vcombine.high %v890, %v922
      %v948 = vcombine.low %v897, %v929
      %v949 = vcombine.high %v897, %v929
      %v950 = vcombine.low %v906, %v938
      %v951 = vcombine.high %v906, %v938
      %v952 = vcombine.low %v913, %v945
      %v953 = vcombine.high %v913, %v945
      %v970 = vcombine.high %v810, %v810
      %v972 = vunpack.c.l.s4 1983009808
      %v973 = vunpack.c.0.s8 %v972
      %v974 = vlaneseq
      %v975 = vshrl.u32 %v974, 7
      %v976 = vsub.s32 %v973, %v975
      %v977 = vrot.slane %v810, %v976
      %v979 = vunpack.c.l.s4 1983009808
      %v980 = vunpack.c.0.s8 %v979
      %v981 = vlaneseq
      %v982 = vshrl.u32 %v981, 7
      %v983 = vsub.s32 %v980, %v982
      %v984 = vrot.slane %v970, %v983
      %v985 = vcombine.high %v977, %v977
      %v986 = vcombine.high %v984, %v984
      %v988 = vunpack.c.l.s4 1983009808
      %v989 = vunpack.c.0.s8 %v988
      %v990 = vlaneseq
      %v991 = vshrl.u32 %v990, 7
      %v992 = vsub.s32 %v989, %v991
      %v993 = vrot.slane %v946, %v992
      %v994 = vcombine.high %v993, %v993
      %v995 = vcombine.high %v811, %v811
      %v997 = vunpack.c.l.s4 1983009808
      %v998 = vunpack.c.0.s8 %v997
      %v999 = vlaneseq
      %v1000 = vshrl.u32 %v999, 7
      %v1001 = vsub.s32 %v998, %v1000
      %v1002 = vrot.slane %v811, %v1001
      %v1004 = vunpack.c.l.s4 1983009808
      %v1005 = vunpack.c.0.s8 %v1004
      %v1006 = vlaneseq
      %v1007 = vshrl.u32 %v1006, 7
      %v1008 = vsub.s32 %v1005, %v1007
      %v1009 = vrot.slane %v995, %v1008
      %v1010 = vcombine.high %v1002, %v1002
      %v1011 = vcombine.high %v1009, %v1009
      %v1013 = vunpack.c.l.s4 1983009808
      %v1014 = vunpack.c.0.s8 %v1013
      %v1015 = vlaneseq
      %v1016 = vshrl.u32 %v1015, 7
      %v1017 = vsub.s32 %v1014, %v1016
      %v1018 = vrot.slane %v947, %v1017
      %v1019 = vcombine.high %v1018, %v1018
      %v1020 = vcombine.high %v812, %v812
      %v1022 = vunpack.c.l.s4 1983009808
      %v1023 = vunpack.c.0.s8 %v1022
      %v1024 = vlaneseq
      %v1025 = vshrl.u32 %v1024, 7
      %v1026 = vsub.s32 %v1023, %v1025
      %v1027 = vrot.slane %v812, %v1026
      %v1029 = vunpack.c.l.s4 1983009808
      %v1030 = vunpack.c.0.s8 %v1029
      %v1031 = vlaneseq
      %v1032 = vshrl.u32 %v1031, 7
      %v1033 = vsub.s32 %v1030, %v1032
      %v1034 = vrot.slane %v1020, %v1033
      %v1035 = vcombine.high %v1027, %v1027
      %v1036 = vcombine.high %v1034, %v1034
      %v1038 = vunpack.c.l.s4 1983009808
      %v1039 = vunpack.c.0.s8 %v1038
      %v1040 = vlaneseq
      %v1041 = vshrl.u32 %v1040, 7
      %v1042 = vsub.s32 %v1039, %v1041
      %v1043 = vrot.slane %v948, %v1042
      %v1044 = vcombine.high %v1043, %v1043
      %v1045 = vcombine.high %v813, %v813
      %v1047 = vunpack.c.l.s4 1983009808
      %v1048 = vunpack.c.0.s8 %v1047
      %v1049 = vlaneseq
      %v1050 = vshrl.u32 %v1049, 7
      %v1051 = vsub.s32 %v1048, %v1050
      %v1052 = vrot.slane %v813, %v1051
      %v1054 = vunpack.c.l.s4 1983009808
      %v1055 = vunpack.c.0.s8 %v1054
      %v1056 = vlaneseq
      %v1057 = vshrl.u32 %v1056, 7
      %v1058 = vsub.s32 %v1055, %v1057
      %v1059 = vrot.slane %v1045, %v1058
      %v1060 = vcombine.high %v1052, %v1052
      %v1061 = vcombine.high %v1059, %v1059
      %v1063 = vunpack.c.l.s4 1983009808
      %v1064 = vunpack.c.0.s8 %v1063
      %v1065 = vlaneseq
      %v1066 = vshrl.u32 %v1065, 7
      %v1067 = vsub.s32 %v1064, %v1066
      %v1068 = vrot.slane %v949, %v1067
      %v1069 = vcombine.high %v1068, %v1068
      %v1070 = vcombine.high %v814, %v814
      %v1072 = vunpack.c.l.s4 1983009808
      %v1073 = vunpack.c.0.s8 %v1072
      %v1074 = vlaneseq
      %v1075 = vshrl.u32 %v1074, 7
      %v1076 = vsub.s32 %v1073, %v1075
      %v1077 = vrot.slane %v814, %v1076
      %v1079 = vunpack.c.l.s4 1983009808
      %v1080 = vunpack.c.0.s8 %v1079
      %v1081 = vlaneseq
      %v1082 = vshrl.u32 %v1081, 7
      %v1083 = vsub.s32 %v1080, %v1082
      %v1084 = vrot.slane %v1070, %v1083
      %v1085 = vcombine.high %v1077, %v1077
      %v1086 = vcombine.high %v1084, %v1084
      %v1088 = vunpack.c.l.s4 1983009808
      %v1089 = vunpack.c.0.s8 %v1088
      %v1090 = vlaneseq
      %v1091 = vshrl.u32 %v1090, 7
      %v1092 = vsub.s32 %v1089, %v1091
      %v1093 = vrot.slane %v950, %v1092
      %v1094 = vcombine.high %v1093, %v1093
      %v1095 = vcombine.high %v815, %v815
      %v1097 = vunpack.c.l.s4 1983009808
      %v1098 = vunpack.c.0.s8 %v1097
      %v1099 = vlaneseq
      %v1100 = vshrl.u32 %v1099, 7
      %v1101 = vsub.s32 %v1098, %v1100
      %v1102 = vrot.slane %v815, %v1101
      %v1104 = vunpack.c.l.s4 1983009808
      %v1105 = vunpack.c.0.s8 %v1104
      %v1106 = vlaneseq
      %v1107 = vshrl.u32 %v1106, 7
      %v1108 = vsub.s32 %v1105, %v1107
      %v1109 = vrot.slane %v1095, %v1108
      %v1110 = vcombine.high %v1102, %v1102
      %v1111 = vcombine.high %v1109, %v1109
      %v1113 = vunpack.c.l.s4 1983009808
      %v1114 = vunpack.c.0.s8 %v1113
      %v1115 = vlaneseq
      %v1116 = vshrl.u32 %v1115, 7
      %v1117 = vsub.s32 %v1114, %v1116
      %v1118 = vrot.slane %v951, %v1117
      %v1119 = vcombine.high %v1118, %v1118
      %v1120 = vcombine.high %v816, %v816
      %v1122 = vunpack.c.l.s4 1983009808
      %v1123 = vunpack.c.0.s8 %v1122
      %v1124 = vlaneseq
      %v1125 = vshrl.u32 %v1124, 7
      %v1126 = vsub.s32 %v1123, %v1125
      %v1127 = vrot.slane %v816, %v1126
      %v1129 = vunpack.c.l.s4 1983009808
      %v1130 = vunpack.c.0.s8 %v1129
      %v1131 = vlaneseq
      %v1132 = vshrl.u32 %v1131, 7
      %v1133 = vsub.s32 %v1130, %v1132
      %v1134 = vrot.slane %v1120, %v1133
      %v1135 = vcombine.high %v1127, %v1127
      %v1136 = vcombine.high %v1134, %v1134
      %v1138 = vunpack.c.l.s4 1983009808
      %v1139 = vunpack.c.0.s8 %v1138
      %v1140 = vlaneseq
      %v1141 = vshrl.u32 %v1140, 7
      %v1142 = vsub.s32 %v1139, %v1141
      %v1143 = vrot.slane %v952, %v1142
      %v1144 = vcombine.high %v1143, %v1143
      %v1145 = vcombine.high %v817, %v817
      %v1147 = vunpack.c.l.s4 1983009808
      %v1148 = vunpack.c.0.s8 %v1147
      %v1149 = vlaneseq
      %v1150 = vshrl.u32 %v1149, 7
      %v1151 = vsub.s32 %v1148, %v1150
      %v1152 = vrot.slane %v817, %v1151
      %v1154 = vunpack.c.l.s4 1983009808
      %v1155 = vunpack.c.0.s8 %v1154
      %v1156 = vlaneseq
      %v1157 = vshrl.u32 %v1156, 7
      %v1158 = vsub.s32 %v1155, %v1157
      %v1159 = vrot.slane %v1145, %v1158
      %v1160 = vcombine.high %v1152, %v1152
      %v1161 = vcombine.high %v1159, %v1159
      %v1163 = vunpack.c.l.s4 1983009808
      %v1164 = vunpack.c.0.s8 %v1163
      %v1165 = vlaneseq
      %v1166 = vshrl.u32 %v1165, 7
      %v1167 = vsub.s32 %v1164, %v1166
      %v1168 = vrot.slane %v953, %v1167
      %v1169 = vcombine.high %v1168, %v1168
      %vm1218 = vcmask 91136
      %v1219 = vsel %vm1218, %v977, -inf
      %v1220 = vrot.slane %v1219, 4
      %v1221 = vmax.f32 %v1219, %v1220
      %v1222 = vrot.slane %v1221, 2
      %v1223 = vmax.f32 %v1221, %v1222
      %v1224 = vrot.slane %v1223, 1
      %v1225 = vmax.f32 %v1223, %v1224
      %v1226 = vsel %vm1218, %v985, -inf
      %v1227 = vrot.slane %v1226, 4
      %v1228 = vmax.f32 %v1226, %v1227
      %v1229 = vrot.slane %v1228, 2
      %v1230 = vmax.f32 %v1228, %v1229
      %v1231 = vrot.slane %v1230, 1
      %v1232 = vmax.f32 %v1230, %v1231
      %v1233 = vsel %vm1218, %v984, -inf
      %v1234 = vrot.slane %v1233, 4
      %v1235 = vmax.f32 %v1233, %v1234
      %v1236 = vrot.slane %v1235, 2
      %v1237 = vmax.f32 %v1235, %v1236
      %v1238 = vrot.slane %v1237, 1
      %v1239 = vmax.f32 %v1237, %v1238
      %v1240 = vsel %vm1218, %v986, -inf
      %v1241 = vrot.slane %v1240, 4
      %v1242 = vmax.f32 %v1240, %v1241
      %v1243 = vrot.slane %v1242, 2
      %v1244 = vmax.f32 %v1242, %v1243
      %v1245 = vrot.slane %v1244, 1
      %v1246 = vmax.f32 %v1244, %v1245
      %v1247 = vsel %vm1218, %v993, -inf
      %v1248 = vrot.slane %v1247, 4
      %v1249 = vmax.f32 %v1247, %v1248
      %v1250 = vrot.slane %v1249, 2
      %v1251 = vmax.f32 %v1249, %v1250
      %v1252 = vrot.slane %v1251, 1
      %v1253 = vmax.f32 %v1251, %v1252
      %v1254 = vsel %vm1218, %v994, -inf
      %v1255 = vrot.slane %v1254, 4
      %v1256 = vmax.f32 %v1254, %v1255
      %v1257 = vrot.slane %v1256, 2
      %v1258 = vmax.f32 %v1256, %v1257
      %v1259 = vrot.slane %v1258, 1
      %v1260 = vmax.f32 %v1258, %v1259
      %v1261 = vsel %vm1218, %v1002, -inf
      %v1262 = vrot.slane %v1261, 4
      %v1263 = vmax.f32 %v1261, %v1262
      %v1264 = vrot.slane %v1263, 2
      %v1265 = vmax.f32 %v1263, %v1264
      %v1266 = vrot.slane %v1265, 1
      %v1267 = vmax.f32 %v1265, %v1266
      %v1268 = vsel %vm1218, %v1010, -inf
      %v1269 = vrot.slane %v1268, 4
      %v1270 = vmax.f32 %v1268, %v1269
      %v1271 = vrot.slane %v1270, 2
      %v1272 = vmax.f32 %v1270, %v1271
      %v1273 = vrot.slane %v1272, 1
      %v1274 = vmax.f32 %v1272, %v1273
      %v1275 = vsel %vm1218, %v1009, -inf
      %v1276 = vrot.slane %v1275, 4
      %v1277 = vmax.f32 %v1275, %v1276
      %v1278 = vrot.slane %v1277, 2
      %v1279 = vmax.f32 %v1277, %v1278
      %v1280 = vrot.slane %v1279, 1
      %v1281 = vmax.f32 %v1279, %v1280
      %v1282 = vsel %vm1218, %v1011, -inf
      %v1283 = vrot.slane %v1282, 4
      %v1284 = vmax.f32 %v1282, %v1283
      %v1285 = vrot.slane %v1284, 2
      %v1286 = vmax.f32 %v1284, %v1285
      %v1287 = vrot.slane %v1286, 1
      %v1288 = vmax.f32 %v1286, %v1287
      %v1289 = vsel %vm1218, %v1018, -inf
      %v1290 = vrot.slane %v1289, 4
      %v1291 = vmax.f32 %v1289, %v1290
      %v1292 = vrot.slane %v1291, 2
      %v1293 = vmax.f32 %v1291, %v1292
      %v1294 = vrot.slane %v1293, 1
      %v1295 = vmax.f32 %v1293, %v1294
      %v1296 = vsel %vm1218, %v1019, -inf
      %v1297 = vrot.slane %v1296, 4
      %v1298 = vmax.f32 %v1296, %v1297
      %v1299 = vrot.slane %v1298, 2
      %v1300 = vmax.f32 %v1298, %v1299
      %v1301 = vrot.slane %v1300, 1
      %v1302 = vmax.f32 %v1300, %v1301
      %v1303 = vsel %vm1218, %v1027, -inf
      %v1304 = vrot.slane %v1303, 4
      %v1305 = vmax.f32 %v1303, %v1304
      %v1306 = vrot.slane %v1305, 2
      %v1307 = vmax.f32 %v1305, %v1306
      %v1308 = vrot.slane %v1307, 1
      %v1309 = vmax.f32 %v1307, %v1308
      %v1310 = vsel %vm1218, %v1035, -inf
      %v1311 = vrot.slane %v1310, 4
      %v1312 = vmax.f32 %v1310, %v1311
      %v1313 = vrot.slane %v1312, 2
      %v1314 = vmax.f32 %v1312, %v1313
      %v1315 = vrot.slane %v1314, 1
      %v1316 = vmax.f32 %v1314, %v1315
      %v1317 = vsel %vm1218, %v1034, -inf
      %v1318 = vrot.slane %v1317, 4
      %v1319 = vmax.f32 %v1317, %v1318
      %v1320 = vrot.slane %v1319, 2
      %v1321 = vmax.f32 %v1319, %v1320
      %v1322 = vrot.slane %v1321, 1
      %v1323 = vmax.f32 %v1321, %v1322
      %v1324 = vsel %vm1218, %v1036, -inf
      %v1325 = vrot.slane %v1324, 4
      %v1326 = vmax.f32 %v1324, %v1325
      %v1327 = vrot.slane %v1326, 2
      %v1328 = vmax.f32 %v1326, %v1327
      %v1329 = vrot.slane %v1328, 1
      %v1330 = vmax.f32 %v1328, %v1329
      %v1331 = vsel %vm1218, %v1043, -inf
      %v1332 = vrot.slane %v1331, 4
      %v1333 = vmax.f32 %v1331, %v1332
      %v1334 = vrot.slane %v1333, 2
      %v1335 = vmax.f32 %v1333, %v1334
      %v1336 = vrot.slane %v1335, 1
      %v1337 = vmax.f32 %v1335, %v1336
      %v1338 = vsel %vm1218, %v1044, -inf
      %v1339 = vrot.slane %v1338, 4
      %v1340 = vmax.f32 %v1338, %v1339
      %v1341 = vrot.slane %v1340, 2
      %v1342 = vmax.f32 %v1340, %v1341
      %v1343 = vrot.slane %v1342, 1
      %v1344 = vmax.f32 %v1342, %v1343
      %v1345 = vsel %vm1218, %v1052, -inf
      %v1346 = vrot.slane %v1345, 4
      %v1347 = vmax.f32 %v1345, %v1346
      %v1348 = vrot.slane %v1347, 2
      %v1349 = vmax.f32 %v1347, %v1348
      %v1350 = vrot.slane %v1349, 1
      %v1351 = vmax.f32 %v1349, %v1350
      %v1352 = vsel %vm1218, %v1060, -inf
      %v1353 = vrot.slane %v1352, 4
      %v1354 = vmax.f32 %v1352, %v1353
      %v1355 = vrot.slane %v1354, 2
      %v1356 = vmax.f32 %v1354, %v1355
      %v1357 = vrot.slane %v1356, 1
      %v1358 = vmax.f32 %v1356, %v1357
      %v1359 = vsel %vm1218, %v1059, -inf
      %v1360 = vrot.slane %v1359, 4
      %v1361 = vmax.f32 %v1359, %v1360
      %v1362 = vrot.slane %v1361, 2
      %v1363 = vmax.f32 %v1361, %v1362
      %v1364 = vrot.slane %v1363, 1
      %v1365 = vmax.f32 %v1363, %v1364
      %v1366 = vsel %vm1218, %v1061, -inf
      %v1367 = vrot.slane %v1366, 4
      %v1368 = vmax.f32 %v1366, %v1367
      %v1369 = vrot.slane %v1368, 2
      %v1370 = vmax.f32 %v1368, %v1369
      %v1371 = vrot.slane %v1370, 1
      %v1372 = vmax.f32 %v1370, %v1371
      %v1373 = vsel %vm1218, %v1068, -inf
      %v1374 = vrot.slane %v1373, 4
      %v1375 = vmax.f32 %v1373, %v1374
      %v1376 = vrot.slane %v1375, 2
      %v1377 = vmax.f32 %v1375, %v1376
      %v1378 = vrot.slane %v1377, 1
      %v1379 = vmax.f32 %v1377, %v1378
      %v1380 = vsel %vm1218, %v1069, -inf
      %v1381 = vrot.slane %v1380, 4
      %v1382 = vmax.f32 %v1380, %v1381
      %v1383 = vrot.slane %v1382, 2
      %v1384 = vmax.f32 %v1382, %v1383
      %v1385 = vrot.slane %v1384, 1
      %v1386 = vmax.f32 %v1384, %v1385
      %v1387 = vsel %vm1218, %v1077, -inf
      %v1388 = vrot.slane %v1387, 4
      %v1389 = vmax.f32 %v1387, %v1388
      %v1390 = vrot.slane %v1389, 2
      %v1391 = vmax.f32 %v1389, %v1390
      %v1392 = vrot.slane %v1391, 1
      %v1393 = vmax.f32 %v1391, %v1392
      %v1394 = vsel %vm1218, %v1085, -inf
      %v1395 = vrot.slane %v1394, 4
      %v1396 = vmax.f32 %v1394, %v1395
      %v1397 = vrot.slane %v1396, 2
      %v1398 = vmax.f32 %v1396, %v1397
      %v1399 = vrot.slane %v1398, 1
      %v1400 = vmax.f32 %v1398, %v1399
      %v1401 = vsel %vm1218, %v1084, -inf
      %v1402 = vrot.slane %v1401, 4
      %v1403 = vmax.f32 %v1401, %v1402
      %v1404 = vrot.slane %v1403, 2
      %v1405 = vmax.f32 %v1403, %v1404
      %v1406 = vrot.slane %v1405, 1
      %v1407 = vmax.f32 %v1405, %v1406
      %v1408 = vsel %vm1218, %v1086, -inf
      %v1409 = vrot.slane %v1408, 4
      %v1410 = vmax.f32 %v1408, %v1409
      %v1411 = vrot.slane %v1410, 2
      %v1412 = vmax.f32 %v1410, %v1411
      %v1413 = vrot.slane %v1412, 1
      %v1414 = vmax.f32 %v1412, %v1413
      %v1415 = vsel %vm1218, %v1093, -inf
      %v1416 = vrot.slane %v1415, 4
      %v1417 = vmax.f32 %v1415, %v1416
      %v1418 = vrot.slane %v1417, 2
      %v1419 = vmax.f32 %v1417, %v1418
      %v1420 = vrot.slane %v1419, 1
      %v1421 = vmax.f32 %v1419, %v1420
      %v1422 = vsel %vm1218, %v1094, -inf
      %v1423 = vrot.slane %v1422, 4
      %v1424 = vmax.f32 %v1422, %v1423
      %v1425 = vrot.slane %v1424, 2
      %v1426 = vmax.f32 %v1424, %v1425
      %v1427 = vrot.slane %v1426, 1
      %v1428 = vmax.f32 %v1426, %v1427
      %v1429 = vsel %vm1218, %v1102, -inf
      %v1430 = vrot.slane %v1429, 4
      %v1431 = vmax.f32 %v1429, %v1430
      %v1432 = vrot.slane %v1431, 2
      %v1433 = vmax.f32 %v1431, %v1432
      %v1434 = vrot.slane %v1433, 1
      %v1435 = vmax.f32 %v1433, %v1434
      %v1436 = vsel %vm1218, %v1110, -inf
      %v1437 = vrot.slane %v1436, 4
      %v1438 = vmax.f32 %v1436, %v1437
      %v1439 = vrot.slane %v1438, 2
      %v1440 = vmax.f32 %v1438, %v1439
      %v1441 = vrot.slane %v1440, 1
      %v1442 = vmax.f32 %v1440, %v1441
      %v1443 = vsel %vm1218, %v1109, -inf
      %v1444 = vrot.slane %v1443, 4
      %v1445 = vmax.f32 %v1443, %v1444
      %v1446 = vrot.slane %v1445, 2
      %v1447 = vmax.f32 %v1445, %v1446
      %v1448 = vrot.slane %v1447, 1
      %v1449 = vmax.f32 %v1447, %v1448
      %v1450 = vsel %vm1218, %v1111, -inf
      %v1451 = vrot.slane %v1450, 4
      %v1452 = vmax.f32 %v1450, %v1451
      %v1453 = vrot.slane %v1452, 2
      %v1454 = vmax.f32 %v1452, %v1453
      %v1455 = vrot.slane %v1454, 1
      %v1456 = vmax.f32 %v1454, %v1455
      %v1457 = vsel %vm1218, %v1118, -inf
      %v1458 = vrot.slane %v1457, 4
      %v1459 = vmax.f32 %v1457, %v1458
      %v1460 = vrot.slane %v1459, 2
      %v1461 = vmax.f32 %v1459, %v1460
      %v1462 = vrot.slane %v1461, 1
      %v1463 = vmax.f32 %v1461, %v1462
      %v1464 = vsel %vm1218, %v1119, -inf
      %v1465 = vrot.slane %v1464, 4
      %v1466 = vmax.f32 %v1464, %v1465
      %v1467 = vrot.slane %v1466, 2
      %v1468 = vmax.f32 %v1466, %v1467
      %v1469 = vrot.slane %v1468, 1
      %v1470 = vmax.f32 %v1468, %v1469
      %v1471 = vsel %vm1218, %v1127, -inf
      %v1472 = vrot.slane %v1471, 4
      %v1473 = vmax.f32 %v1471, %v1472
      %v1474 = vrot.slane %v1473, 2
      %v1475 = vmax.f32 %v1473, %v1474
      %v1476 = vrot.slane %v1475, 1
      %v1477 = vmax.f32 %v1475, %v1476
      %v1478 = vsel %vm1218, %v1135, -inf
      %v1479 = vrot.slane %v1478, 4
      %v1480 = vmax.f32 %v1478, %v1479
      %v1481 = vrot.slane %v1480, 2
      %v1482 = vmax.f32 %v1480, %v1481
      %v1483 = vrot.slane %v1482, 1
      %v1484 = vmax.f32 %v1482, %v1483
      %v1485 = vsel %vm1218, %v1134, -inf
      %v1486 = vrot.slane %v1485, 4
      %v1487 = vmax.f32 %v1485, %v1486
      %v1488 = vrot.slane %v1487, 2
      %v1489 = vmax.f32 %v1487, %v1488
      %v1490 = vrot.slane %v1489, 1
      %v1491 = vmax.f32 %v1489, %v1490
      %v1492 = vsel %vm1218, %v1136, -inf
      %v1493 = vrot.slane %v1492, 4
      %v1494 = vmax.f32 %v1492, %v1493
      %v1495 = vrot.slane %v1494, 2
      %v1496 = vmax.f32 %v1494, %v1495
      %v1497 = vrot.slane %v1496, 1
      %v1498 = vmax.f32 %v1496, %v1497
      %v1499 = vsel %vm1218, %v1143, -inf
      %v1500 = vrot.slane %v1499, 4
      %v1501 = vmax.f32 %v1499, %v1500
      %v1502 = vrot.slane %v1501, 2
      %v1503 = vmax.f32 %v1501, %v1502
      %v1504 = vrot.slane %v1503, 1
      %v1505 = vmax.f32 %v1503, %v1504
      %v1506 = vsel %vm1218, %v1144, -inf
      %v1507 = vrot.slane %v1506, 4
      %v1508 = vmax.f32 %v1506, %v1507
      %v1509 = vrot.slane %v1508, 2
      %v1510 = vmax.f32 %v1508, %v1509
      %v1511 = vrot.slane %v1510, 1
      %v1512 = vmax.f32 %v1510, %v1511
      %v1513 = vsel %vm1218, %v1152, -inf
      %v1514 = vrot.slane %v1513, 4
      %v1515 = vmax.f32 %v1513, %v1514
      %v1516 = vrot.slane %v1515, 2
      %v1517 = vmax.f32 %v1515, %v1516
      %v1518 = vrot.slane %v1517, 1
      %v1519 = vmax.f32 %v1517, %v1518
      %v1520 = vsel %vm1218, %v1160, -inf
      %v1521 = vrot.slane %v1520, 4
      %v1522 = vmax.f32 %v1520, %v1521
      %v1523 = vrot.slane %v1522, 2
      %v1524 = vmax.f32 %v1522, %v1523
      %v1525 = vrot.slane %v1524, 1
      %v1526 = vmax.f32 %v1524, %v1525
      %v1527 = vsel %vm1218, %v1159, -inf
      %v1528 = vrot.slane %v1527, 4
      %v1529 = vmax.f32 %v1527, %v1528
      %v1530 = vrot.slane %v1529, 2
      %v1531 = vmax.f32 %v1529, %v1530
      %v1532 = vrot.slane %v1531, 1
      %v1533 = vmax.f32 %v1531, %v1532
      %v1534 = vsel %vm1218, %v1161, -inf
      %v1535 = vrot.slane %v1534, 4
      %v1536 = vmax.f32 %v1534, %v1535
      %v1537 = vrot.slane %v1536, 2
      %v1538 = vmax.f32 %v1536, %v1537
      %v1539 = vrot.slane %v1538, 1
      %v1540 = vmax.f32 %v1538, %v1539
      %v1541 = vsel %vm1218, %v1168, -inf
      %v1542 = vrot.slane %v1541, 4
      %v1543 = vmax.f32 %v1541, %v1542
      %v1544 = vrot.slane %v1543, 2
      %v1545 = vmax.f32 %v1543, %v1544
      %v1546 = vrot.slane %v1545, 1
      %v1547 = vmax.f32 %v1545, %v1546
      %v1548 = vsel %vm1218, %v1169, -inf
      %v1549 = vrot.slane %v1548, 4
      %v1550 = vmax.f32 %v1548, %v1549
      %v1551 = vrot.slane %v1550, 2
      %v1552 = vmax.f32 %v1550, %v1551
      %v1553 = vrot.slane %v1552, 1
      %v1554 = vmax.f32 %v1552, %v1553
      %1603 = vrot.lane.b32.xlu0 %v1225, 126
      %v1604 = vpop.permute.xlu0 %1603
      %1605 = vrot.lane.b32.xlu0 %v1232, 126
      %v1606 = vpop.permute.xlu0 %1605
      %1607 = vrot.lane.b32.xlu0 %v1239, 126
      %v1608 = vpop.permute.xlu0 %1607
      %1609 = vrot.lane.b32.xlu0 %v1246, 126
      %v1610 = vpop.permute.xlu0 %1609
      %1611 = vrot.lane.b32.xlu0 %v1253, 126
      %v1612 = vpop.permute.xlu0 %1611
      %1613 = vrot.lane.b32.xlu0 %v1260, 126
      %v1614 = vpop.permute.xlu0 %1613
      %1615 = vrot.lane.b32.xlu0 %v1267, 126
      %v1616 = vpop.permute.xlu0 %1615
      %1617 = vrot.lane.b32.xlu0 %v1274, 126
      %v1618 = vpop.permute.xlu0 %1617
      %1619 = vrot.lane.b32.xlu0 %v1281, 126
      %v1620 = vpop.permute.xlu0 %1619
      %1621 = vrot.lane.b32.xlu0 %v1288, 126
      %v1622 = vpop.permute.xlu0 %1621
      %1623 = vrot.lane.b32.xlu0 %v1295, 126
      %v1624 = vpop.permute.xlu0 %1623
      %1625 = vrot.lane.b32.xlu0 %v1302, 126
      %v1626 = vpop.permute.xlu0 %1625
      %1627 = vrot.lane.b32.xlu0 %v1309, 126
      %v1628 = vpop.permute.xlu0 %1627
      %1629 = vrot.lane.b32.xlu0 %v1316, 126
      %v1630 = vpop.permute.xlu0 %1629
      %1631 = vrot.lane.b32.xlu0 %v1323, 126
      %v1632 = vpop.permute.xlu0 %1631
      %1633 = vrot.lane.b32.xlu0 %v1330, 126
      %v1634 = vpop.permute.xlu0 %1633
      %1635 = vrot.lane.b32.xlu0 %v1337, 126
      %v1636 = vpop.permute.xlu0 %1635
      %1637 = vrot.lane.b32.xlu0 %v1344, 126
      %v1638 = vpop.permute.xlu0 %1637
      %1639 = vrot.lane.b32.xlu0 %v1351, 126
      %v1640 = vpop.permute.xlu0 %1639
      %1641 = vrot.lane.b32.xlu0 %v1358, 126
      %v1642 = vpop.permute.xlu0 %1641
      %1643 = vrot.lane.b32.xlu0 %v1365, 126
      %v1644 = vpop.permute.xlu0 %1643
      %1645 = vrot.lane.b32.xlu0 %v1372, 126
      %v1646 = vpop.permute.xlu0 %1645
      %1647 = vrot.lane.b32.xlu0 %v1379, 126
      %v1648 = vpop.permute.xlu0 %1647
      %1649 = vrot.lane.b32.xlu0 %v1386, 126
      %v1650 = vpop.permute.xlu0 %1649
      %1651 = vrot.lane.b32.xlu0 %v1393, 126
      %v1652 = vpop.permute.xlu0 %1651
      %1653 = vrot.lane.b32.xlu0 %v1400, 126
      %v1654 = vpop.permute.xlu0 %1653
      %1655 = vrot.lane.b32.xlu0 %v1407, 126
      %v1656 = vpop.permute.xlu0 %1655
      %1657 = vrot.lane.b32.xlu0 %v1414, 126
      %v1658 = vpop.permute.xlu0 %1657
      %1659 = vrot.lane.b32.xlu0 %v1421, 126
      %v1660 = vpop.permute.xlu0 %1659
      %1661 = vrot.lane.b32.xlu0 %v1428, 126
      %v1662 = vpop.permute.xlu0 %1661
      %1663 = vrot.lane.b32.xlu0 %v1435, 126
      %v1664 = vpop.permute.xlu0 %1663
      %1665 = vrot.lane.b32.xlu0 %v1442, 126
      %v1666 = vpop.permute.xlu0 %1665
      %1667 = vrot.lane.b32.xlu0 %v1449, 126
      %v1668 = vpop.permute.xlu0 %1667
      %1669 = vrot.lane.b32.xlu0 %v1456, 126
      %v1670 = vpop.permute.xlu0 %1669
      %1671 = vrot.lane.b32.xlu0 %v1463, 126
      %v1672 = vpop.permute.xlu0 %1671
      %1673 = vrot.lane.b32.xlu0 %v1470, 126
      %v1674 = vpop.permute.xlu0 %1673
      %1675 = vrot.lane.b32.xlu0 %v1477, 126
      %v1676 = vpop.permute.xlu0 %1675
      %1677 = vrot.lane.b32.xlu0 %v1484, 126
      %v1678 = vpop.permute.xlu0 %1677
      %1679 = vrot.lane.b32.xlu0 %v1491, 126
      %v1680 = vpop.permute.xlu0 %1679
      %1681 = vrot.lane.b32.xlu0 %v1498, 126
      %v1682 = vpop.permute.xlu0 %1681
      %1683 = vrot.lane.b32.xlu0 %v1505, 126
      %v1684 = vpop.permute.xlu0 %1683
      %1685 = vrot.lane.b32.xlu0 %v1512, 126
      %v1686 = vpop.permute.xlu0 %1685
      %1687 = vrot.lane.b32.xlu0 %v1519, 126
      %v1688 = vpop.permute.xlu0 %1687
      %1689 = vrot.lane.b32.xlu0 %v1526, 126
      %v1690 = vpop.permute.xlu0 %1689
      %1691 = vrot.lane.b32.xlu0 %v1533, 126
      %v1692 = vpop.permute.xlu0 %1691
      %1693 = vrot.lane.b32.xlu0 %v1540, 126
      %v1694 = vpop.permute.xlu0 %1693
      %1695 = vrot.lane.b32.xlu0 %v1547, 126
      %v1696 = vpop.permute.xlu0 %1695
      %1697 = vrot.lane.b32.xlu0 %v1554, 126
      %v1698 = vpop.permute.xlu0 %1697
      %1699 = vrot.lane.b32.xlu0 %v1225, 124
      %v1700 = vpop.permute.xlu0 %1699
      %1701 = vrot.lane.b32.xlu0 %v1232, 124
      %v1702 = vpop.permute.xlu0 %1701
      %1703 = vrot.lane.b32.xlu0 %v1239, 124
      %v1704 = vpop.permute.xlu0 %1703
      %1705 = vrot.lane.b32.xlu0 %v1246, 124
      %v1706 = vpop.permute.xlu0 %1705
      %1707 = vrot.lane.b32.xlu0 %v1253, 124
      %v1708 = vpop.permute.xlu0 %1707
      %1709 = vrot.lane.b32.xlu0 %v1260, 124
      %v1710 = vpop.permute.xlu0 %1709
      %1711 = vrot.lane.b32.xlu0 %v1267, 124
      %v1712 = vpop.permute.xlu0 %1711
      %1713 = vrot.lane.b32.xlu0 %v1274, 124
      %v1714 = vpop.permute.xlu0 %1713
      %1715 = vrot.lane.b32.xlu0 %v1281, 124
      %v1716 = vpop.permute.xlu0 %1715
      %1717 = vrot.lane.b32.xlu0 %v1288, 124
      %v1718 = vpop.permute.xlu0 %1717
      %1719 = vrot.lane.b32.xlu0 %v1295, 124
      %v1720 = vpop.permute.xlu0 %1719
      %1721 = vrot.lane.b32.xlu0 %v1302, 124
      %v1722 = vpop.permute.xlu0 %1721
      %1723 = vrot.lane.b32.xlu0 %v1309, 124
      %v1724 = vpop.permute.xlu0 %1723
      %1725 = vrot.lane.b32.xlu0 %v1316, 124
      %v1726 = vpop.permute.xlu0 %1725
      %1727 = vrot.lane.b32.xlu0 %v1323, 124
      %v1728 = vpop.permute.xlu0 %1727
      %1729 = vrot.lane.b32.xlu0 %v1330, 124
      %v1730 = vpop.permute.xlu0 %1729
      %1731 = vrot.lane.b32.xlu0 %v1337, 124
      %v1732 = vpop.permute.xlu0 %1731
      %1733 = vrot.lane.b32.xlu0 %v1344, 124
      %v1734 = vpop.permute.xlu0 %1733
      %1735 = vrot.lane.b32.xlu0 %v1351, 124
      %v1736 = vpop.permute.xlu0 %1735
      %1737 = vrot.lane.b32.xlu0 %v1358, 124
      %v1738 = vpop.permute.xlu0 %1737
      %1739 = vrot.lane.b32.xlu0 %v1365, 124
      %v1740 = vpop.permute.xlu0 %1739
      %1741 = vrot.lane.b32.xlu0 %v1372, 124
      %v1742 = vpop.permute.xlu0 %1741
      %1743 = vrot.lane.b32.xlu0 %v1379, 124
      %v1744 = vpop.permute.xlu0 %1743
      %1745 = vrot.lane.b32.xlu0 %v1386, 124
      %v1746 = vpop.permute.xlu0 %1745
      %1747 = vrot.lane.b32.xlu0 %v1393, 124
      %v1748 = vpop.permute.xlu0 %1747
      %1749 = vrot.lane.b32.xlu0 %v1400, 124
      %v1750 = vpop.permute.xlu0 %1749
      %1751 = vrot.lane.b32.xlu0 %v1407, 124
      %v1752 = vpop.permute.xlu0 %1751
      %1753 = vrot.lane.b32.xlu0 %v1414, 124
      %v1754 = vpop.permute.xlu0 %1753
      %1755 = vrot.lane.b32.xlu0 %v1421, 124
      %v1756 = vpop.permute.xlu0 %1755
      %1757 = vrot.lane.b32.xlu0 %v1428, 124
      %v1758 = vpop.permute.xlu0 %1757
      %1759 = vrot.lane.b32.xlu0 %v1435, 124
      %v1760 = vpop.permute.xlu0 %1759
      %1761 = vrot.lane.b32.xlu0 %v1442, 124
      %v1762 = vpop.permute.xlu0 %1761
      %1763 = vrot.lane.b32.xlu0 %v1449, 124
      %v1764 = vpop.permute.xlu0 %1763
      %1765 = vrot.lane.b32.xlu0 %v1456, 124
      %v1766 = vpop.permute.xlu0 %1765
      %1767 = vrot.lane.b32.xlu0 %v1463, 124
      %v1768 = vpop.permute.xlu0 %1767
      %1769 = vrot.lane.b32.xlu0 %v1470, 124
      %v1770 = vpop.permute.xlu0 %1769
      %1771 = vrot.lane.b32.xlu0 %v1477, 124
      %v1772 = vpop.permute.xlu0 %1771
      %1773 = vrot.lane.b32.xlu0 %v1484, 124
      %v1774 = vpop.permute.xlu0 %1773
      %1775 = vrot.lane.b32.xlu0 %v1491, 124
      %v1776 = vpop.permute.xlu0 %1775
      %1777 = vrot.lane.b32.xlu0 %v1498, 124
      %v1778 = vpop.permute.xlu0 %1777
      %1779 = vrot.lane.b32.xlu0 %v1505, 124
      %v1780 = vpop.permute.xlu0 %1779
      %1781 = vrot.lane.b32.xlu0 %v1512, 124
      %v1782 = vpop.permute.xlu0 %1781
      %1783 = vrot.lane.b32.xlu0 %v1519, 124
      %v1784 = vpop.permute.xlu0 %1783
      %1785 = vrot.lane.b32.xlu0 %v1526, 124
      %v1786 = vpop.permute.xlu0 %1785
      %1787 = vrot.lane.b32.xlu0 %v1533, 124
      %v1788 = vpop.permute.xlu0 %1787
      %1789 = vrot.lane.b32.xlu0 %v1540, 124
      %v1790 = vpop.permute.xlu0 %1789
      %1791 = vrot.lane.b32.xlu0 %v1547, 124
      %v1792 = vpop.permute.xlu0 %1791
      %1793 = vrot.lane.b32.xlu0 %v1554, 124
      %v1794 = vpop.permute.xlu0 %1793
      %1795 = vrot.lane.b32.xlu0 %v1225, 122
      %v1796 = vpop.permute.xlu0 %1795
      %1797 = vrot.lane.b32.xlu0 %v1232, 122
      %v1798 = vpop.permute.xlu0 %1797
      %1799 = vrot.lane.b32.xlu0 %v1239, 122
      %v1800 = vpop.permute.xlu0 %1799
      %1801 = vrot.lane.b32.xlu0 %v1246, 122
      %v1802 = vpop.permute.xlu0 %1801
      %1803 = vrot.lane.b32.xlu0 %v1253, 122
      %v1804 = vpop.permute.xlu0 %1803
      %1805 = vrot.lane.b32.xlu0 %v1260, 122
      %v1806 = vpop.permute.xlu0 %1805
      %1807 = vrot.lane.b32.xlu0 %v1267, 122
      %v1808 = vpop.permute.xlu0 %1807
      %1809 = vrot.lane.b32.xlu0 %v1274, 122
      %v1810 = vpop.permute.xlu0 %1809
      %1811 = vrot.lane.b32.xlu0 %v1281, 122
      %v1812 = vpop.permute.xlu0 %1811
      %1813 = vrot.lane.b32.xlu0 %v1288, 122
      %v1814 = vpop.permute.xlu0 %1813
      %1815 = vrot.lane.b32.xlu0 %v1295, 122
      %v1816 = vpop.permute.xlu0 %1815
      %1817 = vrot.lane.b32.xlu0 %v1302, 122
      %v1818 = vpop.permute.xlu0 %1817
      %1819 = vrot.lane.b32.xlu0 %v1309, 122
      %v1820 = vpop.permute.xlu0 %1819
      %1821 = vrot.lane.b32.xlu0 %v1316, 122
      %v1822 = vpop.permute.xlu0 %1821
      %1823 = vrot.lane.b32.xlu0 %v1323, 122
      %v1824 = vpop.permute.xlu0 %1823
      %1825 = vrot.lane.b32.xlu0 %v1330, 122
      %v1826 = vpop.permute.xlu0 %1825
      %1827 = vrot.lane.b32.xlu0 %v1337, 122
      %v1828 = vpop.permute.xlu0 %1827
      %1829 = vrot.lane.b32.xlu0 %v1344, 122
      %v1830 = vpop.permute.xlu0 %1829
      %1831 = vrot.lane.b32.xlu0 %v1351, 122
      %v1832 = vpop.permute.xlu0 %1831
      %1833 = vrot.lane.b32.xlu0 %v1358, 122
      %v1834 = vpop.permute.xlu0 %1833
      %1835 = vrot.lane.b32.xlu0 %v1365, 122
      %v1836 = vpop.permute.xlu0 %1835
      %1837 = vrot.lane.b32.xlu0 %v1372, 122
      %v1838 = vpop.permute.xlu0 %1837
      %1839 = vrot.lane.b32.xlu0 %v1379, 122
      %v1840 = vpop.permute.xlu0 %1839
      %1841 = vrot.lane.b32.xlu0 %v1386, 122
      %v1842 = vpop.permute.xlu0 %1841
      %1843 = vrot.lane.b32.xlu0 %v1393, 122
      %v1844 = vpop.permute.xlu0 %1843
      %1845 = vrot.lane.b32.xlu0 %v1400, 122
      %v1846 = vpop.permute.xlu0 %1845
      %1847 = vrot.lane.b32.xlu0 %v1407, 122
      %v1848 = vpop.permute.xlu0 %1847
      %1849 = vrot.lane.b32.xlu0 %v1414, 122
      %v1850 = vpop.permute.xlu0 %1849
      %1851 = vrot.lane.b32.xlu0 %v1421, 122
      %v1852 = vpop.permute.xlu0 %1851
      %1853 = vrot.lane.b32.xlu0 %v1428, 122
      %v1854 = vpop.permute.xlu0 %1853
      %1855 = vrot.lane.b32.xlu0 %v1435, 122
      %v1856 = vpop.permute.xlu0 %1855
      %1857 = vrot.lane.b32.xlu0 %v1442, 122
      %v1858 = vpop.permute.xlu0 %1857
      %1859 = vrot.lane.b32.xlu0 %v1449, 122
      %v1860 = vpop.permute.xlu0 %1859
      %1861 = vrot.lane.b32.xlu0 %v1456, 122
      %v1862 = vpop.permute.xlu0 %1861
      %1863 = vrot.lane.b32.xlu0 %v1463, 122
      %v1864 = vpop.permute.xlu0 %1863
      %1865 = vrot.lane.b32.xlu0 %v1470, 122
      %v1866 = vpop.permute.xlu0 %1865
      %1867 = vrot.lane.b32.xlu0 %v1477, 122
      %v1868 = vpop.permute.xlu0 %1867
      %1869 = vrot.lane.b32.xlu0 %v1484, 122
      %v1870 = vpop.permute.xlu0 %1869
      %1871 = vrot.lane.b32.xlu0 %v1491, 122
      %v1872 = vpop.permute.xlu0 %1871
      %1873 = vrot.lane.b32.xlu0 %v1498, 122
      %v1874 = vpop.permute.xlu0 %1873
      %1875 = vrot.lane.b32.xlu0 %v1505, 122
      %v1876 = vpop.permute.xlu0 %1875
      %1877 = vrot.lane.b32.xlu0 %v1512, 122
      %v1878 = vpop.permute.xlu0 %1877
      %1879 = vrot.lane.b32.xlu0 %v1519, 122
      %v1880 = vpop.permute.xlu0 %1879
      %1881 = vrot.lane.b32.xlu0 %v1526, 122
      %v1882 = vpop.permute.xlu0 %1881
      %1883 = vrot.lane.b32.xlu0 %v1533, 122
      %v1884 = vpop.permute.xlu0 %1883
      %1885 = vrot.lane.b32.xlu0 %v1540, 122
      %v1886 = vpop.permute.xlu0 %1885
      %1887 = vrot.lane.b32.xlu0 %v1547, 122
      %v1888 = vpop.permute.xlu0 %1887
      %1889 = vrot.lane.b32.xlu0 %v1554, 122
      %v1890 = vpop.permute.xlu0 %1889
      %1891 = vrot.lane.b32.xlu0 %v1225, 120
      %v1892 = vpop.permute.xlu0 %1891
      %1893 = vrot.lane.b32.xlu0 %v1232, 120
      %v1894 = vpop.permute.xlu0 %1893
      %1895 = vrot.lane.b32.xlu0 %v1239, 120
      %v1896 = vpop.permute.xlu0 %1895
      %1897 = vrot.lane.b32.xlu0 %v1246, 120
      %v1898 = vpop.permute.xlu0 %1897
      %1899 = vrot.lane.b32.xlu0 %v1253, 120
      %v1900 = vpop.permute.xlu0 %1899
      %1901 = vrot.lane.b32.xlu0 %v1260, 120
      %v1902 = vpop.permute.xlu0 %1901
      %1903 = vrot.lane.b32.xlu0 %v1267, 120
      %v1904 = vpop.permute.xlu0 %1903
      %1905 = vrot.lane.b32.xlu0 %v1274, 120
      %v1906 = vpop.permute.xlu0 %1905
      %1907 = vrot.lane.b32.xlu0 %v1281, 120
      %v1908 = vpop.permute.xlu0 %1907
      %1909 = vrot.lane.b32.xlu0 %v1288, 120
      %v1910 = vpop.permute.xlu0 %1909
      %1911 = vrot.lane.b32.xlu0 %v1295, 120
      %v1912 = vpop.permute.xlu0 %1911
      %1913 = vrot.lane.b32.xlu0 %v1302, 120
      %v1914 = vpop.permute.xlu0 %1913
      %1915 = vrot.lane.b32.xlu0 %v1309, 120
      %v1916 = vpop.permute.xlu0 %1915
      %1917 = vrot.lane.b32.xlu0 %v1316, 120
      %v1918 = vpop.permute.xlu0 %1917
      %1919 = vrot.lane.b32.xlu0 %v1323, 120
      %v1920 = vpop.permute.xlu0 %1919
      %1921 = vrot.lane.b32.xlu0 %v1330, 120
      %v1922 = vpop.permute.xlu0 %1921
      %1923 = vrot.lane.b32.xlu0 %v1337, 120
      %v1924 = vpop.permute.xlu0 %1923
      %1925 = vrot.lane.b32.xlu0 %v1344, 120
      %v1926 = vpop.permute.xlu0 %1925
      %1927 = vrot.lane.b32.xlu0 %v1351, 120
      %v1928 = vpop.permute.xlu0 %1927
      %1929 = vrot.lane.b32.xlu0 %v1358, 120
      %v1930 = vpop.permute.xlu0 %1929
      %1931 = vrot.lane.b32.xlu0 %v1365, 120
      %v1932 = vpop.permute.xlu0 %1931
      %1933 = vrot.lane.b32.xlu0 %v1372, 120
      %v1934 = vpop.permute.xlu0 %1933
      %1935 = vrot.lane.b32.xlu0 %v1379, 120
      %v1936 = vpop.permute.xlu0 %1935
      %1937 = vrot.lane.b32.xlu0 %v1386, 120
      %v1938 = vpop.permute.xlu0 %1937
      %1939 = vrot.lane.b32.xlu0 %v1393, 120
      %v1940 = vpop.permute.xlu0 %1939
      %1941 = vrot.lane.b32.xlu0 %v1400, 120
      %v1942 = vpop.permute.xlu0 %1941
      %1943 = vrot.lane.b32.xlu0 %v1407, 120
      %v1944 = vpop.permute.xlu0 %1943
      %1945 = vrot.lane.b32.xlu0 %v1414, 120
      %v1946 = vpop.permute.xlu0 %1945
      %1947 = vrot.lane.b32.xlu0 %v1421, 120
      %v1948 = vpop.permute.xlu0 %1947
      %1949 = vrot.lane.b32.xlu0 %v1428, 120
      %v1950 = vpop.permute.xlu0 %1949
      %1951 = vrot.lane.b32.xlu0 %v1435, 120
      %v1952 = vpop.permute.xlu0 %1951
      %1953 = vrot.lane.b32.xlu0 %v1442, 120
      %v1954 = vpop.permute.xlu0 %1953
      %1955 = vrot.lane.b32.xlu0 %v1449, 120
      %v1956 = vpop.permute.xlu0 %1955
      %1957 = vrot.lane.b32.xlu0 %v1456, 120
      %v1958 = vpop.permute.xlu0 %1957
      %1959 = vrot.lane.b32.xlu0 %v1463, 120
      %v1960 = vpop.permute.xlu0 %1959
      %1961 = vrot.lane.b32.xlu0 %v1470, 120
      %v1962 = vpop.permute.xlu0 %1961
      %1963 = vrot.lane.b32.xlu0 %v1477, 120
      %v1964 = vpop.permute.xlu0 %1963
      %1965 = vrot.lane.b32.xlu0 %v1484, 120
      %v1966 = vpop.permute.xlu0 %1965
      %1967 = vrot.lane.b32.xlu0 %v1491, 120
      %v1968 = vpop.permute.xlu0 %1967
      %1969 = vrot.lane.b32.xlu0 %v1498, 120
      %v1970 = vpop.permute.xlu0 %1969
      %1971 = vrot.lane.b32.xlu0 %v1505, 120
      %v1972 = vpop.permute.xlu0 %1971
      %1973 = vrot.lane.b32.xlu0 %v1512, 120
      %v1974 = vpop.permute.xlu0 %1973
      %1975 = vrot.lane.b32.xlu0 %v1519, 120
      %v1976 = vpop.permute.xlu0 %1975
      %1977 = vrot.lane.b32.xlu0 %v1526, 120
      %v1978 = vpop.permute.xlu0 %1977
      %1979 = vrot.lane.b32.xlu0 %v1533, 120
      %v1980 = vpop.permute.xlu0 %1979
      %1981 = vrot.lane.b32.xlu0 %v1540, 120
      %v1982 = vpop.permute.xlu0 %1981
      %1983 = vrot.lane.b32.xlu0 %v1547, 120
      %v1984 = vpop.permute.xlu0 %1983
      %1985 = vrot.lane.b32.xlu0 %v1554, 120
      %v1986 = vpop.permute.xlu0 %1985
      %1987 = vrot.lane.b32.xlu0 %v1225, 118
      %v1988 = vpop.permute.xlu0 %1987
      %1989 = vrot.lane.b32.xlu0 %v1232, 118
      %v1990 = vpop.permute.xlu0 %1989
      %1991 = vrot.lane.b32.xlu0 %v1239, 118
      %v1992 = vpop.permute.xlu0 %1991
      %1993 = vrot.lane.b32.xlu0 %v1246, 118
      %v1994 = vpop.permute.xlu0 %1993
      %1995 = vrot.lane.b32.xlu0 %v1253, 118
      %v1996 = vpop.permute.xlu0 %1995
      %1997 = vrot.lane.b32.xlu0 %v1260, 118
      %v1998 = vpop.permute.xlu0 %1997
      %1999 = vrot.lane.b32.xlu0 %v1267, 118
      %v2000 = vpop.permute.xlu0 %1999
      %2001 = vrot.lane.b32.xlu0 %v1274, 118
      %v2002 = vpop.permute.xlu0 %2001
      %2003 = vrot.lane.b32.xlu0 %v1281, 118
      %v2004 = vpop.permute.xlu0 %2003
      %2005 = vrot.lane.b32.xlu0 %v1288, 118
      %v2006 = vpop.permute.xlu0 %2005
      %2007 = vrot.lane.b32.xlu0 %v1295, 118
      %v2008 = vpop.permute.xlu0 %2007
      %2009 = vrot.lane.b32.xlu0 %v1302, 118
      %v2010 = vpop.permute.xlu0 %2009
      %2011 = vrot.lane.b32.xlu0 %v1309, 118
      %v2012 = vpop.permute.xlu0 %2011
      %2013 = vrot.lane.b32.xlu0 %v1316, 118
      %v2014 = vpop.permute.xlu0 %2013
      %2015 = vrot.lane.b32.xlu0 %v1323, 118
      %v2016 = vpop.permute.xlu0 %2015
      %2017 = vrot.lane.b32.xlu0 %v1330, 118
      %v2018 = vpop.permute.xlu0 %2017
      %2019 = vrot.lane.b32.xlu0 %v1337, 118
      %v2020 = vpop.permute.xlu0 %2019
      %2021 = vrot.lane.b32.xlu0 %v1344, 118
      %v2022 = vpop.permute.xlu0 %2021
      %2023 = vrot.lane.b32.xlu0 %v1351, 118
      %v2024 = vpop.permute.xlu0 %2023
      %2025 = vrot.lane.b32.xlu0 %v1358, 118
      %v2026 = vpop.permute.xlu0 %2025
      %2027 = vrot.lane.b32.xlu0 %v1365, 118
      %v2028 = vpop.permute.xlu0 %2027
      %2029 = vrot.lane.b32.xlu0 %v1372, 118
      %v2030 = vpop.permute.xlu0 %2029
      %2031 = vrot.lane.b32.xlu0 %v1379, 118
      %v2032 = vpop.permute.xlu0 %2031
      %2033 = vrot.lane.b32.xlu0 %v1386, 118
      %v2034 = vpop.permute.xlu0 %2033
      %2035 = vrot.lane.b32.xlu0 %v1393, 118
      %v2036 = vpop.permute.xlu0 %2035
      %2037 = vrot.lane.b32.xlu0 %v1400, 118
      %v2038 = vpop.permute.xlu0 %2037
      %2039 = vrot.lane.b32.xlu0 %v1407, 118
      %v2040 = vpop.permute.xlu0 %2039
      %2041 = vrot.lane.b32.xlu0 %v1414, 118
      %v2042 = vpop.permute.xlu0 %2041
      %2043 = vrot.lane.b32.xlu0 %v1421, 118
      %v2044 = vpop.permute.xlu0 %2043
      %2045 = vrot.lane.b32.xlu0 %v1428, 118
      %v2046 = vpop.permute.xlu0 %2045
      %2047 = vrot.lane.b32.xlu0 %v1435, 118
      %v2048 = vpop.permute.xlu0 %2047
      %2049 = vrot.lane.b32.xlu0 %v1442, 118
      %v2050 = vpop.permute.xlu0 %2049
      %2051 = vrot.lane.b32.xlu0 %v1449, 118
      %v2052 = vpop.permute.xlu0 %2051
      %2053 = vrot.lane.b32.xlu0 %v1456, 118
      %v2054 = vpop.permute.xlu0 %2053
      %2055 = vrot.lane.b32.xlu0 %v1463, 118
      %v2056 = vpop.permute.xlu0 %2055
      %2057 = vrot.lane.b32.xlu0 %v1470, 118
      %v2058 = vpop.permute.xlu0 %2057
      %2059 = vrot.lane.b32.xlu0 %v1477, 118
      %v2060 = vpop.permute.xlu0 %2059
      %2061 = vrot.lane.b32.xlu0 %v1484, 118
      %v2062 = vpop.permute.xlu0 %2061
      %2063 = vrot.lane.b32.xlu0 %v1491, 118
      %v2064 = vpop.permute.xlu0 %2063
      %2065 = vrot.lane.b32.xlu0 %v1498, 118
      %v2066 = vpop.permute.xlu0 %2065
      %2067 = vrot.lane.b32.xlu0 %v1505, 118
      %v2068 = vpop.permute.xlu0 %2067
      %2069 = vrot.lane.b32.xlu0 %v1512, 118
      %v2070 = vpop.permute.xlu0 %2069
      %2071 = vrot.lane.b32.xlu0 %v1519, 118
      %v2072 = vpop.permute.xlu0 %2071
      %2073 = vrot.lane.b32.xlu0 %v1526, 118
      %v2074 = vpop.permute.xlu0 %2073
      %2075 = vrot.lane.b32.xlu0 %v1533, 118
      %v2076 = vpop.permute.xlu0 %2075
      %2077 = vrot.lane.b32.xlu0 %v1540, 118
      %v2078 = vpop.permute.xlu0 %2077
      %2079 = vrot.lane.b32.xlu0 %v1547, 118
      %v2080 = vpop.permute.xlu0 %2079
      %2081 = vrot.lane.b32.xlu0 %v1554, 118
      %v2082 = vpop.permute.xlu0 %2081
      %v2083 = vrot.slane %v1232, 7
      %vm2084 = vcmask 1041409
      %v2085 = vsel %vm2084, %v2083, %v1225
      %v2086 = vrot.slane %v1239, 6
      %vm2087 = vcmask 1042434
      %v2088 = vsel %vm2087, %v2086, %v2085
      %v2089 = vrot.slane %v1246, 5
      %vm2090 = vcmask 1043459
      %v2091 = vsel %vm2090, %v2089, %v2088
      %v2092 = vrot.slane %v1253, 4
      %vm2093 = vcmask 1044484
      %v2094 = vsel %vm2093, %v2092, %v2091
      %v2095 = vrot.slane %v1260, 3
      %vm2096 = vcmask 1045509
      %v2097 = vsel %vm2096, %v2095, %v2094
      %v2098 = vrot.slane %v1606, 7
      %v2099 = vsel %vm2084, %v2098, %v1604
      %v2100 = vrot.slane %v1608, 6
      %v2101 = vsel %vm2087, %v2100, %v2099
      %v2102 = vrot.slane %v1610, 5
      %v2103 = vsel %vm2090, %v2102, %v2101
      %v2104 = vrot.slane %v1612, 4
      %v2105 = vsel %vm2093, %v2104, %v2103
      %v2106 = vrot.slane %v1614, 3
      %v2107 = vsel %vm2096, %v2106, %v2105
      %v2108 = vrot.slane %v1702, 7
      %v2109 = vsel %vm2084, %v2108, %v1700
      %v2110 = vrot.slane %v1704, 6
      %v2111 = vsel %vm2087, %v2110, %v2109
      %v2112 = vrot.slane %v1706, 5
      %v2113 = vsel %vm2090, %v2112, %v2111
      %v2114 = vrot.slane %v1708, 4
      %v2115 = vsel %vm2093, %v2114, %v2113
      %v2116 = vrot.slane %v1710, 3
      %v2117 = vsel %vm2096, %v2116, %v2115
      %v2118 = vrot.slane %v1798, 7
      %v2119 = vsel %vm2084, %v2118, %v1796
      %v2120 = vrot.slane %v1800, 6
      %v2121 = vsel %vm2087, %v2120, %v2119
      %v2122 = vrot.slane %v1802, 5
      %v2123 = vsel %vm2090, %v2122, %v2121
      %v2124 = vrot.slane %v1804, 4
      %v2125 = vsel %vm2093, %v2124, %v2123
      %v2126 = vrot.slane %v1806, 3
      %v2127 = vsel %vm2096, %v2126, %v2125
      %v2128 = vrot.slane %v1894, 7
      %v2129 = vsel %vm2084, %v2128, %v1892
      %v2130 = vrot.slane %v1896, 6
      %v2131 = vsel %vm2087, %v2130, %v2129
      %v2132 = vrot.slane %v1898, 5
      %v2133 = vsel %vm2090, %v2132, %v2131
      %v2134 = vrot.slane %v1900, 4
      %v2135 = vsel %vm2093, %v2134, %v2133
      %v2136 = vrot.slane %v1902, 3
      %v2137 = vsel %vm2096, %v2136, %v2135
      %v2138 = vrot.slane %v1990, 7
      %v2139 = vsel %vm2084, %v2138, %v1988
      %v2140 = vrot.slane %v1992, 6
      %v2141 = vsel %vm2087, %v2140, %v2139
      %v2142 = vrot.slane %v1994, 5
      %v2143 = vsel %vm2090, %v2142, %v2141
      %v2144 = vrot.slane %v1996, 4
      %v2145 = vsel %vm2093, %v2144, %v2143
      %v2146 = vrot.slane %v1998, 3
      %v2147 = vsel %vm2096, %v2146, %v2145
      %v2148 = vrot.slane %v1274, 7
      %v2149 = vsel %vm2084, %v2148, %v1267
      %v2150 = vrot.slane %v1281, 6
      %v2151 = vsel %vm2087, %v2150, %v2149
      %v2152 = vrot.slane %v1288, 5
      %v2153 = vsel %vm2090, %v2152, %v2151
      %v2154 = vrot.slane %v1295, 4
      %v2155 = vsel %vm2093, %v2154, %v2153
      %v2156 = vrot.slane %v1302, 3
      %v2157 = vsel %vm2096, %v2156, %v2155
      %v2158 = vrot.slane %v1618, 7
      %v2159 = vsel %vm2084, %v2158, %v1616
      %v2160 = vrot.slane %v1620, 6
      %v2161 = vsel %vm2087, %v2160, %v2159
      %v2162 = vrot.slane %v1622, 5
      %v2163 = vsel %vm2090, %v2162, %v2161
      %v2164 = vrot.slane %v1624, 4
      %v2165 = vsel %vm2093, %v2164, %v2163
      %v2166 = vrot.slane %v1626, 3
      %v2167 = vsel %vm2096, %v2166, %v2165
      %v2168 = vrot.slane %v1714, 7
      %v2169 = vsel %vm2084, %v2168, %v1712
      %v2170 = vrot.slane %v1716, 6
      %v2171 = vsel %vm2087, %v2170, %v2169
      %v2172 = vrot.slane %v1718, 5
      %v2173 = vsel %vm2090, %v2172, %v2171
      %v2174 = vrot.slane %v1720, 4
      %v2175 = vsel %vm2093, %v2174, %v2173
      %v2176 = vrot.slane %v1722, 3
      %v2177 = vsel %vm2096, %v2176, %v2175
      %v2178 = vrot.slane %v1810, 7
      %v2179 = vsel %vm2084, %v2178, %v1808
      %v2180 = vrot.slane %v1812, 6
      %v2181 = vsel %vm2087, %v2180, %v2179
      %v2182 = vrot.slane %v1814, 5
      %v2183 = vsel %vm2090, %v2182, %v2181
      %v2184 = vrot.slane %v1816, 4
      %v2185 = vsel %vm2093, %v2184, %v2183
      %v2186 = vrot.slane %v1818, 3
      %v2187 = vsel %vm2096, %v2186, %v2185
      %v2188 = vrot.slane %v1906, 7
      %v2189 = vsel %vm2084, %v2188, %v1904
      %v2190 = vrot.slane %v1908, 6
      %v2191 = vsel %vm2087, %v2190, %v2189
      %v2192 = vrot.slane %v1910, 5
      %v2193 = vsel %vm2090, %v2192, %v2191
      %v2194 = vrot.slane %v1912, 4
      %v2195 = vsel %vm2093, %v2194, %v2193
      %v2196 = vrot.slane %v1914, 3
      %v2197 = vsel %vm2096, %v2196, %v2195
      %v2198 = vrot.slane %v2002, 7
      %v2199 = vsel %vm2084, %v2198, %v2000
      %v2200 = vrot.slane %v2004, 6
      %v2201 = vsel %vm2087, %v2200, %v2199
      %v2202 = vrot.slane %v2006, 5
      %v2203 = vsel %vm2090, %v2202, %v2201
      %v2204 = vrot.slane %v2008, 4
      %v2205 = vsel %vm2093, %v2204, %v2203
      %v2206 = vrot.slane %v2010, 3
      %v2207 = vsel %vm2096, %v2206, %v2205
      %v2208 = vrot.slane %v1316, 7
      %v2209 = vsel %vm2084, %v2208, %v1309
      %v2210 = vrot.slane %v1323, 6
      %v2211 = vsel %vm2087, %v2210, %v2209
      %v2212 = vrot.slane %v1330, 5
      %v2213 = vsel %vm2090, %v2212, %v2211
      %v2214 = vrot.slane %v1337, 4
      %v2215 = vsel %vm2093, %v2214, %v2213
      %v2216 = vrot.slane %v1344, 3
      %v2217 = vsel %vm2096, %v2216, %v2215
      %v2218 = vrot.slane %v1630, 7
      %v2219 = vsel %vm2084, %v2218, %v1628
      %v2220 = vrot.slane %v1632, 6
      %v2221 = vsel %vm2087, %v2220, %v2219
      %v2222 = vrot.slane %v1634, 5
      %v2223 = vsel %vm2090, %v2222, %v2221
      %v2224 = vrot.slane %v1636, 4
      %v2225 = vsel %vm2093, %v2224, %v2223
      %v2226 = vrot.slane %v1638, 3
      %v2227 = vsel %vm2096, %v2226, %v2225
      %v2228 = vrot.slane %v1726, 7
      %v2229 = vsel %vm2084, %v2228, %v1724
      %v2230 = vrot.slane %v1728, 6
      %v2231 = vsel %vm2087, %v2230, %v2229
      %v2232 = vrot.slane %v1730, 5
      %v2233 = vsel %vm2090, %v2232, %v2231
      %v2234 = vrot.slane %v1732, 4
      %v2235 = vsel %vm2093, %v2234, %v2233
      %v2236 = vrot.slane %v1734, 3
      %v2237 = vsel %vm2096, %v2236, %v2235
      %v2238 = vrot.slane %v1822, 7
      %v2239 = vsel %vm2084, %v2238, %v1820
      %v2240 = vrot.slane %v1824, 6
      %v2241 = vsel %vm2087, %v2240, %v2239
      %v2242 = vrot.slane %v1826, 5
      %v2243 = vsel %vm2090, %v2242, %v2241
      %v2244 = vrot.slane %v1828, 4
      %v2245 = vsel %vm2093, %v2244, %v2243
      %v2246 = vrot.slane %v1830, 3
      %v2247 = vsel %vm2096, %v2246, %v2245
      %v2248 = vrot.slane %v1918, 7
      %v2249 = vsel %vm2084, %v2248, %v1916
      %v2250 = vrot.slane %v1920, 6
      %v2251 = vsel %vm2087, %v2250, %v2249
      %v2252 = vrot.slane %v1922, 5
      %v2253 = vsel %vm2090, %v2252, %v2251
      %v2254 = vrot.slane %v1924, 4
      %v2255 = vsel %vm2093, %v2254, %v2253
      %v2256 = vrot.slane %v1926, 3
      %v2257 = vsel %vm2096, %v2256, %v2255
      %v2258 = vrot.slane %v2014, 7
      %v2259 = vsel %vm2084, %v2258, %v2012
      %v2260 = vrot.slane %v2016, 6
      %v2261 = vsel %vm2087, %v2260, %v2259
      %v2262 = vrot.slane %v2018, 5
      %v2263 = vsel %vm2090, %v2262, %v2261
      %v2264 = vrot.slane %v2020, 4
      %v2265 = vsel %vm2093, %v2264, %v2263
      %v2266 = vrot.slane %v2022, 3
      %v2267 = vsel %vm2096, %v2266, %v2265
      %v2268 = vrot.slane %v1358, 7
      %v2269 = vsel %vm2084, %v2268, %v1351
      %v2270 = vrot.slane %v1365, 6
      %v2271 = vsel %vm2087, %v2270, %v2269
      %v2272 = vrot.slane %v1372, 5
      %v2273 = vsel %vm2090, %v2272, %v2271
      %v2274 = vrot.slane %v1379, 4
      %v2275 = vsel %vm2093, %v2274, %v2273
      %v2276 = vrot.slane %v1386, 3
      %v2277 = vsel %vm2096, %v2276, %v2275
      %v2278 = vrot.slane %v1642, 7
      %v2279 = vsel %vm2084, %v2278, %v1640
      %v2280 = vrot.slane %v1644, 6
      %v2281 = vsel %vm2087, %v2280, %v2279
      %v2282 = vrot.slane %v1646, 5
      %v2283 = vsel %vm2090, %v2282, %v2281
      %v2284 = vrot.slane %v1648, 4
      %v2285 = vsel %vm2093, %v2284, %v2283
      %v2286 = vrot.slane %v1650, 3
      %v2287 = vsel %vm2096, %v2286, %v2285
      %v2288 = vrot.slane %v1738, 7
      %v2289 = vsel %vm2084, %v2288, %v1736
      %v2290 = vrot.slane %v1740, 6
      %v2291 = vsel %vm2087, %v2290, %v2289
      %v2292 = vrot.slane %v1742, 5
      %v2293 = vsel %vm2090, %v2292, %v2291
      %v2294 = vrot.slane %v1744, 4
      %v2295 = vsel %vm2093, %v2294, %v2293
      %v2296 = vrot.slane %v1746, 3
      %v2297 = vsel %vm2096, %v2296, %v2295
      %v2298 = vrot.slane %v1834, 7
      %v2299 = vsel %vm2084, %v2298, %v1832
      %v2300 = vrot.slane %v1836, 6
      %v2301 = vsel %vm2087, %v2300, %v2299
      %v2302 = vrot.slane %v1838, 5
      %v2303 = vsel %vm2090, %v2302, %v2301
      %v2304 = vrot.slane %v1840, 4
      %v2305 = vsel %vm2093, %v2304, %v2303
      %v2306 = vrot.slane %v1842, 3
      %v2307 = vsel %vm2096, %v2306, %v2305
      %v2308 = vrot.slane %v1930, 7
      %v2309 = vsel %vm2084, %v2308, %v1928
      %v2310 = vrot.slane %v1932, 6
      %v2311 = vsel %vm2087, %v2310, %v2309
      %v2312 = vrot.slane %v1934, 5
      %v2313 = vsel %vm2090, %v2312, %v2311
      %v2314 = vrot.slane %v1936, 4
      %v2315 = vsel %vm2093, %v2314, %v2313
      %v2316 = vrot.slane %v1938, 3
      %v2317 = vsel %vm2096, %v2316, %v2315
      %v2318 = vrot.slane %v2026, 7
      %v2319 = vsel %vm2084, %v2318, %v2024
      %v2320 = vrot.slane %v2028, 6
      %v2321 = vsel %vm2087, %v2320, %v2319
      %v2322 = vrot.slane %v2030, 5
      %v2323 = vsel %vm2090, %v2322, %v2321
      %v2324 = vrot.slane %v2032, 4
      %v2325 = vsel %vm2093, %v2324, %v2323
      %v2326 = vrot.slane %v2034, 3
      %v2327 = vsel %vm2096, %v2326, %v2325
      %v2328 = vrot.slane %v1400, 7
      %v2329 = vsel %vm2084, %v2328, %v1393
      %v2330 = vrot.slane %v1407, 6
      %v2331 = vsel %vm2087, %v2330, %v2329
      %v2332 = vrot.slane %v1414, 5
      %v2333 = vsel %vm2090, %v2332, %v2331
      %v2334 = vrot.slane %v1421, 4
      %v2335 = vsel %vm2093, %v2334, %v2333
      %v2336 = vrot.slane %v1428, 3
      %v2337 = vsel %vm2096, %v2336, %v2335
      %v2338 = vrot.slane %v1654, 7
      %v2339 = vsel %vm2084, %v2338, %v1652
      %v2340 = vrot.slane %v1656, 6
      %v2341 = vsel %vm2087, %v2340, %v2339
      %v2342 = vrot.slane %v1658, 5
      %v2343 = vsel %vm2090, %v2342, %v2341
      %v2344 = vrot.slane %v1660, 4
      %v2345 = vsel %vm2093, %v2344, %v2343
      %v2346 = vrot.slane %v1662, 3
      %v2347 = vsel %vm2096, %v2346, %v2345
      %v2348 = vrot.slane %v1750, 7
      %v2349 = vsel %vm2084, %v2348, %v1748
      %v2350 = vrot.slane %v1752, 6
      %v2351 = vsel %vm2087, %v2350, %v2349
      %v2352 = vrot.slane %v1754, 5
      %v2353 = vsel %vm2090, %v2352, %v2351
      %v2354 = vrot.slane %v1756, 4
      %v2355 = vsel %vm2093, %v2354, %v2353
      %v2356 = vrot.slane %v1758, 3
      %v2357 = vsel %vm2096, %v2356, %v2355
      %v2358 = vrot.slane %v1846, 7
      %v2359 = vsel %vm2084, %v2358, %v1844
      %v2360 = vrot.slane %v1848, 6
      %v2361 = vsel %vm2087, %v2360, %v2359
      %v2362 = vrot.slane %v1850, 5
      %v2363 = vsel %vm2090, %v2362, %v2361
      %v2364 = vrot.slane %v1852, 4
      %v2365 = vsel %vm2093, %v2364, %v2363
      %v2366 = vrot.slane %v1854, 3
      %v2367 = vsel %vm2096, %v2366, %v2365
      %v2368 = vrot.slane %v1942, 7
      %v2369 = vsel %vm2084, %v2368, %v1940
      %v2370 = vrot.slane %v1944, 6
      %v2371 = vsel %vm2087, %v2370, %v2369
      %v2372 = vrot.slane %v1946, 5
      %v2373 = vsel %vm2090, %v2372, %v2371
      %v2374 = vrot.slane %v1948, 4
      %v2375 = vsel %vm2093, %v2374, %v2373
      %v2376 = vrot.slane %v1950, 3
      %v2377 = vsel %vm2096, %v2376, %v2375
      %v2378 = vrot.slane %v2038, 7
      %v2379 = vsel %vm2084, %v2378, %v2036
      %v2380 = vrot.slane %v2040, 6
      %v2381 = vsel %vm2087, %v2380, %v2379
      %v2382 = vrot.slane %v2042, 5
      %v2383 = vsel %vm2090, %v2382, %v2381
      %v2384 = vrot.slane %v2044, 4
      %v2385 = vsel %vm2093, %v2384, %v2383
      %v2386 = vrot.slane %v2046, 3
      %v2387 = vsel %vm2096, %v2386, %v2385
      %v2388 = vrot.slane %v1442, 7
      %v2389 = vsel %vm2084, %v2388, %v1435
      %v2390 = vrot.slane %v1449, 6
      %v2391 = vsel %vm2087, %v2390, %v2389
      %v2392 = vrot.slane %v1456, 5
      %v2393 = vsel %vm2090, %v2392, %v2391
      %v2394 = vrot.slane %v1463, 4
      %v2395 = vsel %vm2093, %v2394, %v2393
      %v2396 = vrot.slane %v1470, 3
      %v2397 = vsel %vm2096, %v2396, %v2395
      %v2398 = vrot.slane %v1666, 7
      %v2399 = vsel %vm2084, %v2398, %v1664
      %v2400 = vrot.slane %v1668, 6
      %v2401 = vsel %vm2087, %v2400, %v2399
      %v2402 = vrot.slane %v1670, 5
      %v2403 = vsel %vm2090, %v2402, %v2401
      %v2404 = vrot.slane %v1672, 4
      %v2405 = vsel %vm2093, %v2404, %v2403
      %v2406 = vrot.slane %v1674, 3
      %v2407 = vsel %vm2096, %v2406, %v2405
      %v2408 = vrot.slane %v1762, 7
      %v2409 = vsel %vm2084, %v2408, %v1760
      %v2410 = vrot.slane %v1764, 6
      %v2411 = vsel %vm2087, %v2410, %v2409
      %v2412 = vrot.slane %v1766, 5
      %v2413 = vsel %vm2090, %v2412, %v2411
      %v2414 = vrot.slane %v1768, 4
      %v2415 = vsel %vm2093, %v2414, %v2413
      %v2416 = vrot.slane %v1770, 3
      %v2417 = vsel %vm2096, %v2416, %v2415
      %v2418 = vrot.slane %v1858, 7
      %v2419 = vsel %vm2084, %v2418, %v1856
      %v2420 = vrot.slane %v1860, 6
      %v2421 = vsel %vm2087, %v2420, %v2419
      %v2422 = vrot.slane %v1862, 5
      %v2423 = vsel %vm2090, %v2422, %v2421
      %v2424 = vrot.slane %v1864, 4
      %v2425 = vsel %vm2093, %v2424, %v2423
      %v2426 = vrot.slane %v1866, 3
      %v2427 = vsel %vm2096, %v2426, %v2425
      %v2428 = vrot.slane %v1954, 7
      %v2429 = vsel %vm2084, %v2428, %v1952
      %v2430 = vrot.slane %v1956, 6
      %v2431 = vsel %vm2087, %v2430, %v2429
      %v2432 = vrot.slane %v1958, 5
      %v2433 = vsel %vm2090, %v2432, %v2431
      %v2434 = vrot.slane %v1960, 4
      %v2435 = vsel %vm2093, %v2434, %v2433
      %v2436 = vrot.slane %v1962, 3
      %v2437 = vsel %vm2096, %v2436, %v2435
      %v2438 = vrot.slane %v2050, 7
      %v2439 = vsel %vm2084, %v2438, %v2048
      %v2440 = vrot.slane %v2052, 6
      %v2441 = vsel %vm2087, %v2440, %v2439
      %v2442 = vrot.slane %v2054, 5
      %v2443 = vsel %vm2090, %v2442, %v2441
      %v2444 = vrot.slane %v2056, 4
      %v2445 = vsel %vm2093, %v2444, %v2443
      %v2446 = vrot.slane %v2058, 3
      %v2447 = vsel %vm2096, %v2446, %v2445
      %v2448 = vrot.slane %v1484, 7
      %v2449 = vsel %vm2084, %v2448, %v1477
      %v2450 = vrot.slane %v1491, 6
      %v2451 = vsel %vm2087, %v2450, %v2449
      %v2452 = vrot.slane %v1498, 5
      %v2453 = vsel %vm2090, %v2452, %v2451
      %v2454 = vrot.slane %v1505, 4
      %v2455 = vsel %vm2093, %v2454, %v2453
      %v2456 = vrot.slane %v1512, 3
      %v2457 = vsel %vm2096, %v2456, %v2455
      %v2458 = vrot.slane %v1678, 7
      %v2459 = vsel %vm2084, %v2458, %v1676
      %v2460 = vrot.slane %v1680, 6
      %v2461 = vsel %vm2087, %v2460, %v2459
      %v2462 = vrot.slane %v1682, 5
      %v2463 = vsel %vm2090, %v2462, %v2461
      %v2464 = vrot.slane %v1684, 4
      %v2465 = vsel %vm2093, %v2464, %v2463
      %v2466 = vrot.slane %v1686, 3
      %v2467 = vsel %vm2096, %v2466, %v2465
      %v2468 = vrot.slane %v1774, 7
      %v2469 = vsel %vm2084, %v2468, %v1772
      %v2470 = vrot.slane %v1776, 6
      %v2471 = vsel %vm2087, %v2470, %v2469
      %v2472 = vrot.slane %v1778, 5
      %v2473 = vsel %vm2090, %v2472, %v2471
      %v2474 = vrot.slane %v1780, 4
      %v2475 = vsel %vm2093, %v2474, %v2473
      %v2476 = vrot.slane %v1782, 3
      %v2477 = vsel %vm2096, %v2476, %v2475
      %v2478 = vrot.slane %v1870, 7
      %v2479 = vsel %vm2084, %v2478, %v1868
      %v2480 = vrot.slane %v1872, 6
      %v2481 = vsel %vm2087, %v2480, %v2479
      %v2482 = vrot.slane %v1874, 5
      %v2483 = vsel %vm2090, %v2482, %v2481
      %v2484 = vrot.slane %v1876, 4
      %v2485 = vsel %vm2093, %v2484, %v2483
      %v2486 = vrot.slane %v1878, 3
      %v2487 = vsel %vm2096, %v2486, %v2485
      %v2488 = vrot.slane %v1966, 7
      %v2489 = vsel %vm2084, %v2488, %v1964
      %v2490 = vrot.slane %v1968, 6
      %v2491 = vsel %vm2087, %v2490, %v2489
      %v2492 = vrot.slane %v1970, 5
      %v2493 = vsel %vm2090, %v2492, %v2491
      %v2494 = vrot.slane %v1972, 4
      %v2495 = vsel %vm2093, %v2494, %v2493
      %v2496 = vrot.slane %v1974, 3
      %v2497 = vsel %vm2096, %v2496, %v2495
      %v2498 = vrot.slane %v2062, 7
      %v2499 = vsel %vm2084, %v2498, %v2060
      %v2500 = vrot.slane %v2064, 6
      %v2501 = vsel %vm2087, %v2500, %v2499
      %v2502 = vrot.slane %v2066, 5
      %v2503 = vsel %vm2090, %v2502, %v2501
      %v2504 = vrot.slane %v2068, 4
      %v2505 = vsel %vm2093, %v2504, %v2503
      %v2506 = vrot.slane %v2070, 3
      %v2507 = vsel %vm2096, %v2506, %v2505
      %v2508 = vrot.slane %v1526, 7
      %v2509 = vsel %vm2084, %v2508, %v1519
      %v2510 = vrot.slane %v1533, 6
      %v2511 = vsel %vm2087, %v2510, %v2509
      %v2512 = vrot.slane %v1540, 5
      %v2513 = vsel %vm2090, %v2512, %v2511
      %v2514 = vrot.slane %v1547, 4
      %v2515 = vsel %vm2093, %v2514, %v2513
      %v2516 = vrot.slane %v1554, 3
      %v2517 = vsel %vm2096, %v2516, %v2515
      %v2518 = vrot.slane %v1690, 7
      %v2519 = vsel %vm2084, %v2518, %v1688
      %v2520 = vrot.slane %v1692, 6
      %v2521 = vsel %vm2087, %v2520, %v2519
      %v2522 = vrot.slane %v1694, 5
      %v2523 = vsel %vm2090, %v2522, %v2521
      %v2524 = vrot.slane %v1696, 4
      %v2525 = vsel %vm2093, %v2524, %v2523
      %v2526 = vrot.slane %v1698, 3
      %v2527 = vsel %vm2096, %v2526, %v2525
      %v2528 = vrot.slane %v1786, 7
      %v2529 = vsel %vm2084, %v2528, %v1784
      %v2530 = vrot.slane %v1788, 6
      %v2531 = vsel %vm2087, %v2530, %v2529
      %v2532 = vrot.slane %v1790, 5
      %v2533 = vsel %vm2090, %v2532, %v2531
      %v2534 = vrot.slane %v1792, 4
      %v2535 = vsel %vm2093, %v2534, %v2533
      %v2536 = vrot.slane %v1794, 3
      %v2537 = vsel %vm2096, %v2536, %v2535
      %v2538 = vrot.slane %v1882, 7
      %v2539 = vsel %vm2084, %v2538, %v1880
      %v2540 = vrot.slane %v1884, 6
      %v2541 = vsel %vm2087, %v2540, %v2539
      %v2542 = vrot.slane %v1886, 5
      %v2543 = vsel %vm2090, %v2542, %v2541
      %v2544 = vrot.slane %v1888, 4
      %v2545 = vsel %vm2093, %v2544, %v2543
      %v2546 = vrot.slane %v1890, 3
      %v2547 = vsel %vm2096, %v2546, %v2545
      %v2548 = vrot.slane %v1978, 7
      %v2549 = vsel %vm2084, %v2548, %v1976
      %v2550 = vrot.slane %v1980, 6
      %v2551 = vsel %vm2087, %v2550, %v2549
      %v2552 = vrot.slane %v1982, 5
      %v2553 = vsel %vm2090, %v2552, %v2551
      %v2554 = vrot.slane %v1984, 4
      %v2555 = vsel %vm2093, %v2554, %v2553
      %v2556 = vrot.slane %v1986, 3
      %v2557 = vsel %vm2096, %v2556, %v2555
      %v2558 = vrot.slane %v2074, 7
      %v2559 = vsel %vm2084, %v2558, %v2072
      %v2560 = vrot.slane %v2076, 6
      %v2561 = vsel %vm2087, %v2560, %v2559
      %v2562 = vrot.slane %v2078, 5
      %v2563 = vsel %vm2090, %v2562, %v2561
      %v2564 = vrot.slane %v2080, 4
      %v2565 = vsel %vm2093, %v2564, %v2563
      %v2566 = vrot.slane %v2082, 3
      %v2567 = vsel %vm2096, %v2566, %v2565
      %v2616 = vcombine.low %v2097, %v2117
      %v2617 = vcombine.high %v2097, %v2117
      %v2619 = vunpack.c.l.s4 1983009808
      %v2620 = vunpack.c.0.s8 %v2619
      %v2621 = vlaneseq
      %v2622 = vshrl.u32 %v2621, 7
      %v2623 = vsub.s32 %v2620, %v2622
      %v2624 = vrot.slane %v2616, %v2623
      %v2626 = vunpack.c.l.s4 1983009808
      %v2627 = vunpack.c.0.s8 %v2626
      %v2628 = vlaneseq
      %v2629 = vshrl.u32 %v2628, 7
      %v2630 = vsub.s32 %v2627, %v2629
      %v2631 = vrot.slane %v2617, %v2630
      %v2632 = vcombine.low %v2107, %v2127
      %v2633 = vcombine.high %v2107, %v2127
      %v2635 = vunpack.c.l.s4 1983009808
      %v2636 = vunpack.c.0.s8 %v2635
      %v2637 = vlaneseq
      %v2638 = vshrl.u32 %v2637, 7
      %v2639 = vsub.s32 %v2636, %v2638
      %v2640 = vrot.slane %v2632, %v2639
      %v2642 = vunpack.c.l.s4 1983009808
      %v2643 = vunpack.c.0.s8 %v2642
      %v2644 = vlaneseq
      %v2645 = vshrl.u32 %v2644, 7
      %v2646 = vsub.s32 %v2643, %v2645
      %v2647 = vrot.slane %v2633, %v2646
      %v2649 = vunpack.c.l.s4 1983009808
      %v2650 = vunpack.c.0.s8 %v2649
      %v2651 = vlaneseq
      %v2652 = vshrl.u32 %v2651, 7
      %v2653 = vsub.s32 %v2650, %v2652
      %v2654 = vrot.slane %v2137, %v2653
      %v2655 = vcombine.high %v2137, 0.0
      %v2657 = vunpack.c.l.s4 1983009808
      %v2658 = vunpack.c.0.s8 %v2657
      %v2659 = vlaneseq
      %v2660 = vshrl.u32 %v2659, 7
      %v2661 = vsub.s32 %v2658, %v2660
      %v2662 = vrot.slane %v2147, %v2661
      %v2663 = vcombine.high %v2147, 0.0
      %v2664 = vcombine.low %v2624, %v2640
      %v2665 = vcombine.high %v2624, %v2640
      %v2667 = vunpack.c.l.s4 1934713408
      %v2668 = vunpack.c.0.s8 %v2667
      %v2669 = vlaneseq
      %v2670 = vshrl.u32 %v2669, 7
      %v2671 = vsub.s32 %v2668, %v2670
      %v2672 = vrot.slane %v2664, %v2671
      %v2674 = vunpack.c.l.s4 1934713408
      %v2675 = vunpack.c.0.s8 %v2674
      %v2676 = vlaneseq
      %v2677 = vshrl.u32 %v2676, 7
      %v2678 = vsub.s32 %v2675, %v2677
      %v2679 = vrot.slane %v2665, %v2678
      %v2680 = vcombine.low %v2631, %v2647
      %v2682 = vunpack.c.l.s4 1934713408
      %v2683 = vunpack.c.0.s8 %v2682
      %v2684 = vlaneseq
      %v2685 = vshrl.u32 %v2684, 7
      %v2686 = vsub.s32 %v2683, %v2685
      %v2687 = vrot.slane %v2680, %v2686
      %v2688 = vcombine.low %v2654, %v2662
      %v2689 = vcombine.high %v2654, %v2662
      %v2691 = vunpack.c.l.s4 1934713408
      %v2692 = vunpack.c.0.s8 %v2691
      %v2693 = vlaneseq
      %v2694 = vshrl.u32 %v2693, 7
      %v2695 = vsub.s32 %v2692, %v2694
      %v2696 = vrot.slane %v2688, %v2695
      %v2698 = vunpack.c.l.s4 1934713408
      %v2699 = vunpack.c.0.s8 %v2698
      %v2700 = vlaneseq
      %v2701 = vshrl.u32 %v2700, 7
      %v2702 = vsub.s32 %v2699, %v2701
      %v2703 = vrot.slane %v2689, %v2702
      %v2704 = vcombine.low %v2655, %v2663
      %v2706 = vunpack.c.l.s4 1934713408
      %v2707 = vunpack.c.0.s8 %v2706
      %v2708 = vlaneseq
      %v2709 = vshrl.u32 %v2708, 7
      %v2710 = vsub.s32 %v2707, %v2709
      %v2711 = vrot.slane %v2704, %v2710
      %v2712 = vcombine.low %v2672, %v2696
      %v2713 = vcombine.high %v2672, %v2696
      %v2714 = vcombine.low %v2679, %v2703
      %v2715 = vcombine.high %v2679, %v2703
      %v2716 = vcombine.low %v2687, %v2711
      %v2717 = vcombine.high %v2687, %v2711
      %v2718 = vcombine.low %v2157, %v2177
      %v2719 = vcombine.high %v2157, %v2177
      %v2721 = vunpack.c.l.s4 1983009808
      %v2722 = vunpack.c.0.s8 %v2721
      %v2723 = vlaneseq
      %v2724 = vshrl.u32 %v2723, 7
      %v2725 = vsub.s32 %v2722, %v2724
      %v2726 = vrot.slane %v2718, %v2725
      %v2728 = vunpack.c.l.s4 1983009808
      %v2729 = vunpack.c.0.s8 %v2728
      %v2730 = vlaneseq
      %v2731 = vshrl.u32 %v2730, 7
      %v2732 = vsub.s32 %v2729, %v2731
      %v2733 = vrot.slane %v2719, %v2732
      %v2734 = vcombine.low %v2167, %v2187
      %v2735 = vcombine.high %v2167, %v2187
      %v2737 = vunpack.c.l.s4 1983009808
      %v2738 = vunpack.c.0.s8 %v2737
      %v2739 = vlaneseq
      %v2740 = vshrl.u32 %v2739, 7
      %v2741 = vsub.s32 %v2738, %v2740
      %v2742 = vrot.slane %v2734, %v2741
      %v2744 = vunpack.c.l.s4 1983009808
      %v2745 = vunpack.c.0.s8 %v2744
      %v2746 = vlaneseq
      %v2747 = vshrl.u32 %v2746, 7
      %v2748 = vsub.s32 %v2745, %v2747
      %v2749 = vrot.slane %v2735, %v2748
      %v2751 = vunpack.c.l.s4 1983009808
      %v2752 = vunpack.c.0.s8 %v2751
      %v2753 = vlaneseq
      %v2754 = vshrl.u32 %v2753, 7
      %v2755 = vsub.s32 %v2752, %v2754
      %v2756 = vrot.slane %v2197, %v2755
      %v2757 = vcombine.high %v2197, 0.0
      %v2759 = vunpack.c.l.s4 1983009808
      %v2760 = vunpack.c.0.s8 %v2759
      %v2761 = vlaneseq
      %v2762 = vshrl.u32 %v2761, 7
      %v2763 = vsub.s32 %v2760, %v2762
      %v2764 = vrot.slane %v2207, %v2763
      %v2765 = vcombine.high %v2207, 0.0
      %v2766 = vcombine.low %v2726, %v2742
      %v2767 = vcombine.high %v2726, %v2742
      %v2769 = vunpack.c.l.s4 1934713408
      %v2770 = vunpack.c.0.s8 %v2769
      %v2771 = vlaneseq
      %v2772 = vshrl.u32 %v2771, 7
      %v2773 = vsub.s32 %v2770, %v2772
      %v2774 = vrot.slane %v2766, %v2773
      %v2776 = vunpack.c.l.s4 1934713408
      %v2777 = vunpack.c.0.s8 %v2776
      %v2778 = vlaneseq
      %v2779 = vshrl.u32 %v2778, 7
      %v2780 = vsub.s32 %v2777, %v2779
      %v2781 = vrot.slane %v2767, %v2780
      %v2782 = vcombine.low %v2733, %v2749
      %v2784 = vunpack.c.l.s4 1934713408
      %v2785 = vunpack.c.0.s8 %v2784
      %v2786 = vlaneseq
      %v2787 = vshrl.u32 %v2786, 7
      %v2788 = vsub.s32 %v2785, %v2787
      %v2789 = vrot.slane %v2782, %v2788
      %v2790 = vcombine.low %v2756, %v2764
      %v2791 = vcombine.high %v2756, %v2764
      %v2793 = vunpack.c.l.s4 1934713408
      %v2794 = vunpack.c.0.s8 %v2793
      %v2795 = vlaneseq
      %v2796 = vshrl.u32 %v2795, 7
      %v2797 = vsub.s32 %v2794, %v2796
      %v2798 = vrot.slane %v2790, %v2797
      %v2800 = vunpack.c.l.s4 1934713408
      %v2801 = vunpack.c.0.s8 %v2800
      %v2802 = vlaneseq
      %v2803 = vshrl.u32 %v2802, 7
      %v2804 = vsub.s32 %v2801, %v2803
      %v2805 = vrot.slane %v2791, %v2804
      %v2806 = vcombine.low %v2757, %v2765
      %v2808 = vunpack.c.l.s4 1934713408
      %v2809 = vunpack.c.0.s8 %v2808
      %v2810 = vlaneseq
      %v2811 = vshrl.u32 %v2810, 7
      %v2812 = vsub.s32 %v2809, %v2811
      %v2813 = vrot.slane %v2806, %v2812
      %v2814 = vcombine.low %v2774, %v2798
      %v2815 = vcombine.high %v2774, %v2798
      %v2816 = vcombine.low %v2781, %v2805
      %v2817 = vcombine.high %v2781, %v2805
      %v2818 = vcombine.low %v2789, %v2813
      %v2819 = vcombine.high %v2789, %v2813
      %v2820 = vcombine.low %v2217, %v2237
      %v2821 = vcombine.high %v2217, %v2237
      %v2823 = vunpack.c.l.s4 1983009808
      %v2824 = vunpack.c.0.s8 %v2823
      %v2825 = vlaneseq
      %v2826 = vshrl.u32 %v2825, 7
      %v2827 = vsub.s32 %v2824, %v2826
      %v2828 = vrot.slane %v2820, %v2827
      %v2830 = vunpack.c.l.s4 1983009808
      %v2831 = vunpack.c.0.s8 %v2830
      %v2832 = vlaneseq
      %v2833 = vshrl.u32 %v2832, 7
      %v2834 = vsub.s32 %v2831, %v2833
      %v2835 = vrot.slane %v2821, %v2834
      %v2836 = vcombine.low %v2227, %v2247
      %v2837 = vcombine.high %v2227, %v2247
      %v2839 = vunpack.c.l.s4 1983009808
      %v2840 = vunpack.c.0.s8 %v2839
      %v2841 = vlaneseq
      %v2842 = vshrl.u32 %v2841, 7
      %v2843 = vsub.s32 %v2840, %v2842
      %v2844 = vrot.slane %v2836, %v2843
      %v2846 = vunpack.c.l.s4 1983009808
      %v2847 = vunpack.c.0.s8 %v2846
      %v2848 = vlaneseq
      %v2849 = vshrl.u32 %v2848, 7
      %v2850 = vsub.s32 %v2847, %v2849
      %v2851 = vrot.slane %v2837, %v2850
      %v2853 = vunpack.c.l.s4 1983009808
      %v2854 = vunpack.c.0.s8 %v2853
      %v2855 = vlaneseq
      %v2856 = vshrl.u32 %v2855, 7
      %v2857 = vsub.s32 %v2854, %v2856
      %v2858 = vrot.slane %v2257, %v2857
      %v2859 = vcombine.high %v2257, 0.0
      %v2861 = vunpack.c.l.s4 1983009808
      %v2862 = vunpack.c.0.s8 %v2861
      %v2863 = vlaneseq
      %v2864 = vshrl.u32 %v2863, 7
      %v2865 = vsub.s32 %v2862, %v2864
      %v2866 = vrot.slane %v2267, %v2865
      %v2867 = vcombine.high %v2267, 0.0
      %v2868 = vcombine.low %v2828, %v2844
      %v2869 = vcombine.high %v2828, %v2844
      %v2871 = vunpack.c.l.s4 1934713408
      %v2872 = vunpack.c.0.s8 %v2871
      %v2873 = vlaneseq
      %v2874 = vshrl.u32 %v2873, 7
      %v2875 = vsub.s32 %v2872, %v2874
      %v2876 = vrot.slane %v2868, %v2875
      %v2878 = vunpack.c.l.s4 1934713408
      %v2879 = vunpack.c.0.s8 %v2878
      %v2880 = vlaneseq
      %v2881 = vshrl.u32 %v2880, 7
      %v2882 = vsub.s32 %v2879, %v2881
      %v2883 = vrot.slane %v2869, %v2882
      %v2884 = vcombine.low %v2835, %v2851
      %v2886 = vunpack.c.l.s4 1934713408
      %v2887 = vunpack.c.0.s8 %v2886
      %v2888 = vlaneseq
      %v2889 = vshrl.u32 %v2888, 7
      %v2890 = vsub.s32 %v2887, %v2889
      %v2891 = vrot.slane %v2884, %v2890
      %v2892 = vcombine.low %v2858, %v2866
      %v2893 = vcombine.high %v2858, %v2866
      %v2895 = vunpack.c.l.s4 1934713408
      %v2896 = vunpack.c.0.s8 %v2895
      %v2897 = vlaneseq
      %v2898 = vshrl.u32 %v2897, 7
      %v2899 = vsub.s32 %v2896, %v2898
      %v2900 = vrot.slane %v2892, %v2899
      %v2902 = vunpack.c.l.s4 1934713408
      %v2903 = vunpack.c.0.s8 %v2902
      %v2904 = vlaneseq
      %v2905 = vshrl.u32 %v2904, 7
      %v2906 = vsub.s32 %v2903, %v2905
      %v2907 = vrot.slane %v2893, %v2906
      %v2908 = vcombine.low %v2859, %v2867
      %v2910 = vunpack.c.l.s4 1934713408
      %v2911 = vunpack.c.0.s8 %v2910
      %v2912 = vlaneseq
      %v2913 = vshrl.u32 %v2912, 7
      %v2914 = vsub.s32 %v2911, %v2913
      %v2915 = vrot.slane %v2908, %v2914
      %v2916 = vcombine.low %v2876, %v2900
      %v2917 = vcombine.high %v2876, %v2900
      %v2918 = vcombine.low %v2883, %v2907
      %v2919 = vcombine.high %v2883, %v2907
      %v2920 = vcombine.low %v2891, %v2915
      %v2921 = vcombine.high %v2891, %v2915
      %v2922 = vcombine.low %v2277, %v2297
      %v2923 = vcombine.high %v2277, %v2297
      %v2925 = vunpack.c.l.s4 1983009808
      %v2926 = vunpack.c.0.s8 %v2925
      %v2927 = vlaneseq
      %v2928 = vshrl.u32 %v2927, 7
      %v2929 = vsub.s32 %v2926, %v2928
      %v2930 = vrot.slane %v2922, %v2929
      %v2932 = vunpack.c.l.s4 1983009808
      %v2933 = vunpack.c.0.s8 %v2932
      %v2934 = vlaneseq
      %v2935 = vshrl.u32 %v2934, 7
      %v2936 = vsub.s32 %v2933, %v2935
      %v2937 = vrot.slane %v2923, %v2936
      %v2938 = vcombine.low %v2287, %v2307
      %v2939 = vcombine.high %v2287, %v2307
      %v2941 = vunpack.c.l.s4 1983009808
      %v2942 = vunpack.c.0.s8 %v2941
      %v2943 = vlaneseq
      %v2944 = vshrl.u32 %v2943, 7
      %v2945 = vsub.s32 %v2942, %v2944
      %v2946 = vrot.slane %v2938, %v2945
      %v2948 = vunpack.c.l.s4 1983009808
      %v2949 = vunpack.c.0.s8 %v2948
      %v2950 = vlaneseq
      %v2951 = vshrl.u32 %v2950, 7
      %v2952 = vsub.s32 %v2949, %v2951
      %v2953 = vrot.slane %v2939, %v2952
      %v2955 = vunpack.c.l.s4 1983009808
      %v2956 = vunpack.c.0.s8 %v2955
      %v2957 = vlaneseq
      %v2958 = vshrl.u32 %v2957, 7
      %v2959 = vsub.s32 %v2956, %v2958
      %v2960 = vrot.slane %v2317, %v2959
      %v2961 = vcombine.high %v2317, 0.0
      %v2963 = vunpack.c.l.s4 1983009808
      %v2964 = vunpack.c.0.s8 %v2963
      %v2965 = vlaneseq
      %v2966 = vshrl.u32 %v2965, 7
      %v2967 = vsub.s32 %v2964, %v2966
      %v2968 = vrot.slane %v2327, %v2967
      %v2969 = vcombine.high %v2327, 0.0
      %v2970 = vcombine.low %v2930, %v2946
      %v2971 = vcombine.high %v2930, %v2946
      %v2973 = vunpack.c.l.s4 1934713408
      %v2974 = vunpack.c.0.s8 %v2973
      %v2975 = vlaneseq
      %v2976 = vshrl.u32 %v2975, 7
      %v2977 = vsub.s32 %v2974, %v2976
      %v2978 = vrot.slane %v2970, %v2977
      %v2980 = vunpack.c.l.s4 1934713408
      %v2981 = vunpack.c.0.s8 %v2980
      %v2982 = vlaneseq
      %v2983 = vshrl.u32 %v2982, 7
      %v2984 = vsub.s32 %v2981, %v2983
      %v2985 = vrot.slane %v2971, %v2984
      %v2986 = vcombine.low %v2937, %v2953
      %v2988 = vunpack.c.l.s4 1934713408
      %v2989 = vunpack.c.0.s8 %v2988
      %v2990 = vlaneseq
      %v2991 = vshrl.u32 %v2990, 7
      %v2992 = vsub.s32 %v2989, %v2991
      %v2993 = vrot.slane %v2986, %v2992
      %v2994 = vcombine.low %v2960, %v2968
      %v2995 = vcombine.high %v2960, %v2968
      %v2997 = vunpack.c.l.s4 1934713408
      %v2998 = vunpack.c.0.s8 %v2997
      %v2999 = vlaneseq
      %v3000 = vshrl.u32 %v2999, 7
      %v3001 = vsub.s32 %v2998, %v3000
      %v3002 = vrot.slane %v2994, %v3001
      %v3004 = vunpack.c.l.s4 1934713408
      %v3005 = vunpack.c.0.s8 %v3004
      %v3006 = vlaneseq
      %v3007 = vshrl.u32 %v3006, 7
      %v3008 = vsub.s32 %v3005, %v3007
      %v3009 = vrot.slane %v2995, %v3008
      %v3010 = vcombine.low %v2961, %v2969
      %v3012 = vunpack.c.l.s4 1934713408
      %v3013 = vunpack.c.0.s8 %v3012
      %v3014 = vlaneseq
      %v3015 = vshrl.u32 %v3014, 7
      %v3016 = vsub.s32 %v3013, %v3015
      %v3017 = vrot.slane %v3010, %v3016
      %v3018 = vcombine.low %v2978, %v3002
      %v3019 = vcombine.high %v2978, %v3002
      %v3020 = vcombine.low %v2985, %v3009
      %v3021 = vcombine.high %v2985, %v3009
      %v3022 = vcombine.low %v2993, %v3017
      %v3023 = vcombine.high %v2993, %v3017
      %v3024 = vcombine.low %v2337, %v2357
      %v3025 = vcombine.high %v2337, %v2357
      %v3027 = vunpack.c.l.s4 1983009808
      %v3028 = vunpack.c.0.s8 %v3027
      %v3029 = vlaneseq
      %v3030 = vshrl.u32 %v3029, 7
      %v3031 = vsub.s32 %v3028, %v3030
      %v3032 = vrot.slane %v3024, %v3031
      %v3034 = vunpack.c.l.s4 1983009808
      %v3035 = vunpack.c.0.s8 %v3034
      %v3036 = vlaneseq
      %v3037 = vshrl.u32 %v3036, 7
      %v3038 = vsub.s32 %v3035, %v3037
      %v3039 = vrot.slane %v3025, %v3038
      %v3040 = vcombine.low %v2347, %v2367
      %v3041 = vcombine.high %v2347, %v2367
      %v3043 = vunpack.c.l.s4 1983009808
      %v3044 = vunpack.c.0.s8 %v3043
      %v3045 = vlaneseq
      %v3046 = vshrl.u32 %v3045, 7
      %v3047 = vsub.s32 %v3044, %v3046
      %v3048 = vrot.slane %v3040, %v3047
      %v3050 = vunpack.c.l.s4 1983009808
      %v3051 = vunpack.c.0.s8 %v3050
      %v3052 = vlaneseq
      %v3053 = vshrl.u32 %v3052, 7
      %v3054 = vsub.s32 %v3051, %v3053
      %v3055 = vrot.slane %v3041, %v3054
      %v3057 = vunpack.c.l.s4 1983009808
      %v3058 = vunpack.c.0.s8 %v3057
      %v3059 = vlaneseq
      %v3060 = vshrl.u32 %v3059, 7
      %v3061 = vsub.s32 %v3058, %v3060
      %v3062 = vrot.slane %v2377, %v3061
      %v3063 = vcombine.high %v2377, 0.0
      %v3065 = vunpack.c.l.s4 1983009808
      %v3066 = vunpack.c.0.s8 %v3065
      %v3067 = vlaneseq
      %v3068 = vshrl.u32 %v3067, 7
      %v3069 = vsub.s32 %v3066, %v3068
      %v3070 = vrot.slane %v2387, %v3069
      %v3071 = vcombine.high %v2387, 0.0
      %v3072 = vcombine.low %v3032, %v3048
      %v3073 = vcombine.high %v3032, %v3048
      %v3075 = vunpack.c.l.s4 1934713408
      %v3076 = vunpack.c.0.s8 %v3075
      %v3077 = vlaneseq
      %v3078 = vshrl.u32 %v3077, 7
      %v3079 = vsub.s32 %v3076, %v3078
      %v3080 = vrot.slane %v3072, %v3079
      %v3082 = vunpack.c.l.s4 1934713408
      %v3083 = vunpack.c.0.s8 %v3082
      %v3084 = vlaneseq
      %v3085 = vshrl.u32 %v3084, 7
      %v3086 = vsub.s32 %v3083, %v3085
      %v3087 = vrot.slane %v3073, %v3086
      %v3088 = vcombine.low %v3039, %v3055
      %v3090 = vunpack.c.l.s4 1934713408
      %v3091 = vunpack.c.0.s8 %v3090
      %v3092 = vlaneseq
      %v3093 = vshrl.u32 %v3092, 7
      %v3094 = vsub.s32 %v3091, %v3093
      %v3095 = vrot.slane %v3088, %v3094
      %v3096 = vcombine.low %v3062, %v3070
      %v3097 = vcombine.high %v3062, %v3070
      %v3099 = vunpack.c.l.s4 1934713408
      %v3100 = vunpack.c.0.s8 %v3099
      %v3101 = vlaneseq
      %v3102 = vshrl.u32 %v3101, 7
      %v3103 = vsub.s32 %v3100, %v3102
      %v3104 = vrot.slane %v3096, %v3103
      %v3106 = vunpack.c.l.s4 1934713408
      %v3107 = vunpack.c.0.s8 %v3106
      %v3108 = vlaneseq
      %v3109 = vshrl.u32 %v3108, 7
      %v3110 = vsub.s32 %v3107, %v3109
      %v3111 = vrot.slane %v3097, %v3110
      %v3112 = vcombine.low %v3063, %v3071
      %v3114 = vunpack.c.l.s4 1934713408
      %v3115 = vunpack.c.0.s8 %v3114
      %v3116 = vlaneseq
      %v3117 = vshrl.u32 %v3116, 7
      %v3118 = vsub.s32 %v3115, %v3117
      %v3119 = vrot.slane %v3112, %v3118
      %v3120 = vcombine.low %v3080, %v3104
      %v3121 = vcombine.high %v3080, %v3104
      %v3122 = vcombine.low %v3087, %v3111
      %v3123 = vcombine.high %v3087, %v3111
      %v3124 = vcombine.low %v3095, %v3119
      %v3125 = vcombine.high %v3095, %v3119
      %v3126 = vcombine.low %v2397, %v2417
      %v3127 = vcombine.high %v2397, %v2417
      %v3129 = vunpack.c.l.s4 1983009808
      %v3130 = vunpack.c.0.s8 %v3129
      %v3131 = vlaneseq
      %v3132 = vshrl.u32 %v3131, 7
      %v3133 = vsub.s32 %v3130, %v3132
      %v3134 = vrot.slane %v3126, %v3133
      %v3136 = vunpack.c.l.s4 1983009808
      %v3137 = vunpack.c.0.s8 %v3136
      %v3138 = vlaneseq
      %v3139 = vshrl.u32 %v3138, 7
      %v3140 = vsub.s32 %v3137, %v3139
      %v3141 = vrot.slane %v3127, %v3140
      %v3142 = vcombine.low %v2407, %v2427
      %v3143 = vcombine.high %v2407, %v2427
      %v3145 = vunpack.c.l.s4 1983009808
      %v3146 = vunpack.c.0.s8 %v3145
      %v3147 = vlaneseq
      %v3148 = vshrl.u32 %v3147, 7
      %v3149 = vsub.s32 %v3146, %v3148
      %v3150 = vrot.slane %v3142, %v3149
      %v3152 = vunpack.c.l.s4 1983009808
      %v3153 = vunpack.c.0.s8 %v3152
      %v3154 = vlaneseq
      %v3155 = vshrl.u32 %v3154, 7
      %v3156 = vsub.s32 %v3153, %v3155
      %v3157 = vrot.slane %v3143, %v3156
      %v3159 = vunpack.c.l.s4 1983009808
      %v3160 = vunpack.c.0.s8 %v3159
      %v3161 = vlaneseq
      %v3162 = vshrl.u32 %v3161, 7
      %v3163 = vsub.s32 %v3160, %v3162
      %v3164 = vrot.slane %v2437, %v3163
      %v3165 = vcombine.high %v2437, 0.0
      %v3167 = vunpack.c.l.s4 1983009808
      %v3168 = vunpack.c.0.s8 %v3167
      %v3169 = vlaneseq
      %v3170 = vshrl.u32 %v3169, 7
      %v3171 = vsub.s32 %v3168, %v3170
      %v3172 = vrot.slane %v2447, %v3171
      %v3173 = vcombine.high %v2447, 0.0
      %v3174 = vcombine.low %v3134, %v3150
      %v3175 = vcombine.high %v3134, %v3150
      %v3177 = vunpack.c.l.s4 1934713408
      %v3178 = vunpack.c.0.s8 %v3177
      %v3179 = vlaneseq
      %v3180 = vshrl.u32 %v3179, 7
      %v3181 = vsub.s32 %v3178, %v3180
      %v3182 = vrot.slane %v3174, %v3181
      %v3184 = vunpack.c.l.s4 1934713408
      %v3185 = vunpack.c.0.s8 %v3184
      %v3186 = vlaneseq
      %v3187 = vshrl.u32 %v3186, 7
      %v3188 = vsub.s32 %v3185, %v3187
      %v3189 = vrot.slane %v3175, %v3188
      %v3190 = vcombine.low %v3141, %v3157
      %v3192 = vunpack.c.l.s4 1934713408
      %v3193 = vunpack.c.0.s8 %v3192
      %v3194 = vlaneseq
      %v3195 = vshrl.u32 %v3194, 7
      %v3196 = vsub.s32 %v3193, %v3195
      %v3197 = vrot.slane %v3190, %v3196
      %v3198 = vcombine.low %v3164, %v3172
      %v3199 = vcombine.high %v3164, %v3172
      %v3201 = vunpack.c.l.s4 1934713408
      %v3202 = vunpack.c.0.s8 %v3201
      %v3203 = vlaneseq
      %v3204 = vshrl.u32 %v3203, 7
      %v3205 = vsub.s32 %v3202, %v3204
      %v3206 = vrot.slane %v3198, %v3205
      %v3208 = vunpack.c.l.s4 1934713408
      %v3209 = vunpack.c.0.s8 %v3208
      %v3210 = vlaneseq
      %v3211 = vshrl.u32 %v3210, 7
      %v3212 = vsub.s32 %v3209, %v3211
      %v3213 = vrot.slane %v3199, %v3212
      %v3214 = vcombine.low %v3165, %v3173
      %v3216 = vunpack.c.l.s4 1934713408
      %v3217 = vunpack.c.0.s8 %v3216
      %v3218 = vlaneseq
      %v3219 = vshrl.u32 %v3218, 7
      %v3220 = vsub.s32 %v3217, %v3219
      %v3221 = vrot.slane %v3214, %v3220
      %v3222 = vcombine.low %v3182, %v3206
      %v3223 = vcombine.high %v3182, %v3206
      %v3224 = vcombine.low %v3189, %v3213
      %v3225 = vcombine.high %v3189, %v3213
      %v3226 = vcombine.low %v3197, %v3221
      %v3227 = vcombine.high %v3197, %v3221
      %v3228 = vcombine.low %v2457, %v2477
      %v3229 = vcombine.high %v2457, %v2477
      %v3231 = vunpack.c.l.s4 1983009808
      %v3232 = vunpack.c.0.s8 %v3231
      %v3233 = vlaneseq
      %v3234 = vshrl.u32 %v3233, 7
      %v3235 = vsub.s32 %v3232, %v3234
      %v3236 = vrot.slane %v3228, %v3235
      %v3238 = vunpack.c.l.s4 1983009808
      %v3239 = vunpack.c.0.s8 %v3238
      %v3240 = vlaneseq
      %v3241 = vshrl.u32 %v3240, 7
      %v3242 = vsub.s32 %v3239, %v3241
      %v3243 = vrot.slane %v3229, %v3242
      %v3244 = vcombine.low %v2467, %v2487
      %v3245 = vcombine.high %v2467, %v2487
      %v3247 = vunpack.c.l.s4 1983009808
      %v3248 = vunpack.c.0.s8 %v3247
      %v3249 = vlaneseq
      %v3250 = vshrl.u32 %v3249, 7
      %v3251 = vsub.s32 %v3248, %v3250
      %v3252 = vrot.slane %v3244, %v3251
      %v3254 = vunpack.c.l.s4 1983009808
      %v3255 = vunpack.c.0.s8 %v3254
      %v3256 = vlaneseq
      %v3257 = vshrl.u32 %v3256, 7
      %v3258 = vsub.s32 %v3255, %v3257
      %v3259 = vrot.slane %v3245, %v3258
      %v3261 = vunpack.c.l.s4 1983009808
      %v3262 = vunpack.c.0.s8 %v3261
      %v3263 = vlaneseq
      %v3264 = vshrl.u32 %v3263, 7
      %v3265 = vsub.s32 %v3262, %v3264
      %v3266 = vrot.slane %v2497, %v3265
      %v3267 = vcombine.high %v2497, 0.0
      %v3269 = vunpack.c.l.s4 1983009808
      %v3270 = vunpack.c.0.s8 %v3269
      %v3271 = vlaneseq
      %v3272 = vshrl.u32 %v3271, 7
      %v3273 = vsub.s32 %v3270, %v3272
      %v3274 = vrot.slane %v2507, %v3273
      %v3275 = vcombine.high %v2507, 0.0
      %v3276 = vcombine.low %v3236, %v3252
      %v3277 = vcombine.high %v3236, %v3252
      %v3279 = vunpack.c.l.s4 1934713408
      %v3280 = vunpack.c.0.s8 %v3279
      %v3281 = vlaneseq
      %v3282 = vshrl.u32 %v3281, 7
      %v3283 = vsub.s32 %v3280, %v3282
      %v3284 = vrot.slane %v3276, %v3283
      %v3286 = vunpack.c.l.s4 1934713408
      %v3287 = vunpack.c.0.s8 %v3286
      %v3288 = vlaneseq
      %v3289 = vshrl.u32 %v3288, 7
      %v3290 = vsub.s32 %v3287, %v3289
      %v3291 = vrot.slane %v3277, %v3290
      %v3292 = vcombine.low %v3243, %v3259
      %v3294 = vunpack.c.l.s4 1934713408
      %v3295 = vunpack.c.0.s8 %v3294
      %v3296 = vlaneseq
      %v3297 = vshrl.u32 %v3296, 7
      %v3298 = vsub.s32 %v3295, %v3297
      %v3299 = vrot.slane %v3292, %v3298
      %v3300 = vcombine.low %v3266, %v3274
      %v3301 = vcombine.high %v3266, %v3274
      %v3303 = vunpack.c.l.s4 1934713408
      %v3304 = vunpack.c.0.s8 %v3303
      %v3305 = vlaneseq
      %v3306 = vshrl.u32 %v3305, 7
      %v3307 = vsub.s32 %v3304, %v3306
      %v3308 = vrot.slane %v3300, %v3307
      %v3310 = vunpack.c.l.s4 1934713408
      %v3311 = vunpack.c.0.s8 %v3310
      %v3312 = vlaneseq
      %v3313 = vshrl.u32 %v3312, 7
      %v3314 = vsub.s32 %v3311, %v3313
      %v3315 = vrot.slane %v3301, %v3314
      %v3316 = vcombine.low %v3267, %v3275
      %v3318 = vunpack.c.l.s4 1934713408
      %v3319 = vunpack.c.0.s8 %v3318
      %v3320 = vlaneseq
      %v3321 = vshrl.u32 %v3320, 7
      %v3322 = vsub.s32 %v3319, %v3321
      %v3323 = vrot.slane %v3316, %v3322
      %v3324 = vcombine.low %v3284, %v3308
      %v3325 = vcombine.high %v3284, %v3308
      %v3326 = vcombine.low %v3291, %v3315
      %v3327 = vcombine.high %v3291, %v3315
      %v3328 = vcombine.low %v3299, %v3323
      %v3329 = vcombine.high %v3299, %v3323
      %v3330 = vcombine.low %v2517, %v2537
      %v3331 = vcombine.high %v2517, %v2537
      %v3333 = vunpack.c.l.s4 1983009808
      %v3334 = vunpack.c.0.s8 %v3333
      %v3335 = vlaneseq
      %v3336 = vshrl.u32 %v3335, 7
      %v3337 = vsub.s32 %v3334, %v3336
      %v3338 = vrot.slane %v3330, %v3337
      %v3340 = vunpack.c.l.s4 1983009808
      %v3341 = vunpack.c.0.s8 %v3340
      %v3342 = vlaneseq
      %v3343 = vshrl.u32 %v3342, 7
      %v3344 = vsub.s32 %v3341, %v3343
      %v3345 = vrot.slane %v3331, %v3344
      %v3346 = vcombine.low %v2527, %v2547
      %v3347 = vcombine.high %v2527, %v2547
      %v3349 = vunpack.c.l.s4 1983009808
      %v3350 = vunpack.c.0.s8 %v3349
      %v3351 = vlaneseq
      %v3352 = vshrl.u32 %v3351, 7
      %v3353 = vsub.s32 %v3350, %v3352
      %v3354 = vrot.slane %v3346, %v3353
      %v3356 = vunpack.c.l.s4 1983009808
      %v3357 = vunpack.c.0.s8 %v3356
      %v3358 = vlaneseq
      %v3359 = vshrl.u32 %v3358, 7
      %v3360 = vsub.s32 %v3357, %v3359
      %v3361 = vrot.slane %v3347, %v3360
      %v3363 = vunpack.c.l.s4 1983009808
      %v3364 = vunpack.c.0.s8 %v3363
      %v3365 = vlaneseq
      %v3366 = vshrl.u32 %v3365, 7
      %v3367 = vsub.s32 %v3364, %v3366
      %v3368 = vrot.slane %v2557, %v3367
      %v3369 = vcombine.high %v2557, 0.0
      %v3371 = vunpack.c.l.s4 1983009808
      %v3372 = vunpack.c.0.s8 %v3371
      %v3373 = vlaneseq
      %v3374 = vshrl.u32 %v3373, 7
      %v3375 = vsub.s32 %v3372, %v3374
      %v3376 = vrot.slane %v2567, %v3375
      %v3377 = vcombine.high %v2567, 0.0
      %v3378 = vcombine.low %v3338, %v3354
      %v3379 = vcombine.high %v3338, %v3354
      %v3381 = vunpack.c.l.s4 1934713408
      %v3382 = vunpack.c.0.s8 %v3381
      %v3383 = vlaneseq
      %v3384 = vshrl.u32 %v3383, 7
      %v3385 = vsub.s32 %v3382, %v3384
      %v3386 = vrot.slane %v3378, %v3385
      %v3388 = vunpack.c.l.s4 1934713408
      %v3389 = vunpack.c.0.s8 %v3388
      %v3390 = vlaneseq
      %v3391 = vshrl.u32 %v3390, 7
      %v3392 = vsub.s32 %v3389, %v3391
      %v3393 = vrot.slane %v3379, %v3392
      %v3394 = vcombine.low %v3345, %v3361
      %v3396 = vunpack.c.l.s4 1934713408
      %v3397 = vunpack.c.0.s8 %v3396
      %v3398 = vlaneseq
      %v3399 = vshrl.u32 %v3398, 7
      %v3400 = vsub.s32 %v3397, %v3399
      %v3401 = vrot.slane %v3394, %v3400
      %v3402 = vcombine.low %v3368, %v3376
      %v3403 = vcombine.high %v3368, %v3376
      %v3405 = vunpack.c.l.s4 1934713408
      %v3406 = vunpack.c.0.s8 %v3405
      %v3407 = vlaneseq
      %v3408 = vshrl.u32 %v3407, 7
      %v3409 = vsub.s32 %v3406, %v3408
      %v3410 = vrot.slane %v3402, %v3409
      %v3412 = vunpack.c.l.s4 1934713408
      %v3413 = vunpack.c.0.s8 %v3412
      %v3414 = vlaneseq
      %v3415 = vshrl.u32 %v3414, 7
      %v3416 = vsub.s32 %v3413, %v3415
      %v3417 = vrot.slane %v3403, %v3416
      %v3418 = vcombine.low %v3369, %v3377
      %v3420 = vunpack.c.l.s4 1934713408
      %v3421 = vunpack.c.0.s8 %v3420
      %v3422 = vlaneseq
      %v3423 = vshrl.u32 %v3422, 7
      %v3424 = vsub.s32 %v3421, %v3423
      %v3425 = vrot.slane %v3418, %v3424
      %v3426 = vcombine.low %v3386, %v3410
      %v3427 = vcombine.high %v3386, %v3410
      %v3428 = vcombine.low %v3393, %v3417
      %v3429 = vcombine.high %v3393, %v3417
      %v3430 = vcombine.low %v3401, %v3425
      %v3431 = vcombine.high %v3401, %v3425
      %vm3432 = vcmask 13312
      %v3433 = vsel %vm3432, %v2712, -inf
      %3434 = vmax.xlane.f32.xlu0 %v3433
      %v3435 = vpop.xlane.xlu0 %3434
      %v3436 = vsel %vm3432, %v2713, -inf
      %3437 = vmax.xlane.f32.xlu0 %v3436
      %v3438 = vpop.xlane.xlu0 %3437
      %v3439 = vsel %vm3432, %v2714, -inf
      %3440 = vmax.xlane.f32.xlu0 %v3439
      %v3441 = vpop.xlane.xlu0 %3440
      %v3442 = vsel %vm3432, %v2715, -inf
      %3443 = vmax.xlane.f32.xlu0 %v3442
      %v3444 = vpop.xlane.xlu0 %3443
      %v3445 = vsel %vm3432, %v2716, -inf
      %3446 = vmax.xlane.f32.xlu0 %v3445
      %v3447 = vpop.xlane.xlu0 %3446
      %v3448 = vsel %vm3432, %v2717, -inf
      %3449 = vmax.xlane.f32.xlu0 %v3448
      %v3450 = vpop.xlane.xlu0 %3449
      %v3451 = vsel %vm3432, %v2814, -inf
      %3452 = vmax.xlane.f32.xlu0 %v3451
      %v3453 = vpop.xlane.xlu0 %3452
      %v3454 = vsel %vm3432, %v2815, -inf
      %3455 = vmax.xlane.f32.xlu0 %v3454
      %v3456 = vpop.xlane.xlu0 %3455
      %v3457 = vsel %vm3432, %v2816, -inf
      %3458 = vmax.xlane.f32.xlu0 %v3457
      %v3459 = vpop.xlane.xlu0 %3458
      %v3460 = vsel %vm3432, %v2817, -inf
      %3461 = vmax.xlane.f32.xlu0 %v3460
      %v3462 = vpop.xlane.xlu0 %3461
      %v3463 = vsel %vm3432, %v2818, -inf
      %3464 = vmax.xlane.f32.xlu0 %v3463
      %v3465 = vpop.xlane.xlu0 %3464
      %v3466 = vsel %vm3432, %v2819, -inf
      %3467 = vmax.xlane.f32.xlu0 %v3466
      %v3468 = vpop.xlane.xlu0 %3467
      %v3469 = vsel %vm3432, %v2916, -inf
      %3470 = vmax.xlane.f32.xlu0 %v3469
      %v3471 = vpop.xlane.xlu0 %3470
      %v3472 = vsel %vm3432, %v2917, -inf
      %3473 = vmax.xlane.f32.xlu0 %v3472
      %v3474 = vpop.xlane.xlu0 %3473
      %v3475 = vsel %vm3432, %v2918, -inf
      %3476 = vmax.xlane.f32.xlu0 %v3475
      %v3477 = vpop.xlane.xlu0 %3476
      %v3478 = vsel %vm3432, %v2919, -inf
      %3479 = vmax.xlane.f32.xlu0 %v3478
      %v3480 = vpop.xlane.xlu0 %3479
      %v3481 = vsel %vm3432, %v2920, -inf
      %3482 = vmax.xlane.f32.xlu0 %v3481
      %v3483 = vpop.xlane.xlu0 %3482
      %v3484 = vsel %vm3432, %v2921, -inf
      %3485 = vmax.xlane.f32.xlu0 %v3484
      %v3486 = vpop.xlane.xlu0 %3485
      %v3487 = vsel %vm3432, %v3018, -inf
      %3488 = vmax.xlane.f32.xlu0 %v3487
      %v3489 = vpop.xlane.xlu0 %3488
      %v3490 = vsel %vm3432, %v3019, -inf
      %3491 = vmax.xlane.f32.xlu0 %v3490
      %v3492 = vpop.xlane.xlu0 %3491
      %v3493 = vsel %vm3432, %v3020, -inf
      %3494 = vmax.xlane.f32.xlu0 %v3493
      %v3495 = vpop.xlane.xlu0 %3494
      %v3496 = vsel %vm3432, %v3021, -inf
      %3497 = vmax.xlane.f32.xlu0 %v3496
      %v3498 = vpop.xlane.xlu0 %3497
      %v3499 = vsel %vm3432, %v3022, -inf
      %3500 = vmax.xlane.f32.xlu0 %v3499
      %v3501 = vpop.xlane.xlu0 %3500
      %v3502 = vsel %vm3432, %v3023, -inf
      %3503 = vmax.xlane.f32.xlu0 %v3502
      %v3504 = vpop.xlane.xlu0 %3503
      %v3505 = vsel %vm3432, %v3120, -inf
      %3506 = vmax.xlane.f32.xlu0 %v3505
      %v3507 = vpop.xlane.xlu0 %3506
      %v3508 = vsel %vm3432, %v3121, -inf
      %3509 = vmax.xlane.f32.xlu0 %v3508
      %v3510 = vpop.xlane.xlu0 %3509
      %v3511 = vsel %vm3432, %v3122, -inf
      %3512 = vmax.xlane.f32.xlu0 %v3511
      %v3513 = vpop.xlane.xlu0 %3512
      %v3514 = vsel %vm3432, %v3123, -inf
      %3515 = vmax.xlane.f32.xlu0 %v3514
      %v3516 = vpop.xlane.xlu0 %3515
      %v3517 = vsel %vm3432, %v3124, -inf
      %3518 = vmax.xlane.f32.xlu0 %v3517
      %v3519 = vpop.xlane.xlu0 %3518
      %v3520 = vsel %vm3432, %v3125, -inf
      %3521 = vmax.xlane.f32.xlu0 %v3520
      %v3522 = vpop.xlane.xlu0 %3521
      %v3523 = vsel %vm3432, %v3222, -inf
      %3524 = vmax.xlane.f32.xlu0 %v3523
      %v3525 = vpop.xlane.xlu0 %3524
      %v3526 = vsel %vm3432, %v3223, -inf
      %3527 = vmax.xlane.f32.xlu0 %v3526
      %v3528 = vpop.xlane.xlu0 %3527
      %v3529 = vsel %vm3432, %v3224, -inf
      %3530 = vmax.xlane.f32.xlu0 %v3529
      %v3531 = vpop.xlane.xlu0 %3530
      %v3532 = vsel %vm3432, %v3225, -inf
      %3533 = vmax.xlane.f32.xlu0 %v3532
      %v3534 = vpop.xlane.xlu0 %3533
      %v3535 = vsel %vm3432, %v3226, -inf
      %3536 = vmax.xlane.f32.xlu0 %v3535
      %v3537 = vpop.xlane.xlu0 %3536
      %v3538 = vsel %vm3432, %v3227, -inf
      %3539 = vmax.xlane.f32.xlu0 %v3538
      %v3540 = vpop.xlane.xlu0 %3539
      %v3541 = vsel %vm3432, %v3324, -inf
      %3542 = vmax.xlane.f32.xlu0 %v3541
      %v3543 = vpop.xlane.xlu0 %3542
      %v3544 = vsel %vm3432, %v3325, -inf
      %3545 = vmax.xlane.f32.xlu0 %v3544
      %v3546 = vpop.xlane.xlu0 %3545
      %v3547 = vsel %vm3432, %v3326, -inf
      %3548 = vmax.xlane.f32.xlu0 %v3547
      %v3549 = vpop.xlane.xlu0 %3548
      %v3550 = vsel %vm3432, %v3327, -inf
      %3551 = vmax.xlane.f32.xlu0 %v3550
      %v3552 = vpop.xlane.xlu0 %3551
      %v3553 = vsel %vm3432, %v3328, -inf
      %3554 = vmax.xlane.f32.xlu0 %v3553
      %v3555 = vpop.xlane.xlu0 %3554
      %v3556 = vsel %vm3432, %v3329, -inf
      %3557 = vmax.xlane.f32.xlu0 %v3556
      %v3558 = vpop.xlane.xlu0 %3557
      %v3559 = vsel %vm3432, %v3426, -inf
      %3560 = vmax.xlane.f32.xlu0 %v3559
      %v3561 = vpop.xlane.xlu0 %3560
      %v3562 = vsel %vm3432, %v3427, -inf
      %3563 = vmax.xlane.f32.xlu0 %v3562
      %v3564 = vpop.xlane.xlu0 %3563
      %v3565 = vsel %vm3432, %v3428, -inf
      %3566 = vmax.xlane.f32.xlu0 %v3565
      %v3567 = vpop.xlane.xlu0 %3566
      %v3568 = vsel %vm3432, %v3429, -inf
      %3569 = vmax.xlane.f32.xlu0 %v3568
      %v3570 = vpop.xlane.xlu0 %3569
      %v3571 = vsel %vm3432, %v3430, -inf
      %3572 = vmax.xlane.f32.xlu0 %v3571
      %v3573 = vpop.xlane.xlu0 %3572
      %v3574 = vsel %vm3432, %v3431, -inf
      %3575 = vmax.xlane.f32.xlu0 %v3574
      %v3576 = vpop.xlane.xlu0 %3575
      %v3626 = vunpack.c.l.s4 269488144
      %v3627 = vunpack.c.0.s8 %v3626
      %v3628 = vlaneseq
      %v3629 = vshrl.u32 %v3628, 7
      %v3630 = vsub.s32 %v3627, %v3629
      %v3631 = vrot.slane %v3435, %v3630
      %v3633 = vunpack.c.l.s4 842150450
      %v3634 = vunpack.c.0.s8 %v3633
      %v3635 = vlaneseq
      %v3636 = vshrl.u32 %v3635, 7
      %v3637 = vsub.s32 %v3634, %v3636
      %v3638 = vrot.slane %v3435, %v3637
      %v3640 = vunpack.c.l.s4 1414812756
      %v3641 = vunpack.c.0.s8 %v3640
      %v3642 = vlaneseq
      %v3643 = vshrl.u32 %v3642, 7
      %v3644 = vsub.s32 %v3641, %v3643
      %v3645 = vrot.slane %v3435, %v3644
      %v3647 = vunpack.c.l.s4 269488144
      %v3648 = vunpack.c.0.s8 %v3647
      %v3649 = vlaneseq
      %v3650 = vshrl.u32 %v3649, 7
      %v3651 = vsub.s32 %v3648, %v3650
      %v3652 = vrot.slane %v3438, %v3651
      %v3654 = vunpack.c.l.s4 842150450
      %v3655 = vunpack.c.0.s8 %v3654
      %v3656 = vlaneseq
      %v3657 = vshrl.u32 %v3656, 7
      %v3658 = vsub.s32 %v3655, %v3657
      %v3659 = vrot.slane %v3438, %v3658
      %v3661 = vunpack.c.l.s4 1414812756
      %v3662 = vunpack.c.0.s8 %v3661
      %v3663 = vlaneseq
      %v3664 = vshrl.u32 %v3663, 7
      %v3665 = vsub.s32 %v3662, %v3664
      %v3666 = vrot.slane %v3438, %v3665
      %v3668 = vunpack.c.l.s4 269488144
      %v3669 = vunpack.c.0.s8 %v3668
      %v3670 = vlaneseq
      %v3671 = vshrl.u32 %v3670, 7
      %v3672 = vsub.s32 %v3669, %v3671
      %v3673 = vrot.slane %v3441, %v3672
      %v3675 = vunpack.c.l.s4 842150450
      %v3676 = vunpack.c.0.s8 %v3675
      %v3677 = vlaneseq
      %v3678 = vshrl.u32 %v3677, 7
      %v3679 = vsub.s32 %v3676, %v3678
      %v3680 = vrot.slane %v3441, %v3679
      %v3682 = vunpack.c.l.s4 1414812756
      %v3683 = vunpack.c.0.s8 %v3682
      %v3684 = vlaneseq
      %v3685 = vshrl.u32 %v3684, 7
      %v3686 = vsub.s32 %v3683, %v3685
      %v3687 = vrot.slane %v3441, %v3686
      %v3689 = vunpack.c.l.s4 269488144
      %v3690 = vunpack.c.0.s8 %v3689
      %v3691 = vlaneseq
      %v3692 = vshrl.u32 %v3691, 7
      %v3693 = vsub.s32 %v3690, %v3692
      %v3694 = vrot.slane %v3444, %v3693
      %v3696 = vunpack.c.l.s4 842150450
      %v3697 = vunpack.c.0.s8 %v3696
      %v3698 = vlaneseq
      %v3699 = vshrl.u32 %v3698, 7
      %v3700 = vsub.s32 %v3697, %v3699
      %v3701 = vrot.slane %v3444, %v3700
      %v3703 = vunpack.c.l.s4 1414812756
      %v3704 = vunpack.c.0.s8 %v3703
      %v3705 = vlaneseq
      %v3706 = vshrl.u32 %v3705, 7
      %v3707 = vsub.s32 %v3704, %v3706
      %v3708 = vrot.slane %v3444, %v3707
      %v3710 = vunpack.c.l.s4 269488144
      %v3711 = vunpack.c.0.s8 %v3710
      %v3712 = vlaneseq
      %v3713 = vshrl.u32 %v3712, 7
      %v3714 = vsub.s32 %v3711, %v3713
      %v3715 = vrot.slane %v3447, %v3714
      %v3717 = vunpack.c.l.s4 842150450
      %v3718 = vunpack.c.0.s8 %v3717
      %v3719 = vlaneseq
      %v3720 = vshrl.u32 %v3719, 7
      %v3721 = vsub.s32 %v3718, %v3720
      %v3722 = vrot.slane %v3447, %v3721
      %v3724 = vunpack.c.l.s4 1414812756
      %v3725 = vunpack.c.0.s8 %v3724
      %v3726 = vlaneseq
      %v3727 = vshrl.u32 %v3726, 7
      %v3728 = vsub.s32 %v3725, %v3727
      %v3729 = vrot.slane %v3447, %v3728
      %v3731 = vunpack.c.l.s4 269488144
      %v3732 = vunpack.c.0.s8 %v3731
      %v3733 = vlaneseq
      %v3734 = vshrl.u32 %v3733, 7
      %v3735 = vsub.s32 %v3732, %v3734
      %v3736 = vrot.slane %v3450, %v3735
      %v3738 = vunpack.c.l.s4 842150450
      %v3739 = vunpack.c.0.s8 %v3738
      %v3740 = vlaneseq
      %v3741 = vshrl.u32 %v3740, 7
      %v3742 = vsub.s32 %v3739, %v3741
      %v3743 = vrot.slane %v3450, %v3742
      %v3745 = vunpack.c.l.s4 1414812756
      %v3746 = vunpack.c.0.s8 %v3745
      %v3747 = vlaneseq
      %v3748 = vshrl.u32 %v3747, 7
      %v3749 = vsub.s32 %v3746, %v3748
      %v3750 = vrot.slane %v3450, %v3749
      %v3752 = vunpack.c.l.s4 269488144
      %v3753 = vunpack.c.0.s8 %v3752
      %v3754 = vlaneseq
      %v3755 = vshrl.u32 %v3754, 7
      %v3756 = vsub.s32 %v3753, %v3755
      %v3757 = vrot.slane %v3453, %v3756
      %v3759 = vunpack.c.l.s4 842150450
      %v3760 = vunpack.c.0.s8 %v3759
      %v3761 = vlaneseq
      %v3762 = vshrl.u32 %v3761, 7
      %v3763 = vsub.s32 %v3760, %v3762
      %v3764 = vrot.slane %v3453, %v3763
      %v3766 = vunpack.c.l.s4 1414812756
      %v3767 = vunpack.c.0.s8 %v3766
      %v3768 = vlaneseq
      %v3769 = vshrl.u32 %v3768, 7
      %v3770 = vsub.s32 %v3767, %v3769
      %v3771 = vrot.slane %v3453, %v3770
      %v3773 = vunpack.c.l.s4 269488144
      %v3774 = vunpack.c.0.s8 %v3773
      %v3775 = vlaneseq
      %v3776 = vshrl.u32 %v3775, 7
      %v3777 = vsub.s32 %v3774, %v3776
      %v3778 = vrot.slane %v3456, %v3777
      %v3780 = vunpack.c.l.s4 842150450
      %v3781 = vunpack.c.0.s8 %v3780
      %v3782 = vlaneseq
      %v3783 = vshrl.u32 %v3782, 7
      %v3784 = vsub.s32 %v3781, %v3783
      %v3785 = vrot.slane %v3456, %v3784
      %v3787 = vunpack.c.l.s4 1414812756
      %v3788 = vunpack.c.0.s8 %v3787
      %v3789 = vlaneseq
      %v3790 = vshrl.u32 %v3789, 7
      %v3791 = vsub.s32 %v3788, %v3790
      %v3792 = vrot.slane %v3456, %v3791
      %v3794 = vunpack.c.l.s4 269488144
      %v3795 = vunpack.c.0.s8 %v3794
      %v3796 = vlaneseq
      %v3797 = vshrl.u32 %v3796, 7
      %v3798 = vsub.s32 %v3795, %v3797
      %v3799 = vrot.slane %v3459, %v3798
      %v3801 = vunpack.c.l.s4 842150450
      %v3802 = vunpack.c.0.s8 %v3801
      %v3803 = vlaneseq
      %v3804 = vshrl.u32 %v3803, 7
      %v3805 = vsub.s32 %v3802, %v3804
      %v3806 = vrot.slane %v3459, %v3805
      %v3808 = vunpack.c.l.s4 1414812756
      %v3809 = vunpack.c.0.s8 %v3808
      %v3810 = vlaneseq
      %v3811 = vshrl.u32 %v3810, 7
      %v3812 = vsub.s32 %v3809, %v3811
      %v3813 = vrot.slane %v3459, %v3812
      %v3815 = vunpack.c.l.s4 269488144
      %v3816 = vunpack.c.0.s8 %v3815
      %v3817 = vlaneseq
      %v3818 = vshrl.u32 %v3817, 7
      %v3819 = vsub.s32 %v3816, %v3818
      %v3820 = vrot.slane %v3462, %v3819
      %v3822 = vunpack.c.l.s4 842150450
      %v3823 = vunpack.c.0.s8 %v3822
      %v3824 = vlaneseq
      %v3825 = vshrl.u32 %v3824, 7
      %v3826 = vsub.s32 %v3823, %v3825
      %v3827 = vrot.slane %v3462, %v3826
      %v3829 = vunpack.c.l.s4 1414812756
      %v3830 = vunpack.c.0.s8 %v3829
      %v3831 = vlaneseq
      %v3832 = vshrl.u32 %v3831, 7
      %v3833 = vsub.s32 %v3830, %v3832
      %v3834 = vrot.slane %v3462, %v3833
      %v3836 = vunpack.c.l.s4 269488144
      %v3837 = vunpack.c.0.s8 %v3836
      %v3838 = vlaneseq
      %v3839 = vshrl.u32 %v3838, 7
      %v3840 = vsub.s32 %v3837, %v3839
      %v3841 = vrot.slane %v3465, %v3840
      %v3843 = vunpack.c.l.s4 842150450
      %v3844 = vunpack.c.0.s8 %v3843
      %v3845 = vlaneseq
      %v3846 = vshrl.u32 %v3845, 7
      %v3847 = vsub.s32 %v3844, %v3846
      %v3848 = vrot.slane %v3465, %v3847
      %v3850 = vunpack.c.l.s4 1414812756
      %v3851 = vunpack.c.0.s8 %v3850
      %v3852 = vlaneseq
      %v3853 = vshrl.u32 %v3852, 7
      %v3854 = vsub.s32 %v3851, %v3853
      %v3855 = vrot.slane %v3465, %v3854
      %v3857 = vunpack.c.l.s4 269488144
      %v3858 = vunpack.c.0.s8 %v3857
      %v3859 = vlaneseq
      %v3860 = vshrl.u32 %v3859, 7
      %v3861 = vsub.s32 %v3858, %v3860
      %v3862 = vrot.slane %v3468, %v3861
      %v3864 = vunpack.c.l.s4 842150450
      %v3865 = vunpack.c.0.s8 %v3864
      %v3866 = vlaneseq
      %v3867 = vshrl.u32 %v3866, 7
      %v3868 = vsub.s32 %v3865, %v3867
      %v3869 = vrot.slane %v3468, %v3868
      %v3871 = vunpack.c.l.s4 1414812756
      %v3872 = vunpack.c.0.s8 %v3871
      %v3873 = vlaneseq
      %v3874 = vshrl.u32 %v3873, 7
      %v3875 = vsub.s32 %v3872, %v3874
      %v3876 = vrot.slane %v3468, %v3875
      %v3878 = vunpack.c.l.s4 269488144
      %v3879 = vunpack.c.0.s8 %v3878
      %v3880 = vlaneseq
      %v3881 = vshrl.u32 %v3880, 7
      %v3882 = vsub.s32 %v3879, %v3881
      %v3883 = vrot.slane %v3471, %v3882
      %v3885 = vunpack.c.l.s4 842150450
      %v3886 = vunpack.c.0.s8 %v3885
      %v3887 = vlaneseq
      %v3888 = vshrl.u32 %v3887, 7
      %v3889 = vsub.s32 %v3886, %v3888
      %v3890 = vrot.slane %v3471, %v3889
      %v3892 = vunpack.c.l.s4 1414812756
      %v3893 = vunpack.c.0.s8 %v3892
      %v3894 = vlaneseq
      %v3895 = vshrl.u32 %v3894, 7
      %v3896 = vsub.s32 %v3893, %v3895
      %v3897 = vrot.slane %v3471, %v3896
      %v3899 = vunpack.c.l.s4 269488144
      %v3900 = vunpack.c.0.s8 %v3899
      %v3901 = vlaneseq
      %v3902 = vshrl.u32 %v3901, 7
      %v3903 = vsub.s32 %v3900, %v3902
      %v3904 = vrot.slane %v3474, %v3903
      %v3906 = vunpack.c.l.s4 842150450
      %v3907 = vunpack.c.0.s8 %v3906
      %v3908 = vlaneseq
      %v3909 = vshrl.u32 %v3908, 7
      %v3910 = vsub.s32 %v3907, %v3909
      %v3911 = vrot.slane %v3474, %v3910
      %v3913 = vunpack.c.l.s4 1414812756
      %v3914 = vunpack.c.0.s8 %v3913
      %v3915 = vlaneseq
      %v3916 = vshrl.u32 %v3915, 7
      %v3917 = vsub.s32 %v3914, %v3916
      %v3918 = vrot.slane %v3474, %v3917
      %v3920 = vunpack.c.l.s4 269488144
      %v3921 = vunpack.c.0.s8 %v3920
      %v3922 = vlaneseq
      %v3923 = vshrl.u32 %v3922, 7
      %v3924 = vsub.s32 %v3921, %v3923
      %v3925 = vrot.slane %v3477, %v3924
      %v3927 = vunpack.c.l.s4 842150450
      %v3928 = vunpack.c.0.s8 %v3927
      %v3929 = vlaneseq
      %v3930 = vshrl.u32 %v3929, 7
      %v3931 = vsub.s32 %v3928, %v3930
      %v3932 = vrot.slane %v3477, %v3931
      %v3934 = vunpack.c.l.s4 1414812756
      %v3935 = vunpack.c.0.s8 %v3934
      %v3936 = vlaneseq
      %v3937 = vshrl.u32 %v3936, 7
      %v3938 = vsub.s32 %v3935, %v3937
      %v3939 = vrot.slane %v3477, %v3938
      %v3941 = vunpack.c.l.s4 269488144
      %v3942 = vunpack.c.0.s8 %v3941
      %v3943 = vlaneseq
      %v3944 = vshrl.u32 %v3943, 7
      %v3945 = vsub.s32 %v3942, %v3944
      %v3946 = vrot.slane %v3480, %v3945
      %v3948 = vunpack.c.l.s4 842150450
      %v3949 = vunpack.c.0.s8 %v3948
      %v3950 = vlaneseq
      %v3951 = vshrl.u32 %v3950, 7
      %v3952 = vsub.s32 %v3949, %v3951
      %v3953 = vrot.slane %v3480, %v3952
      %v3955 = vunpack.c.l.s4 1414812756
      %v3956 = vunpack.c.0.s8 %v3955
      %v3957 = vlaneseq
      %v3958 = vshrl.u32 %v3957, 7
      %v3959 = vsub.s32 %v3956, %v3958
      %v3960 = vrot.slane %v3480, %v3959
      %v3962 = vunpack.c.l.s4 269488144
      %v3963 = vunpack.c.0.s8 %v3962
      %v3964 = vlaneseq
      %v3965 = vshrl.u32 %v3964, 7
      %v3966 = vsub.s32 %v3963, %v3965
      %v3967 = vrot.slane %v3483, %v3966
      %v3969 = vunpack.c.l.s4 842150450
      %v3970 = vunpack.c.0.s8 %v3969
      %v3971 = vlaneseq
      %v3972 = vshrl.u32 %v3971, 7
      %v3973 = vsub.s32 %v3970, %v3972
      %v3974 = vrot.slane %v3483, %v3973
      %v3976 = vunpack.c.l.s4 1414812756
      %v3977 = vunpack.c.0.s8 %v3976
      %v3978 = vlaneseq
      %v3979 = vshrl.u32 %v3978, 7
      %v3980 = vsub.s32 %v3977, %v3979
      %v3981 = vrot.slane %v3483, %v3980
      %v3983 = vunpack.c.l.s4 269488144
      %v3984 = vunpack.c.0.s8 %v3983
      %v3985 = vlaneseq
      %v3986 = vshrl.u32 %v3985, 7
      %v3987 = vsub.s32 %v3984, %v3986
      %v3988 = vrot.slane %v3486, %v3987
      %v3990 = vunpack.c.l.s4 842150450
      %v3991 = vunpack.c.0.s8 %v3990
      %v3992 = vlaneseq
      %v3993 = vshrl.u32 %v3992, 7
      %v3994 = vsub.s32 %v3991, %v3993
      %v3995 = vrot.slane %v3486, %v3994
      %v3997 = vunpack.c.l.s4 1414812756
      %v3998 = vunpack.c.0.s8 %v3997
      %v3999 = vlaneseq
      %v4000 = vshrl.u32 %v3999, 7
      %v4001 = vsub.s32 %v3998, %v4000
      %v4002 = vrot.slane %v3486, %v4001
      %v4004 = vunpack.c.l.s4 269488144
      %v4005 = vunpack.c.0.s8 %v4004
      %v4006 = vlaneseq
      %v4007 = vshrl.u32 %v4006, 7
      %v4008 = vsub.s32 %v4005, %v4007
      %v4009 = vrot.slane %v3489, %v4008
      %v4011 = vunpack.c.l.s4 842150450
      %v4012 = vunpack.c.0.s8 %v4011
      %v4013 = vlaneseq
      %v4014 = vshrl.u32 %v4013, 7
      %v4015 = vsub.s32 %v4012, %v4014
      %v4016 = vrot.slane %v3489, %v4015
      %v4018 = vunpack.c.l.s4 1414812756
      %v4019 = vunpack.c.0.s8 %v4018
      %v4020 = vlaneseq
      %v4021 = vshrl.u32 %v4020, 7
      %v4022 = vsub.s32 %v4019, %v4021
      %v4023 = vrot.slane %v3489, %v4022
      %v4025 = vunpack.c.l.s4 269488144
      %v4026 = vunpack.c.0.s8 %v4025
      %v4027 = vlaneseq
      %v4028 = vshrl.u32 %v4027, 7
      %v4029 = vsub.s32 %v4026, %v4028
      %v4030 = vrot.slane %v3492, %v4029
      %v4032 = vunpack.c.l.s4 842150450
      %v4033 = vunpack.c.0.s8 %v4032
      %v4034 = vlaneseq
      %v4035 = vshrl.u32 %v4034, 7
      %v4036 = vsub.s32 %v4033, %v4035
      %v4037 = vrot.slane %v3492, %v4036
      %v4039 = vunpack.c.l.s4 1414812756
      %v4040 = vunpack.c.0.s8 %v4039
      %v4041 = vlaneseq
      %v4042 = vshrl.u32 %v4041, 7
      %v4043 = vsub.s32 %v4040, %v4042
      %v4044 = vrot.slane %v3492, %v4043
      %v4046 = vunpack.c.l.s4 269488144
      %v4047 = vunpack.c.0.s8 %v4046
      %v4048 = vlaneseq
      %v4049 = vshrl.u32 %v4048, 7
      %v4050 = vsub.s32 %v4047, %v4049
      %v4051 = vrot.slane %v3495, %v4050
      %v4053 = vunpack.c.l.s4 842150450
      %v4054 = vunpack.c.0.s8 %v4053
      %v4055 = vlaneseq
      %v4056 = vshrl.u32 %v4055, 7
      %v4057 = vsub.s32 %v4054, %v4056
      %v4058 = vrot.slane %v3495, %v4057
      %v4060 = vunpack.c.l.s4 1414812756
      %v4061 = vunpack.c.0.s8 %v4060
      %v4062 = vlaneseq
      %v4063 = vshrl.u32 %v4062, 7
      %v4064 = vsub.s32 %v4061, %v4063
      %v4065 = vrot.slane %v3495, %v4064
      %v4067 = vunpack.c.l.s4 269488144
      %v4068 = vunpack.c.0.s8 %v4067
      %v4069 = vlaneseq
      %v4070 = vshrl.u32 %v4069, 7
      %v4071 = vsub.s32 %v4068, %v4070
      %v4072 = vrot.slane %v3498, %v4071
      %v4074 = vunpack.c.l.s4 842150450
      %v4075 = vunpack.c.0.s8 %v4074
      %v4076 = vlaneseq
      %v4077 = vshrl.u32 %v4076, 7
      %v4078 = vsub.s32 %v4075, %v4077
      %v4079 = vrot.slane %v3498, %v4078
      %v4081 = vunpack.c.l.s4 1414812756
      %v4082 = vunpack.c.0.s8 %v4081
      %v4083 = vlaneseq
      %v4084 = vshrl.u32 %v4083, 7
      %v4085 = vsub.s32 %v4082, %v4084
      %v4086 = vrot.slane %v3498, %v4085
      %v4088 = vunpack.c.l.s4 269488144
      %v4089 = vunpack.c.0.s8 %v4088
      %v4090 = vlaneseq
      %v4091 = vshrl.u32 %v4090, 7
      %v4092 = vsub.s32 %v4089, %v4091
      %v4093 = vrot.slane %v3501, %v4092
      %v4095 = vunpack.c.l.s4 842150450
      %v4096 = vunpack.c.0.s8 %v4095
      %v4097 = vlaneseq
      %v4098 = vshrl.u32 %v4097, 7
      %v4099 = vsub.s32 %v4096, %v4098
      %v4100 = vrot.slane %v3501, %v4099
      %v4102 = vunpack.c.l.s4 1414812756
      %v4103 = vunpack.c.0.s8 %v4102
      %v4104 = vlaneseq
      %v4105 = vshrl.u32 %v4104, 7
      %v4106 = vsub.s32 %v4103, %v4105
      %v4107 = vrot.slane %v3501, %v4106
      %v4109 = vunpack.c.l.s4 269488144
      %v4110 = vunpack.c.0.s8 %v4109
      %v4111 = vlaneseq
      %v4112 = vshrl.u32 %v4111, 7
      %v4113 = vsub.s32 %v4110, %v4112
      %v4114 = vrot.slane %v3504, %v4113
      %v4116 = vunpack.c.l.s4 842150450
      %v4117 = vunpack.c.0.s8 %v4116
      %v4118 = vlaneseq
      %v4119 = vshrl.u32 %v4118, 7
      %v4120 = vsub.s32 %v4117, %v4119
      %v4121 = vrot.slane %v3504, %v4120
      %v4123 = vunpack.c.l.s4 1414812756
      %v4124 = vunpack.c.0.s8 %v4123
      %v4125 = vlaneseq
      %v4126 = vshrl.u32 %v4125, 7
      %v4127 = vsub.s32 %v4124, %v4126
      %v4128 = vrot.slane %v3504, %v4127
      %v4130 = vunpack.c.l.s4 269488144
      %v4131 = vunpack.c.0.s8 %v4130
      %v4132 = vlaneseq
      %v4133 = vshrl.u32 %v4132, 7
      %v4134 = vsub.s32 %v4131, %v4133
      %v4135 = vrot.slane %v3507, %v4134
      %v4137 = vunpack.c.l.s4 842150450
      %v4138 = vunpack.c.0.s8 %v4137
      %v4139 = vlaneseq
      %v4140 = vshrl.u32 %v4139, 7
      %v4141 = vsub.s32 %v4138, %v4140
      %v4142 = vrot.slane %v3507, %v4141
      %v4144 = vunpack.c.l.s4 1414812756
      %v4145 = vunpack.c.0.s8 %v4144
      %v4146 = vlaneseq
      %v4147 = vshrl.u32 %v4146, 7
      %v4148 = vsub.s32 %v4145, %v4147
      %v4149 = vrot.slane %v3507, %v4148
      %v4151 = vunpack.c.l.s4 269488144
      %v4152 = vunpack.c.0.s8 %v4151
      %v4153 = vlaneseq
      %v4154 = vshrl.u32 %v4153, 7
      %v4155 = vsub.s32 %v4152, %v4154
      %v4156 = vrot.slane %v3510, %v4155
      %v4158 = vunpack.c.l.s4 842150450
      %v4159 = vunpack.c.0.s8 %v4158
      %v4160 = vlaneseq
      %v4161 = vshrl.u32 %v4160, 7
      %v4162 = vsub.s32 %v4159, %v4161
      %v4163 = vrot.slane %v3510, %v4162
      %v4165 = vunpack.c.l.s4 1414812756
      %v4166 = vunpack.c.0.s8 %v4165
      %v4167 = vlaneseq
      %v4168 = vshrl.u32 %v4167, 7
      %v4169 = vsub.s32 %v4166, %v4168
      %v4170 = vrot.slane %v3510, %v4169
      %v4172 = vunpack.c.l.s4 269488144
      %v4173 = vunpack.c.0.s8 %v4172
      %v4174 = vlaneseq
      %v4175 = vshrl.u32 %v4174, 7
      %v4176 = vsub.s32 %v4173, %v4175
      %v4177 = vrot.slane %v3513, %v4176
      %v4179 = vunpack.c.l.s4 842150450
      %v4180 = vunpack.c.0.s8 %v4179
      %v4181 = vlaneseq
      %v4182 = vshrl.u32 %v4181, 7
      %v4183 = vsub.s32 %v4180, %v4182
      %v4184 = vrot.slane %v3513, %v4183
      %v4186 = vunpack.c.l.s4 1414812756
      %v4187 = vunpack.c.0.s8 %v4186
      %v4188 = vlaneseq
      %v4189 = vshrl.u32 %v4188, 7
      %v4190 = vsub.s32 %v4187, %v4189
      %v4191 = vrot.slane %v3513, %v4190
      %v4193 = vunpack.c.l.s4 269488144
      %v4194 = vunpack.c.0.s8 %v4193
      %v4195 = vlaneseq
      %v4196 = vshrl.u32 %v4195, 7
      %v4197 = vsub.s32 %v4194, %v4196
      %v4198 = vrot.slane %v3516, %v4197
      %v4200 = vunpack.c.l.s4 842150450
      %v4201 = vunpack.c.0.s8 %v4200
      %v4202 = vlaneseq
      %v4203 = vshrl.u32 %v4202, 7
      %v4204 = vsub.s32 %v4201, %v4203
      %v4205 = vrot.slane %v3516, %v4204
      %v4207 = vunpack.c.l.s4 1414812756
      %v4208 = vunpack.c.0.s8 %v4207
      %v4209 = vlaneseq
      %v4210 = vshrl.u32 %v4209, 7
      %v4211 = vsub.s32 %v4208, %v4210
      %v4212 = vrot.slane %v3516, %v4211
      %v4214 = vunpack.c.l.s4 269488144
      %v4215 = vunpack.c.0.s8 %v4214
      %v4216 = vlaneseq
      %v4217 = vshrl.u32 %v4216, 7
      %v4218 = vsub.s32 %v4215, %v4217
      %v4219 = vrot.slane %v3519, %v4218
      %v4221 = vunpack.c.l.s4 842150450
      %v4222 = vunpack.c.0.s8 %v4221
      %v4223 = vlaneseq
      %v4224 = vshrl.u32 %v4223, 7
      %v4225 = vsub.s32 %v4222, %v4224
      %v4226 = vrot.slane %v3519, %v4225
      %v4228 = vunpack.c.l.s4 1414812756
      %v4229 = vunpack.c.0.s8 %v4228
      %v4230 = vlaneseq
      %v4231 = vshrl.u32 %v4230, 7
      %v4232 = vsub.s32 %v4229, %v4231
      %v4233 = vrot.slane %v3519, %v4232
      %v4235 = vunpack.c.l.s4 269488144
      %v4236 = vunpack.c.0.s8 %v4235
      %v4237 = vlaneseq
      %v4238 = vshrl.u32 %v4237, 7
      %v4239 = vsub.s32 %v4236, %v4238
      %v4240 = vrot.slane %v3522, %v4239
      %v4242 = vunpack.c.l.s4 842150450
      %v4243 = vunpack.c.0.s8 %v4242
      %v4244 = vlaneseq
      %v4245 = vshrl.u32 %v4244, 7
      %v4246 = vsub.s32 %v4243, %v4245
      %v4247 = vrot.slane %v3522, %v4246
      %v4249 = vunpack.c.l.s4 1414812756
      %v4250 = vunpack.c.0.s8 %v4249
      %v4251 = vlaneseq
      %v4252 = vshrl.u32 %v4251, 7
      %v4253 = vsub.s32 %v4250, %v4252
      %v4254 = vrot.slane %v3522, %v4253
      %v4256 = vunpack.c.l.s4 269488144
      %v4257 = vunpack.c.0.s8 %v4256
      %v4258 = vlaneseq
      %v4259 = vshrl.u32 %v4258, 7
      %v4260 = vsub.s32 %v4257, %v4259
      %v4261 = vrot.slane %v3525, %v4260
      %v4263 = vunpack.c.l.s4 842150450
      %v4264 = vunpack.c.0.s8 %v4263
      %v4265 = vlaneseq
      %v4266 = vshrl.u32 %v4265, 7
      %v4267 = vsub.s32 %v4264, %v4266
      %v4268 = vrot.slane %v3525, %v4267
      %v4270 = vunpack.c.l.s4 1414812756
      %v4271 = vunpack.c.0.s8 %v4270
      %v4272 = vlaneseq
      %v4273 = vshrl.u32 %v4272, 7
      %v4274 = vsub.s32 %v4271, %v4273
      %v4275 = vrot.slane %v3525, %v4274
      %v4277 = vunpack.c.l.s4 269488144
      %v4278 = vunpack.c.0.s8 %v4277
      %v4279 = vlaneseq
      %v4280 = vshrl.u32 %v4279, 7
      %v4281 = vsub.s32 %v4278, %v4280
      %v4282 = vrot.slane %v3528, %v4281
      %v4284 = vunpack.c.l.s4 842150450
      %v4285 = vunpack.c.0.s8 %v4284
      %v4286 = vlaneseq
      %v4287 = vshrl.u32 %v4286, 7
      %v4288 = vsub.s32 %v4285, %v4287
      %v4289 = vrot.slane %v3528, %v4288
      %v4291 = vunpack.c.l.s4 1414812756
      %v4292 = vunpack.c.0.s8 %v4291
      %v4293 = vlaneseq
      %v4294 = vshrl.u32 %v4293, 7
      %v4295 = vsub.s32 %v4292, %v4294
      %v4296 = vrot.slane %v3528, %v4295
      %v4298 = vunpack.c.l.s4 269488144
      %v4299 = vunpack.c.0.s8 %v4298
      %v4300 = vlaneseq
      %v4301 = vshrl.u32 %v4300, 7
      %v4302 = vsub.s32 %v4299, %v4301
      %v4303 = vrot.slane %v3531, %v4302
      %v4305 = vunpack.c.l.s4 842150450
      %v4306 = vunpack.c.0.s8 %v4305
      %v4307 = vlaneseq
      %v4308 = vshrl.u32 %v4307, 7
      %v4309 = vsub.s32 %v4306, %v4308
      %v4310 = vrot.slane %v3531, %v4309
      %v4312 = vunpack.c.l.s4 1414812756
      %v4313 = vunpack.c.0.s8 %v4312
      %v4314 = vlaneseq
      %v4315 = vshrl.u32 %v4314, 7
      %v4316 = vsub.s32 %v4313, %v4315
      %v4317 = vrot.slane %v3531, %v4316
      %v4319 = vunpack.c.l.s4 269488144
      %v4320 = vunpack.c.0.s8 %v4319
      %v4321 = vlaneseq
      %v4322 = vshrl.u32 %v4321, 7
      %v4323 = vsub.s32 %v4320, %v4322
      %v4324 = vrot.slane %v3534, %v4323
      %v4326 = vunpack.c.l.s4 842150450
      %v4327 = vunpack.c.0.s8 %v4326
      %v4328 = vlaneseq
      %v4329 = vshrl.u32 %v4328, 7
      %v4330 = vsub.s32 %v4327, %v4329
      %v4331 = vrot.slane %v3534, %v4330
      %v4333 = vunpack.c.l.s4 1414812756
      %v4334 = vunpack.c.0.s8 %v4333
      %v4335 = vlaneseq
      %v4336 = vshrl.u32 %v4335, 7
      %v4337 = vsub.s32 %v4334, %v4336
      %v4338 = vrot.slane %v3534, %v4337
      %v4340 = vunpack.c.l.s4 269488144
      %v4341 = vunpack.c.0.s8 %v4340
      %v4342 = vlaneseq
      %v4343 = vshrl.u32 %v4342, 7
      %v4344 = vsub.s32 %v4341, %v4343
      %v4345 = vrot.slane %v3537, %v4344
      %v4347 = vunpack.c.l.s4 842150450
      %v4348 = vunpack.c.0.s8 %v4347
      %v4349 = vlaneseq
      %v4350 = vshrl.u32 %v4349, 7
      %v4351 = vsub.s32 %v4348, %v4350
      %v4352 = vrot.slane %v3537, %v4351
      %v4354 = vunpack.c.l.s4 1414812756
      %v4355 = vunpack.c.0.s8 %v4354
      %v4356 = vlaneseq
      %v4357 = vshrl.u32 %v4356, 7
      %v4358 = vsub.s32 %v4355, %v4357
      %v4359 = vrot.slane %v3537, %v4358
      %v4361 = vunpack.c.l.s4 269488144
      %v4362 = vunpack.c.0.s8 %v4361
      %v4363 = vlaneseq
      %v4364 = vshrl.u32 %v4363, 7
      %v4365 = vsub.s32 %v4362, %v4364
      %v4366 = vrot.slane %v3540, %v4365
      %v4368 = vunpack.c.l.s4 842150450
      %v4369 = vunpack.c.0.s8 %v4368
      %v4370 = vlaneseq
      %v4371 = vshrl.u32 %v4370, 7
      %v4372 = vsub.s32 %v4369, %v4371
      %v4373 = vrot.slane %v3540, %v4372
      %v4375 = vunpack.c.l.s4 1414812756
      %v4376 = vunpack.c.0.s8 %v4375
      %v4377 = vlaneseq
      %v4378 = vshrl.u32 %v4377, 7
      %v4379 = vsub.s32 %v4376, %v4378
      %v4380 = vrot.slane %v3540, %v4379
      %v4382 = vunpack.c.l.s4 269488144
      %v4383 = vunpack.c.0.s8 %v4382
      %v4384 = vlaneseq
      %v4385 = vshrl.u32 %v4384, 7
      %v4386 = vsub.s32 %v4383, %v4385
      %v4387 = vrot.slane %v3543, %v4386
      %v4389 = vunpack.c.l.s4 842150450
      %v4390 = vunpack.c.0.s8 %v4389
      %v4391 = vlaneseq
      %v4392 = vshrl.u32 %v4391, 7
      %v4393 = vsub.s32 %v4390, %v4392
      %v4394 = vrot.slane %v3543, %v4393
      %v4396 = vunpack.c.l.s4 1414812756
      %v4397 = vunpack.c.0.s8 %v4396
      %v4398 = vlaneseq
      %v4399 = vshrl.u32 %v4398, 7
      %v4400 = vsub.s32 %v4397, %v4399
      %v4401 = vrot.slane %v3543, %v4400
      %v4403 = vunpack.c.l.s4 269488144
      %v4404 = vunpack.c.0.s8 %v4403
      %v4405 = vlaneseq
      %v4406 = vshrl.u32 %v4405, 7
      %v4407 = vsub.s32 %v4404, %v4406
      %v4408 = vrot.slane %v3546, %v4407
      %v4410 = vunpack.c.l.s4 842150450
      %v4411 = vunpack.c.0.s8 %v4410
      %v4412 = vlaneseq
      %v4413 = vshrl.u32 %v4412, 7
      %v4414 = vsub.s32 %v4411, %v4413
      %v4415 = vrot.slane %v3546, %v4414
      %v4417 = vunpack.c.l.s4 1414812756
      %v4418 = vunpack.c.0.s8 %v4417
      %v4419 = vlaneseq
      %v4420 = vshrl.u32 %v4419, 7
      %v4421 = vsub.s32 %v4418, %v4420
      %v4422 = vrot.slane %v3546, %v4421
      %v4424 = vunpack.c.l.s4 269488144
      %v4425 = vunpack.c.0.s8 %v4424
      %v4426 = vlaneseq
      %v4427 = vshrl.u32 %v4426, 7
      %v4428 = vsub.s32 %v4425, %v4427
      %v4429 = vrot.slane %v3549, %v4428
      %v4431 = vunpack.c.l.s4 842150450
      %v4432 = vunpack.c.0.s8 %v4431
      %v4433 = vlaneseq
      %v4434 = vshrl.u32 %v4433, 7
      %v4435 = vsub.s32 %v4432, %v4434
      %v4436 = vrot.slane %v3549, %v4435
      %v4438 = vunpack.c.l.s4 1414812756
      %v4439 = vunpack.c.0.s8 %v4438
      %v4440 = vlaneseq
      %v4441 = vshrl.u32 %v4440, 7
      %v4442 = vsub.s32 %v4439, %v4441
      %v4443 = vrot.slane %v3549, %v4442
      %v4445 = vunpack.c.l.s4 269488144
      %v4446 = vunpack.c.0.s8 %v4445
      %v4447 = vlaneseq
      %v4448 = vshrl.u32 %v4447, 7
      %v4449 = vsub.s32 %v4446, %v4448
      %v4450 = vrot.slane %v3552, %v4449
      %v4452 = vunpack.c.l.s4 842150450
      %v4453 = vunpack.c.0.s8 %v4452
      %v4454 = vlaneseq
      %v4455 = vshrl.u32 %v4454, 7
      %v4456 = vsub.s32 %v4453, %v4455
      %v4457 = vrot.slane %v3552, %v4456
      %v4459 = vunpack.c.l.s4 1414812756
      %v4460 = vunpack.c.0.s8 %v4459
      %v4461 = vlaneseq
      %v4462 = vshrl.u32 %v4461, 7
      %v4463 = vsub.s32 %v4460, %v4462
      %v4464 = vrot.slane %v3552, %v4463
      %v4466 = vunpack.c.l.s4 269488144
      %v4467 = vunpack.c.0.s8 %v4466
      %v4468 = vlaneseq
      %v4469 = vshrl.u32 %v4468, 7
      %v4470 = vsub.s32 %v4467, %v4469
      %v4471 = vrot.slane %v3555, %v4470
      %v4473 = vunpack.c.l.s4 842150450
      %v4474 = vunpack.c.0.s8 %v4473
      %v4475 = vlaneseq
      %v4476 = vshrl.u32 %v4475, 7
      %v4477 = vsub.s32 %v4474, %v4476
      %v4478 = vrot.slane %v3555, %v4477
      %v4480 = vunpack.c.l.s4 1414812756
      %v4481 = vunpack.c.0.s8 %v4480
      %v4482 = vlaneseq
      %v4483 = vshrl.u32 %v4482, 7
      %v4484 = vsub.s32 %v4481, %v4483
      %v4485 = vrot.slane %v3555, %v4484
      %v4487 = vunpack.c.l.s4 269488144
      %v4488 = vunpack.c.0.s8 %v4487
      %v4489 = vlaneseq
      %v4490 = vshrl.u32 %v4489, 7
      %v4491 = vsub.s32 %v4488, %v4490
      %v4492 = vrot.slane %v3558, %v4491
      %v4494 = vunpack.c.l.s4 842150450
      %v4495 = vunpack.c.0.s8 %v4494
      %v4496 = vlaneseq
      %v4497 = vshrl.u32 %v4496, 7
      %v4498 = vsub.s32 %v4495, %v4497
      %v4499 = vrot.slane %v3558, %v4498
      %v4501 = vunpack.c.l.s4 1414812756
      %v4502 = vunpack.c.0.s8 %v4501
      %v4503 = vlaneseq
      %v4504 = vshrl.u32 %v4503, 7
      %v4505 = vsub.s32 %v4502, %v4504
      %v4506 = vrot.slane %v3558, %v4505
      %v4508 = vunpack.c.l.s4 269488144
      %v4509 = vunpack.c.0.s8 %v4508
      %v4510 = vlaneseq
      %v4511 = vshrl.u32 %v4510, 7
      %v4512 = vsub.s32 %v4509, %v4511
      %v4513 = vrot.slane %v3561, %v4512
      %v4515 = vunpack.c.l.s4 842150450
      %v4516 = vunpack.c.0.s8 %v4515
      %v4517 = vlaneseq
      %v4518 = vshrl.u32 %v4517, 7
      %v4519 = vsub.s32 %v4516, %v4518
      %v4520 = vrot.slane %v3561, %v4519
      %v4522 = vunpack.c.l.s4 1414812756
      %v4523 = vunpack.c.0.s8 %v4522
      %v4524 = vlaneseq
      %v4525 = vshrl.u32 %v4524, 7
      %v4526 = vsub.s32 %v4523, %v4525
      %v4527 = vrot.slane %v3561, %v4526
      %v4529 = vunpack.c.l.s4 269488144
      %v4530 = vunpack.c.0.s8 %v4529
      %v4531 = vlaneseq
      %v4532 = vshrl.u32 %v4531, 7
      %v4533 = vsub.s32 %v4530, %v4532
      %v4534 = vrot.slane %v3564, %v4533
      %v4536 = vunpack.c.l.s4 842150450
      %v4537 = vunpack.c.0.s8 %v4536
      %v4538 = vlaneseq
      %v4539 = vshrl.u32 %v4538, 7
      %v4540 = vsub.s32 %v4537, %v4539
      %v4541 = vrot.slane %v3564, %v4540
      %v4543 = vunpack.c.l.s4 1414812756
      %v4544 = vunpack.c.0.s8 %v4543
      %v4545 = vlaneseq
      %v4546 = vshrl.u32 %v4545, 7
      %v4547 = vsub.s32 %v4544, %v4546
      %v4548 = vrot.slane %v3564, %v4547
      %v4550 = vunpack.c.l.s4 269488144
      %v4551 = vunpack.c.0.s8 %v4550
      %v4552 = vlaneseq
      %v4553 = vshrl.u32 %v4552, 7
      %v4554 = vsub.s32 %v4551, %v4553
      %v4555 = vrot.slane %v3567, %v4554
      %v4557 = vunpack.c.l.s4 842150450
      %v4558 = vunpack.c.0.s8 %v4557
      %v4559 = vlaneseq
      %v4560 = vshrl.u32 %v4559, 7
      %v4561 = vsub.s32 %v4558, %v4560
      %v4562 = vrot.slane %v3567, %v4561
      %v4564 = vunpack.c.l.s4 1414812756
      %v4565 = vunpack.c.0.s8 %v4564
      %v4566 = vlaneseq
      %v4567 = vshrl.u32 %v4566, 7
      %v4568 = vsub.s32 %v4565, %v4567
      %v4569 = vrot.slane %v3567, %v4568
      %v4571 = vunpack.c.l.s4 269488144
      %v4572 = vunpack.c.0.s8 %v4571
      %v4573 = vlaneseq
      %v4574 = vshrl.u32 %v4573, 7
      %v4575 = vsub.s32 %v4572, %v4574
      %v4576 = vrot.slane %v3570, %v4575
      %v4578 = vunpack.c.l.s4 842150450
      %v4579 = vunpack.c.0.s8 %v4578
      %v4580 = vlaneseq
      %v4581 = vshrl.u32 %v4580, 7
      %v4582 = vsub.s32 %v4579, %v4581
      %v4583 = vrot.slane %v3570, %v4582
      %v4585 = vunpack.c.l.s4 1414812756
      %v4586 = vunpack.c.0.s8 %v4585
      %v4587 = vlaneseq
      %v4588 = vshrl.u32 %v4587, 7
      %v4589 = vsub.s32 %v4586, %v4588
      %v4590 = vrot.slane %v3570, %v4589
      %v4592 = vunpack.c.l.s4 269488144
      %v4593 = vunpack.c.0.s8 %v4592
      %v4594 = vlaneseq
      %v4595 = vshrl.u32 %v4594, 7
      %v4596 = vsub.s32 %v4593, %v4595
      %v4597 = vrot.slane %v3573, %v4596
      %v4599 = vunpack.c.l.s4 842150450
      %v4600 = vunpack.c.0.s8 %v4599
      %v4601 = vlaneseq
      %v4602 = vshrl.u32 %v4601, 7
      %v4603 = vsub.s32 %v4600, %v4602
      %v4604 = vrot.slane %v3573, %v4603
      %v4606 = vunpack.c.l.s4 1414812756
      %v4607 = vunpack.c.0.s8 %v4606
      %v4608 = vlaneseq
      %v4609 = vshrl.u32 %v4608, 7
      %v4610 = vsub.s32 %v4607, %v4609
      %v4611 = vrot.slane %v3573, %v4610
      %v4613 = vunpack.c.l.s4 269488144
      %v4614 = vunpack.c.0.s8 %v4613
      %v4615 = vlaneseq
      %v4616 = vshrl.u32 %v4615, 7
      %v4617 = vsub.s32 %v4614, %v4616
      %v4618 = vrot.slane %v3576, %v4617
      %v4620 = vunpack.c.l.s4 842150450
      %v4621 = vunpack.c.0.s8 %v4620
      %v4622 = vlaneseq
      %v4623 = vshrl.u32 %v4622, 7
      %v4624 = vsub.s32 %v4621, %v4623
      %v4625 = vrot.slane %v3576, %v4624
      %v4627 = vunpack.c.l.s4 1414812756
      %v4628 = vunpack.c.0.s8 %v4627
      %v4629 = vlaneseq
      %v4630 = vshrl.u32 %v4629, 7
      %v4631 = vsub.s32 %v4628, %v4630
      %v4632 = vrot.slane %v3576, %v4631
      %v4633 = vlaneseq
      %v4634 = vshrl.u32 %v4633, 7
      %v4635 = vsub.s32 0, %v4634
      %v4636 = vrot.slane %v3631, %v4635
      %v4637 = vlaneseq
      %v4638 = vshrl.u32 %v4637, 7
      %v4639 = vsub.s32 1, %v4638
      %v4640 = vrot.slane %v3631, %v4639
      %v4641 = vlaneseq
      %v4642 = vshrl.u32 %v4641, 7
      %v4643 = vsub.s32 0, %v4642
      %v4644 = vrot.slane %v3638, %v4643
      %v4645 = vlaneseq
      %v4646 = vshrl.u32 %v4645, 7
      %v4647 = vsub.s32 1, %v4646
      %v4648 = vrot.slane %v3638, %v4647
      %v4649 = vlaneseq
      %v4650 = vshrl.u32 %v4649, 7
      %v4651 = vsub.s32 0, %v4650
      %v4652 = vrot.slane %v3645, %v4651
      %v4653 = vlaneseq
      %v4654 = vshrl.u32 %v4653, 7
      %v4655 = vsub.s32 1, %v4654
      %v4656 = vrot.slane %v3645, %v4655
      %v4657 = vlaneseq
      %v4658 = vshrl.u32 %v4657, 7
      %v4659 = vsub.s32 0, %v4658
      %v4660 = vrot.slane %v3652, %v4659
      %v4661 = vlaneseq
      %v4662 = vshrl.u32 %v4661, 7
      %v4663 = vsub.s32 1, %v4662
      %v4664 = vrot.slane %v3652, %v4663
      %v4665 = vlaneseq
      %v4666 = vshrl.u32 %v4665, 7
      %v4667 = vsub.s32 0, %v4666
      %v4668 = vrot.slane %v3659, %v4667
      %v4669 = vlaneseq
      %v4670 = vshrl.u32 %v4669, 7
      %v4671 = vsub.s32 1, %v4670
      %v4672 = vrot.slane %v3659, %v4671
      %v4673 = vlaneseq
      %v4674 = vshrl.u32 %v4673, 7
      %v4675 = vsub.s32 0, %v4674
      %v4676 = vrot.slane %v3666, %v4675
      %v4677 = vlaneseq
      %v4678 = vshrl.u32 %v4677, 7
      %v4679 = vsub.s32 1, %v4678
      %v4680 = vrot.slane %v3666, %v4679
      %v4681 = vlaneseq
      %v4682 = vshrl.u32 %v4681, 7
      %v4683 = vsub.s32 0, %v4682
      %v4684 = vrot.slane %v3673, %v4683
      %v4685 = vlaneseq
      %v4686 = vshrl.u32 %v4685, 7
      %v4687 = vsub.s32 1, %v4686
      %v4688 = vrot.slane %v3673, %v4687
      %v4689 = vlaneseq
      %v4690 = vshrl.u32 %v4689, 7
      %v4691 = vsub.s32 0, %v4690
      %v4692 = vrot.slane %v3680, %v4691
      %v4693 = vlaneseq
      %v4694 = vshrl.u32 %v4693, 7
      %v4695 = vsub.s32 1, %v4694
      %v4696 = vrot.slane %v3680, %v4695
      %v4697 = vlaneseq
      %v4698 = vshrl.u32 %v4697, 7
      %v4699 = vsub.s32 0, %v4698
      %v4700 = vrot.slane %v3687, %v4699
      %v4701 = vlaneseq
      %v4702 = vshrl.u32 %v4701, 7
      %v4703 = vsub.s32 1, %v4702
      %v4704 = vrot.slane %v3687, %v4703
      %v4705 = vlaneseq
      %v4706 = vshrl.u32 %v4705, 7
      %v4707 = vsub.s32 0, %v4706
      %v4708 = vrot.slane %v3694, %v4707
      %v4709 = vlaneseq
      %v4710 = vshrl.u32 %v4709, 7
      %v4711 = vsub.s32 1, %v4710
      %v4712 = vrot.slane %v3694, %v4711
      %v4713 = vlaneseq
      %v4714 = vshrl.u32 %v4713, 7
      %v4715 = vsub.s32 0, %v4714
      %v4716 = vrot.slane %v3701, %v4715
      %v4717 = vlaneseq
      %v4718 = vshrl.u32 %v4717, 7
      %v4719 = vsub.s32 1, %v4718
      %v4720 = vrot.slane %v3701, %v4719
      %v4721 = vlaneseq
      %v4722 = vshrl.u32 %v4721, 7
      %v4723 = vsub.s32 0, %v4722
      %v4724 = vrot.slane %v3708, %v4723
      %v4725 = vlaneseq
      %v4726 = vshrl.u32 %v4725, 7
      %v4727 = vsub.s32 1, %v4726
      %v4728 = vrot.slane %v3708, %v4727
      %v4729 = vlaneseq
      %v4730 = vshrl.u32 %v4729, 7
      %v4731 = vsub.s32 0, %v4730
      %v4732 = vrot.slane %v3715, %v4731
      %v4733 = vlaneseq
      %v4734 = vshrl.u32 %v4733, 7
      %v4735 = vsub.s32 1, %v4734
      %v4736 = vrot.slane %v3715, %v4735
      %v4737 = vlaneseq
      %v4738 = vshrl.u32 %v4737, 7
      %v4739 = vsub.s32 0, %v4738
      %v4740 = vrot.slane %v3722, %v4739
      %v4741 = vlaneseq
      %v4742 = vshrl.u32 %v4741, 7
      %v4743 = vsub.s32 1, %v4742
      %v4744 = vrot.slane %v3722, %v4743
      %v4745 = vlaneseq
      %v4746 = vshrl.u32 %v4745, 7
      %v4747 = vsub.s32 0, %v4746
      %v4748 = vrot.slane %v3729, %v4747
      %v4749 = vlaneseq
      %v4750 = vshrl.u32 %v4749, 7
      %v4751 = vsub.s32 1, %v4750
      %v4752 = vrot.slane %v3729, %v4751
      %v4753 = vlaneseq
      %v4754 = vshrl.u32 %v4753, 7
      %v4755 = vsub.s32 0, %v4754
      %v4756 = vrot.slane %v3736, %v4755
      %v4757 = vlaneseq
      %v4758 = vshrl.u32 %v4757, 7
      %v4759 = vsub.s32 1, %v4758
      %v4760 = vrot.slane %v3736, %v4759
      %v4761 = vlaneseq
      %v4762 = vshrl.u32 %v4761, 7
      %v4763 = vsub.s32 0, %v4762
      %v4764 = vrot.slane %v3743, %v4763
      %v4765 = vlaneseq
      %v4766 = vshrl.u32 %v4765, 7
      %v4767 = vsub.s32 1, %v4766
      %v4768 = vrot.slane %v3743, %v4767
      %v4769 = vlaneseq
      %v4770 = vshrl.u32 %v4769, 7
      %v4771 = vsub.s32 0, %v4770
      %v4772 = vrot.slane %v3750, %v4771
      %v4773 = vlaneseq
      %v4774 = vshrl.u32 %v4773, 7
      %v4775 = vsub.s32 1, %v4774
      %v4776 = vrot.slane %v3750, %v4775
      %v4777 = vlaneseq
      %v4778 = vshrl.u32 %v4777, 7
      %v4779 = vsub.s32 0, %v4778
      %v4780 = vrot.slane %v3757, %v4779
      %v4781 = vlaneseq
      %v4782 = vshrl.u32 %v4781, 7
      %v4783 = vsub.s32 1, %v4782
      %v4784 = vrot.slane %v3757, %v4783
      %v4785 = vlaneseq
      %v4786 = vshrl.u32 %v4785, 7
      %v4787 = vsub.s32 0, %v4786
      %v4788 = vrot.slane %v3764, %v4787
      %v4789 = vlaneseq
      %v4790 = vshrl.u32 %v4789, 7
      %v4791 = vsub.s32 1, %v4790
      %v4792 = vrot.slane %v3764, %v4791
      %v4793 = vlaneseq
      %v4794 = vshrl.u32 %v4793, 7
      %v4795 = vsub.s32 0, %v4794
      %v4796 = vrot.slane %v3771, %v4795
      %v4797 = vlaneseq
      %v4798 = vshrl.u32 %v4797, 7
      %v4799 = vsub.s32 1, %v4798
      %v4800 = vrot.slane %v3771, %v4799
      %v4801 = vlaneseq
      %v4802 = vshrl.u32 %v4801, 7
      %v4803 = vsub.s32 0, %v4802
      %v4804 = vrot.slane %v3778, %v4803
      %v4805 = vlaneseq
      %v4806 = vshrl.u32 %v4805, 7
      %v4807 = vsub.s32 1, %v4806
      %v4808 = vrot.slane %v3778, %v4807
      %v4809 = vlaneseq
      %v4810 = vshrl.u32 %v4809, 7
      %v4811 = vsub.s32 0, %v4810
      %v4812 = vrot.slane %v3785, %v4811
      %v4813 = vlaneseq
      %v4814 = vshrl.u32 %v4813, 7
      %v4815 = vsub.s32 1, %v4814
      %v4816 = vrot.slane %v3785, %v4815
      %v4817 = vlaneseq
      %v4818 = vshrl.u32 %v4817, 7
      %v4819 = vsub.s32 0, %v4818
      %v4820 = vrot.slane %v3792, %v4819
      %v4821 = vlaneseq
      %v4822 = vshrl.u32 %v4821, 7
      %v4823 = vsub.s32 1, %v4822
      %v4824 = vrot.slane %v3792, %v4823
      %v4825 = vlaneseq
      %v4826 = vshrl.u32 %v4825, 7
      %v4827 = vsub.s32 0, %v4826
      %v4828 = vrot.slane %v3799, %v4827
      %v4829 = vlaneseq
      %v4830 = vshrl.u32 %v4829, 7
      %v4831 = vsub.s32 1, %v4830
      %v4832 = vrot.slane %v3799, %v4831
      %v4833 = vlaneseq
      %v4834 = vshrl.u32 %v4833, 7
      %v4835 = vsub.s32 0, %v4834
      %v4836 = vrot.slane %v3806, %v4835
      %v4837 = vlaneseq
      %v4838 = vshrl.u32 %v4837, 7
      %v4839 = vsub.s32 1, %v4838
      %v4840 = vrot.slane %v3806, %v4839
      %v4841 = vlaneseq
      %v4842 = vshrl.u32 %v4841, 7
      %v4843 = vsub.s32 0, %v4842
      %v4844 = vrot.slane %v3813, %v4843
      %v4845 = vlaneseq
      %v4846 = vshrl.u32 %v4845, 7
      %v4847 = vsub.s32 1, %v4846
      %v4848 = vrot.slane %v3813, %v4847
      %v4849 = vlaneseq
      %v4850 = vshrl.u32 %v4849, 7
      %v4851 = vsub.s32 0, %v4850
      %v4852 = vrot.slane %v3820, %v4851
      %v4853 = vlaneseq
      %v4854 = vshrl.u32 %v4853, 7
      %v4855 = vsub.s32 1, %v4854
      %v4856 = vrot.slane %v3820, %v4855
      %v4857 = vlaneseq
      %v4858 = vshrl.u32 %v4857, 7
      %v4859 = vsub.s32 0, %v4858
      %v4860 = vrot.slane %v3827, %v4859
      %v4861 = vlaneseq
      %v4862 = vshrl.u32 %v4861, 7
      %v4863 = vsub.s32 1, %v4862
      %v4864 = vrot.slane %v3827, %v4863
      %v4865 = vlaneseq
      %v4866 = vshrl.u32 %v4865, 7
      %v4867 = vsub.s32 0, %v4866
      %v4868 = vrot.slane %v3834, %v4867
      %v4869 = vlaneseq
      %v4870 = vshrl.u32 %v4869, 7
      %v4871 = vsub.s32 1, %v4870
      %v4872 = vrot.slane %v3834, %v4871
      %v4873 = vlaneseq
      %v4874 = vshrl.u32 %v4873, 7
      %v4875 = vsub.s32 0, %v4874
      %v4876 = vrot.slane %v3841, %v4875
      %v4877 = vlaneseq
      %v4878 = vshrl.u32 %v4877, 7
      %v4879 = vsub.s32 1, %v4878
      %v4880 = vrot.slane %v3841, %v4879
      %v4881 = vlaneseq
      %v4882 = vshrl.u32 %v4881, 7
      %v4883 = vsub.s32 0, %v4882
      %v4884 = vrot.slane %v3848, %v4883
      %v4885 = vlaneseq
      %v4886 = vshrl.u32 %v4885, 7
      %v4887 = vsub.s32 1, %v4886
      %v4888 = vrot.slane %v3848, %v4887
      %v4889 = vlaneseq
      %v4890 = vshrl.u32 %v4889, 7
      %v4891 = vsub.s32 0, %v4890
      %v4892 = vrot.slane %v3855, %v4891
      %v4893 = vlaneseq
      %v4894 = vshrl.u32 %v4893, 7
      %v4895 = vsub.s32 1, %v4894
      %v4896 = vrot.slane %v3855, %v4895
      %v4897 = vlaneseq
      %v4898 = vshrl.u32 %v4897, 7
      %v4899 = vsub.s32 0, %v4898
      %v4900 = vrot.slane %v3862, %v4899
      %v4901 = vlaneseq
      %v4902 = vshrl.u32 %v4901, 7
      %v4903 = vsub.s32 1, %v4902
      %v4904 = vrot.slane %v3862, %v4903
      %v4905 = vlaneseq
      %v4906 = vshrl.u32 %v4905, 7
      %v4907 = vsub.s32 0, %v4906
      %v4908 = vrot.slane %v3869, %v4907
      %v4909 = vlaneseq
      %v4910 = vshrl.u32 %v4909, 7
      %v4911 = vsub.s32 1, %v4910
      %v4912 = vrot.slane %v3869, %v4911
      %v4913 = vlaneseq
      %v4914 = vshrl.u32 %v4913, 7
      %v4915 = vsub.s32 0, %v4914
      %v4916 = vrot.slane %v3876, %v4915
      %v4917 = vlaneseq
      %v4918 = vshrl.u32 %v4917, 7
      %v4919 = vsub.s32 1, %v4918
      %v4920 = vrot.slane %v3876, %v4919
      %v4921 = vlaneseq
      %v4922 = vshrl.u32 %v4921, 7
      %v4923 = vsub.s32 0, %v4922
      %v4924 = vrot.slane %v3883, %v4923
      %v4925 = vlaneseq
      %v4926 = vshrl.u32 %v4925, 7
      %v4927 = vsub.s32 1, %v4926
      %v4928 = vrot.slane %v3883, %v4927
      %v4929 = vlaneseq
      %v4930 = vshrl.u32 %v4929, 7
      %v4931 = vsub.s32 0, %v4930
      %v4932 = vrot.slane %v3890, %v4931
      %v4933 = vlaneseq
      %v4934 = vshrl.u32 %v4933, 7
      %v4935 = vsub.s32 1, %v4934
      %v4936 = vrot.slane %v3890, %v4935
      %v4937 = vlaneseq
      %v4938 = vshrl.u32 %v4937, 7
      %v4939 = vsub.s32 0, %v4938
      %v4940 = vrot.slane %v3897, %v4939
      %v4941 = vlaneseq
      %v4942 = vshrl.u32 %v4941, 7
      %v4943 = vsub.s32 1, %v4942
      %v4944 = vrot.slane %v3897, %v4943
      %v4945 = vlaneseq
      %v4946 = vshrl.u32 %v4945, 7
      %v4947 = vsub.s32 0, %v4946
      %v4948 = vrot.slane %v3904, %v4947
      %v4949 = vlaneseq
      %v4950 = vshrl.u32 %v4949, 7
      %v4951 = vsub.s32 1, %v4950
      %v4952 = vrot.slane %v3904, %v4951
      %v4953 = vlaneseq
      %v4954 = vshrl.u32 %v4953, 7
      %v4955 = vsub.s32 0, %v4954
      %v4956 = vrot.slane %v3911, %v4955
      %v4957 = vlaneseq
      %v4958 = vshrl.u32 %v4957, 7
      %v4959 = vsub.s32 1, %v4958
      %v4960 = vrot.slane %v3911, %v4959
      %v4961 = vlaneseq
      %v4962 = vshrl.u32 %v4961, 7
      %v4963 = vsub.s32 0, %v4962
      %v4964 = vrot.slane %v3918, %v4963
      %v4965 = vlaneseq
      %v4966 = vshrl.u32 %v4965, 7
      %v4967 = vsub.s32 1, %v4966
      %v4968 = vrot.slane %v3918, %v4967
      %v4969 = vlaneseq
      %v4970 = vshrl.u32 %v4969, 7
      %v4971 = vsub.s32 0, %v4970
      %v4972 = vrot.slane %v3925, %v4971
      %v4973 = vlaneseq
      %v4974 = vshrl.u32 %v4973, 7
      %v4975 = vsub.s32 1, %v4974
      %v4976 = vrot.slane %v3925, %v4975
      %v4977 = vlaneseq
      %v4978 = vshrl.u32 %v4977, 7
      %v4979 = vsub.s32 0, %v4978
      %v4980 = vrot.slane %v3932, %v4979
      %v4981 = vlaneseq
      %v4982 = vshrl.u32 %v4981, 7
      %v4983 = vsub.s32 1, %v4982
      %v4984 = vrot.slane %v3932, %v4983
      %v4985 = vlaneseq
      %v4986 = vshrl.u32 %v4985, 7
      %v4987 = vsub.s32 0, %v4986
      %v4988 = vrot.slane %v3939, %v4987
      %v4989 = vlaneseq
      %v4990 = vshrl.u32 %v4989, 7
      %v4991 = vsub.s32 1, %v4990
      %v4992 = vrot.slane %v3939, %v4991
      %v4993 = vlaneseq
      %v4994 = vshrl.u32 %v4993, 7
      %v4995 = vsub.s32 0, %v4994
      %v4996 = vrot.slane %v3946, %v4995
      %v4997 = vlaneseq
      %v4998 = vshrl.u32 %v4997, 7
      %v4999 = vsub.s32 1, %v4998
      %v5000 = vrot.slane %v3946, %v4999
      %v5001 = vlaneseq
      %v5002 = vshrl.u32 %v5001, 7
      %v5003 = vsub.s32 0, %v5002
      %v5004 = vrot.slane %v3953, %v5003
      %v5005 = vlaneseq
      %v5006 = vshrl.u32 %v5005, 7
      %v5007 = vsub.s32 1, %v5006
      %v5008 = vrot.slane %v3953, %v5007
      %v5009 = vlaneseq
      %v5010 = vshrl.u32 %v5009, 7
      %v5011 = vsub.s32 0, %v5010
      %v5012 = vrot.slane %v3960, %v5011
      %v5013 = vlaneseq
      %v5014 = vshrl.u32 %v5013, 7
      %v5015 = vsub.s32 1, %v5014
      %v5016 = vrot.slane %v3960, %v5015
      %v5017 = vlaneseq
      %v5018 = vshrl.u32 %v5017, 7
      %v5019 = vsub.s32 0, %v5018
      %v5020 = vrot.slane %v3967, %v5019
      %v5021 = vlaneseq
      %v5022 = vshrl.u32 %v5021, 7
      %v5023 = vsub.s32 1, %v5022
      %v5024 = vrot.slane %v3967, %v5023
      %v5025 = vlaneseq
      %v5026 = vshrl.u32 %v5025, 7
      %v5027 = vsub.s32 0, %v5026
      %v5028 = vrot.slane %v3974, %v5027
      %v5029 = vlaneseq
      %v5030 = vshrl.u32 %v5029, 7
      %v5031 = vsub.s32 1, %v5030
      %v5032 = vrot.slane %v3974, %v5031
      %v5033 = vlaneseq
      %v5034 = vshrl.u32 %v5033, 7
      %v5035 = vsub.s32 0, %v5034
      %v5036 = vrot.slane %v3981, %v5035
      %v5037 = vlaneseq
      %v5038 = vshrl.u32 %v5037, 7
      %v5039 = vsub.s32 1, %v5038
      %v5040 = vrot.slane %v3981, %v5039
      %v5041 = vlaneseq
      %v5042 = vshrl.u32 %v5041, 7
      %v5043 = vsub.s32 0, %v5042
      %v5044 = vrot.slane %v3988, %v5043
      %v5045 = vlaneseq
      %v5046 = vshrl.u32 %v5045, 7
      %v5047 = vsub.s32 1, %v5046
      %v5048 = vrot.slane %v3988, %v5047
      %v5049 = vlaneseq
      %v5050 = vshrl.u32 %v5049, 7
      %v5051 = vsub.s32 0, %v5050
      %v5052 = vrot.slane %v3995, %v5051
      %v5053 = vlaneseq
      %v5054 = vshrl.u32 %v5053, 7
      %v5055 = vsub.s32 1, %v5054
      %v5056 = vrot.slane %v3995, %v5055
      %v5057 = vlaneseq
      %v5058 = vshrl.u32 %v5057, 7
      %v5059 = vsub.s32 0, %v5058
      %v5060 = vrot.slane %v4002, %v5059
      %v5061 = vlaneseq
      %v5062 = vshrl.u32 %v5061, 7
      %v5063 = vsub.s32 1, %v5062
      %v5064 = vrot.slane %v4002, %v5063
      %v5065 = vlaneseq
      %v5066 = vshrl.u32 %v5065, 7
      %v5067 = vsub.s32 0, %v5066
      %v5068 = vrot.slane %v4009, %v5067
      %v5069 = vlaneseq
      %v5070 = vshrl.u32 %v5069, 7
      %v5071 = vsub.s32 1, %v5070
      %v5072 = vrot.slane %v4009, %v5071
      %v5073 = vlaneseq
      %v5074 = vshrl.u32 %v5073, 7
      %v5075 = vsub.s32 0, %v5074
      %v5076 = vrot.slane %v4016, %v5075
      %v5077 = vlaneseq
      %v5078 = vshrl.u32 %v5077, 7
      %v5079 = vsub.s32 1, %v5078
      %v5080 = vrot.slane %v4016, %v5079
      %v5081 = vlaneseq
      %v5082 = vshrl.u32 %v5081, 7
      %v5083 = vsub.s32 0, %v5082
      %v5084 = vrot.slane %v4023, %v5083
      %v5085 = vlaneseq
      %v5086 = vshrl.u32 %v5085, 7
      %v5087 = vsub.s32 1, %v5086
      %v5088 = vrot.slane %v4023, %v5087
      %v5089 = vlaneseq
      %v5090 = vshrl.u32 %v5089, 7
      %v5091 = vsub.s32 0, %v5090
      %v5092 = vrot.slane %v4030, %v5091
      %v5093 = vlaneseq
      %v5094 = vshrl.u32 %v5093, 7
      %v5095 = vsub.s32 1, %v5094
      %v5096 = vrot.slane %v4030, %v5095
      %v5097 = vlaneseq
      %v5098 = vshrl.u32 %v5097, 7
      %v5099 = vsub.s32 0, %v5098
      %v5100 = vrot.slane %v4037, %v5099
      %v5101 = vlaneseq
      %v5102 = vshrl.u32 %v5101, 7
      %v5103 = vsub.s32 1, %v5102
      %v5104 = vrot.slane %v4037, %v5103
      %v5105 = vlaneseq
      %v5106 = vshrl.u32 %v5105, 7
      %v5107 = vsub.s32 0, %v5106
      %v5108 = vrot.slane %v4044, %v5107
      %v5109 = vlaneseq
      %v5110 = vshrl.u32 %v5109, 7
      %v5111 = vsub.s32 1, %v5110
      %v5112 = vrot.slane %v4044, %v5111
      %v5113 = vlaneseq
      %v5114 = vshrl.u32 %v5113, 7
      %v5115 = vsub.s32 0, %v5114
      %v5116 = vrot.slane %v4051, %v5115
      %v5117 = vlaneseq
      %v5118 = vshrl.u32 %v5117, 7
      %v5119 = vsub.s32 1, %v5118
      %v5120 = vrot.slane %v4051, %v5119
      %v5121 = vlaneseq
      %v5122 = vshrl.u32 %v5121, 7
      %v5123 = vsub.s32 0, %v5122
      %v5124 = vrot.slane %v4058, %v5123
      %v5125 = vlaneseq
      %v5126 = vshrl.u32 %v5125, 7
      %v5127 = vsub.s32 1, %v5126
      %v5128 = vrot.slane %v4058, %v5127
      %v5129 = vlaneseq
      %v5130 = vshrl.u32 %v5129, 7
      %v5131 = vsub.s32 0, %v5130
      %v5132 = vrot.slane %v4065, %v5131
      %v5133 = vlaneseq
      %v5134 = vshrl.u32 %v5133, 7
      %v5135 = vsub.s32 1, %v5134
      %v5136 = vrot.slane %v4065, %v5135
      %v5137 = vlaneseq
      %v5138 = vshrl.u32 %v5137, 7
      %v5139 = vsub.s32 0, %v5138
      %v5140 = vrot.slane %v4072, %v5139
      %v5141 = vlaneseq
      %v5142 = vshrl.u32 %v5141, 7
      %v5143 = vsub.s32 1, %v5142
      %v5144 = vrot.slane %v4072, %v5143
      %v5145 = vlaneseq
      %v5146 = vshrl.u32 %v5145, 7
      %v5147 = vsub.s32 0, %v5146
      %v5148 = vrot.slane %v4079, %v5147
      %v5149 = vlaneseq
      %v5150 = vshrl.u32 %v5149, 7
      %v5151 = vsub.s32 1, %v5150
      %v5152 = vrot.slane %v4079, %v5151
      %v5153 = vlaneseq
      %v5154 = vshrl.u32 %v5153, 7
      %v5155 = vsub.s32 0, %v5154
      %v5156 = vrot.slane %v4086, %v5155
      %v5157 = vlaneseq
      %v5158 = vshrl.u32 %v5157, 7
      %v5159 = vsub.s32 1, %v5158
      %v5160 = vrot.slane %v4086, %v5159
      %v5161 = vlaneseq
      %v5162 = vshrl.u32 %v5161, 7
      %v5163 = vsub.s32 0, %v5162
      %v5164 = vrot.slane %v4093, %v5163
      %v5165 = vlaneseq
      %v5166 = vshrl.u32 %v5165, 7
      %v5167 = vsub.s32 1, %v5166
      %v5168 = vrot.slane %v4093, %v5167
      %v5169 = vlaneseq
      %v5170 = vshrl.u32 %v5169, 7
      %v5171 = vsub.s32 0, %v5170
      %v5172 = vrot.slane %v4100, %v5171
      %v5173 = vlaneseq
      %v5174 = vshrl.u32 %v5173, 7
      %v5175 = vsub.s32 1, %v5174
      %v5176 = vrot.slane %v4100, %v5175
      %v5177 = vlaneseq
      %v5178 = vshrl.u32 %v5177, 7
      %v5179 = vsub.s32 0, %v5178
      %v5180 = vrot.slane %v4107, %v5179
      %v5181 = vlaneseq
      %v5182 = vshrl.u32 %v5181, 7
      %v5183 = vsub.s32 1, %v5182
      %v5184 = vrot.slane %v4107, %v5183
      %v5185 = vlaneseq
      %v5186 = vshrl.u32 %v5185, 7
      %v5187 = vsub.s32 0, %v5186
      %v5188 = vrot.slane %v4114, %v5187
      %v5189 = vlaneseq
      %v5190 = vshrl.u32 %v5189, 7
      %v5191 = vsub.s32 1, %v5190
      %v5192 = vrot.slane %v4114, %v5191
      %v5193 = vlaneseq
      %v5194 = vshrl.u32 %v5193, 7
      %v5195 = vsub.s32 0, %v5194
      %v5196 = vrot.slane %v4121, %v5195
      %v5197 = vlaneseq
      %v5198 = vshrl.u32 %v5197, 7
      %v5199 = vsub.s32 1, %v5198
      %v5200 = vrot.slane %v4121, %v5199
      %v5201 = vlaneseq
      %v5202 = vshrl.u32 %v5201, 7
      %v5203 = vsub.s32 0, %v5202
      %v5204 = vrot.slane %v4128, %v5203
      %v5205 = vlaneseq
      %v5206 = vshrl.u32 %v5205, 7
      %v5207 = vsub.s32 1, %v5206
      %v5208 = vrot.slane %v4128, %v5207
      %v5209 = vlaneseq
      %v5210 = vshrl.u32 %v5209, 7
      %v5211 = vsub.s32 0, %v5210
      %v5212 = vrot.slane %v4135, %v5211
      %v5213 = vlaneseq
      %v5214 = vshrl.u32 %v5213, 7
      %v5215 = vsub.s32 1, %v5214
      %v5216 = vrot.slane %v4135, %v5215
      %v5217 = vlaneseq
      %v5218 = vshrl.u32 %v5217, 7
      %v5219 = vsub.s32 0, %v5218
      %v5220 = vrot.slane %v4142, %v5219
      %v5221 = vlaneseq
      %v5222 = vshrl.u32 %v5221, 7
      %v5223 = vsub.s32 1, %v5222
      %v5224 = vrot.slane %v4142, %v5223
      %v5225 = vlaneseq
      %v5226 = vshrl.u32 %v5225, 7
      %v5227 = vsub.s32 0, %v5226
      %v5228 = vrot.slane %v4149, %v5227
      %v5229 = vlaneseq
      %v5230 = vshrl.u32 %v5229, 7
      %v5231 = vsub.s32 1, %v5230
      %v5232 = vrot.slane %v4149, %v5231
      %v5233 = vlaneseq
      %v5234 = vshrl.u32 %v5233, 7
      %v5235 = vsub.s32 0, %v5234
      %v5236 = vrot.slane %v4156, %v5235
      %v5237 = vlaneseq
      %v5238 = vshrl.u32 %v5237, 7
      %v5239 = vsub.s32 1, %v5238
      %v5240 = vrot.slane %v4156, %v5239
      %v5241 = vlaneseq
      %v5242 = vshrl.u32 %v5241, 7
      %v5243 = vsub.s32 0, %v5242
      %v5244 = vrot.slane %v4163, %v5243
      %v5245 = vlaneseq
      %v5246 = vshrl.u32 %v5245, 7
      %v5247 = vsub.s32 1, %v5246
      %v5248 = vrot.slane %v4163, %v5247
      %v5249 = vlaneseq
      %v5250 = vshrl.u32 %v5249, 7
      %v5251 = vsub.s32 0, %v5250
      %v5252 = vrot.slane %v4170, %v5251
      %v5253 = vlaneseq
      %v5254 = vshrl.u32 %v5253, 7
      %v5255 = vsub.s32 1, %v5254
      %v5256 = vrot.slane %v4170, %v5255
      %v5257 = vlaneseq
      %v5258 = vshrl.u32 %v5257, 7
      %v5259 = vsub.s32 0, %v5258
      %v5260 = vrot.slane %v4177, %v5259
      %v5261 = vlaneseq
      %v5262 = vshrl.u32 %v5261, 7
      %v5263 = vsub.s32 1, %v5262
      %v5264 = vrot.slane %v4177, %v5263
      %v5265 = vlaneseq
      %v5266 = vshrl.u32 %v5265, 7
      %v5267 = vsub.s32 0, %v5266
      %v5268 = vrot.slane %v4184, %v5267
      %v5269 = vlaneseq
      %v5270 = vshrl.u32 %v5269, 7
      %v5271 = vsub.s32 1, %v5270
      %v5272 = vrot.slane %v4184, %v5271
      %v5273 = vlaneseq
      %v5274 = vshrl.u32 %v5273, 7
      %v5275 = vsub.s32 0, %v5274
      %v5276 = vrot.slane %v4191, %v5275
      %v5277 = vlaneseq
      %v5278 = vshrl.u32 %v5277, 7
      %v5279 = vsub.s32 1, %v5278
      %v5280 = vrot.slane %v4191, %v5279
      %v5281 = vlaneseq
      %v5282 = vshrl.u32 %v5281, 7
      %v5283 = vsub.s32 0, %v5282
      %v5284 = vrot.slane %v4198, %v5283
      %v5285 = vlaneseq
      %v5286 = vshrl.u32 %v5285, 7
      %v5287 = vsub.s32 1, %v5286
      %v5288 = vrot.slane %v4198, %v5287
      %v5289 = vlaneseq
      %v5290 = vshrl.u32 %v5289, 7
      %v5291 = vsub.s32 0, %v5290
      %v5292 = vrot.slane %v4205, %v5291
      %v5293 = vlaneseq
      %v5294 = vshrl.u32 %v5293, 7
      %v5295 = vsub.s32 1, %v5294
      %v5296 = vrot.slane %v4205, %v5295
      %v5297 = vlaneseq
      %v5298 = vshrl.u32 %v5297, 7
      %v5299 = vsub.s32 0, %v5298
      %v5300 = vrot.slane %v4212, %v5299
      %v5301 = vlaneseq
      %v5302 = vshrl.u32 %v5301, 7
      %v5303 = vsub.s32 1, %v5302
      %v5304 = vrot.slane %v4212, %v5303
      %v5305 = vlaneseq
      %v5306 = vshrl.u32 %v5305, 7
      %v5307 = vsub.s32 0, %v5306
      %v5308 = vrot.slane %v4219, %v5307
      %v5309 = vlaneseq
      %v5310 = vshrl.u32 %v5309, 7
      %v5311 = vsub.s32 1, %v5310
      %v5312 = vrot.slane %v4219, %v5311
      %v5313 = vlaneseq
      %v5314 = vshrl.u32 %v5313, 7
      %v5315 = vsub.s32 0, %v5314
      %v5316 = vrot.slane %v4226, %v5315
      %v5317 = vlaneseq
      %v5318 = vshrl.u32 %v5317, 7
      %v5319 = vsub.s32 1, %v5318
      %v5320 = vrot.slane %v4226, %v5319
      %v5321 = vlaneseq
      %v5322 = vshrl.u32 %v5321, 7
      %v5323 = vsub.s32 0, %v5322
      %v5324 = vrot.slane %v4233, %v5323
      %v5325 = vlaneseq
      %v5326 = vshrl.u32 %v5325, 7
      %v5327 = vsub.s32 1, %v5326
      %v5328 = vrot.slane %v4233, %v5327
      %v5329 = vlaneseq
      %v5330 = vshrl.u32 %v5329, 7
      %v5331 = vsub.s32 0, %v5330
      %v5332 = vrot.slane %v4240, %v5331
      %v5333 = vlaneseq
      %v5334 = vshrl.u32 %v5333, 7
      %v5335 = vsub.s32 1, %v5334
      %v5336 = vrot.slane %v4240, %v5335
      %v5337 = vlaneseq
      %v5338 = vshrl.u32 %v5337, 7
      %v5339 = vsub.s32 0, %v5338
      %v5340 = vrot.slane %v4247, %v5339
      %v5341 = vlaneseq
      %v5342 = vshrl.u32 %v5341, 7
      %v5343 = vsub.s32 1, %v5342
      %v5344 = vrot.slane %v4247, %v5343
      %v5345 = vlaneseq
      %v5346 = vshrl.u32 %v5345, 7
      %v5347 = vsub.s32 0, %v5346
      %v5348 = vrot.slane %v4254, %v5347
      %v5349 = vlaneseq
      %v5350 = vshrl.u32 %v5349, 7
      %v5351 = vsub.s32 1, %v5350
      %v5352 = vrot.slane %v4254, %v5351
      %v5353 = vlaneseq
      %v5354 = vshrl.u32 %v5353, 7
      %v5355 = vsub.s32 0, %v5354
      %v5356 = vrot.slane %v4261, %v5355
      %v5357 = vlaneseq
      %v5358 = vshrl.u32 %v5357, 7
      %v5359 = vsub.s32 1, %v5358
      %v5360 = vrot.slane %v4261, %v5359
      %v5361 = vlaneseq
      %v5362 = vshrl.u32 %v5361, 7
      %v5363 = vsub.s32 0, %v5362
      %v5364 = vrot.slane %v4268, %v5363
      %v5365 = vlaneseq
      %v5366 = vshrl.u32 %v5365, 7
      %v5367 = vsub.s32 1, %v5366
      %v5368 = vrot.slane %v4268, %v5367
      %v5369 = vlaneseq
      %v5370 = vshrl.u32 %v5369, 7
      %v5371 = vsub.s32 0, %v5370
      %v5372 = vrot.slane %v4275, %v5371
      %v5373 = vlaneseq
      %v5374 = vshrl.u32 %v5373, 7
      %v5375 = vsub.s32 1, %v5374
      %v5376 = vrot.slane %v4275, %v5375
      %v5377 = vlaneseq
      %v5378 = vshrl.u32 %v5377, 7
      %v5379 = vsub.s32 0, %v5378
      %v5380 = vrot.slane %v4282, %v5379
      %v5381 = vlaneseq
      %v5382 = vshrl.u32 %v5381, 7
      %v5383 = vsub.s32 1, %v5382
      %v5384 = vrot.slane %v4282, %v5383
      %v5385 = vlaneseq
      %v5386 = vshrl.u32 %v5385, 7
      %v5387 = vsub.s32 0, %v5386
      %v5388 = vrot.slane %v4289, %v5387
      %v5389 = vlaneseq
      %v5390 = vshrl.u32 %v5389, 7
      %v5391 = vsub.s32 1, %v5390
      %v5392 = vrot.slane %v4289, %v5391
      %v5393 = vlaneseq
      %v5394 = vshrl.u32 %v5393, 7
      %v5395 = vsub.s32 0, %v5394
      %v5396 = vrot.slane %v4296, %v5395
      %v5397 = vlaneseq
      %v5398 = vshrl.u32 %v5397, 7
      %v5399 = vsub.s32 1, %v5398
      %v5400 = vrot.slane %v4296, %v5399
      %v5401 = vlaneseq
      %v5402 = vshrl.u32 %v5401, 7
      %v5403 = vsub.s32 0, %v5402
      %v5404 = vrot.slane %v4303, %v5403
      %v5405 = vlaneseq
      %v5406 = vshrl.u32 %v5405, 7
      %v5407 = vsub.s32 1, %v5406
      %v5408 = vrot.slane %v4303, %v5407
      %v5409 = vlaneseq
      %v5410 = vshrl.u32 %v5409, 7
      %v5411 = vsub.s32 0, %v5410
      %v5412 = vrot.slane %v4310, %v5411
      %v5413 = vlaneseq
      %v5414 = vshrl.u32 %v5413, 7
      %v5415 = vsub.s32 1, %v5414
      %v5416 = vrot.slane %v4310, %v5415
      %v5417 = vlaneseq
      %v5418 = vshrl.u32 %v5417, 7
      %v5419 = vsub.s32 0, %v5418
      %v5420 = vrot.slane %v4317, %v5419
      %v5421 = vlaneseq
      %v5422 = vshrl.u32 %v5421, 7
      %v5423 = vsub.s32 1, %v5422
      %v5424 = vrot.slane %v4317, %v5423
      %v5425 = vlaneseq
      %v5426 = vshrl.u32 %v5425, 7
      %v5427 = vsub.s32 0, %v5426
      %v5428 = vrot.slane %v4324, %v5427
      %v5429 = vlaneseq
      %v5430 = vshrl.u32 %v5429, 7
      %v5431 = vsub.s32 1, %v5430
      %v5432 = vrot.slane %v4324, %v5431
      %v5433 = vlaneseq
      %v5434 = vshrl.u32 %v5433, 7
      %v5435 = vsub.s32 0, %v5434
      %v5436 = vrot.slane %v4331, %v5435
      %v5437 = vlaneseq
      %v5438 = vshrl.u32 %v5437, 7
      %v5439 = vsub.s32 1, %v5438
      %v5440 = vrot.slane %v4331, %v5439
      %v5441 = vlaneseq
      %v5442 = vshrl.u32 %v5441, 7
      %v5443 = vsub.s32 0, %v5442
      %v5444 = vrot.slane %v4338, %v5443
      %v5445 = vlaneseq
      %v5446 = vshrl.u32 %v5445, 7
      %v5447 = vsub.s32 1, %v5446
      %v5448 = vrot.slane %v4338, %v5447
      %v5449 = vlaneseq
      %v5450 = vshrl.u32 %v5449, 7
      %v5451 = vsub.s32 0, %v5450
      %v5452 = vrot.slane %v4345, %v5451
      %v5453 = vlaneseq
      %v5454 = vshrl.u32 %v5453, 7
      %v5455 = vsub.s32 1, %v5454
      %v5456 = vrot.slane %v4345, %v5455
      %v5457 = vlaneseq
      %v5458 = vshrl.u32 %v5457, 7
      %v5459 = vsub.s32 0, %v5458
      %v5460 = vrot.slane %v4352, %v5459
      %v5461 = vlaneseq
      %v5462 = vshrl.u32 %v5461, 7
      %v5463 = vsub.s32 1, %v5462
      %v5464 = vrot.slane %v4352, %v5463
      %v5465 = vlaneseq
      %v5466 = vshrl.u32 %v5465, 7
      %v5467 = vsub.s32 0, %v5466
      %v5468 = vrot.slane %v4359, %v5467
      %v5469 = vlaneseq
      %v5470 = vshrl.u32 %v5469, 7
      %v5471 = vsub.s32 1, %v5470
      %v5472 = vrot.slane %v4359, %v5471
      %v5473 = vlaneseq
      %v5474 = vshrl.u32 %v5473, 7
      %v5475 = vsub.s32 0, %v5474
      %v5476 = vrot.slane %v4366, %v5475
      %v5477 = vlaneseq
      %v5478 = vshrl.u32 %v5477, 7
      %v5479 = vsub.s32 1, %v5478
      %v5480 = vrot.slane %v4366, %v5479
      %v5481 = vlaneseq
      %v5482 = vshrl.u32 %v5481, 7
      %v5483 = vsub.s32 0, %v5482
      %v5484 = vrot.slane %v4373, %v5483
      %v5485 = vlaneseq
      %v5486 = vshrl.u32 %v5485, 7
      %v5487 = vsub.s32 1, %v5486
      %v5488 = vrot.slane %v4373, %v5487
      %v5489 = vlaneseq
      %v5490 = vshrl.u32 %v5489, 7
      %v5491 = vsub.s32 0, %v5490
      %v5492 = vrot.slane %v4380, %v5491
      %v5493 = vlaneseq
      %v5494 = vshrl.u32 %v5493, 7
      %v5495 = vsub.s32 1, %v5494
      %v5496 = vrot.slane %v4380, %v5495
      %v5497 = vlaneseq
      %v5498 = vshrl.u32 %v5497, 7
      %v5499 = vsub.s32 0, %v5498
      %v5500 = vrot.slane %v4387, %v5499
      %v5501 = vlaneseq
      %v5502 = vshrl.u32 %v5501, 7
      %v5503 = vsub.s32 1, %v5502
      %v5504 = vrot.slane %v4387, %v5503
      %v5505 = vlaneseq
      %v5506 = vshrl.u32 %v5505, 7
      %v5507 = vsub.s32 0, %v5506
      %v5508 = vrot.slane %v4394, %v5507
      %v5509 = vlaneseq
      %v5510 = vshrl.u32 %v5509, 7
      %v5511 = vsub.s32 1, %v5510
      %v5512 = vrot.slane %v4394, %v5511
      %v5513 = vlaneseq
      %v5514 = vshrl.u32 %v5513, 7
      %v5515 = vsub.s32 0, %v5514
      %v5516 = vrot.slane %v4401, %v5515
      %v5517 = vlaneseq
      %v5518 = vshrl.u32 %v5517, 7
      %v5519 = vsub.s32 1, %v5518
      %v5520 = vrot.slane %v4401, %v5519
      %v5521 = vlaneseq
      %v5522 = vshrl.u32 %v5521, 7
      %v5523 = vsub.s32 0, %v5522
      %v5524 = vrot.slane %v4408, %v5523
      %v5525 = vlaneseq
      %v5526 = vshrl.u32 %v5525, 7
      %v5527 = vsub.s32 1, %v5526
      %v5528 = vrot.slane %v4408, %v5527
      %v5529 = vlaneseq
      %v5530 = vshrl.u32 %v5529, 7
      %v5531 = vsub.s32 0, %v5530
      %v5532 = vrot.slane %v4415, %v5531
      %v5533 = vlaneseq
      %v5534 = vshrl.u32 %v5533, 7
      %v5535 = vsub.s32 1, %v5534
      %v5536 = vrot.slane %v4415, %v5535
      %v5537 = vlaneseq
      %v5538 = vshrl.u32 %v5537, 7
      %v5539 = vsub.s32 0, %v5538
      %v5540 = vrot.slane %v4422, %v5539
      %v5541 = vlaneseq
      %v5542 = vshrl.u32 %v5541, 7
      %v5543 = vsub.s32 1, %v5542
      %v5544 = vrot.slane %v4422, %v5543
      %v5545 = vlaneseq
      %v5546 = vshrl.u32 %v5545, 7
      %v5547 = vsub.s32 0, %v5546
      %v5548 = vrot.slane %v4429, %v5547
      %v5549 = vlaneseq
      %v5550 = vshrl.u32 %v5549, 7
      %v5551 = vsub.s32 1, %v5550
      %v5552 = vrot.slane %v4429, %v5551
      %v5553 = vlaneseq
      %v5554 = vshrl.u32 %v5553, 7
      %v5555 = vsub.s32 0, %v5554
      %v5556 = vrot.slane %v4436, %v5555
      %v5557 = vlaneseq
      %v5558 = vshrl.u32 %v5557, 7
      %v5559 = vsub.s32 1, %v5558
      %v5560 = vrot.slane %v4436, %v5559
      %v5561 = vlaneseq
      %v5562 = vshrl.u32 %v5561, 7
      %v5563 = vsub.s32 0, %v5562
      %v5564 = vrot.slane %v4443, %v5563
      %v5565 = vlaneseq
      %v5566 = vshrl.u32 %v5565, 7
      %v5567 = vsub.s32 1, %v5566
      %v5568 = vrot.slane %v4443, %v5567
      %v5569 = vlaneseq
      %v5570 = vshrl.u32 %v5569, 7
      %v5571 = vsub.s32 0, %v5570
      %v5572 = vrot.slane %v4450, %v5571
      %v5573 = vlaneseq
      %v5574 = vshrl.u32 %v5573, 7
      %v5575 = vsub.s32 1, %v5574
      %v5576 = vrot.slane %v4450, %v5575
      %v5577 = vlaneseq
      %v5578 = vshrl.u32 %v5577, 7
      %v5579 = vsub.s32 0, %v5578
      %v5580 = vrot.slane %v4457, %v5579
      %v5581 = vlaneseq
      %v5582 = vshrl.u32 %v5581, 7
      %v5583 = vsub.s32 1, %v5582
      %v5584 = vrot.slane %v4457, %v5583
      %v5585 = vlaneseq
      %v5586 = vshrl.u32 %v5585, 7
      %v5587 = vsub.s32 0, %v5586
      %v5588 = vrot.slane %v4464, %v5587
      %v5589 = vlaneseq
      %v5590 = vshrl.u32 %v5589, 7
      %v5591 = vsub.s32 1, %v5590
      %v5592 = vrot.slane %v4464, %v5591
      %v5593 = vlaneseq
      %v5594 = vshrl.u32 %v5593, 7
      %v5595 = vsub.s32 0, %v5594
      %v5596 = vrot.slane %v4471, %v5595
      %v5597 = vlaneseq
      %v5598 = vshrl.u32 %v5597, 7
      %v5599 = vsub.s32 1, %v5598
      %v5600 = vrot.slane %v4471, %v5599
      %v5601 = vlaneseq
      %v5602 = vshrl.u32 %v5601, 7
      %v5603 = vsub.s32 0, %v5602
      %v5604 = vrot.slane %v4478, %v5603
      %v5605 = vlaneseq
      %v5606 = vshrl.u32 %v5605, 7
      %v5607 = vsub.s32 1, %v5606
      %v5608 = vrot.slane %v4478, %v5607
      %v5609 = vlaneseq
      %v5610 = vshrl.u32 %v5609, 7
      %v5611 = vsub.s32 0, %v5610
      %v5612 = vrot.slane %v4485, %v5611
      %v5613 = vlaneseq
      %v5614 = vshrl.u32 %v5613, 7
      %v5615 = vsub.s32 1, %v5614
      %v5616 = vrot.slane %v4485, %v5615
      %v5617 = vlaneseq
      %v5618 = vshrl.u32 %v5617, 7
      %v5619 = vsub.s32 0, %v5618
      %v5620 = vrot.slane %v4492, %v5619
      %v5621 = vlaneseq
      %v5622 = vshrl.u32 %v5621, 7
      %v5623 = vsub.s32 1, %v5622
      %v5624 = vrot.slane %v4492, %v5623
      %v5625 = vlaneseq
      %v5626 = vshrl.u32 %v5625, 7
      %v5627 = vsub.s32 0, %v5626
      %v5628 = vrot.slane %v4499, %v5627
      %v5629 = vlaneseq
      %v5630 = vshrl.u32 %v5629, 7
      %v5631 = vsub.s32 1, %v5630
      %v5632 = vrot.slane %v4499, %v5631
      %v5633 = vlaneseq
      %v5634 = vshrl.u32 %v5633, 7
      %v5635 = vsub.s32 0, %v5634
      %v5636 = vrot.slane %v4506, %v5635
      %v5637 = vlaneseq
      %v5638 = vshrl.u32 %v5637, 7
      %v5639 = vsub.s32 1, %v5638
      %v5640 = vrot.slane %v4506, %v5639
      %v5641 = vlaneseq
      %v5642 = vshrl.u32 %v5641, 7
      %v5643 = vsub.s32 0, %v5642
      %v5644 = vrot.slane %v4513, %v5643
      %v5645 = vlaneseq
      %v5646 = vshrl.u32 %v5645, 7
      %v5647 = vsub.s32 1, %v5646
      %v5648 = vrot.slane %v4513, %v5647
      %v5649 = vlaneseq
      %v5650 = vshrl.u32 %v5649, 7
      %v5651 = vsub.s32 0, %v5650
      %v5652 = vrot.slane %v4520, %v5651
      %v5653 = vlaneseq
      %v5654 = vshrl.u32 %v5653, 7
      %v5655 = vsub.s32 1, %v5654
      %v5656 = vrot.slane %v4520, %v5655
      %v5657 = vlaneseq
      %v5658 = vshrl.u32 %v5657, 7
      %v5659 = vsub.s32 0, %v5658
      %v5660 = vrot.slane %v4527, %v5659
      %v5661 = vlaneseq
      %v5662 = vshrl.u32 %v5661, 7
      %v5663 = vsub.s32 1, %v5662
      %v5664 = vrot.slane %v4527, %v5663
      %v5665 = vlaneseq
      %v5666 = vshrl.u32 %v5665, 7
      %v5667 = vsub.s32 0, %v5666
      %v5668 = vrot.slane %v4534, %v5667
      %v5669 = vlaneseq
      %v5670 = vshrl.u32 %v5669, 7
      %v5671 = vsub.s32 1, %v5670
      %v5672 = vrot.slane %v4534, %v5671
      %v5673 = vlaneseq
      %v5674 = vshrl.u32 %v5673, 7
      %v5675 = vsub.s32 0, %v5674
      %v5676 = vrot.slane %v4541, %v5675
      %v5677 = vlaneseq
      %v5678 = vshrl.u32 %v5677, 7
      %v5679 = vsub.s32 1, %v5678
      %v5680 = vrot.slane %v4541, %v5679
      %v5681 = vlaneseq
      %v5682 = vshrl.u32 %v5681, 7
      %v5683 = vsub.s32 0, %v5682
      %v5684 = vrot.slane %v4548, %v5683
      %v5685 = vlaneseq
      %v5686 = vshrl.u32 %v5685, 7
      %v5687 = vsub.s32 1, %v5686
      %v5688 = vrot.slane %v4548, %v5687
      %v5689 = vlaneseq
      %v5690 = vshrl.u32 %v5689, 7
      %v5691 = vsub.s32 0, %v5690
      %v5692 = vrot.slane %v4555, %v5691
      %v5693 = vlaneseq
      %v5694 = vshrl.u32 %v5693, 7
      %v5695 = vsub.s32 1, %v5694
      %v5696 = vrot.slane %v4555, %v5695
      %v5697 = vlaneseq
      %v5698 = vshrl.u32 %v5697, 7
      %v5699 = vsub.s32 0, %v5698
      %v5700 = vrot.slane %v4562, %v5699
      %v5701 = vlaneseq
      %v5702 = vshrl.u32 %v5701, 7
      %v5703 = vsub.s32 1, %v5702
      %v5704 = vrot.slane %v4562, %v5703
      %v5705 = vlaneseq
      %v5706 = vshrl.u32 %v5705, 7
      %v5707 = vsub.s32 0, %v5706
      %v5708 = vrot.slane %v4569, %v5707
      %v5709 = vlaneseq
      %v5710 = vshrl.u32 %v5709, 7
      %v5711 = vsub.s32 1, %v5710
      %v5712 = vrot.slane %v4569, %v5711
      %v5713 = vlaneseq
      %v5714 = vshrl.u32 %v5713, 7
      %v5715 = vsub.s32 0, %v5714
      %v5716 = vrot.slane %v4576, %v5715
      %v5717 = vlaneseq
      %v5718 = vshrl.u32 %v5717, 7
      %v5719 = vsub.s32 1, %v5718
      %v5720 = vrot.slane %v4576, %v5719
      %v5721 = vlaneseq
      %v5722 = vshrl.u32 %v5721, 7
      %v5723 = vsub.s32 0, %v5722
      %v5724 = vrot.slane %v4583, %v5723
      %v5725 = vlaneseq
      %v5726 = vshrl.u32 %v5725, 7
      %v5727 = vsub.s32 1, %v5726
      %v5728 = vrot.slane %v4583, %v5727
      %v5729 = vlaneseq
      %v5730 = vshrl.u32 %v5729, 7
      %v5731 = vsub.s32 0, %v5730
      %v5732 = vrot.slane %v4590, %v5731
      %v5733 = vlaneseq
      %v5734 = vshrl.u32 %v5733, 7
      %v5735 = vsub.s32 1, %v5734
      %v5736 = vrot.slane %v4590, %v5735
      %v5737 = vlaneseq
      %v5738 = vshrl.u32 %v5737, 7
      %v5739 = vsub.s32 0, %v5738
      %v5740 = vrot.slane %v4597, %v5739
      %v5741 = vlaneseq
      %v5742 = vshrl.u32 %v5741, 7
      %v5743 = vsub.s32 1, %v5742
      %v5744 = vrot.slane %v4597, %v5743
      %v5745 = vlaneseq
      %v5746 = vshrl.u32 %v5745, 7
      %v5747 = vsub.s32 0, %v5746
      %v5748 = vrot.slane %v4604, %v5747
      %v5749 = vlaneseq
      %v5750 = vshrl.u32 %v5749, 7
      %v5751 = vsub.s32 1, %v5750
      %v5752 = vrot.slane %v4604, %v5751
      %v5753 = vlaneseq
      %v5754 = vshrl.u32 %v5753, 7
      %v5755 = vsub.s32 0, %v5754
      %v5756 = vrot.slane %v4611, %v5755
      %v5757 = vlaneseq
      %v5758 = vshrl.u32 %v5757, 7
      %v5759 = vsub.s32 1, %v5758
      %v5760 = vrot.slane %v4611, %v5759
      %v5761 = vlaneseq
      %v5762 = vshrl.u32 %v5761, 7
      %v5763 = vsub.s32 0, %v5762
      %v5764 = vrot.slane %v4618, %v5763
      %v5765 = vlaneseq
      %v5766 = vshrl.u32 %v5765, 7
      %v5767 = vsub.s32 1, %v5766
      %v5768 = vrot.slane %v4618, %v5767
      %v5769 = vlaneseq
      %v5770 = vshrl.u32 %v5769, 7
      %v5771 = vsub.s32 0, %v5770
      %v5772 = vrot.slane %v4625, %v5771
      %v5773 = vlaneseq
      %v5774 = vshrl.u32 %v5773, 7
      %v5775 = vsub.s32 1, %v5774
      %v5776 = vrot.slane %v4625, %v5775
      %v5777 = vlaneseq
      %v5778 = vshrl.u32 %v5777, 7
      %v5779 = vsub.s32 0, %v5778
      %v5780 = vrot.slane %v4632, %v5779
      %v5781 = vlaneseq
      %v5782 = vshrl.u32 %v5781, 7
      %v5783 = vsub.s32 1, %v5782
      %v5784 = vrot.slane %v4632, %v5783
      %v5785 = vcombine.low %v4636, %v4640
      %v5786 = vcombine.low %v4644, %v4648
      %v5787 = vcombine.low %v4652, %v4656
      %v5788 = vcombine.low %v4660, %v4664
      %v5790 = vunpack.c.l.s4 1966171168
      %v5791 = vunpack.c.0.s8 %v5790
      %v5792 = vlaneseq
      %v5793 = vshrl.u32 %v5792, 7
      %v5794 = vsub.s32 %v5791, %v5793
      %v5795 = vrot.slane %v5785, %v5794
      %v5797 = vunpack.c.l.s4 1966171168
      %v5798 = vunpack.c.0.s8 %v5797
      %v5799 = vlaneseq
      %v5800 = vshrl.u32 %v5799, 7
      %v5801 = vsub.s32 %v5798, %v5800
      %v5802 = vrot.slane %v5786, %v5801
      %v5804 = vunpack.c.l.s4 1966171168
      %v5805 = vunpack.c.0.s8 %v5804
      %v5806 = vlaneseq
      %v5807 = vshrl.u32 %v5806, 7
      %v5808 = vsub.s32 %v5805, %v5807
      %v5809 = vrot.slane %v5787, %v5808
      %v5811 = vunpack.c.l.s4 1966171168
      %v5812 = vunpack.c.0.s8 %v5811
      %v5813 = vlaneseq
      %v5814 = vshrl.u32 %v5813, 7
      %v5815 = vsub.s32 %v5812, %v5814
      %v5816 = vrot.slane %v5788, %v5815
      %v5817 = vcombine.low %v5795, %v5802
      %v5818 = vcombine.low %v5809, %v5816
      %v5820 = vunpack.c.l.s4 1966171168
      %v5821 = vunpack.c.0.s8 %v5820
      %v5822 = vlaneseq
      %v5823 = vshrl.u32 %v5822, 7
      %v5824 = vsub.s32 %v5821, %v5823
      %v5825 = vrot.slane %v5817, %v5824
      %v5827 = vunpack.c.l.s4 1966171168
      %v5828 = vunpack.c.0.s8 %v5827
      %v5829 = vlaneseq
      %v5830 = vshrl.u32 %v5829, 7
      %v5831 = vsub.s32 %v5828, %v5830
      %v5832 = vrot.slane %v5818, %v5831
      %v5833 = vcombine.low %v5825, %v5832
      %v5834 = vcombine.low %v4668, %v4672
      %v5835 = vcombine.low %v4676, %v4680
      %v5836 = vcombine.low %v4684, %v4688
      %v5837 = vcombine.low %v4692, %v4696
      %v5839 = vunpack.c.l.s4 1966171168
      %v5840 = vunpack.c.0.s8 %v5839
      %v5841 = vlaneseq
      %v5842 = vshrl.u32 %v5841, 7
      %v5843 = vsub.s32 %v5840, %v5842
      %v5844 = vrot.slane %v5834, %v5843
      %v5846 = vunpack.c.l.s4 1966171168
      %v5847 = vunpack.c.0.s8 %v5846
      %v5848 = vlaneseq
      %v5849 = vshrl.u32 %v5848, 7
      %v5850 = vsub.s32 %v5847, %v5849
      %v5851 = vrot.slane %v5835, %v5850
      %v5853 = vunpack.c.l.s4 1966171168
      %v5854 = vunpack.c.0.s8 %v5853
      %v5855 = vlaneseq
      %v5856 = vshrl.u32 %v5855, 7
      %v5857 = vsub.s32 %v5854, %v5856
      %v5858 = vrot.slane %v5836, %v5857
      %v5860 = vunpack.c.l.s4 1966171168
      %v5861 = vunpack.c.0.s8 %v5860
      %v5862 = vlaneseq
      %v5863 = vshrl.u32 %v5862, 7
      %v5864 = vsub.s32 %v5861, %v5863
      %v5865 = vrot.slane %v5837, %v5864
      %v5866 = vcombine.low %v5844, %v5851
      %v5867 = vcombine.low %v5858, %v5865
      %v5869 = vunpack.c.l.s4 1966171168
      %v5870 = vunpack.c.0.s8 %v5869
      %v5871 = vlaneseq
      %v5872 = vshrl.u32 %v5871, 7
      %v5873 = vsub.s32 %v5870, %v5872
      %v5874 = vrot.slane %v5866, %v5873
      %v5876 = vunpack.c.l.s4 1966171168
      %v5877 = vunpack.c.0.s8 %v5876
      %v5878 = vlaneseq
      %v5879 = vshrl.u32 %v5878, 7
      %v5880 = vsub.s32 %v5877, %v5879
      %v5881 = vrot.slane %v5867, %v5880
      %v5882 = vcombine.low %v5874, %v5881
      %v5883 = vcombine.low %v4700, %v4704
      %v5884 = vcombine.low %v4708, %v4712
      %v5885 = vcombine.low %v4716, %v4720
      %v5886 = vcombine.low %v4724, %v4728
      %v5888 = vunpack.c.l.s4 1966171168
      %v5889 = vunpack.c.0.s8 %v5888
      %v5890 = vlaneseq
      %v5891 = vshrl.u32 %v5890, 7
      %v5892 = vsub.s32 %v5889, %v5891
      %v5893 = vrot.slane %v5883, %v5892
      %v5895 = vunpack.c.l.s4 1966171168
      %v5896 = vunpack.c.0.s8 %v5895
      %v5897 = vlaneseq
      %v5898 = vshrl.u32 %v5897, 7
      %v5899 = vsub.s32 %v5896, %v5898
      %v5900 = vrot.slane %v5884, %v5899
      %v5902 = vunpack.c.l.s4 1966171168
      %v5903 = vunpack.c.0.s8 %v5902
      %v5904 = vlaneseq
      %v5905 = vshrl.u32 %v5904, 7
      %v5906 = vsub.s32 %v5903, %v5905
      %v5907 = vrot.slane %v5885, %v5906
      %v5909 = vunpack.c.l.s4 1966171168
      %v5910 = vunpack.c.0.s8 %v5909
      %v5911 = vlaneseq
      %v5912 = vshrl.u32 %v5911, 7
      %v5913 = vsub.s32 %v5910, %v5912
      %v5914 = vrot.slane %v5886, %v5913
      %v5915 = vcombine.low %v5893, %v5900
      %v5916 = vcombine.low %v5907, %v5914
      %v5918 = vunpack.c.l.s4 1966171168
      %v5919 = vunpack.c.0.s8 %v5918
      %v5920 = vlaneseq
      %v5921 = vshrl.u32 %v5920, 7
      %v5922 = vsub.s32 %v5919, %v5921
      %v5923 = vrot.slane %v5915, %v5922
      %v5925 = vunpack.c.l.s4 1966171168
      %v5926 = vunpack.c.0.s8 %v5925
      %v5927 = vlaneseq
      %v5928 = vshrl.u32 %v5927, 7
      %v5929 = vsub.s32 %v5926, %v5928
      %v5930 = vrot.slane %v5916, %v5929
      %v5931 = vcombine.low %v5923, %v5930
      %v5932 = vcombine.low %v4732, %v4736
      %v5933 = vcombine.low %v4740, %v4744
      %v5934 = vcombine.low %v4748, %v4752
      %v5935 = vcombine.low %v4756, %v4760
      %v5937 = vunpack.c.l.s4 1966171168
      %v5938 = vunpack.c.0.s8 %v5937
      %v5939 = vlaneseq
      %v5940 = vshrl.u32 %v5939, 7
      %v5941 = vsub.s32 %v5938, %v5940
      %v5942 = vrot.slane %v5932, %v5941
      %v5944 = vunpack.c.l.s4 1966171168
      %v5945 = vunpack.c.0.s8 %v5944
      %v5946 = vlaneseq
      %v5947 = vshrl.u32 %v5946, 7
      %v5948 = vsub.s32 %v5945, %v5947
      %v5949 = vrot.slane %v5933, %v5948
      %v5951 = vunpack.c.l.s4 1966171168
      %v5952 = vunpack.c.0.s8 %v5951
      %v5953 = vlaneseq
      %v5954 = vshrl.u32 %v5953, 7
      %v5955 = vsub.s32 %v5952, %v5954
      %v5956 = vrot.slane %v5934, %v5955
      %v5958 = vunpack.c.l.s4 1966171168
      %v5959 = vunpack.c.0.s8 %v5958
      %v5960 = vlaneseq
      %v5961 = vshrl.u32 %v5960, 7
      %v5962 = vsub.s32 %v5959, %v5961
      %v5963 = vrot.slane %v5935, %v5962
      %v5964 = vcombine.low %v5942, %v5949
      %v5965 = vcombine.low %v5956, %v5963
      %v5967 = vunpack.c.l.s4 1966171168
      %v5968 = vunpack.c.0.s8 %v5967
      %v5969 = vlaneseq
      %v5970 = vshrl.u32 %v5969, 7
      %v5971 = vsub.s32 %v5968, %v5970
      %v5972 = vrot.slane %v5964, %v5971
      %v5974 = vunpack.c.l.s4 1966171168
      %v5975 = vunpack.c.0.s8 %v5974
      %v5976 = vlaneseq
      %v5977 = vshrl.u32 %v5976, 7
      %v5978 = vsub.s32 %v5975, %v5977
      %v5979 = vrot.slane %v5965, %v5978
      %v5980 = vcombine.low %v5972, %v5979
      %v5981 = vcombine.low %v4764, %v4768
      %v5982 = vcombine.low %v4772, %v4776
      %v5983 = vcombine.low %v4780, %v4784
      %v5984 = vcombine.low %v4788, %v4792
      %v5986 = vunpack.c.l.s4 1966171168
      %v5987 = vunpack.c.0.s8 %v5986
      %v5988 = vlaneseq
      %v5989 = vshrl.u32 %v5988, 7
      %v5990 = vsub.s32 %v5987, %v5989
      %v5991 = vrot.slane %v5981, %v5990
      %v5993 = vunpack.c.l.s4 1966171168
      %v5994 = vunpack.c.0.s8 %v5993
      %v5995 = vlaneseq
      %v5996 = vshrl.u32 %v5995, 7
      %v5997 = vsub.s32 %v5994, %v5996
      %v5998 = vrot.slane %v5982, %v5997
      %v6000 = vunpack.c.l.s4 1966171168
      %v6001 = vunpack.c.0.s8 %v6000
      %v6002 = vlaneseq
      %v6003 = vshrl.u32 %v6002, 7
      %v6004 = vsub.s32 %v6001, %v6003
      %v6005 = vrot.slane %v5983, %v6004
      %v6007 = vunpack.c.l.s4 1966171168
      %v6008 = vunpack.c.0.s8 %v6007
      %v6009 = vlaneseq
      %v6010 = vshrl.u32 %v6009, 7
      %v6011 = vsub.s32 %v6008, %v6010
      %v6012 = vrot.slane %v5984, %v6011
      %v6013 = vcombine.low %v5991, %v5998
      %v6014 = vcombine.low %v6005, %v6012
      %v6016 = vunpack.c.l.s4 1966171168
      %v6017 = vunpack.c.0.s8 %v6016
      %v6018 = vlaneseq
      %v6019 = vshrl.u32 %v6018, 7
      %v6020 = vsub.s32 %v6017, %v6019
      %v6021 = vrot.slane %v6013, %v6020
      %v6023 = vunpack.c.l.s4 1966171168
      %v6024 = vunpack.c.0.s8 %v6023
      %v6025 = vlaneseq
      %v6026 = vshrl.u32 %v6025, 7
      %v6027 = vsub.s32 %v6024, %v6026
      %v6028 = vrot.slane %v6014, %v6027
      %v6029 = vcombine.low %v6021, %v6028
      %v6030 = vcombine.low %v4796, %v4800
      %v6031 = vcombine.low %v4804, %v4808
      %v6032 = vcombine.low %v4812, %v4816
      %v6033 = vcombine.low %v4820, %v4824
      %v6035 = vunpack.c.l.s4 1966171168
      %v6036 = vunpack.c.0.s8 %v6035
      %v6037 = vlaneseq
      %v6038 = vshrl.u32 %v6037, 7
      %v6039 = vsub.s32 %v6036, %v6038
      %v6040 = vrot.slane %v6030, %v6039
      %v6042 = vunpack.c.l.s4 1966171168
      %v6043 = vunpack.c.0.s8 %v6042
      %v6044 = vlaneseq
      %v6045 = vshrl.u32 %v6044, 7
      %v6046 = vsub.s32 %v6043, %v6045
      %v6047 = vrot.slane %v6031, %v6046
      %v6049 = vunpack.c.l.s4 1966171168
      %v6050 = vunpack.c.0.s8 %v6049
      %v6051 = vlaneseq
      %v6052 = vshrl.u32 %v6051, 7
      %v6053 = vsub.s32 %v6050, %v6052
      %v6054 = vrot.slane %v6032, %v6053
      %v6056 = vunpack.c.l.s4 1966171168
      %v6057 = vunpack.c.0.s8 %v6056
      %v6058 = vlaneseq
      %v6059 = vshrl.u32 %v6058, 7
      %v6060 = vsub.s32 %v6057, %v6059
      %v6061 = vrot.slane %v6033, %v6060
      %v6062 = vcombine.low %v6040, %v6047
      %v6063 = vcombine.low %v6054, %v6061
      %v6065 = vunpack.c.l.s4 1966171168
      %v6066 = vunpack.c.0.s8 %v6065
      %v6067 = vlaneseq
      %v6068 = vshrl.u32 %v6067, 7
      %v6069 = vsub.s32 %v6066, %v6068
      %v6070 = vrot.slane %v6062, %v6069
      %v6072 = vunpack.c.l.s4 1966171168
      %v6073 = vunpack.c.0.s8 %v6072
      %v6074 = vlaneseq
      %v6075 = vshrl.u32 %v6074, 7
      %v6076 = vsub.s32 %v6073, %v6075
      %v6077 = vrot.slane %v6063, %v6076
      %v6078 = vcombine.low %v6070, %v6077
      %v6079 = vcombine.low %v4828, %v4832
      %v6080 = vcombine.low %v4836, %v4840
      %v6081 = vcombine.low %v4844, %v4848
      %v6082 = vcombine.low %v4852, %v4856
      %v6084 = vunpack.c.l.s4 1966171168
      %v6085 = vunpack.c.0.s8 %v6084
      %v6086 = vlaneseq
      %v6087 = vshrl.u32 %v6086, 7
      %v6088 = vsub.s32 %v6085, %v6087
      %v6089 = vrot.slane %v6079, %v6088
      %v6091 = vunpack.c.l.s4 1966171168
      %v6092 = vunpack.c.0.s8 %v6091
      %v6093 = vlaneseq
      %v6094 = vshrl.u32 %v6093, 7
      %v6095 = vsub.s32 %v6092, %v6094
      %v6096 = vrot.slane %v6080, %v6095
      %v6098 = vunpack.c.l.s4 1966171168
      %v6099 = vunpack.c.0.s8 %v6098
      %v6100 = vlaneseq
      %v6101 = vshrl.u32 %v6100, 7
      %v6102 = vsub.s32 %v6099, %v6101
      %v6103 = vrot.slane %v6081, %v6102
      %v6105 = vunpack.c.l.s4 1966171168
      %v6106 = vunpack.c.0.s8 %v6105
      %v6107 = vlaneseq
      %v6108 = vshrl.u32 %v6107, 7
      %v6109 = vsub.s32 %v6106, %v6108
      %v6110 = vrot.slane %v6082, %v6109
      %v6111 = vcombine.low %v6089, %v6096
      %v6112 = vcombine.low %v6103, %v6110
      %v6114 = vunpack.c.l.s4 1966171168
      %v6115 = vunpack.c.0.s8 %v6114
      %v6116 = vlaneseq
      %v6117 = vshrl.u32 %v6116, 7
      %v6118 = vsub.s32 %v6115, %v6117
      %v6119 = vrot.slane %v6111, %v6118
      %v6121 = vunpack.c.l.s4 1966171168
      %v6122 = vunpack.c.0.s8 %v6121
      %v6123 = vlaneseq
      %v6124 = vshrl.u32 %v6123, 7
      %v6125 = vsub.s32 %v6122, %v6124
      %v6126 = vrot.slane %v6112, %v6125
      %v6127 = vcombine.low %v6119, %v6126
      %v6128 = vcombine.low %v4860, %v4864
      %v6129 = vcombine.low %v4868, %v4872
      %v6130 = vcombine.low %v4876, %v4880
      %v6131 = vcombine.low %v4884, %v4888
      %v6133 = vunpack.c.l.s4 1966171168
      %v6134 = vunpack.c.0.s8 %v6133
      %v6135 = vlaneseq
      %v6136 = vshrl.u32 %v6135, 7
      %v6137 = vsub.s32 %v6134, %v6136
      %v6138 = vrot.slane %v6128, %v6137
      %v6140 = vunpack.c.l.s4 1966171168
      %v6141 = vunpack.c.0.s8 %v6140
      %v6142 = vlaneseq
      %v6143 = vshrl.u32 %v6142, 7
      %v6144 = vsub.s32 %v6141, %v6143
      %v6145 = vrot.slane %v6129, %v6144
      %v6147 = vunpack.c.l.s4 1966171168
      %v6148 = vunpack.c.0.s8 %v6147
      %v6149 = vlaneseq
      %v6150 = vshrl.u32 %v6149, 7
      %v6151 = vsub.s32 %v6148, %v6150
      %v6152 = vrot.slane %v6130, %v6151
      %v6154 = vunpack.c.l.s4 1966171168
      %v6155 = vunpack.c.0.s8 %v6154
      %v6156 = vlaneseq
      %v6157 = vshrl.u32 %v6156, 7
      %v6158 = vsub.s32 %v6155, %v6157
      %v6159 = vrot.slane %v6131, %v6158
      %v6160 = vcombine.low %v6138, %v6145
      %v6161 = vcombine.low %v6152, %v6159
      %v6163 = vunpack.c.l.s4 1966171168
      %v6164 = vunpack.c.0.s8 %v6163
      %v6165 = vlaneseq
      %v6166 = vshrl.u32 %v6165, 7
      %v6167 = vsub.s32 %v6164, %v6166
      %v6168 = vrot.slane %v6160, %v6167
      %v6170 = vunpack.c.l.s4 1966171168
      %v6171 = vunpack.c.0.s8 %v6170
      %v6172 = vlaneseq
      %v6173 = vshrl.u32 %v6172, 7
      %v6174 = vsub.s32 %v6171, %v6173
      %v6175 = vrot.slane %v6161, %v6174
      %v6176 = vcombine.low %v6168, %v6175
      %v6177 = vcombine.low %v4892, %v4896
      %v6178 = vcombine.low %v4900, %v4904
      %v6179 = vcombine.low %v4908, %v4912
      %v6180 = vcombine.low %v4916, %v4920
      %v6182 = vunpack.c.l.s4 1966171168
      %v6183 = vunpack.c.0.s8 %v6182
      %v6184 = vlaneseq
      %v6185 = vshrl.u32 %v6184, 7
      %v6186 = vsub.s32 %v6183, %v6185
      %v6187 = vrot.slane %v6177, %v6186
      %v6189 = vunpack.c.l.s4 1966171168
      %v6190 = vunpack.c.0.s8 %v6189
      %v6191 = vlaneseq
      %v6192 = vshrl.u32 %v6191, 7
      %v6193 = vsub.s32 %v6190, %v6192
      %v6194 = vrot.slane %v6178, %v6193
      %v6196 = vunpack.c.l.s4 1966171168
      %v6197 = vunpack.c.0.s8 %v6196
      %v6198 = vlaneseq
      %v6199 = vshrl.u32 %v6198, 7
      %v6200 = vsub.s32 %v6197, %v6199
      %v6201 = vrot.slane %v6179, %v6200
      %v6203 = vunpack.c.l.s4 1966171168
      %v6204 = vunpack.c.0.s8 %v6203
      %v6205 = vlaneseq
      %v6206 = vshrl.u32 %v6205, 7
      %v6207 = vsub.s32 %v6204, %v6206
      %v6208 = vrot.slane %v6180, %v6207
      %v6209 = vcombine.low %v6187, %v6194
      %v6210 = vcombine.low %v6201, %v6208
      %v6212 = vunpack.c.l.s4 1966171168
      %v6213 = vunpack.c.0.s8 %v6212
      %v6214 = vlaneseq
      %v6215 = vshrl.u32 %v6214, 7
      %v6216 = vsub.s32 %v6213, %v6215
      %v6217 = vrot.slane %v6209, %v6216
      %v6219 = vunpack.c.l.s4 1966171168
      %v6220 = vunpack.c.0.s8 %v6219
      %v6221 = vlaneseq
      %v6222 = vshrl.u32 %v6221, 7
      %v6223 = vsub.s32 %v6220, %v6222
      %v6224 = vrot.slane %v6210, %v6223
      %v6225 = vcombine.low %v6217, %v6224
      %v6226 = vcombine.low %v4924, %v4928
      %v6227 = vcombine.low %v4932, %v4936
      %v6228 = vcombine.low %v4940, %v4944
      %v6229 = vcombine.low %v4948, %v4952
      %v6231 = vunpack.c.l.s4 1966171168
      %v6232 = vunpack.c.0.s8 %v6231
      %v6233 = vlaneseq
      %v6234 = vshrl.u32 %v6233, 7
      %v6235 = vsub.s32 %v6232, %v6234
      %v6236 = vrot.slane %v6226, %v6235
      %v6238 = vunpack.c.l.s4 1966171168
      %v6239 = vunpack.c.0.s8 %v6238
      %v6240 = vlaneseq
      %v6241 = vshrl.u32 %v6240, 7
      %v6242 = vsub.s32 %v6239, %v6241
      %v6243 = vrot.slane %v6227, %v6242
      %v6245 = vunpack.c.l.s4 1966171168
      %v6246 = vunpack.c.0.s8 %v6245
      %v6247 = vlaneseq
      %v6248 = vshrl.u32 %v6247, 7
      %v6249 = vsub.s32 %v6246, %v6248
      %v6250 = vrot.slane %v6228, %v6249
      %v6252 = vunpack.c.l.s4 1966171168
      %v6253 = vunpack.c.0.s8 %v6252
      %v6254 = vlaneseq
      %v6255 = vshrl.u32 %v6254, 7
      %v6256 = vsub.s32 %v6253, %v6255
      %v6257 = vrot.slane %v6229, %v6256
      %v6258 = vcombine.low %v6236, %v6243
      %v6259 = vcombine.low %v6250, %v6257
      %v6261 = vunpack.c.l.s4 1966171168
      %v6262 = vunpack.c.0.s8 %v6261
      %v6263 = vlaneseq
      %v6264 = vshrl.u32 %v6263, 7
      %v6265 = vsub.s32 %v6262, %v6264
      %v6266 = vrot.slane %v6258, %v6265
      %v6268 = vunpack.c.l.s4 1966171168
      %v6269 = vunpack.c.0.s8 %v6268
      %v6270 = vlaneseq
      %v6271 = vshrl.u32 %v6270, 7
      %v6272 = vsub.s32 %v6269, %v6271
      %v6273 = vrot.slane %v6259, %v6272
      %v6274 = vcombine.low %v6266, %v6273
      %v6275 = vcombine.low %v4956, %v4960
      %v6276 = vcombine.low %v4964, %v4968
      %v6277 = vcombine.low %v4972, %v4976
      %v6278 = vcombine.low %v4980, %v4984
      %v6280 = vunpack.c.l.s4 1966171168
      %v6281 = vunpack.c.0.s8 %v6280
      %v6282 = vlaneseq
      %v6283 = vshrl.u32 %v6282, 7
      %v6284 = vsub.s32 %v6281, %v6283
      %v6285 = vrot.slane %v6275, %v6284
      %v6287 = vunpack.c.l.s4 1966171168
      %v6288 = vunpack.c.0.s8 %v6287
      %v6289 = vlaneseq
      %v6290 = vshrl.u32 %v6289, 7
      %v6291 = vsub.s32 %v6288, %v6290
      %v6292 = vrot.slane %v6276, %v6291
      %v6294 = vunpack.c.l.s4 1966171168
      %v6295 = vunpack.c.0.s8 %v6294
      %v6296 = vlaneseq
      %v6297 = vshrl.u32 %v6296, 7
      %v6298 = vsub.s32 %v6295, %v6297
      %v6299 = vrot.slane %v6277, %v6298
      %v6301 = vunpack.c.l.s4 1966171168
      %v6302 = vunpack.c.0.s8 %v6301
      %v6303 = vlaneseq
      %v6304 = vshrl.u32 %v6303, 7
      %v6305 = vsub.s32 %v6302, %v6304
      %v6306 = vrot.slane %v6278, %v6305
      %v6307 = vcombine.low %v6285, %v6292
      %v6308 = vcombine.low %v6299, %v6306
      %v6310 = vunpack.c.l.s4 1966171168
      %v6311 = vunpack.c.0.s8 %v6310
      %v6312 = vlaneseq
      %v6313 = vshrl.u32 %v6312, 7
      %v6314 = vsub.s32 %v6311, %v6313
      %v6315 = vrot.slane %v6307, %v6314
      %v6317 = vunpack.c.l.s4 1966171168
      %v6318 = vunpack.c.0.s8 %v6317
      %v6319 = vlaneseq
      %v6320 = vshrl.u32 %v6319, 7
      %v6321 = vsub.s32 %v6318, %v6320
      %v6322 = vrot.slane %v6308, %v6321
      %v6323 = vcombine.low %v6315, %v6322
      %v6324 = vcombine.low %v4988, %v4992
      %v6325 = vcombine.low %v4996, %v5000
      %v6326 = vcombine.low %v5004, %v5008
      %v6327 = vcombine.low %v5012, %v5016
      %v6329 = vunpack.c.l.s4 1966171168
      %v6330 = vunpack.c.0.s8 %v6329
      %v6331 = vlaneseq
      %v6332 = vshrl.u32 %v6331, 7
      %v6333 = vsub.s32 %v6330, %v6332
      %v6334 = vrot.slane %v6324, %v6333
      %v6336 = vunpack.c.l.s4 1966171168
      %v6337 = vunpack.c.0.s8 %v6336
      %v6338 = vlaneseq
      %v6339 = vshrl.u32 %v6338, 7
      %v6340 = vsub.s32 %v6337, %v6339
      %v6341 = vrot.slane %v6325, %v6340
      %v6343 = vunpack.c.l.s4 1966171168
      %v6344 = vunpack.c.0.s8 %v6343
      %v6345 = vlaneseq
      %v6346 = vshrl.u32 %v6345, 7
      %v6347 = vsub.s32 %v6344, %v6346
      %v6348 = vrot.slane %v6326, %v6347
      %v6350 = vunpack.c.l.s4 1966171168
      %v6351 = vunpack.c.0.s8 %v6350
      %v6352 = vlaneseq
      %v6353 = vshrl.u32 %v6352, 7
      %v6354 = vsub.s32 %v6351, %v6353
      %v6355 = vrot.slane %v6327, %v6354
      %v6356 = vcombine.low %v6334, %v6341
      %v6357 = vcombine.low %v6348, %v6355
      %v6359 = vunpack.c.l.s4 1966171168
      %v6360 = vunpack.c.0.s8 %v6359
      %v6361 = vlaneseq
      %v6362 = vshrl.u32 %v6361, 7
      %v6363 = vsub.s32 %v6360, %v6362
      %v6364 = vrot.slane %v6356, %v6363
      %v6366 = vunpack.c.l.s4 1966171168
      %v6367 = vunpack.c.0.s8 %v6366
      %v6368 = vlaneseq
      %v6369 = vshrl.u32 %v6368, 7
      %v6370 = vsub.s32 %v6367, %v6369
      %v6371 = vrot.slane %v6357, %v6370
      %v6372 = vcombine.low %v6364, %v6371
      %v6373 = vcombine.low %v5020, %v5024
      %v6374 = vcombine.low %v5028, %v5032
      %v6375 = vcombine.low %v5036, %v5040
      %v6376 = vcombine.low %v5044, %v5048
      %v6378 = vunpack.c.l.s4 1966171168
      %v6379 = vunpack.c.0.s8 %v6378
      %v6380 = vlaneseq
      %v6381 = vshrl.u32 %v6380, 7
      %v6382 = vsub.s32 %v6379, %v6381
      %v6383 = vrot.slane %v6373, %v6382
      %v6385 = vunpack.c.l.s4 1966171168
      %v6386 = vunpack.c.0.s8 %v6385
      %v6387 = vlaneseq
      %v6388 = vshrl.u32 %v6387, 7
      %v6389 = vsub.s32 %v6386, %v6388
      %v6390 = vrot.slane %v6374, %v6389
      %v6392 = vunpack.c.l.s4 1966171168
      %v6393 = vunpack.c.0.s8 %v6392
      %v6394 = vlaneseq
      %v6395 = vshrl.u32 %v6394, 7
      %v6396 = vsub.s32 %v6393, %v6395
      %v6397 = vrot.slane %v6375, %v6396
      %v6399 = vunpack.c.l.s4 1966171168
      %v6400 = vunpack.c.0.s8 %v6399
      %v6401 = vlaneseq
      %v6402 = vshrl.u32 %v6401, 7
      %v6403 = vsub.s32 %v6400, %v6402
      %v6404 = vrot.slane %v6376, %v6403
      %v6405 = vcombine.low %v6383, %v6390
      %v6406 = vcombine.low %v6397, %v6404
      %v6408 = vunpack.c.l.s4 1966171168
      %v6409 = vunpack.c.0.s8 %v6408
      %v6410 = vlaneseq
      %v6411 = vshrl.u32 %v6410, 7
      %v6412 = vsub.s32 %v6409, %v6411
      %v6413 = vrot.slane %v6405, %v6412
      %v6415 = vunpack.c.l.s4 1966171168
      %v6416 = vunpack.c.0.s8 %v6415
      %v6417 = vlaneseq
      %v6418 = vshrl.u32 %v6417, 7
      %v6419 = vsub.s32 %v6416, %v6418
      %v6420 = vrot.slane %v6406, %v6419
      %v6421 = vcombine.low %v6413, %v6420
      %v6422 = vcombine.low %v5052, %v5056
      %v6423 = vcombine.low %v5060, %v5064
      %v6424 = vcombine.low %v5068, %v5072
      %v6425 = vcombine.low %v5076, %v5080
      %v6427 = vunpack.c.l.s4 1966171168
      %v6428 = vunpack.c.0.s8 %v6427
      %v6429 = vlaneseq
      %v6430 = vshrl.u32 %v6429, 7
      %v6431 = vsub.s32 %v6428, %v6430
      %v6432 = vrot.slane %v6422, %v6431
      %v6434 = vunpack.c.l.s4 1966171168
      %v6435 = vunpack.c.0.s8 %v6434
      %v6436 = vlaneseq
      %v6437 = vshrl.u32 %v6436, 7
      %v6438 = vsub.s32 %v6435, %v6437
      %v6439 = vrot.slane %v6423, %v6438
      %v6441 = vunpack.c.l.s4 1966171168
      %v6442 = vunpack.c.0.s8 %v6441
      %v6443 = vlaneseq
      %v6444 = vshrl.u32 %v6443, 7
      %v6445 = vsub.s32 %v6442, %v6444
      %v6446 = vrot.slane %v6424, %v6445
      %v6448 = vunpack.c.l.s4 1966171168
      %v6449 = vunpack.c.0.s8 %v6448
      %v6450 = vlaneseq
      %v6451 = vshrl.u32 %v6450, 7
      %v6452 = vsub.s32 %v6449, %v6451
      %v6453 = vrot.slane %v6425, %v6452
      %v6454 = vcombine.low %v6432, %v6439
      %v6455 = vcombine.low %v6446, %v6453
      %v6457 = vunpack.c.l.s4 1966171168
      %v6458 = vunpack.c.0.s8 %v6457
      %v6459 = vlaneseq
      %v6460 = vshrl.u32 %v6459, 7
      %v6461 = vsub.s32 %v6458, %v6460
      %v6462 = vrot.slane %v6454, %v6461
      %v6464 = vunpack.c.l.s4 1966171168
      %v6465 = vunpack.c.0.s8 %v6464
      %v6466 = vlaneseq
      %v6467 = vshrl.u32 %v6466, 7
      %v6468 = vsub.s32 %v6465, %v6467
      %v6469 = vrot.slane %v6455, %v6468
      %v6470 = vcombine.low %v6462, %v6469
      %v6471 = vcombine.low %v5084, %v5088
      %v6472 = vcombine.low %v5092, %v5096
      %v6473 = vcombine.low %v5100, %v5104
      %v6474 = vcombine.low %v5108, %v5112
      %v6476 = vunpack.c.l.s4 1966171168
      %v6477 = vunpack.c.0.s8 %v6476
      %v6478 = vlaneseq
      %v6479 = vshrl.u32 %v6478, 7
      %v6480 = vsub.s32 %v6477, %v6479
      %v6481 = vrot.slane %v6471, %v6480
      %v6483 = vunpack.c.l.s4 1966171168
      %v6484 = vunpack.c.0.s8 %v6483
      %v6485 = vlaneseq
      %v6486 = vshrl.u32 %v6485, 7
      %v6487 = vsub.s32 %v6484, %v6486
      %v6488 = vrot.slane %v6472, %v6487
      %v6490 = vunpack.c.l.s4 1966171168
      %v6491 = vunpack.c.0.s8 %v6490
      %v6492 = vlaneseq
      %v6493 = vshrl.u32 %v6492, 7
      %v6494 = vsub.s32 %v6491, %v6493
      %v6495 = vrot.slane %v6473, %v6494
      %v6497 = vunpack.c.l.s4 1966171168
      %v6498 = vunpack.c.0.s8 %v6497
      %v6499 = vlaneseq
      %v6500 = vshrl.u32 %v6499, 7
      %v6501 = vsub.s32 %v6498, %v6500
      %v6502 = vrot.slane %v6474, %v6501
      %v6503 = vcombine.low %v6481, %v6488
      %v6504 = vcombine.low %v6495, %v6502
      %v6506 = vunpack.c.l.s4 1966171168
      %v6507 = vunpack.c.0.s8 %v6506
      %v6508 = vlaneseq
      %v6509 = vshrl.u32 %v6508, 7
      %v6510 = vsub.s32 %v6507, %v6509
      %v6511 = vrot.slane %v6503, %v6510
      %v6513 = vunpack.c.l.s4 1966171168
      %v6514 = vunpack.c.0.s8 %v6513
      %v6515 = vlaneseq
      %v6516 = vshrl.u32 %v6515, 7
      %v6517 = vsub.s32 %v6514, %v6516
      %v6518 = vrot.slane %v6504, %v6517
      %v6519 = vcombine.low %v6511, %v6518
      %v6520 = vcombine.low %v5116, %v5120
      %v6521 = vcombine.low %v5124, %v5128
      %v6522 = vcombine.low %v5132, %v5136
      %v6523 = vcombine.low %v5140, %v5144
      %v6525 = vunpack.c.l.s4 1966171168
      %v6526 = vunpack.c.0.s8 %v6525
      %v6527 = vlaneseq
      %v6528 = vshrl.u32 %v6527, 7
      %v6529 = vsub.s32 %v6526, %v6528
      %v6530 = vrot.slane %v6520, %v6529
      %v6532 = vunpack.c.l.s4 1966171168
      %v6533 = vunpack.c.0.s8 %v6532
      %v6534 = vlaneseq
      %v6535 = vshrl.u32 %v6534, 7
      %v6536 = vsub.s32 %v6533, %v6535
      %v6537 = vrot.slane %v6521, %v6536
      %v6539 = vunpack.c.l.s4 1966171168
      %v6540 = vunpack.c.0.s8 %v6539
      %v6541 = vlaneseq
      %v6542 = vshrl.u32 %v6541, 7
      %v6543 = vsub.s32 %v6540, %v6542
      %v6544 = vrot.slane %v6522, %v6543
      %v6546 = vunpack.c.l.s4 1966171168
      %v6547 = vunpack.c.0.s8 %v6546
      %v6548 = vlaneseq
      %v6549 = vshrl.u32 %v6548, 7
      %v6550 = vsub.s32 %v6547, %v6549
      %v6551 = vrot.slane %v6523, %v6550
      %v6552 = vcombine.low %v6530, %v6537
      %v6553 = vcombine.low %v6544, %v6551
      %v6555 = vunpack.c.l.s4 1966171168
      %v6556 = vunpack.c.0.s8 %v6555
      %v6557 = vlaneseq
      %v6558 = vshrl.u32 %v6557, 7
      %v6559 = vsub.s32 %v6556, %v6558
      %v6560 = vrot.slane %v6552, %v6559
      %v6562 = vunpack.c.l.s4 1966171168
      %v6563 = vunpack.c.0.s8 %v6562
      %v6564 = vlaneseq
      %v6565 = vshrl.u32 %v6564, 7
      %v6566 = vsub.s32 %v6563, %v6565
      %v6567 = vrot.slane %v6553, %v6566
      %v6568 = vcombine.low %v6560, %v6567
      %v6569 = vcombine.low %v5148, %v5152
      %v6570 = vcombine.low %v5156, %v5160
      %v6571 = vcombine.low %v5164, %v5168
      %v6572 = vcombine.low %v5172, %v5176
      %v6574 = vunpack.c.l.s4 1966171168
      %v6575 = vunpack.c.0.s8 %v6574
      %v6576 = vlaneseq
      %v6577 = vshrl.u32 %v6576, 7
      %v6578 = vsub.s32 %v6575, %v6577
      %v6579 = vrot.slane %v6569, %v6578
      %v6581 = vunpack.c.l.s4 1966171168
      %v6582 = vunpack.c.0.s8 %v6581
      %v6583 = vlaneseq
      %v6584 = vshrl.u32 %v6583, 7
      %v6585 = vsub.s32 %v6582, %v6584
      %v6586 = vrot.slane %v6570, %v6585
      %v6588 = vunpack.c.l.s4 1966171168
      %v6589 = vunpack.c.0.s8 %v6588
      %v6590 = vlaneseq
      %v6591 = vshrl.u32 %v6590, 7
      %v6592 = vsub.s32 %v6589, %v6591
      %v6593 = vrot.slane %v6571, %v6592
      %v6595 = vunpack.c.l.s4 1966171168
      %v6596 = vunpack.c.0.s8 %v6595
      %v6597 = vlaneseq
      %v6598 = vshrl.u32 %v6597, 7
      %v6599 = vsub.s32 %v6596, %v6598
      %v6600 = vrot.slane %v6572, %v6599
      %v6601 = vcombine.low %v6579, %v6586
      %v6602 = vcombine.low %v6593, %v6600
      %v6604 = vunpack.c.l.s4 1966171168
      %v6605 = vunpack.c.0.s8 %v6604
      %v6606 = vlaneseq
      %v6607 = vshrl.u32 %v6606, 7
      %v6608 = vsub.s32 %v6605, %v6607
      %v6609 = vrot.slane %v6601, %v6608
      %v6611 = vunpack.c.l.s4 1966171168
      %v6612 = vunpack.c.0.s8 %v6611
      %v6613 = vlaneseq
      %v6614 = vshrl.u32 %v6613, 7
      %v6615 = vsub.s32 %v6612, %v6614
      %v6616 = vrot.slane %v6602, %v6615
      %v6617 = vcombine.low %v6609, %v6616
      %v6618 = vcombine.low %v5180, %v5184
      %v6619 = vcombine.low %v5188, %v5192
      %v6620 = vcombine.low %v5196, %v5200
      %v6621 = vcombine.low %v5204, %v5208
      %v6623 = vunpack.c.l.s4 1966171168
      %v6624 = vunpack.c.0.s8 %v6623
      %v6625 = vlaneseq
      %v6626 = vshrl.u32 %v6625, 7
      %v6627 = vsub.s32 %v6624, %v6626
      %v6628 = vrot.slane %v6618, %v6627
      %v6630 = vunpack.c.l.s4 1966171168
      %v6631 = vunpack.c.0.s8 %v6630
      %v6632 = vlaneseq
      %v6633 = vshrl.u32 %v6632, 7
      %v6634 = vsub.s32 %v6631, %v6633
      %v6635 = vrot.slane %v6619, %v6634
      %v6637 = vunpack.c.l.s4 1966171168
      %v6638 = vunpack.c.0.s8 %v6637
      %v6639 = vlaneseq
      %v6640 = vshrl.u32 %v6639, 7
      %v6641 = vsub.s32 %v6638, %v6640
      %v6642 = vrot.slane %v6620, %v6641
      %v6644 = vunpack.c.l.s4 1966171168
      %v6645 = vunpack.c.0.s8 %v6644
      %v6646 = vlaneseq
      %v6647 = vshrl.u32 %v6646, 7
      %v6648 = vsub.s32 %v6645, %v6647
      %v6649 = vrot.slane %v6621, %v6648
      %v6650 = vcombine.low %v6628, %v6635
      %v6651 = vcombine.low %v6642, %v6649
      %v6653 = vunpack.c.l.s4 1966171168
      %v6654 = vunpack.c.0.s8 %v6653
      %v6655 = vlaneseq
      %v6656 = vshrl.u32 %v6655, 7
      %v6657 = vsub.s32 %v6654, %v6656
      %v6658 = vrot.slane %v6650, %v6657
      %v6660 = vunpack.c.l.s4 1966171168
      %v6661 = vunpack.c.0.s8 %v6660
      %v6662 = vlaneseq
      %v6663 = vshrl.u32 %v6662, 7
      %v6664 = vsub.s32 %v6661, %v6663
      %v6665 = vrot.slane %v6651, %v6664
      %v6666 = vcombine.low %v6658, %v6665
      %v6667 = vcombine.low %v5212, %v5216
      %v6668 = vcombine.low %v5220, %v5224
      %v6669 = vcombine.low %v5228, %v5232
      %v6670 = vcombine.low %v5236, %v5240
      %v6672 = vunpack.c.l.s4 1966171168
      %v6673 = vunpack.c.0.s8 %v6672
      %v6674 = vlaneseq
      %v6675 = vshrl.u32 %v6674, 7
      %v6676 = vsub.s32 %v6673, %v6675
      %v6677 = vrot.slane %v6667, %v6676
      %v6679 = vunpack.c.l.s4 1966171168
      %v6680 = vunpack.c.0.s8 %v6679
      %v6681 = vlaneseq
      %v6682 = vshrl.u32 %v6681, 7
      %v6683 = vsub.s32 %v6680, %v6682
      %v6684 = vrot.slane %v6668, %v6683
      %v6686 = vunpack.c.l.s4 1966171168
      %v6687 = vunpack.c.0.s8 %v6686
      %v6688 = vlaneseq
      %v6689 = vshrl.u32 %v6688, 7
      %v6690 = vsub.s32 %v6687, %v6689
      %v6691 = vrot.slane %v6669, %v6690
      %v6693 = vunpack.c.l.s4 1966171168
      %v6694 = vunpack.c.0.s8 %v6693
      %v6695 = vlaneseq
      %v6696 = vshrl.u32 %v6695, 7
      %v6697 = vsub.s32 %v6694, %v6696
      %v6698 = vrot.slane %v6670, %v6697
      %v6699 = vcombine.low %v6677, %v6684
      %v6700 = vcombine.low %v6691, %v6698
      %v6702 = vunpack.c.l.s4 1966171168
      %v6703 = vunpack.c.0.s8 %v6702
      %v6704 = vlaneseq
      %v6705 = vshrl.u32 %v6704, 7
      %v6706 = vsub.s32 %v6703, %v6705
      %v6707 = vrot.slane %v6699, %v6706
      %v6709 = vunpack.c.l.s4 1966171168
      %v6710 = vunpack.c.0.s8 %v6709
      %v6711 = vlaneseq
      %v6712 = vshrl.u32 %v6711, 7
      %v6713 = vsub.s32 %v6710, %v6712
      %v6714 = vrot.slane %v6700, %v6713
      %v6715 = vcombine.low %v6707, %v6714
      %v6716 = vcombine.low %v5244, %v5248
      %v6717 = vcombine.low %v5252, %v5256
      %v6718 = vcombine.low %v5260, %v5264
      %v6719 = vcombine.low %v5268, %v5272
      %v6721 = vunpack.c.l.s4 1966171168
      %v6722 = vunpack.c.0.s8 %v6721
      %v6723 = vlaneseq
      %v6724 = vshrl.u32 %v6723, 7
      %v6725 = vsub.s32 %v6722, %v6724
      %v6726 = vrot.slane %v6716, %v6725
      %v6728 = vunpack.c.l.s4 1966171168
      %v6729 = vunpack.c.0.s8 %v6728
      %v6730 = vlaneseq
      %v6731 = vshrl.u32 %v6730, 7
      %v6732 = vsub.s32 %v6729, %v6731
      %v6733 = vrot.slane %v6717, %v6732
      %v6735 = vunpack.c.l.s4 1966171168
      %v6736 = vunpack.c.0.s8 %v6735
      %v6737 = vlaneseq
      %v6738 = vshrl.u32 %v6737, 7
      %v6739 = vsub.s32 %v6736, %v6738
      %v6740 = vrot.slane %v6718, %v6739
      %v6742 = vunpack.c.l.s4 1966171168
      %v6743 = vunpack.c.0.s8 %v6742
      %v6744 = vlaneseq
      %v6745 = vshrl.u32 %v6744, 7
      %v6746 = vsub.s32 %v6743, %v6745
      %v6747 = vrot.slane %v6719, %v6746
      %v6748 = vcombine.low %v6726, %v6733
      %v6749 = vcombine.low %v6740, %v6747
      %v6751 = vunpack.c.l.s4 1966171168
      %v6752 = vunpack.c.0.s8 %v6751
      %v6753 = vlaneseq
      %v6754 = vshrl.u32 %v6753, 7
      %v6755 = vsub.s32 %v6752, %v6754
      %v6756 = vrot.slane %v6748, %v6755
      %v6758 = vunpack.c.l.s4 1966171168
      %v6759 = vunpack.c.0.s8 %v6758
      %v6760 = vlaneseq
      %v6761 = vshrl.u32 %v6760, 7
      %v6762 = vsub.s32 %v6759, %v6761
      %v6763 = vrot.slane %v6749, %v6762
      %v6764 = vcombine.low %v6756, %v6763
      %v6765 = vcombine.low %v5276, %v5280
      %v6766 = vcombine.low %v5284, %v5288
      %v6767 = vcombine.low %v5292, %v5296
      %v6768 = vcombine.low %v5300, %v5304
      %v6770 = vunpack.c.l.s4 1966171168
      %v6771 = vunpack.c.0.s8 %v6770
      %v6772 = vlaneseq
      %v6773 = vshrl.u32 %v6772, 7
      %v6774 = vsub.s32 %v6771, %v6773
      %v6775 = vrot.slane %v6765, %v6774
      %v6777 = vunpack.c.l.s4 1966171168
      %v6778 = vunpack.c.0.s8 %v6777
      %v6779 = vlaneseq
      %v6780 = vshrl.u32 %v6779, 7
      %v6781 = vsub.s32 %v6778, %v6780
      %v6782 = vrot.slane %v6766, %v6781
      %v6784 = vunpack.c.l.s4 1966171168
      %v6785 = vunpack.c.0.s8 %v6784
      %v6786 = vlaneseq
      %v6787 = vshrl.u32 %v6786, 7
      %v6788 = vsub.s32 %v6785, %v6787
      %v6789 = vrot.slane %v6767, %v6788
      %v6791 = vunpack.c.l.s4 1966171168
      %v6792 = vunpack.c.0.s8 %v6791
      %v6793 = vlaneseq
      %v6794 = vshrl.u32 %v6793, 7
      %v6795 = vsub.s32 %v6792, %v6794
      %v6796 = vrot.slane %v6768, %v6795
      %v6797 = vcombine.low %v6775, %v6782
      %v6798 = vcombine.low %v6789, %v6796
      %v6800 = vunpack.c.l.s4 1966171168
      %v6801 = vunpack.c.0.s8 %v6800
      %v6802 = vlaneseq
      %v6803 = vshrl.u32 %v6802, 7
      %v6804 = vsub.s32 %v6801, %v6803
      %v6805 = vrot.slane %v6797, %v6804
      %v6807 = vunpack.c.l.s4 1966171168
      %v6808 = vunpack.c.0.s8 %v6807
      %v6809 = vlaneseq
      %v6810 = vshrl.u32 %v6809, 7
      %v6811 = vsub.s32 %v6808, %v6810
      %v6812 = vrot.slane %v6798, %v6811
      %v6813 = vcombine.low %v6805, %v6812
      %v6814 = vcombine.low %v5308, %v5312
      %v6815 = vcombine.low %v5316, %v5320
      %v6816 = vcombine.low %v5324, %v5328
      %v6817 = vcombine.low %v5332, %v5336
      %v6819 = vunpack.c.l.s4 1966171168
      %v6820 = vunpack.c.0.s8 %v6819
      %v6821 = vlaneseq
      %v6822 = vshrl.u32 %v6821, 7
      %v6823 = vsub.s32 %v6820, %v6822
      %v6824 = vrot.slane %v6814, %v6823
      %v6826 = vunpack.c.l.s4 1966171168
      %v6827 = vunpack.c.0.s8 %v6826
      %v6828 = vlaneseq
      %v6829 = vshrl.u32 %v6828, 7
      %v6830 = vsub.s32 %v6827, %v6829
      %v6831 = vrot.slane %v6815, %v6830
      %v6833 = vunpack.c.l.s4 1966171168
      %v6834 = vunpack.c.0.s8 %v6833
      %v6835 = vlaneseq
      %v6836 = vshrl.u32 %v6835, 7
      %v6837 = vsub.s32 %v6834, %v6836
      %v6838 = vrot.slane %v6816, %v6837
      %v6840 = vunpack.c.l.s4 1966171168
      %v6841 = vunpack.c.0.s8 %v6840
      %v6842 = vlaneseq
      %v6843 = vshrl.u32 %v6842, 7
      %v6844 = vsub.s32 %v6841, %v6843
      %v6845 = vrot.slane %v6817, %v6844
      %v6846 = vcombine.low %v6824, %v6831
      %v6847 = vcombine.low %v6838, %v6845
      %v6849 = vunpack.c.l.s4 1966171168
      %v6850 = vunpack.c.0.s8 %v6849
      %v6851 = vlaneseq
      %v6852 = vshrl.u32 %v6851, 7
      %v6853 = vsub.s32 %v6850, %v6852
      %v6854 = vrot.slane %v6846, %v6853
      %v6856 = vunpack.c.l.s4 1966171168
      %v6857 = vunpack.c.0.s8 %v6856
      %v6858 = vlaneseq
      %v6859 = vshrl.u32 %v6858, 7
      %v6860 = vsub.s32 %v6857, %v6859
      %v6861 = vrot.slane %v6847, %v6860
      %v6862 = vcombine.low %v6854, %v6861
      %v6863 = vcombine.low %v5340, %v5344
      %v6864 = vcombine.low %v5348, %v5352
      %v6865 = vcombine.low %v5356, %v5360
      %v6866 = vcombine.low %v5364, %v5368
      %v6868 = vunpack.c.l.s4 1966171168
      %v6869 = vunpack.c.0.s8 %v6868
      %v6870 = vlaneseq
      %v6871 = vshrl.u32 %v6870, 7
      %v6872 = vsub.s32 %v6869, %v6871
      %v6873 = vrot.slane %v6863, %v6872
      %v6875 = vunpack.c.l.s4 1966171168
      %v6876 = vunpack.c.0.s8 %v6875
      %v6877 = vlaneseq
      %v6878 = vshrl.u32 %v6877, 7
      %v6879 = vsub.s32 %v6876, %v6878
      %v6880 = vrot.slane %v6864, %v6879
      %v6882 = vunpack.c.l.s4 1966171168
      %v6883 = vunpack.c.0.s8 %v6882
      %v6884 = vlaneseq
      %v6885 = vshrl.u32 %v6884, 7
      %v6886 = vsub.s32 %v6883, %v6885
      %v6887 = vrot.slane %v6865, %v6886
      %v6889 = vunpack.c.l.s4 1966171168
      %v6890 = vunpack.c.0.s8 %v6889
      %v6891 = vlaneseq
      %v6892 = vshrl.u32 %v6891, 7
      %v6893 = vsub.s32 %v6890, %v6892
      %v6894 = vrot.slane %v6866, %v6893
      %v6895 = vcombine.low %v6873, %v6880
      %v6896 = vcombine.low %v6887, %v6894
      %v6898 = vunpack.c.l.s4 1966171168
      %v6899 = vunpack.c.0.s8 %v6898
      %v6900 = vlaneseq
      %v6901 = vshrl.u32 %v6900, 7
      %v6902 = vsub.s32 %v6899, %v6901
      %v6903 = vrot.slane %v6895, %v6902
      %v6905 = vunpack.c.l.s4 1966171168
      %v6906 = vunpack.c.0.s8 %v6905
      %v6907 = vlaneseq
      %v6908 = vshrl.u32 %v6907, 7
      %v6909 = vsub.s32 %v6906, %v6908
      %v6910 = vrot.slane %v6896, %v6909
      %v6911 = vcombine.low %v6903, %v6910
      %v6912 = vcombine.low %v5372, %v5376
      %v6913 = vcombine.low %v5380, %v5384
      %v6914 = vcombine.low %v5388, %v5392
      %v6915 = vcombine.low %v5396, %v5400
      %v6917 = vunpack.c.l.s4 1966171168
      %v6918 = vunpack.c.0.s8 %v6917
      %v6919 = vlaneseq
      %v6920 = vshrl.u32 %v6919, 7
      %v6921 = vsub.s32 %v6918, %v6920
      %v6922 = vrot.slane %v6912, %v6921
      %v6924 = vunpack.c.l.s4 1966171168
      %v6925 = vunpack.c.0.s8 %v6924
      %v6926 = vlaneseq
      %v6927 = vshrl.u32 %v6926, 7
      %v6928 = vsub.s32 %v6925, %v6927
      %v6929 = vrot.slane %v6913, %v6928
      %v6931 = vunpack.c.l.s4 1966171168
      %v6932 = vunpack.c.0.s8 %v6931
      %v6933 = vlaneseq
      %v6934 = vshrl.u32 %v6933, 7
      %v6935 = vsub.s32 %v6932, %v6934
      %v6936 = vrot.slane %v6914, %v6935
      %v6938 = vunpack.c.l.s4 1966171168
      %v6939 = vunpack.c.0.s8 %v6938
      %v6940 = vlaneseq
      %v6941 = vshrl.u32 %v6940, 7
      %v6942 = vsub.s32 %v6939, %v6941
      %v6943 = vrot.slane %v6915, %v6942
      %v6944 = vcombine.low %v6922, %v6929
      %v6945 = vcombine.low %v6936, %v6943
      %v6947 = vunpack.c.l.s4 1966171168
      %v6948 = vunpack.c.0.s8 %v6947
      %v6949 = vlaneseq
      %v6950 = vshrl.u32 %v6949, 7
      %v6951 = vsub.s32 %v6948, %v6950
      %v6952 = vrot.slane %v6944, %v6951
      %v6954 = vunpack.c.l.s4 1966171168
      %v6955 = vunpack.c.0.s8 %v6954
      %v6956 = vlaneseq
      %v6957 = vshrl.u32 %v6956, 7
      %v6958 = vsub.s32 %v6955, %v6957
      %v6959 = vrot.slane %v6945, %v6958
      %v6960 = vcombine.low %v6952, %v6959
      %v6961 = vcombine.low %v5404, %v5408
      %v6962 = vcombine.low %v5412, %v5416
      %v6963 = vcombine.low %v5420, %v5424
      %v6964 = vcombine.low %v5428, %v5432
      %v6966 = vunpack.c.l.s4 1966171168
      %v6967 = vunpack.c.0.s8 %v6966
      %v6968 = vlaneseq
      %v6969 = vshrl.u32 %v6968, 7
      %v6970 = vsub.s32 %v6967, %v6969
      %v6971 = vrot.slane %v6961, %v6970
      %v6973 = vunpack.c.l.s4 1966171168
      %v6974 = vunpack.c.0.s8 %v6973
      %v6975 = vlaneseq
      %v6976 = vshrl.u32 %v6975, 7
      %v6977 = vsub.s32 %v6974, %v6976
      %v6978 = vrot.slane %v6962, %v6977
      %v6980 = vunpack.c.l.s4 1966171168
      %v6981 = vunpack.c.0.s8 %v6980
      %v6982 = vlaneseq
      %v6983 = vshrl.u32 %v6982, 7
      %v6984 = vsub.s32 %v6981, %v6983
      %v6985 = vrot.slane %v6963, %v6984
      %v6987 = vunpack.c.l.s4 1966171168
      %v6988 = vunpack.c.0.s8 %v6987
      %v6989 = vlaneseq
      %v6990 = vshrl.u32 %v6989, 7
      %v6991 = vsub.s32 %v6988, %v6990
      %v6992 = vrot.slane %v6964, %v6991
      %v6993 = vcombine.low %v6971, %v6978
      %v6994 = vcombine.low %v6985, %v6992
      %v6996 = vunpack.c.l.s4 1966171168
      %v6997 = vunpack.c.0.s8 %v6996
      %v6998 = vlaneseq
      %v6999 = vshrl.u32 %v6998, 7
      %v7000 = vsub.s32 %v6997, %v6999
      %v7001 = vrot.slane %v6993, %v7000
      %v7003 = vunpack.c.l.s4 1966171168
      %v7004 = vunpack.c.0.s8 %v7003
      %v7005 = vlaneseq
      %v7006 = vshrl.u32 %v7005, 7
      %v7007 = vsub.s32 %v7004, %v7006
      %v7008 = vrot.slane %v6994, %v7007
      %v7009 = vcombine.low %v7001, %v7008
      %v7010 = vcombine.low %v5436, %v5440
      %v7011 = vcombine.low %v5444, %v5448
      %v7012 = vcombine.low %v5452, %v5456
      %v7013 = vcombine.low %v5460, %v5464
      %v7015 = vunpack.c.l.s4 1966171168
      %v7016 = vunpack.c.0.s8 %v7015
      %v7017 = vlaneseq
      %v7018 = vshrl.u32 %v7017, 7
      %v7019 = vsub.s32 %v7016, %v7018
      %v7020 = vrot.slane %v7010, %v7019
      %v7022 = vunpack.c.l.s4 1966171168
      %v7023 = vunpack.c.0.s8 %v7022
      %v7024 = vlaneseq
      %v7025 = vshrl.u32 %v7024, 7
      %v7026 = vsub.s32 %v7023, %v7025
      %v7027 = vrot.slane %v7011, %v7026
      %v7029 = vunpack.c.l.s4 1966171168
      %v7030 = vunpack.c.0.s8 %v7029
      %v7031 = vlaneseq
      %v7032 = vshrl.u32 %v7031, 7
      %v7033 = vsub.s32 %v7030, %v7032
      %v7034 = vrot.slane %v7012, %v7033
      %v7036 = vunpack.c.l.s4 1966171168
      %v7037 = vunpack.c.0.s8 %v7036
      %v7038 = vlaneseq
      %v7039 = vshrl.u32 %v7038, 7
      %v7040 = vsub.s32 %v7037, %v7039
      %v7041 = vrot.slane %v7013, %v7040
      %v7042 = vcombine.low %v7020, %v7027
      %v7043 = vcombine.low %v7034, %v7041
      %v7045 = vunpack.c.l.s4 1966171168
      %v7046 = vunpack.c.0.s8 %v7045
      %v7047 = vlaneseq
      %v7048 = vshrl.u32 %v7047, 7
      %v7049 = vsub.s32 %v7046, %v7048
      %v7050 = vrot.slane %v7042, %v7049
      %v7052 = vunpack.c.l.s4 1966171168
      %v7053 = vunpack.c.0.s8 %v7052
      %v7054 = vlaneseq
      %v7055 = vshrl.u32 %v7054, 7
      %v7056 = vsub.s32 %v7053, %v7055
      %v7057 = vrot.slane %v7043, %v7056
      %v7058 = vcombine.low %v7050, %v7057
      %v7059 = vcombine.low %v5468, %v5472
      %v7060 = vcombine.low %v5476, %v5480
      %v7061 = vcombine.low %v5484, %v5488
      %v7062 = vcombine.low %v5492, %v5496
      %v7064 = vunpack.c.l.s4 1966171168
      %v7065 = vunpack.c.0.s8 %v7064
      %v7066 = vlaneseq
      %v7067 = vshrl.u32 %v7066, 7
      %v7068 = vsub.s32 %v7065, %v7067
      %v7069 = vrot.slane %v7059, %v7068
      %v7071 = vunpack.c.l.s4 1966171168
      %v7072 = vunpack.c.0.s8 %v7071
      %v7073 = vlaneseq
      %v7074 = vshrl.u32 %v7073, 7
      %v7075 = vsub.s32 %v7072, %v7074
      %v7076 = vrot.slane %v7060, %v7075
      %v7078 = vunpack.c.l.s4 1966171168
      %v7079 = vunpack.c.0.s8 %v7078
      %v7080 = vlaneseq
      %v7081 = vshrl.u32 %v7080, 7
      %v7082 = vsub.s32 %v7079, %v7081
      %v7083 = vrot.slane %v7061, %v7082
      %v7085 = vunpack.c.l.s4 1966171168
      %v7086 = vunpack.c.0.s8 %v7085
      %v7087 = vlaneseq
      %v7088 = vshrl.u32 %v7087, 7
      %v7089 = vsub.s32 %v7086, %v7088
      %v7090 = vrot.slane %v7062, %v7089
      %v7091 = vcombine.low %v7069, %v7076
      %v7092 = vcombine.low %v7083, %v7090
      %v7094 = vunpack.c.l.s4 1966171168
      %v7095 = vunpack.c.0.s8 %v7094
      %v7096 = vlaneseq
      %v7097 = vshrl.u32 %v7096, 7
      %v7098 = vsub.s32 %v7095, %v7097
      %v7099 = vrot.slane %v7091, %v7098
      %v7101 = vunpack.c.l.s4 1966171168
      %v7102 = vunpack.c.0.s8 %v7101
      %v7103 = vlaneseq
      %v7104 = vshrl.u32 %v7103, 7
      %v7105 = vsub.s32 %v7102, %v7104
      %v7106 = vrot.slane %v7092, %v7105
      %v7107 = vcombine.low %v7099, %v7106
      %v7108 = vcombine.low %v5500, %v5504
      %v7109 = vcombine.low %v5508, %v5512
      %v7110 = vcombine.low %v5516, %v5520
      %v7111 = vcombine.low %v5524, %v5528
      %v7113 = vunpack.c.l.s4 1966171168
      %v7114 = vunpack.c.0.s8 %v7113
      %v7115 = vlaneseq
      %v7116 = vshrl.u32 %v7115, 7
      %v7117 = vsub.s32 %v7114, %v7116
      %v7118 = vrot.slane %v7108, %v7117
      %v7120 = vunpack.c.l.s4 1966171168
      %v7121 = vunpack.c.0.s8 %v7120
      %v7122 = vlaneseq
      %v7123 = vshrl.u32 %v7122, 7
      %v7124 = vsub.s32 %v7121, %v7123
      %v7125 = vrot.slane %v7109, %v7124
      %v7127 = vunpack.c.l.s4 1966171168
      %v7128 = vunpack.c.0.s8 %v7127
      %v7129 = vlaneseq
      %v7130 = vshrl.u32 %v7129, 7
      %v7131 = vsub.s32 %v7128, %v7130
      %v7132 = vrot.slane %v7110, %v7131
      %v7134 = vunpack.c.l.s4 1966171168
      %v7135 = vunpack.c.0.s8 %v7134
      %v7136 = vlaneseq
      %v7137 = vshrl.u32 %v7136, 7
      %v7138 = vsub.s32 %v7135, %v7137
      %v7139 = vrot.slane %v7111, %v7138
      %v7140 = vcombine.low %v7118, %v7125
      %v7141 = vcombine.low %v7132, %v7139
      %v7143 = vunpack.c.l.s4 1966171168
      %v7144 = vunpack.c.0.s8 %v7143
      %v7145 = vlaneseq
      %v7146 = vshrl.u32 %v7145, 7
      %v7147 = vsub.s32 %v7144, %v7146
      %v7148 = vrot.slane %v7140, %v7147
      %v7150 = vunpack.c.l.s4 1966171168
      %v7151 = vunpack.c.0.s8 %v7150
      %v7152 = vlaneseq
      %v7153 = vshrl.u32 %v7152, 7
      %v7154 = vsub.s32 %v7151, %v7153
      %v7155 = vrot.slane %v7141, %v7154
      %v7156 = vcombine.low %v7148, %v7155
      %v7157 = vcombine.low %v5532, %v5536
      %v7158 = vcombine.low %v5540, %v5544
      %v7159 = vcombine.low %v5548, %v5552
      %v7160 = vcombine.low %v5556, %v5560
      %v7162 = vunpack.c.l.s4 1966171168
      %v7163 = vunpack.c.0.s8 %v7162
      %v7164 = vlaneseq
      %v7165 = vshrl.u32 %v7164, 7
      %v7166 = vsub.s32 %v7163, %v7165
      %v7167 = vrot.slane %v7157, %v7166
      %v7169 = vunpack.c.l.s4 1966171168
      %v7170 = vunpack.c.0.s8 %v7169
      %v7171 = vlaneseq
      %v7172 = vshrl.u32 %v7171, 7
      %v7173 = vsub.s32 %v7170, %v7172
      %v7174 = vrot.slane %v7158, %v7173
      %v7176 = vunpack.c.l.s4 1966171168
      %v7177 = vunpack.c.0.s8 %v7176
      %v7178 = vlaneseq
      %v7179 = vshrl.u32 %v7178, 7
      %v7180 = vsub.s32 %v7177, %v7179
      %v7181 = vrot.slane %v7159, %v7180
      %v7183 = vunpack.c.l.s4 1966171168
      %v7184 = vunpack.c.0.s8 %v7183
      %v7185 = vlaneseq
      %v7186 = vshrl.u32 %v7185, 7
      %v7187 = vsub.s32 %v7184, %v7186
      %v7188 = vrot.slane %v7160, %v7187
      %v7189 = vcombine.low %v7167, %v7174
      %v7190 = vcombine.low %v7181, %v7188
      %v7192 = vunpack.c.l.s4 1966171168
      %v7193 = vunpack.c.0.s8 %v7192
      %v7194 = vlaneseq
      %v7195 = vshrl.u32 %v7194, 7
      %v7196 = vsub.s32 %v7193, %v7195
      %v7197 = vrot.slane %v7189, %v7196
      %v7199 = vunpack.c.l.s4 1966171168
      %v7200 = vunpack.c.0.s8 %v7199
      %v7201 = vlaneseq
      %v7202 = vshrl.u32 %v7201, 7
      %v7203 = vsub.s32 %v7200, %v7202
      %v7204 = vrot.slane %v7190, %v7203
      %v7205 = vcombine.low %v7197, %v7204
      %v7206 = vcombine.low %v5564, %v5568
      %v7207 = vcombine.low %v5572, %v5576
      %v7208 = vcombine.low %v5580, %v5584
      %v7209 = vcombine.low %v5588, %v5592
      %v7211 = vunpack.c.l.s4 1966171168
      %v7212 = vunpack.c.0.s8 %v7211
      %v7213 = vlaneseq
      %v7214 = vshrl.u32 %v7213, 7
      %v7215 = vsub.s32 %v7212, %v7214
      %v7216 = vrot.slane %v7206, %v7215
      %v7218 = vunpack.c.l.s4 1966171168
      %v7219 = vunpack.c.0.s8 %v7218
      %v7220 = vlaneseq
      %v7221 = vshrl.u32 %v7220, 7
      %v7222 = vsub.s32 %v7219, %v7221
      %v7223 = vrot.slane %v7207, %v7222
      %v7225 = vunpack.c.l.s4 1966171168
      %v7226 = vunpack.c.0.s8 %v7225
      %v7227 = vlaneseq
      %v7228 = vshrl.u32 %v7227, 7
      %v7229 = vsub.s32 %v7226, %v7228
      %v7230 = vrot.slane %v7208, %v7229
      %v7232 = vunpack.c.l.s4 1966171168
      %v7233 = vunpack.c.0.s8 %v7232
      %v7234 = vlaneseq
      %v7235 = vshrl.u32 %v7234, 7
      %v7236 = vsub.s32 %v7233, %v7235
      %v7237 = vrot.slane %v7209, %v7236
      %v7238 = vcombine.low %v7216, %v7223
      %v7239 = vcombine.low %v7230, %v7237
      %v7241 = vunpack.c.l.s4 1966171168
      %v7242 = vunpack.c.0.s8 %v7241
      %v7243 = vlaneseq
      %v7244 = vshrl.u32 %v7243, 7
      %v7245 = vsub.s32 %v7242, %v7244
      %v7246 = vrot.slane %v7238, %v7245
      %v7248 = vunpack.c.l.s4 1966171168
      %v7249 = vunpack.c.0.s8 %v7248
      %v7250 = vlaneseq
      %v7251 = vshrl.u32 %v7250, 7
      %v7252 = vsub.s32 %v7249, %v7251
      %v7253 = vrot.slane %v7239, %v7252
      %v7254 = vcombine.low %v7246, %v7253
      %v7255 = vcombine.low %v5596, %v5600
      %v7256 = vcombine.low %v5604, %v5608
      %v7257 = vcombine.low %v5612, %v5616
      %v7258 = vcombine.low %v5620, %v5624
      %v7260 = vunpack.c.l.s4 1966171168
      %v7261 = vunpack.c.0.s8 %v7260
      %v7262 = vlaneseq
      %v7263 = vshrl.u32 %v7262, 7
      %v7264 = vsub.s32 %v7261, %v7263
      %v7265 = vrot.slane %v7255, %v7264
      %v7267 = vunpack.c.l.s4 1966171168
      %v7268 = vunpack.c.0.s8 %v7267
      %v7269 = vlaneseq
      %v7270 = vshrl.u32 %v7269, 7
      %v7271 = vsub.s32 %v7268, %v7270
      %v7272 = vrot.slane %v7256, %v7271
      %v7274 = vunpack.c.l.s4 1966171168
      %v7275 = vunpack.c.0.s8 %v7274
      %v7276 = vlaneseq
      %v7277 = vshrl.u32 %v7276, 7
      %v7278 = vsub.s32 %v7275, %v7277
      %v7279 = vrot.slane %v7257, %v7278
      %v7281 = vunpack.c.l.s4 1966171168
      %v7282 = vunpack.c.0.s8 %v7281
      %v7283 = vlaneseq
      %v7284 = vshrl.u32 %v7283, 7
      %v7285 = vsub.s32 %v7282, %v7284
      %v7286 = vrot.slane %v7258, %v7285
      %v7287 = vcombine.low %v7265, %v7272
      %v7288 = vcombine.low %v7279, %v7286
      %v7290 = vunpack.c.l.s4 1966171168
      %v7291 = vunpack.c.0.s8 %v7290
      %v7292 = vlaneseq
      %v7293 = vshrl.u32 %v7292, 7
      %v7294 = vsub.s32 %v7291, %v7293
      %v7295 = vrot.slane %v7287, %v7294
      %v7297 = vunpack.c.l.s4 1966171168
      %v7298 = vunpack.c.0.s8 %v7297
      %v7299 = vlaneseq
      %v7300 = vshrl.u32 %v7299, 7
      %v7301 = vsub.s32 %v7298, %v7300
      %v7302 = vrot.slane %v7288, %v7301
      %v7303 = vcombine.low %v7295, %v7302
      %v7304 = vcombine.low %v5628, %v5632
      %v7305 = vcombine.low %v5636, %v5640
      %v7306 = vcombine.low %v5644, %v5648
      %v7307 = vcombine.low %v5652, %v5656
      %v7309 = vunpack.c.l.s4 1966171168
      %v7310 = vunpack.c.0.s8 %v7309
      %v7311 = vlaneseq
      %v7312 = vshrl.u32 %v7311, 7
      %v7313 = vsub.s32 %v7310, %v7312
      %v7314 = vrot.slane %v7304, %v7313
      %v7316 = vunpack.c.l.s4 1966171168
      %v7317 = vunpack.c.0.s8 %v7316
      %v7318 = vlaneseq
      %v7319 = vshrl.u32 %v7318, 7
      %v7320 = vsub.s32 %v7317, %v7319
      %v7321 = vrot.slane %v7305, %v7320
      %v7323 = vunpack.c.l.s4 1966171168
      %v7324 = vunpack.c.0.s8 %v7323
      %v7325 = vlaneseq
      %v7326 = vshrl.u32 %v7325, 7
      %v7327 = vsub.s32 %v7324, %v7326
      %v7328 = vrot.slane %v7306, %v7327
      %v7330 = vunpack.c.l.s4 1966171168
      %v7331 = vunpack.c.0.s8 %v7330
      %v7332 = vlaneseq
      %v7333 = vshrl.u32 %v7332, 7
      %v7334 = vsub.s32 %v7331, %v7333
      %v7335 = vrot.slane %v7307, %v7334
      %v7336 = vcombine.low %v7314, %v7321
      %v7337 = vcombine.low %v7328, %v7335
      %v7339 = vunpack.c.l.s4 1966171168
      %v7340 = vunpack.c.0.s8 %v7339
      %v7341 = vlaneseq
      %v7342 = vshrl.u32 %v7341, 7
      %v7343 = vsub.s32 %v7340, %v7342
      %v7344 = vrot.slane %v7336, %v7343
      %v7346 = vunpack.c.l.s4 1966171168
      %v7347 = vunpack.c.0.s8 %v7346
      %v7348 = vlaneseq
      %v7349 = vshrl.u32 %v7348, 7
      %v7350 = vsub.s32 %v7347, %v7349
      %v7351 = vrot.slane %v7337, %v7350
      %v7352 = vcombine.low %v7344, %v7351
      %v7353 = vcombine.low %v5660, %v5664
      %v7354 = vcombine.low %v5668, %v5672
      %v7355 = vcombine.low %v5676, %v5680
      %v7356 = vcombine.low %v5684, %v5688
      %v7358 = vunpack.c.l.s4 1966171168
      %v7359 = vunpack.c.0.s8 %v7358
      %v7360 = vlaneseq
      %v7361 = vshrl.u32 %v7360, 7
      %v7362 = vsub.s32 %v7359, %v7361
      %v7363 = vrot.slane %v7353, %v7362
      %v7365 = vunpack.c.l.s4 1966171168
      %v7366 = vunpack.c.0.s8 %v7365
      %v7367 = vlaneseq
      %v7368 = vshrl.u32 %v7367, 7
      %v7369 = vsub.s32 %v7366, %v7368
      %v7370 = vrot.slane %v7354, %v7369
      %v7372 = vunpack.c.l.s4 1966171168
      %v7373 = vunpack.c.0.s8 %v7372
      %v7374 = vlaneseq
      %v7375 = vshrl.u32 %v7374, 7
      %v7376 = vsub.s32 %v7373, %v7375
      %v7377 = vrot.slane %v7355, %v7376
      %v7379 = vunpack.c.l.s4 1966171168
      %v7380 = vunpack.c.0.s8 %v7379
      %v7381 = vlaneseq
      %v7382 = vshrl.u32 %v7381, 7
      %v7383 = vsub.s32 %v7380, %v7382
      %v7384 = vrot.slane %v7356, %v7383
      %v7385 = vcombine.low %v7363, %v7370
      %v7386 = vcombine.low %v7377, %v7384
      %v7388 = vunpack.c.l.s4 1966171168
      %v7389 = vunpack.c.0.s8 %v7388
      %v7390 = vlaneseq
      %v7391 = vshrl.u32 %v7390, 7
      %v7392 = vsub.s32 %v7389, %v7391
      %v7393 = vrot.slane %v7385, %v7392
      %v7395 = vunpack.c.l.s4 1966171168
      %v7396 = vunpack.c.0.s8 %v7395
      %v7397 = vlaneseq
      %v7398 = vshrl.u32 %v7397, 7
      %v7399 = vsub.s32 %v7396, %v7398
      %v7400 = vrot.slane %v7386, %v7399
      %v7401 = vcombine.low %v7393, %v7400
      %v7402 = vcombine.low %v5692, %v5696
      %v7403 = vcombine.low %v5700, %v5704
      %v7404 = vcombine.low %v5708, %v5712
      %v7405 = vcombine.low %v5716, %v5720
      %v7407 = vunpack.c.l.s4 1966171168
      %v7408 = vunpack.c.0.s8 %v7407
      %v7409 = vlaneseq
      %v7410 = vshrl.u32 %v7409, 7
      %v7411 = vsub.s32 %v7408, %v7410
      %v7412 = vrot.slane %v7402, %v7411
      %v7414 = vunpack.c.l.s4 1966171168
      %v7415 = vunpack.c.0.s8 %v7414
      %v7416 = vlaneseq
      %v7417 = vshrl.u32 %v7416, 7
      %v7418 = vsub.s32 %v7415, %v7417
      %v7419 = vrot.slane %v7403, %v7418
      %v7421 = vunpack.c.l.s4 1966171168
      %v7422 = vunpack.c.0.s8 %v7421
      %v7423 = vlaneseq
      %v7424 = vshrl.u32 %v7423, 7
      %v7425 = vsub.s32 %v7422, %v7424
      %v7426 = vrot.slane %v7404, %v7425
      %v7428 = vunpack.c.l.s4 1966171168
      %v7429 = vunpack.c.0.s8 %v7428
      %v7430 = vlaneseq
      %v7431 = vshrl.u32 %v7430, 7
      %v7432 = vsub.s32 %v7429, %v7431
      %v7433 = vrot.slane %v7405, %v7432
      %v7434 = vcombine.low %v7412, %v7419
      %v7435 = vcombine.low %v7426, %v7433
      %v7437 = vunpack.c.l.s4 1966171168
      %v7438 = vunpack.c.0.s8 %v7437
      %v7439 = vlaneseq
      %v7440 = vshrl.u32 %v7439, 7
      %v7441 = vsub.s32 %v7438, %v7440
      %v7442 = vrot.slane %v7434, %v7441
      %v7444 = vunpack.c.l.s4 1966171168
      %v7445 = vunpack.c.0.s8 %v7444
      %v7446 = vlaneseq
      %v7447 = vshrl.u32 %v7446, 7
      %v7448 = vsub.s32 %v7445, %v7447
      %v7449 = vrot.slane %v7435, %v7448
      %v7450 = vcombine.low %v7442, %v7449
      %v7451 = vcombine.low %v5724, %v5728
      %v7452 = vcombine.low %v5732, %v5736
      %v7453 = vcombine.low %v5740, %v5744
      %v7454 = vcombine.low %v5748, %v5752
      %v7456 = vunpack.c.l.s4 1966171168
      %v7457 = vunpack.c.0.s8 %v7456
      %v7458 = vlaneseq
      %v7459 = vshrl.u32 %v7458, 7
      %v7460 = vsub.s32 %v7457, %v7459
      %v7461 = vrot.slane %v7451, %v7460
      %v7463 = vunpack.c.l.s4 1966171168
      %v7464 = vunpack.c.0.s8 %v7463
      %v7465 = vlaneseq
      %v7466 = vshrl.u32 %v7465, 7
      %v7467 = vsub.s32 %v7464, %v7466
      %v7468 = vrot.slane %v7452, %v7467
      %v7470 = vunpack.c.l.s4 1966171168
      %v7471 = vunpack.c.0.s8 %v7470
      %v7472 = vlaneseq
      %v7473 = vshrl.u32 %v7472, 7
      %v7474 = vsub.s32 %v7471, %v7473
      %v7475 = vrot.slane %v7453, %v7474
      %v7477 = vunpack.c.l.s4 1966171168
      %v7478 = vunpack.c.0.s8 %v7477
      %v7479 = vlaneseq
      %v7480 = vshrl.u32 %v7479, 7
      %v7481 = vsub.s32 %v7478, %v7480
      %v7482 = vrot.slane %v7454, %v7481
      %v7483 = vcombine.low %v7461, %v7468
      %v7484 = vcombine.low %v7475, %v7482
      %v7486 = vunpack.c.l.s4 1966171168
      %v7487 = vunpack.c.0.s8 %v7486
      %v7488 = vlaneseq
      %v7489 = vshrl.u32 %v7488, 7
      %v7490 = vsub.s32 %v7487, %v7489
      %v7491 = vrot.slane %v7483, %v7490
      %v7493 = vunpack.c.l.s4 1966171168
      %v7494 = vunpack.c.0.s8 %v7493
      %v7495 = vlaneseq
      %v7496 = vshrl.u32 %v7495, 7
      %v7497 = vsub.s32 %v7494, %v7496
      %v7498 = vrot.slane %v7484, %v7497
      %v7499 = vcombine.low %v7491, %v7498
      %v7500 = vcombine.low %v5756, %v5760
      %v7501 = vcombine.low %v5764, %v5768
      %v7502 = vcombine.low %v5772, %v5776
      %v7503 = vcombine.low %v5780, %v5784
      %v7505 = vunpack.c.l.s4 1966171168
      %v7506 = vunpack.c.0.s8 %v7505
      %v7507 = vlaneseq
      %v7508 = vshrl.u32 %v7507, 7
      %v7509 = vsub.s32 %v7506, %v7508
      %v7510 = vrot.slane %v7500, %v7509
      %v7512 = vunpack.c.l.s4 1966171168
      %v7513 = vunpack.c.0.s8 %v7512
      %v7514 = vlaneseq
      %v7515 = vshrl.u32 %v7514, 7
      %v7516 = vsub.s32 %v7513, %v7515
      %v7517 = vrot.slane %v7501, %v7516
      %v7519 = vunpack.c.l.s4 1966171168
      %v7520 = vunpack.c.0.s8 %v7519
      %v7521 = vlaneseq
      %v7522 = vshrl.u32 %v7521, 7
      %v7523 = vsub.s32 %v7520, %v7522
      %v7524 = vrot.slane %v7502, %v7523
      %v7526 = vunpack.c.l.s4 1966171168
      %v7527 = vunpack.c.0.s8 %v7526
      %v7528 = vlaneseq
      %v7529 = vshrl.u32 %v7528, 7
      %v7530 = vsub.s32 %v7527, %v7529
      %v7531 = vrot.slane %v7503, %v7530
      %v7532 = vcombine.low %v7510, %v7517
      %v7533 = vcombine.low %v7524, %v7531
      %v7535 = vunpack.c.l.s4 1966171168
      %v7536 = vunpack.c.0.s8 %v7535
      %v7537 = vlaneseq
      %v7538 = vshrl.u32 %v7537, 7
      %v7539 = vsub.s32 %v7536, %v7538
      %v7540 = vrot.slane %v7532, %v7539
      %v7542 = vunpack.c.l.s4 1966171168
      %v7543 = vunpack.c.0.s8 %v7542
      %v7544 = vlaneseq
      %v7545 = vshrl.u32 %v7544, 7
      %v7546 = vsub.s32 %v7543, %v7545
      %v7547 = vrot.slane %v7533, %v7546
      %v7548 = vcombine.low %v7540, %v7547
      %7549 = vset.pattern.permute.xlu0 0
      %7550 = vperm.xlu0 %7549, %v5833
      %v7551 = vpop.permute.xlu0 %7550
      %7552 = vset.pattern.permute.xlu0 0
      %7553 = vperm.xlu0 %7552, %v5882
      %v7554 = vpop.permute.xlu0 %7553
      %7555 = vset.pattern.permute.xlu0 0
      %7556 = vperm.xlu0 %7555, %v5931
      %v7557 = vpop.permute.xlu0 %7556
      %7558 = vset.pattern.permute.xlu0 0
      %7559 = vperm.xlu0 %7558, %v5980
      %v7560 = vpop.permute.xlu0 %7559
      %7561 = vset.pattern.permute.xlu0 0
      %7562 = vperm.xlu0 %7561, %v6029
      %v7563 = vpop.permute.xlu0 %7562
      %7564 = vset.pattern.permute.xlu0 0
      %7565 = vperm.xlu0 %7564, %v6078
      %v7566 = vpop.permute.xlu0 %7565
      %7567 = vset.pattern.permute.xlu0 0
      %7568 = vperm.xlu0 %7567, %v6127
      %v7569 = vpop.permute.xlu0 %7568
      %7570 = vset.pattern.permute.xlu0 0
      %7571 = vperm.xlu0 %7570, %v6176
      %v7572 = vpop.permute.xlu0 %7571
      %7573 = vset.pattern.permute.xlu0 0
      %7574 = vperm.xlu0 %7573, %v6225
      %v7575 = vpop.permute.xlu0 %7574
      %7576 = vset.pattern.permute.xlu0 0
      %7577 = vperm.xlu0 %7576, %v6274
      %v7578 = vpop.permute.xlu0 %7577
      %7579 = vset.pattern.permute.xlu0 0
      %7580 = vperm.xlu0 %7579, %v6323
      %v7581 = vpop.permute.xlu0 %7580
      %7582 = vset.pattern.permute.xlu0 0
      %7583 = vperm.xlu0 %7582, %v6372
      %v7584 = vpop.permute.xlu0 %7583
      %7585 = vset.pattern.permute.xlu0 0
      %7586 = vperm.xlu0 %7585, %v6421
      %v7587 = vpop.permute.xlu0 %7586
      %7588 = vset.pattern.permute.xlu0 0
      %7589 = vperm.xlu0 %7588, %v6470
      %v7590 = vpop.permute.xlu0 %7589
      %7591 = vset.pattern.permute.xlu0 0
      %7592 = vperm.xlu0 %7591, %v6519
      %v7593 = vpop.permute.xlu0 %7592
      %7594 = vset.pattern.permute.xlu0 0
      %7595 = vperm.xlu0 %7594, %v6568
      %v7596 = vpop.permute.xlu0 %7595
      %7597 = vset.pattern.permute.xlu0 0
      %7598 = vperm.xlu0 %7597, %v6617
      %v7599 = vpop.permute.xlu0 %7598
      %7600 = vset.pattern.permute.xlu0 0
      %7601 = vperm.xlu0 %7600, %v6666
      %v7602 = vpop.permute.xlu0 %7601
      %7603 = vset.pattern.permute.xlu0 0
      %7604 = vperm.xlu0 %7603, %v6715
      %v7605 = vpop.permute.xlu0 %7604
      %7606 = vset.pattern.permute.xlu0 0
      %7607 = vperm.xlu0 %7606, %v6764
      %v7608 = vpop.permute.xlu0 %7607
      %7609 = vset.pattern.permute.xlu0 0
      %7610 = vperm.xlu0 %7609, %v6813
      %v7611 = vpop.permute.xlu0 %7610
      %7612 = vset.pattern.permute.xlu0 0
      %7613 = vperm.xlu0 %7612, %v6862
      %v7614 = vpop.permute.xlu0 %7613
      %7615 = vset.pattern.permute.xlu0 0
      %7616 = vperm.xlu0 %7615, %v6911
      %v7617 = vpop.permute.xlu0 %7616
      %7618 = vset.pattern.permute.xlu0 0
      %7619 = vperm.xlu0 %7618, %v6960
      %v7620 = vpop.permute.xlu0 %7619
      %7621 = vset.pattern.permute.xlu0 0
      %7622 = vperm.xlu0 %7621, %v7009
      %v7623 = vpop.permute.xlu0 %7622
      %7624 = vset.pattern.permute.xlu0 0
      %7625 = vperm.xlu0 %7624, %v7058
      %v7626 = vpop.permute.xlu0 %7625
      %7627 = vset.pattern.permute.xlu0 0
      %7628 = vperm.xlu0 %7627, %v7107
      %v7629 = vpop.permute.xlu0 %7628
      %7630 = vset.pattern.permute.xlu0 0
      %7631 = vperm.xlu0 %7630, %v7156
      %v7632 = vpop.permute.xlu0 %7631
      %7633 = vset.pattern.permute.xlu0 0
      %7634 = vperm.xlu0 %7633, %v7205
      %v7635 = vpop.permute.xlu0 %7634
      %7636 = vset.pattern.permute.xlu0 0
      %7637 = vperm.xlu0 %7636, %v7254
      %v7638 = vpop.permute.xlu0 %7637
      %7639 = vset.pattern.permute.xlu0 0
      %7640 = vperm.xlu0 %7639, %v7303
      %v7641 = vpop.permute.xlu0 %7640
      %7642 = vset.pattern.permute.xlu0 0
      %7643 = vperm.xlu0 %7642, %v7352
      %v7644 = vpop.permute.xlu0 %7643
      %7645 = vset.pattern.permute.xlu0 0
      %7646 = vperm.xlu0 %7645, %v7401
      %v7647 = vpop.permute.xlu0 %7646
      %7648 = vset.pattern.permute.xlu0 0
      %7649 = vperm.xlu0 %7648, %v7450
      %v7650 = vpop.permute.xlu0 %7649
      %7651 = vset.pattern.permute.xlu0 0
      %7652 = vperm.xlu0 %7651, %v7499
      %v7653 = vpop.permute.xlu0 %7652
      %7654 = vset.pattern.permute.xlu0 0
      %7655 = vperm.xlu0 %7654, %v7548
      %v7656 = vpop.permute.xlu0 %7655
      %v7657 = vlaneseq
      %v7658 = vand.u32 %v7657, 127
      %v7659 = vlaneseq
      %v7660 = vshrl.u32 %v7659, 7
      %v7661 = vsub.s32 %v7658, %v7660
      %v7662 = vrot.slane %v7551, %v7661
      %v7663 = vadd.s32 %v7658, 4294967288
      %v7664 = vlaneseq
      %v7665 = vshrl.u32 %v7664, 7
      %v7666 = vsub.s32 %v7663, %v7665
      %v7667 = vrot.slane %v7554, %v7666
      %vm7668 = vcmask 130112
      %v7669 = vsel %vm7668, %v7667, %v7662
      %v7670 = vadd.s32 %v7658, 4294967280
      %v7671 = vlaneseq
      %v7672 = vshrl.u32 %v7671, 7
      %v7673 = vsub.s32 %v7670, %v7672
      %v7674 = vrot.slane %v7557, %v7673
      %vm7675 = vcmask 195712
      %v7676 = vsel %vm7675, %v7674, %v7669
      %v7677 = vadd.s32 %v7658, 4294967272
      %v7678 = vlaneseq
      %v7679 = vshrl.u32 %v7678, 7
      %v7680 = vsub.s32 %v7677, %v7679
      %v7681 = vrot.slane %v7560, %v7680
      %vm7682 = vcmask 261312
      %v7683 = vsel %vm7682, %v7681, %v7676
      %v7684 = vadd.s32 %v7658, 4294967264
      %v7685 = vlaneseq
      %v7686 = vshrl.u32 %v7685, 7
      %v7687 = vsub.s32 %v7684, %v7686
      %v7688 = vrot.slane %v7563, %v7687
      %vm7689 = vcmask 326912
      %v7690 = vsel %vm7689, %v7688, %v7683
      %v7691 = vadd.s32 %v7658, 4294967256
      %v7692 = vlaneseq
      %v7693 = vshrl.u32 %v7692, 7
      %v7694 = vsub.s32 %v7691, %v7693
      %v7695 = vrot.slane %v7566, %v7694
      %vm7696 = vcmask 392512
      %v7697 = vsel %vm7696, %v7695, %v7690
      %v7698 = vadd.s32 %v7658, 4294967248
      %v7699 = vlaneseq
      %v7700 = vshrl.u32 %v7699, 7
      %v7701 = vsub.s32 %v7698, %v7700
      %v7702 = vrot.slane %v7569, %v7701
      %vm7703 = vcmask 458112
      %v7704 = vsel %vm7703, %v7702, %v7697
      %v7705 = vadd.s32 %v7658, 4294967240
      %v7706 = vlaneseq
      %v7707 = vshrl.u32 %v7706, 7
      %v7708 = vsub.s32 %v7705, %v7707
      %v7709 = vrot.slane %v7572, %v7708
      %vm7710 = vcmask 523712
      %v7711 = vsel %vm7710, %v7709, %v7704
      %v7712 = vadd.s32 %v7658, 4294967232
      %v7713 = vlaneseq
      %v7714 = vshrl.u32 %v7713, 7
      %v7715 = vsub.s32 %v7712, %v7714
      %v7716 = vrot.slane %v7575, %v7715
      %vm7717 = vcmask 589312
      %v7718 = vsel %vm7717, %v7716, %v7711
      %v7719 = vadd.s32 %v7658, 4294967224
      %v7720 = vlaneseq
      %v7721 = vshrl.u32 %v7720, 7
      %v7722 = vsub.s32 %v7719, %v7721
      %v7723 = vrot.slane %v7578, %v7722
      %vm7724 = vcmask 654912
      %v7725 = vsel %vm7724, %v7723, %v7718
      %v7726 = vadd.s32 %v7658, 4294967216
      %v7727 = vlaneseq
      %v7728 = vshrl.u32 %v7727, 7
      %v7729 = vsub.s32 %v7726, %v7728
      %v7730 = vrot.slane %v7581, %v7729
      %vm7731 = vcmask 720512
      %v7732 = vsel %vm7731, %v7730, %v7725
      %v7733 = vadd.s32 %v7658, 4294967208
      %v7734 = vlaneseq
      %v7735 = vshrl.u32 %v7734, 7
      %v7736 = vsub.s32 %v7733, %v7735
      %v7737 = vrot.slane %v7584, %v7736
      %vm7738 = vcmask 786112
      %v7739 = vsel %vm7738, %v7737, %v7732
      %v7740 = vadd.s32 %v7658, 4294967200
      %v7741 = vlaneseq
      %v7742 = vshrl.u32 %v7741, 7
      %v7743 = vsub.s32 %v7740, %v7742
      %v7744 = vrot.slane %v7587, %v7743
      %vm7745 = vcmask 851712
      %v7746 = vsel %vm7745, %v7744, %v7739
      %v7747 = vadd.s32 %v7658, 4294967192
      %v7748 = vlaneseq
      %v7749 = vshrl.u32 %v7748, 7
      %v7750 = vsub.s32 %v7747, %v7749
      %v7751 = vrot.slane %v7590, %v7750
      %vm7752 = vcmask 917312
      %v7753 = vsel %vm7752, %v7751, %v7746
      %v7754 = vadd.s32 %v7658, 4294967184
      %v7755 = vlaneseq
      %v7756 = vshrl.u32 %v7755, 7
      %v7757 = vsub.s32 %v7754, %v7756
      %v7758 = vrot.slane %v7593, %v7757
      %vm7759 = vcmask 982912
      %v7760 = vsel %vm7759, %v7758, %v7753
      %v7761 = vadd.s32 %v7658, 4294967176
      %v7762 = vlaneseq
      %v7763 = vshrl.u32 %v7762, 7
      %v7764 = vsub.s32 %v7761, %v7763
      %v7765 = vrot.slane %v7596, %v7764
      %vm7766 = vcmask 1048512
      %v7767 = vsel %vm7766, %v7765, %v7760
      %v7768 = vlaneseq
      %v7769 = vshrl.u32 %v7768, 7
      %v7770 = vsub.s32 %v7658, %v7769
      %v7771 = vrot.slane %v7599, %v7770
      %v7772 = vlaneseq
      %v7773 = vshrl.u32 %v7772, 7
      %v7774 = vsub.s32 %v7663, %v7773
      %v7775 = vrot.slane %v7602, %v7774
      %v7776 = vsel %vm7668, %v7775, %v7771
      %v7777 = vlaneseq
      %v7778 = vshrl.u32 %v7777, 7
      %v7779 = vsub.s32 %v7670, %v7778
      %v7780 = vrot.slane %v7605, %v7779
      %v7781 = vsel %vm7675, %v7780, %v7776
      %v7782 = vlaneseq
      %v7783 = vshrl.u32 %v7782, 7
      %v7784 = vsub.s32 %v7677, %v7783
      %v7785 = vrot.slane %v7608, %v7784
      %v7786 = vsel %vm7682, %v7785, %v7781
      %v7787 = vlaneseq
      %v7788 = vshrl.u32 %v7787, 7
      %v7789 = vsub.s32 %v7684, %v7788
      %v7790 = vrot.slane %v7611, %v7789
      %v7791 = vsel %vm7689, %v7790, %v7786
      %v7792 = vlaneseq
      %v7793 = vshrl.u32 %v7792, 7
      %v7794 = vsub.s32 %v7691, %v7793
      %v7795 = vrot.slane %v7614, %v7794
      %v7796 = vsel %vm7696, %v7795, %v7791
      %v7797 = vlaneseq
      %v7798 = vshrl.u32 %v7797, 7
      %v7799 = vsub.s32 %v7698, %v7798
      %v7800 = vrot.slane %v7617, %v7799
      %v7801 = vsel %vm7703, %v7800, %v7796
      %v7802 = vlaneseq
      %v7803 = vshrl.u32 %v7802, 7
      %v7804 = vsub.s32 %v7705, %v7803
      %v7805 = vrot.slane %v7620, %v7804
      %v7806 = vsel %vm7710, %v7805, %v7801
      %v7807 = vlaneseq
      %v7808 = vshrl.u32 %v7807, 7
      %v7809 = vsub.s32 %v7712, %v7808
      %v7810 = vrot.slane %v7623, %v7809
      %v7811 = vsel %vm7717, %v7810, %v7806
      %v7812 = vlaneseq
      %v7813 = vshrl.u32 %v7812, 7
      %v7814 = vsub.s32 %v7719, %v7813
      %v7815 = vrot.slane %v7626, %v7814
      %v7816 = vsel %vm7724, %v7815, %v7811
      %v7817 = vlaneseq
      %v7818 = vshrl.u32 %v7817, 7
      %v7819 = vsub.s32 %v7726, %v7818
      %v7820 = vrot.slane %v7629, %v7819
      %v7821 = vsel %vm7731, %v7820, %v7816
      %v7822 = vlaneseq
      %v7823 = vshrl.u32 %v7822, 7
      %v7824 = vsub.s32 %v7733, %v7823
      %v7825 = vrot.slane %v7632, %v7824
      %v7826 = vsel %vm7738, %v7825, %v7821
      %v7827 = vlaneseq
      %v7828 = vshrl.u32 %v7827, 7
      %v7829 = vsub.s32 %v7740, %v7828
      %v7830 = vrot.slane %v7635, %v7829
      %v7831 = vsel %vm7745, %v7830, %v7826
      %v7832 = vlaneseq
      %v7833 = vshrl.u32 %v7832, 7
      %v7834 = vsub.s32 %v7747, %v7833
      %v7835 = vrot.slane %v7638, %v7834
      %v7836 = vsel %vm7752, %v7835, %v7831
      %v7837 = vlaneseq
      %v7838 = vshrl.u32 %v7837, 7
      %v7839 = vsub.s32 %v7754, %v7838
      %v7840 = vrot.slane %v7641, %v7839
      %v7841 = vsel %vm7759, %v7840, %v7836
      %v7842 = vlaneseq
      %v7843 = vshrl.u32 %v7842, 7
      %v7844 = vsub.s32 %v7761, %v7843
      %v7845 = vrot.slane %v7644, %v7844
      %v7846 = vsel %vm7766, %v7845, %v7841
      %v7847 = vlaneseq
      %v7848 = vshrl.u32 %v7847, 7
      %v7849 = vsub.s32 %v7658, %v7848
      %v7850 = vrot.slane %v7647, %v7849
      %v7851 = vlaneseq
      %v7852 = vshrl.u32 %v7851, 7
      %v7853 = vsub.s32 %v7663, %v7852
      %v7854 = vrot.slane %v7650, %v7853
      %v7855 = vsel %vm7668, %v7854, %v7850
      %v7856 = vlaneseq
      %v7857 = vshrl.u32 %v7856, 7
      %v7858 = vsub.s32 %v7670, %v7857
      %v7859 = vrot.slane %v7653, %v7858
      %v7860 = vsel %vm7675, %v7859, %v7855
      %v7861 = vlaneseq
      %v7862 = vshrl.u32 %v7861, 7
      %v7863 = vsub.s32 %v7677, %v7862
      %v7864 = vrot.slane %v7656, %v7863
      %v7865 = vsel %vm7682, %v7864, %v7860
      %v7866 = vcombine.low %v7767, %v7846
      %v7868 = vunpack.c.l.s4 1966171168
      %v7869 = vunpack.c.0.s8 %v7868
      %v7870 = vlaneseq
      %v7871 = vshrl.u32 %v7870, 7
      %v7872 = vsub.s32 %v7869, %v7871
      %v7873 = vrot.slane %v7866, %v7872
      %v7875 = vunpack.c.l.s4 1966171168
      %v7876 = vunpack.c.0.s8 %v7875
      %v7877 = vlaneseq
      %v7878 = vshrl.u32 %v7877, 7
      %v7879 = vsub.s32 %v7876, %v7878
      %v7880 = vrot.slane %v7865, %v7879
      %v7881 = vcombine.low %v7873, %v7880
      %v7883 = vunpack.c.l.s4 1966171168
      %v7884 = vunpack.c.0.s8 %v7883
      %v7885 = vlaneseq
      %v7886 = vshrl.u32 %v7885, 7
      %v7887 = vsub.s32 %v7884, %v7886
      %v7888 = vrot.slane %v7881, %v7887
      %v7890 = vlaneseq
      %vm7891 = vcmp.ge.s32.totalorder %v7890, 0
      %vm7892 = vcmp.lt.s32.totalorder %v7890, 288
      %vm7893 = vmand %vm7891, %vm7892
      %7894 = vst.msk [vmem:[%s195] sm:$0x7] %vm7893, %v7888
      %p7895 = scmp.lt.s32.totalorder %s15, 1
      %s7896 = scalar_select %p7895, %s15, 1
      %s7897 = smul.addr %s7896, 3
      %s7898 = scalar_lea.vmem %s4, %s7897
      // Predicated region
      $region37: #{conv_bn_relu_up.1} parent=35 // pred_check
        %p7899 = pneg %p122
      $region38: #{conv_bn_relu_up.1} parent=35 // pred_check_branch
        %7901 = sbr.rel (%p7899) target = $region40
      $region39: #{conv_bn_relu_up.1} parent=35 // pred_region
        _
      $region40: #{conv_bn_relu_up.1} parent=35 // pred_fallthru
        _
    $region36: #{conv_bn_relu_up.1} parent=5 // pred_fallthru
      _
    %p7902 = scmp.le.s32.totalorder 2, %s10
    // Predicated region
    $region41: #{conv_bn_relu_up.1} parent=5 // pred_check
      %p7903 = pneg %p7902
    $region42: #{conv_bn_relu_up.1} parent=5 // pred_check_branch
      %7905 = sbr.rel (%p7903) target = $region44
    $region43: #{conv_bn_relu_up.1} parent=5 // pred_region
      %s7906 = ssub.s32 %s10, 2
      // Predicated region
      $region45: #{conv_bn_relu_up.1} parent=43 // pred_check
        %p7907 = pneg %p128
      $region46: #{conv_bn_relu_up.1} parent=43 // pred_check_branch
        %7909 = sbr.rel (%p7907) target = $region48
      $region47: #{conv_bn_relu_up.1} parent=43 // pred_region
        %p7910 = scmp.lt.s32.totalorder %s16, 1
        %s7911 = scalar_select %p7910, %s16, 1
        %s7912 = smul.addr %s7911, 3
        %s7913 = scalar_lea.vmem %s4, %s7912
      $region48: #{conv_bn_relu_up.1} parent=43 // pred_fallthru
        _
    $region44: #{conv_bn_relu_up.1} parent=5 // pred_fallthru
      _
  $region6: #{conv_bn_relu_up.1} parent=0 // loop_footer
    %s14 = sadd.s32 1, %s10
  $region7: #{conv_bn_relu_up.1} parent=0 // loop_footer_branch
    %9 = sbr.rel target = $region3
  $region8: #{conv_bn_relu_up.1} parent=0 // loop_exit
    _

</llo_original>
